<compile_context>
chip_gen: v7x
topology: tpu7x:2x2x1
jax: 0.10.0
libtpu: 0.0.40
codegen_flags: <defaults>
</compile_context>

<pallas_src>
import functools

import jax
import jax.numpy as jnp
import numpy as np
from jax.experimental import pallas as pl
from jax.experimental.pallas import tpu as pltpu


N_PAD = 128                      # lane-dense GEMM output width (full-width vst)
VMEM_LIMIT = 32 * 1024 * 1024    # scoped-VMEM cap, safe on v5e/v6e/v7x


def _round_up(x, m):
    return ((x + m - 1) // m) * m


def _choose_tiles(M, tm_cap):
    """Pick (TM, grid) so M_pad ~= M, TM % 16 == 0 and grid is even and >= 2."""
    g = max(2, pl.cdiv(M, tm_cap))
    if g % 2:
        g += 1
    tm = _round_up(pl.cdiv(M, g), 16)
    return tm, g


# ---------------------------------------------------------------------------
# Pallas kernel: out = relu?(x @ w + b)   (bf16 operands, f32 accumulate)
# ---------------------------------------------------------------------------
def _mm_bias_act_kernel(x_ref, w_ref, b_ref, o_ref, *, relu):
    acc = jnp.dot(x_ref[...], w_ref[...], preferred_element_type=jnp.float32)
    acc = acc + b_ref[...]          # (1, N) f32 bias, broadcast over the M tile
    if relu:
        acc = jnp.maximum(acc, 0.0)
    o_ref[...] = acc.astype(o_ref.dtype)


def pallas_matmul_bias(x, w, b, *, relu, out_dtype, tm_cap=256):
    """relu?(x @ w + b), M-tiled Pallas GEMM with resident weight/bias blocks.

    x: (M, K) bf16, w: (K, N) bf16 with N % 128 == 0, b: (1, N) f32.
    """
    M, K = x.shape
    K2, N = w.shape
    assert K == K2, (K, K2)
    assert N % 128 == 0, N

    TM, G = _choose_tiles(M, tm_cap)
    M_pad = TM * G
    if M_pad != M:
        x = jnp.pad(x, ((0, M_pad - M), (0, 0)))

    y = pl.pallas_call(
        functools.partial(_mm_bias_act_kernel, relu=relu),
        out_shape=jax.ShapeDtypeStruct((M_pad, N), out_dtype),
        grid=(G,),
        in_specs=[
            pl.BlockSpec((TM, K), lambda i: (i, 0)),   # activations: M-tiled
            pl.BlockSpec((K, N), lambda i: (0, 0)),    # weight: resident
            pl.BlockSpec((1, N), lambda i: (0, 0)),    # bias: resident
        ],
        out_specs=pl.BlockSpec((TM, N), lambda i: (i, 0)),
        compiler_params=pltpu.CompilerParams(
            dimension_semantics=("parallel",),         # megacore-shard M (v7x)
            vmem_limit_bytes=VMEM_LIMIT),
    )(x, w, b)

    return y[:M] if M_pad != M else y   # drop the relu(bias) garbage pad rows


# ---------------------------------------------------------------------------
# Pallas kernel: fused FC head  out = relu(x @ w1 + b1) @ w2 + b2
# ---------------------------------------------------------------------------
def _fc_head_kernel(x_ref, w1_ref, b1_ref, w2_ref, b2_ref, o_ref):
    h = jnp.dot(x_ref[...], w1_ref[...], preferred_element_type=jnp.float32)
    h = jnp.maximum(h + b1_ref[...], 0.0)
    y = jnp.dot(h.astype(jnp.bfloat16), w2_ref[...],
                preferred_element_type=jnp.float32)
    o_ref[...] = (y + b2_ref[...]).astype(o_ref.dtype)


def pallas_fc_head(x, w1, b1, w2, b2, *, out_dtype=jnp.float32, tm_cap=128):
    """Fused fc1(+ReLU)+fc2; the (TM, 512) intermediate never leaves VMEM."""
    M, K1 = x.shape
    K1b, H = w1.shape
    Hb, N = w2.shape
    assert K1 == K1b and H == Hb, (K1, K1b, H, Hb)
    assert H % 128 == 0 and N % 128 == 0, (H, N)

    TM, G = _choose_tiles(M, tm_cap)
    M_pad = TM * G
    if M_pad != M:
        x = jnp.pad(x, ((0, M_pad - M), (0, 0)))

    y = pl.pallas_call(
        _fc_head_kernel,
        out_shape=jax.ShapeDtypeStruct((M_pad, N), out_dtype),
        grid=(G,),
        in_specs=[
            pl.BlockSpec((TM, K1), lambda i: (i, 0)),  # flattened activations
            pl.BlockSpec((K1, H), lambda i: (0, 0)),   # fc1 weight: resident
            pl.BlockSpec((1, H), lambda i: (0, 0)),    # fc1 bias: resident
            pl.BlockSpec((H, N), lambda i: (0, 0)),    # fc2 weight: resident
            pl.BlockSpec((1, N), lambda i: (0, 0)),    # fc2 bias: resident
        ],
        out_specs=pl.BlockSpec((TM, N), lambda i: (i, 0)),
        compiler_params=pltpu.CompilerParams(
            dimension_semantics=("parallel",),
            vmem_limit_bytes=VMEM_LIMIT),
    )(x, w1, b1, w2, b2)

    return y[:M] if M_pad != M else y


# ---------------------------------------------------------------------------
# im2col glue (plain JAX / XLA); column order is (kh, kw, c) to match the
# prepared weight layout.  TODO(synk): fuse this patch gather into the Pallas
# GEMM (strided pl.ds reads from a VMEM tile) to kill the col HBM roundtrip.
# ---------------------------------------------------------------------------
def im2col_from_nchw(x, k, s):
    """First-layer im2col reading the NCHW input directly.

    The NCHW->NHWC relayout (and the bf16 cast done by the caller) fuses into
    this gather, so the raw input is only read once from HBM.
    """
    B, C, H, W = x.shape
    OH = (H - k) // s + 1
    OW = (W - k) // s + 1
    patches = []
    for i in range(k):
        for j in range(k):
            patches.append(x[:, :, i:i + s * OH:s, j:j + s * OW:s])  # (B,C,OH,OW)
    col = jnp.stack(patches, axis=2)                 # (B, C, k*k, OH, OW)
    col = col.transpose(0, 3, 4, 2, 1)               # (B, OH, OW, k*k, C)
    return col.reshape(B * OH * OW, k * k * C), OH, OW


def im2col_nhwc(x, k, s, c_real):
    """im2col on an NHWC activation, keeping only the first c_real channels.

    Slicing off the lane padding of the previous GEMM's 128-wide output fuses
    into the same gather, so GEMM K stays at k*k*c_real (512 / 576) instead of
    k*k*128 (2048 / 1152).
    """
    B, H, W, _ = x.shape
    OH = (H - k) // s + 1
    OW = (W - k) // s + 1
    patches = []
    for i in range(k):
        for j in range(k):
            patches.append(x[:, i:i + s * OH:s, j:j + s * OW:s, :c_real])
    col = jnp.stack(patches, axis=3)                 # (B, OH, OW, k*k, c_real)
    return col.reshape(B * OH * OW, k * k * c_real), OH, OW


# ---------------------------------------------------------------------------
# Parameters (torch-style init) and the TPU-friendly prepared layout.
# ---------------------------------------------------------------------------
def init_params(key, state_dim, action_dim):
    """Deterministic PyTorch-style uniform(-1/sqrt(fan_in), 1/sqrt(fan_in))."""
    ks = jax.random.split(key, 10)

    def u(k, shape, fan_in):
        bound = 1.0 / np.sqrt(fan_in)
        return jax.random.uniform(k, shape, jnp.float32, -bound, bound)

    p = {}
    p["w1"] = u(ks[0], (32, state_dim, 8, 8), state_dim * 8 * 8)
    p["b1"] = u(ks[1], (32,), state_dim * 8 * 8)
    p["w2"] = u(ks[2], (64, 32, 4, 4), 32 * 4 * 4)
    p["b2"] = u(ks[3], (64,), 32 * 4 * 4)
    p["w3"] = u(ks[4], (64, 64, 3, 3), 64 * 3 * 3)
    p["b3"] = u(ks[5], (64,), 64 * 3 * 3)
    p["wf1"] = u(ks[6], (64 * 7 * 7, 512), 64 * 7 * 7)   # stored as (in, out)
    p["bf1"] = u(ks[7], (512,), 64 * 7 * 7)
    p["wf2"] = u(ks[8], (512, action_dim), 512)
    p["bf2"] = u(ks[9], (action_dim,), 512)
    return p


def prepare_params(p, state_dim, action_dim):
    """One-time reorder/pad/cast of the torch-layout params for the kernels."""

    def conv_w(w):
        # (O, C, kh, kw) -> (kh, kw, C, O) -> pad O to 128 -> (kh*kw*C, 128).
        # Input channels are NOT padded (real K), only the output is lane-dense.
        O, C, kh, kw = w.shape
        wt = jnp.transpose(w, (2, 3, 1, 0))
        wt = jnp.pad(wt, ((0, 0), (0, 0), (0, 0), (0, N_PAD - O)))
        return wt.reshape(kh * kw * C, N_PAD).astype(jnp.bfloat16)

    def bias(b, n_pad):
        return jnp.pad(b, (0, n_pad - b.shape[0])).reshape(1, n_pad).astype(jnp.float32)

    q = {}
    q["w1"], q["b1"] = conv_w(p["w1"]), bias(p["b1"], N_PAD)   # K = 8*8*state_dim
    q["w2"], q["b2"] = conv_w(p["w2"]), bias(p["b2"], N_PAD)   # K = 4*4*32 = 512
    q["w3"], q["b3"] = conv_w(p["w3"]), bias(p["b3"], N_PAD)   # K = 3*3*64 = 576

    # torch .view(B,-1) flattens NCHW as (c, h, w); our flatten is NHWC (h, w, c).
    # Permute fc1 rows once so results are identical.
    wf1 = p["wf1"].reshape(64, 7, 7, 512).transpose(1, 2, 0, 3).reshape(64 * 7 * 7, 512)
    q["wf1"] = wf1.astype(jnp.bfloat16)
    q["bf1"] = bias(p["bf1"], 512)

    a_pad = _round_up(action_dim, 128)
    q["wf2"] = jnp.pad(p["wf2"], ((0, 0), (0, a_pad - action_dim))).astype(jnp.bfloat16)
    q["bf2"] = bias(p["bf2"], a_pad)
    return q


# ---------------------------------------------------------------------------
# DQNConv forward (prepared params; input is NCHW like PyTorch)
# ---------------------------------------------------------------------------
def dqn_conv_forward(q, x, *, action_dim):
    B = x.shape[0]
    xb = x.astype(jnp.bfloat16)

    # conv1: 8x8 s4, 4 -> 32 channels (output lane-padded to 128), K = 256
    col, OH, OW = im2col_from_nchw(xb, 8, 4)
    h = pallas_matmul_bias(col, q["w1"], q["b1"], relu=True,
                           out_dtype=jnp.bfloat16).reshape(B, OH, OW, N_PAD)
    # conv2: 4x4 s2, 32 -> 64 channels, K = 512 (real channels only)
    col, OH, OW = im2col_nhwc(h, 4, 2, 32)
    h = pallas_matmul_bias(col, q["w2"], q["b2"], relu=True,
                           out_dtype=jnp.bfloat16).reshape(B, OH, OW, N_PAD)
    # conv3: 3x3 s1, 64 -> 64 channels, K = 576 (real channels only)
    col, OH, OW = im2col_nhwc(h, 3, 1, 64)
    h = pallas_matmul_bias(col, q["w3"], q["b3"], relu=True,
                           out_dtype=jnp.bfloat16).reshape(B, OH, OW, N_PAD)

    flat = h[..., :64].reshape(B, -1)                    # (B, 3136) bf16, NHWC order
    out = pallas_fc_head(flat, q["wf1"], q["bf1"], q["wf2"], q["bf2"])
    return out[:, :action_dim]                           # (B, A) f32


# ---------------------------------------------------------------------------
# Pure-JAX f32 reference (XLA convs, torch layout) for a sanity check.
# ---------------------------------------------------------------------------
def reference_forward(params, x):
    def conv(x, w, b, s):
        y = jax.lax.conv_general_dilated(
            x, w, window_strides=(s, s), padding="VALID",
            dimension_numbers=("NCHW", "OIHW", "NCHW"))
        return jnp.maximum(y + b[None, :, None, None], 0.0)

    h = conv(x, params["w1"], params["b1"], 4)
    h = conv(h, params["w2"], params["b2"], 2)
    h = conv(h, params["w3"], params["b3"], 1)
    flat = h.reshape(x.shape[0], -1)
    h = jnp.maximum(flat @ params["wf1"] + params["bf1"], 0.0)
    return h @ params["wf2"] + params["bf2"]


if __name__ == "__main__":
    # The fc layer hard-codes 64*7*7 input features, so spatial must be 84x84
    # (84 -> 20 -> 9 -> 7). Batch and channel count stay small.
    B, state_dim, H, W = 2, 4, 84, 84
    action_dim = 6

    key = jax.random.PRNGKey(0)
    k_params, k_x = jax.random.split(key)
    params = init_params(k_params, state_dim, action_dim)
    prepared = prepare_params(params, state_dim, action_dim)
    x = jax.random.normal(k_x, (B, state_dim, H, W), jnp.float32)

    fwd = jax.jit(functools.partial(dqn_conv_forward, action_dim=action_dim))
    out = fwd(prepared, x)
    jax.block_until_ready(out)
    assert out.shape == (B, action_dim), out.shape

    ref = reference_forward(params, x)
    np.testing.assert_allclose(np.asarray(out), np.asarray(ref),
                               rtol=5e-2, atol=5e-2)

    print("KERNEL_OK")
</pallas_src>

<mosaic_0001>
module attributes {stable_mosaic.version = 11 : i64} {
  func.func @_mm_bias_act_kernel(%arg0: i32, %arg1: memref<208x256xbf16, #tpu.memory_space<vmem>>, %arg2: memref<256x128xbf16, #tpu.memory_space<vmem>>, %arg3: memref<1x128xf32, #tpu.memory_space<vmem>>, %arg4: memref<208x128xbf16, #tpu.memory_space<vmem>>) attributes {dimension_semantics = [#tpu.dimension_semantics<parallel>], iteration_bounds = array<i64: 4>, scalar_prefetch = 0 : i64, scratch_operands = 0 : i64, tpu.core_type = #tpu.core_type<tc>, window_params = [{transform_indices = @transform_0, window_bounds = array<i64: 208, 256>}, {pipeline_mode = #tpu.pipeline_mode<synchronous>, transform_indices = @transform_1, window_bounds = array<i64: 256, 128>}, {pipeline_mode = #tpu.pipeline_mode<synchronous>, transform_indices = @transform_2, window_bounds = array<i64: 1, 128>}, {transform_indices = @transform_3, window_bounds = array<i64: 208, 128>}]} {
    %c0 = arith.constant 0 : index
    %c0_0 = arith.constant 0 : index
    %0 = vector.load %arg1[%c0, %c0_0] : memref<208x256xbf16, #tpu.memory_space<vmem>>, vector<208x256xbf16>
    %c0_1 = arith.constant 0 : index
    %c0_2 = arith.constant 0 : index
    %1 = vector.load %arg2[%c0_1, %c0_2] : memref<256x128xbf16, #tpu.memory_space<vmem>>, vector<256x128xbf16>
    %cst = arith.constant dense<0.000000e+00> : vector<208x128xf32>
    %2 = tpu.matmul %0, %1, %cst {dimension_numbers = #tpu.dot_dimension_numbers<[1], [0], [0], [1], [0, 0, 1, 1], [], []>} : vector<208x256xbf16>, vector<256x128xbf16>, vector<208x128xf32> -> vector<208x128xf32>
    %c0_3 = arith.constant 0 : index
    %c0_4 = arith.constant 0 : index
    %3 = vector.load %arg3[%c0_3, %c0_4] : memref<1x128xf32, #tpu.memory_space<vmem>>, vector<1x128xf32>
    %4 = vector.broadcast %3 : vector<1x128xf32> to vector<208x128xf32>
    %5 = arith.addf %2, %4 : vector<208x128xf32>
    %cst_5 = arith.constant 0.000000e+00 : f32
    %6 = vector.broadcast %cst_5 : f32 to vector<208x128xf32>
    %7 = arith.maximumf %5, %6 : vector<208x128xf32>
    %8 = arith.truncf %7 : vector<208x128xf32> to vector<208x128xbf16>
    %c0_6 = arith.constant 0 : index
    %c0_7 = arith.constant 0 : index
    %9 = vector.load %arg4[%c0_6, %c0_7] : memref<208x128xbf16, #tpu.memory_space<vmem>>, vector<208x128xbf16>
    tpu.vector_store %arg4[%c0_6, %c0_7], %8 {strides = array<i32>} : memref<208x128xbf16, #tpu.memory_space<vmem>>, vector<208x128xbf16>,
    return
  }
  func.func @transform_0(%arg0: i32) -> (i32, i32) {
    %c0_i32 = arith.constant 0 : i32
    %c0_i32_0 = arith.constant 0 : i32
    return %arg0, %c0_i32 : i32, i32
  }
  func.func @transform_1(%arg0: i32) -> (i32, i32) {
    %c0_i32 = arith.constant 0 : i32
    %c0_i32_0 = arith.constant 0 : i32
    %c0_i32_1 = arith.constant 0 : i32
    return %c0_i32, %c0_i32_0 : i32, i32
  }
  func.func @transform_2(%arg0: i32) -> (i32, i32) {
    %c0_i32 = arith.constant 0 : i32
    %c0_i32_0 = arith.constant 0 : i32
    %c0_i32_1 = arith.constant 0 : i32
    return %c0_i32, %c0_i32_0 : i32, i32
  }
  func.func @transform_3(%arg0: i32) -> (i32, i32) {
    %c0_i32 = arith.constant 0 : i32
    %c0_i32_0 = arith.constant 0 : i32
    return %arg0, %c0_i32 : i32, i32
  }
}

module attributes {stable_mosaic.version = 11 : i64} {
  func.func @_mm_bias_act_kernel(%arg0: i32, %arg1: memref<96x512xbf16, #tpu.memory_space<vmem>>, %arg2: memref<512x128xbf16, #tpu.memory_space<vmem>>, %arg3: memref<1x128xf32, #tpu.memory_space<vmem>>, %arg4: memref<96x128xbf16, #tpu.memory_space<vmem>>) attributes {dimension_semantics = [#tpu.dimension_semantics<parallel>], iteration_bounds = array<i64: 2>, scalar_prefetch = 0 : i64, scratch_operands = 0 : i64, tpu.core_type = #tpu.core_type<tc>, window_params = [{transform_indices = @transform_0, window_bounds = array<i64: 96, 512>}, {pipeline_mode = #tpu.pipeline_mode<synchronous>, transform_indices = @transform_1, window_bounds = array<i64: 512, 128>}, {pipeline_mode = #tpu.pipeline_mode<synchronous>, transform_indices = @transform_2, window_bounds = array<i64: 1, 128>}, {transform_indices = @transform_3, window_bounds = array<i64: 96, 128>}]} {
    %c0 = arith.constant 0 : index
    %c0_0 = arith.constant 0 : index
    %0 = vector.load %arg1[%c0, %c0_0] : memref<96x512xbf16, #tpu.memory_space<vmem>>, vector<96x512xbf16>
    %c0_1 = arith.constant 0 : index
    %c0_2 = arith.constant 0 : index
    %1 = vector.load %arg2[%c0_1, %c0_2] : memref<512x128xbf16, #tpu.memory_space<vmem>>, vector<512x128xbf16>
    %cst = arith.constant dense<0.000000e+00> : vector<96x128xf32>
    %2 = tpu.matmul %0, %1, %cst {dimension_numbers = #tpu.dot_dimension_numbers<[1], [0], [0], [1], [0, 0, 1, 1], [], []>} : vector<96x512xbf16>, vector<512x128xbf16>, vector<96x128xf32> -> vector<96x128xf32>
    %c0_3 = arith.constant 0 : index
    %c0_4 = arith.constant 0 : index
    %3 = vector.load %arg3[%c0_3, %c0_4] : memref<1x128xf32, #tpu.memory_space<vmem>>, vector<1x128xf32>
    %4 = vector.broadcast %3 : vector<1x128xf32> to vector<96x128xf32>
    %5 = arith.addf %2, %4 : vector<96x128xf32>
    %cst_5 = arith.constant 0.000000e+00 : f32
    %6 = vector.broadcast %cst_5 : f32 to vector<96x128xf32>
    %7 = arith.maximumf %5, %6 : vector<96x128xf32>
    %8 = arith.truncf %7 : vector<96x128xf32> to vector<96x128xbf16>
    %c0_6 = arith.constant 0 : index
    %c0_7 = arith.constant 0 : index
    %9 = vector.load %arg4[%c0_6, %c0_7] : memref<96x128xbf16, #tpu.memory_space<vmem>>, vector<96x128xbf16>
    tpu.vector_store %arg4[%c0_6, %c0_7], %8 {strides = array<i32>} : memref<96x128xbf16, #tpu.memory_space<vmem>>, vector<96x128xbf16>,
    return
  }
  func.func @transform_0(%arg0: i32) -> (i32, i32) {
    %c0_i32 = arith.constant 0 : i32
    %c0_i32_0 = arith.constant 0 : i32
    return %arg0, %c0_i32 : i32, i32
  }
  func.func @transform_1(%arg0: i32) -> (i32, i32) {
    %c0_i32 = arith.constant 0 : i32
    %c0_i32_0 = arith.constant 0 : i32
    %c0_i32_1 = arith.constant 0 : i32
    return %c0_i32, %c0_i32_0 : i32, i32
  }
  func.func @transform_2(%arg0: i32) -> (i32, i32) {
    %c0_i32 = arith.constant 0 : i32
    %c0_i32_0 = arith.constant 0 : i32
    %c0_i32_1 = arith.constant 0 : i32
    return %c0_i32, %c0_i32_0 : i32, i32
  }
  func.func @transform_3(%arg0: i32) -> (i32, i32) {
    %c0_i32 = arith.constant 0 : i32
    %c0_i32_0 = arith.constant 0 : i32
    return %arg0, %c0_i32 : i32, i32
  }
}

module attributes {stable_mosaic.version = 11 : i64} {
  func.func @_mm_bias_act_kernel(%arg0: i32, %arg1: memref<64x576xbf16, #tpu.memory_space<vmem>>, %arg2: memref<576x128xbf16, #tpu.memory_space<vmem>>, %arg3: memref<1x128xf32, #tpu.memory_space<vmem>>, %arg4: memref<64x128xbf16, #tpu.memory_space<vmem>>) attributes {dimension_semantics = [#tpu.dimension_semantics<parallel>], iteration_bounds = array<i64: 2>, scalar_prefetch = 0 : i64, scratch_operands = 0 : i64, tpu.core_type = #tpu.core_type<tc>, window_params = [{transform_indices = @transform_0, window_bounds = array<i64: 64, 576>}, {pipeline_mode = #tpu.pipeline_mode<synchronous>, transform_indices = @transform_1, window_bounds = array<i64: 576, 128>}, {pipeline_mode = #tpu.pipeline_mode<synchronous>, transform_indices = @transform_2, window_bounds = array<i64: 1, 128>}, {transform_indices = @transform_3, window_bounds = array<i64: 64, 128>}]} {
    %c0 = arith.constant 0 : index
    %c0_0 = arith.constant 0 : index
    %0 = vector.load %arg1[%c0, %c0_0] : memref<64x576xbf16, #tpu.memory_space<vmem>>, vector<64x576xbf16>
    %c0_1 = arith.constant 0 : index
    %c0_2 = arith.constant 0 : index
    %1 = vector.load %arg2[%c0_1, %c0_2] : memref<576x128xbf16, #tpu.memory_space<vmem>>, vector<576x128xbf16>
    %cst = arith.constant dense<0.000000e+00> : vector<64x128xf32>
    %2 = tpu.matmul %0, %1, %cst {dimension_numbers = #tpu.dot_dimension_numbers<[1], [0], [0], [1], [0, 0, 1, 1], [], []>} : vector<64x576xbf16>, vector<576x128xbf16>, vector<64x128xf32> -> vector<64x128xf32>
    %c0_3 = arith.constant 0 : index
    %c0_4 = arith.constant 0 : index
    %3 = vector.load %arg3[%c0_3, %c0_4] : memref<1x128xf32, #tpu.memory_space<vmem>>, vector<1x128xf32>
    %4 = vector.broadcast %3 : vector<1x128xf32> to vector<64x128xf32>
    %5 = arith.addf %2, %4 : vector<64x128xf32>
    %cst_5 = arith.constant 0.000000e+00 : f32
    %6 = vector.broadcast %cst_5 : f32 to vector<64x128xf32>
    %7 = arith.maximumf %5, %6 : vector<64x128xf32>
    %8 = arith.truncf %7 : vector<64x128xf32> to vector<64x128xbf16>
    %c0_6 = arith.constant 0 : index
    %c0_7 = arith.constant 0 : index
    %9 = vector.load %arg4[%c0_6, %c0_7] : memref<64x128xbf16, #tpu.memory_space<vmem>>, vector<64x128xbf16>
    tpu.vector_store %arg4[%c0_6, %c0_7], %8 {strides = array<i32>} : memref<64x128xbf16, #tpu.memory_space<vmem>>, vector<64x128xbf16>,
    return
  }
  func.func @transform_0(%arg0: i32) -> (i32, i32) {
    %c0_i32 = arith.constant 0 : i32
    %c0_i32_0 = arith.constant 0 : i32
    return %arg0, %c0_i32 : i32, i32
  }
  func.func @transform_1(%arg0: i32) -> (i32, i32) {
    %c0_i32 = arith.constant 0 : i32
    %c0_i32_0 = arith.constant 0 : i32
    %c0_i32_1 = arith.constant 0 : i32
    return %c0_i32, %c0_i32_0 : i32, i32
  }
  func.func @transform_2(%arg0: i32) -> (i32, i32) {
    %c0_i32 = arith.constant 0 : i32
    %c0_i32_0 = arith.constant 0 : i32
    %c0_i32_1 = arith.constant 0 : i32
    return %c0_i32, %c0_i32_0 : i32, i32
  }
  func.func @transform_3(%arg0: i32) -> (i32, i32) {
    %c0_i32 = arith.constant 0 : i32
    %c0_i32_0 = arith.constant 0 : i32
    return %arg0, %c0_i32 : i32, i32
  }
}

module attributes {stable_mosaic.version = 11 : i64} {
  func.func @_fc_head_kernel(%arg0: i32, %arg1: memref<16x3136xbf16, #tpu.memory_space<vmem>>, %arg2: memref<3136x512xbf16, #tpu.memory_space<vmem>>, %arg3: memref<1x512xf32, #tpu.memory_space<vmem>>, %arg4: memref<512x128xbf16, #tpu.memory_space<vmem>>, %arg5: memref<1x128xf32, #tpu.memory_space<vmem>>, %arg6: memref<16x128xf32, #tpu.memory_space<vmem>>) attributes {dimension_semantics = [#tpu.dimension_semantics<parallel>], iteration_bounds = array<i64: 2>, scalar_prefetch = 0 : i64, scratch_operands = 0 : i64, tpu.core_type = #tpu.core_type<tc>, window_params = [{transform_indices = @transform_0, window_bounds = array<i64: 16, 3136>}, {pipeline_mode = #tpu.pipeline_mode<synchronous>, transform_indices = @transform_1, window_bounds = array<i64: 3136, 512>}, {pipeline_mode = #tpu.pipeline_mode<synchronous>, transform_indices = @transform_2, window_bounds = array<i64: 1, 512>}, {pipeline_mode = #tpu.pipeline_mode<synchronous>, transform_indices = @transform_3, window_bounds = array<i64: 512, 128>}, {pipeline_mode = #tpu.pipeline_mode<synchronous>, transform_indices = @transform_4, window_bounds = array<i64: 1, 128>}, {transform_indices = @transform_5, window_bounds = array<i64: 16, 128>}]} {
    %c0 = arith.constant 0 : index
    %c0_0 = arith.constant 0 : index
    %0 = vector.load %arg1[%c0, %c0_0] : memref<16x3136xbf16, #tpu.memory_space<vmem>>, vector<16x3136xbf16>
    %c0_1 = arith.constant 0 : index
    %c0_2 = arith.constant 0 : index
    %1 = vector.load %arg2[%c0_1, %c0_2] : memref<3136x512xbf16, #tpu.memory_space<vmem>>, vector<3136x512xbf16>
    %cst = arith.constant dense<0.000000e+00> : vector<16x512xf32>
    %2 = tpu.matmul %0, %1, %cst {dimension_numbers = #tpu.dot_dimension_numbers<[1], [0], [0], [1], [0, 0, 1, 1], [], []>} : vector<16x3136xbf16>, vector<3136x512xbf16>, vector<16x512xf32> -> vector<16x512xf32>
    %c0_3 = arith.constant 0 : index
    %c0_4 = arith.constant 0 : index
    %3 = vector.load %arg3[%c0_3, %c0_4] : memref<1x512xf32, #tpu.memory_space<vmem>>, vector<1x512xf32>
    %4 = vector.broadcast %3 : vector<1x512xf32> to vector<16x512xf32>
    %5 = arith.addf %2, %4 : vector<16x512xf32>
    %cst_5 = arith.constant 0.000000e+00 : f32
    %6 = vector.broadcast %cst_5 : f32 to vector<16x512xf32>
    %7 = arith.maximumf %5, %6 : vector<16x512xf32>
    %8 = arith.truncf %7 : vector<16x512xf32> to vector<16x512xbf16>
    %c0_6 = arith.constant 0 : index
    %c0_7 = arith.constant 0 : index
    %9 = vector.load %arg4[%c0_6, %c0_7] : memref<512x128xbf16, #tpu.memory_space<vmem>>, vector<512x128xbf16>
    %cst_8 = arith.constant dense<0.000000e+00> : vector<16x128xf32>
    %10 = tpu.matmul %8, %9, %cst_8 {dimension_numbers = #tpu.dot_dimension_numbers<[1], [0], [0], [1], [0, 0, 1, 1], [], []>} : vector<16x512xbf16>, vector<512x128xbf16>, vector<16x128xf32> -> vector<16x128xf32>
    %c0_9 = arith.constant 0 : index
    %c0_10 = arith.constant 0 : index
    %11 = vector.load %arg5[%c0_9, %c0_10] : memref<1x128xf32, #tpu.memory_space<vmem>>, vector<1x128xf32>
    %12 = vector.broadcast %11 : vector<1x128xf32> to vector<16x128xf32>
    %13 = arith.addf %10, %12 : vector<16x128xf32>
    %c0_11 = arith.constant 0 : index
    %c0_12 = arith.constant 0 : index
    %14 = vector.load %arg6[%c0_11, %c0_12] : memref<16x128xf32, #tpu.memory_space<vmem>>, vector<16x128xf32>
    tpu.vector_store %arg6[%c0_11, %c0_12], %13 {strides = array<i32>} : memref<16x128xf32, #tpu.memory_space<vmem>>, vector<16x128xf32>,
    return
  }
  func.func @transform_0(%arg0: i32) -> (i32, i32) {
    %c0_i32 = arith.constant 0 : i32
    %c0_i32_0 = arith.constant 0 : i32
    return %arg0, %c0_i32 : i32, i32
  }
  func.func @transform_1(%arg0: i32) -> (i32, i32) {
    %c0_i32 = arith.constant 0 : i32
    %c0_i32_0 = arith.constant 0 : i32
    %c0_i32_1 = arith.constant 0 : i32
    return %c0_i32, %c0_i32_0 : i32, i32
  }
  func.func @transform_2(%arg0: i32) -> (i32, i32) {
    %c0_i32 = arith.constant 0 : i32
    %c0_i32_0 = arith.constant 0 : i32
    %c0_i32_1 = arith.constant 0 : i32
    return %c0_i32, %c0_i32_0 : i32, i32
  }
  func.func @transform_3(%arg0: i32) -> (i32, i32) {
    %c0_i32 = arith.constant 0 : i32
    %c0_i32_0 = arith.constant 0 : i32
    %c0_i32_1 = arith.constant 0 : i32
    return %c0_i32, %c0_i32_0 : i32, i32
  }
  func.func @transform_4(%arg0: i32) -> (i32, i32) {
    %c0_i32 = arith.constant 0 : i32
    %c0_i32_0 = arith.constant 0 : i32
    %c0_i32_1 = arith.constant 0 : i32
    return %c0_i32, %c0_i32_0 : i32, i32
  }
  func.func @transform_5(%arg0: i32) -> (i32, i32) {
    %c0_i32 = arith.constant 0 : i32
    %c0_i32_0 = arith.constant 0 : i32
    return %arg0, %c0_i32 : i32, i32
  }
}

</mosaic_0001>

<llo_original>
// kernel: dqn_conv_forward.4
$region0: #{dqn_conv_forward.4}
  #allocation0 [shape = 'u32[]', space=smem, size = 0x4, offset = 0x4, fixed_abs, tag = 'smem constant byte address 0x4 - core index']
  #allocation1 [shape = 'u32[144,128]{1,0:T(1,128)}', space=vmem, size = 0x12000, scoped, tag = 'internal scratch']
  %s0 = inlined_call_operand.vmem [shape: bf16[832,256], index: 0, kind: input, shape index: {}]
  %s1 = inlined_call_operand.vmem [shape: bf16[256,128], index: 1, kind: input, shape index: {}]
  %s2 = inlined_call_operand.vmem [shape: f32[1,128], index: 2, kind: input, shape index: {}]
  %s3 = inlined_call_operand.vmem [shape: bf16[832,128], index: 3, kind: output, shape index: {}]
  %s4 = sld [smem:[#allocation0]]
  $region45: #{dqn_conv_forward.4} parent=0
    _
  %s6 = ssub.s32 1, %s4
  %s7 = scalar_select 0, %s6, %s4
  loop: start=0, step=1, limit=6
  $region2: #{dqn_conv_forward.4} parent=0 // loop_pre_header
    _
  $region3: #{dqn_conv_forward.4} parent=0 // loop_header
    %s9 = sphi 0, %s13
    %p10 = scmp.ge.s32.totalorder %s9, 6
    %s19 = sphi 0, %s21
    %s22 = sphi 0, %s19
    %s23 = sphi 0, %s22
    %s39 = sphi 0, %s23
    %s43 = sphi 0, %s43
    %s45 = sphi 0, %s43
    %s46 = sphi 0, %s45
    %s60 = sphi 0, %s46
    %s64 = sphi 0, %s64
    %s66 = sphi 0, %s64
    %s67 = sphi 0, %s66
    %s81 = sphi 0, %s67
    %s87 = sphi 0, %s89
    %s90 = sphi 0, %s87
    %s91 = sphi 0, %s90
    %s107 = sphi 0, %s91
  $region4: #{dqn_conv_forward.4} parent=0 // loop_header_branch
    %12 = sbr.rel (%p10) target = $region8
  $region5: #{dqn_conv_forward.4} parent=0 // loop_body
    %s14 = ssub.s32 %s9, 1
    %s15 = ssub.s32 %s9, 2
    %s16 = sadd.s32 %s9, 1
    %s17 = ssub.s32 %s9, %s16
    %p18 = scmp.eq.s32.totalorder %s17, 0
    %s20 = sadd.s32 %s19, 1
    %s21 = scalar_select %p18, %s19, %s20
    %p24 = pneg %p18
    %p25 = scmp.eq.s32.totalorder %s9, 3
    %p26 = por %p24, %p25
    %p27 = scmp.ne.s32.totalorder %s19, %s22
    %p28 = scmp.eq.s32.totalorder %s9, 0
    %p29 = por %p27, %p28
    %p30 = scmp.ne.s32.totalorder %s19, %s22
    %p31 = scmp.eq.s32.totalorder %s14, 3
    %p32 = por %p30, %p31
    %p33 = scmp.ne.s32.totalorder %s22, %s23
    %p34 = scmp.eq.s32.totalorder %s14, 0
    %p35 = por %p33, %p34
    %p36 = scmp.ne.s32.totalorder %s22, %s23
    %p37 = scmp.eq.s32.totalorder %s15, 3
    %p38 = por %p36, %p37
    %p40 = scmp.ne.s32.totalorder %s23, %s39
    %p41 = scmp.eq.s32.totalorder %s15, 0
    %p42 = por %p40, %p41
    %s44 = sadd.s32 %s43, 1
    %p47 = scmp.eq.s32.totalorder %s9, 3
    %p48 = scmp.ne.s32.totalorder %s43, %s45
    %p49 = scmp.eq.s32.totalorder %s9, 0
    %p50 = por %p48, %p49
    %p51 = scmp.ne.s32.totalorder %s43, %s45
    %p52 = scmp.eq.s32.totalorder %s14, 3
    %p53 = por %p51, %p52
    %p54 = scmp.ne.s32.totalorder %s45, %s46
    %p55 = scmp.eq.s32.totalorder %s14, 0
    %p56 = por %p54, %p55
    %p57 = scmp.ne.s32.totalorder %s45, %s46
    %p58 = scmp.eq.s32.totalorder %s15, 3
    %p59 = por %p57, %p58
    %p61 = scmp.ne.s32.totalorder %s46, %s60
    %p62 = scmp.eq.s32.totalorder %s15, 0
    %p63 = por %p61, %p62
    %s65 = sadd.s32 %s64, 1
    %p68 = scmp.eq.s32.totalorder %s9, 3
    %p69 = scmp.ne.s32.totalorder %s64, %s66
    %p70 = scmp.eq.s32.totalorder %s9, 0
    %p71 = por %p69, %p70
    %p72 = scmp.ne.s32.totalorder %s64, %s66
    %p73 = scmp.eq.s32.totalorder %s14, 3
    %p74 = por %p72, %p73
    %p75 = scmp.ne.s32.totalorder %s66, %s67
    %p76 = scmp.eq.s32.totalorder %s14, 0
    %p77 = por %p75, %p76
    %p78 = scmp.ne.s32.totalorder %s66, %s67
    %p79 = scmp.eq.s32.totalorder %s15, 3
    %p80 = por %p78, %p79
    %p82 = scmp.ne.s32.totalorder %s67, %s81
    %p83 = scmp.eq.s32.totalorder %s15, 0
    %p84 = por %p82, %p83
    %s85 = ssub.s32 %s9, %s16
    %p86 = scmp.eq.s32.totalorder %s85, 0
    %s88 = sadd.s32 %s87, 1
    %s89 = scalar_select %p86, %s87, %s88
    %p92 = pneg %p86
    %p93 = scmp.eq.s32.totalorder %s9, 3
    %p94 = por %p92, %p93
    %p95 = scmp.ne.s32.totalorder %s87, %s90
    %p96 = scmp.eq.s32.totalorder %s9, 0
    %p97 = por %p95, %p96
    %p98 = scmp.ne.s32.totalorder %s87, %s90
    %p99 = scmp.eq.s32.totalorder %s14, 3
    %p100 = por %p98, %p99
    %p101 = scmp.ne.s32.totalorder %s90, %s91
    %p102 = scmp.eq.s32.totalorder %s14, 0
    %p103 = por %p101, %p102
    %p104 = scmp.ne.s32.totalorder %s90, %s91
    %p105 = scmp.eq.s32.totalorder %s15, 3
    %p106 = por %p104, %p105
    %p108 = scmp.ne.s32.totalorder %s91, %s107
    %p109 = scmp.eq.s32.totalorder %s15, 0
    %p110 = por %p108, %p109
    %p111 = scmp.le.s32.totalorder 1, %s9
    %p112 = scmp.lt.s32.totalorder %s9, 5
    %p113 = pnand %p111, %p112
    %p114 = pneg %p113
    // Predicated region
    $region9: #{dqn_conv_forward.4} parent=5 // pred_check
      _
    $region10: #{dqn_conv_forward.4} parent=5 // pred_check_branch
      %116 = sbr.rel (%p113) target = $region12
    $region11: #{dqn_conv_forward.4} parent=5 // pred_region
      %s117 = ssub.s32 %s9, 1
      // Predicated region
      $region13: #{dqn_conv_forward.4} parent=11 // pred_check
        %p118 = pneg %p56
      $region14: #{dqn_conv_forward.4} parent=11 // pred_check_branch
        %120 = sbr.rel (%p118) target = $region16
      $region15: #{dqn_conv_forward.4} parent=11 // pred_region
        _
      $region16: #{dqn_conv_forward.4} parent=11 // pred_fallthru
        _
      // Predicated region
      $region17: #{dqn_conv_forward.4} parent=11 // pred_check
        %p121 = pneg %p77
      $region18: #{dqn_conv_forward.4} parent=11 // pred_check_branch
        %123 = sbr.rel (%p121) target = $region20
      $region19: #{dqn_conv_forward.4} parent=11 // pred_region
        _
      $region20: #{dqn_conv_forward.4} parent=11 // pred_fallthru
        _
    $region12: #{dqn_conv_forward.4} parent=5 // pred_fallthru
      _
    %p124 = scmp.lt.s32.totalorder %s9, 4
    // Predicated region
    $region21: #{dqn_conv_forward.4} parent=5 // pred_check
      %p125 = pneg %p124
    $region22: #{dqn_conv_forward.4} parent=5 // pred_check_branch
      %127 = sbr.rel (%p125) target = $region24
    $region23: #{dqn_conv_forward.4} parent=5 // pred_region
      // Predicated region
      $region25: #{dqn_conv_forward.4} parent=23 // pred_check
        %p128 = pneg %p29
      $region26: #{dqn_conv_forward.4} parent=23 // pred_check_branch
        %130 = sbr.rel (%p128) target = $region28
      $region27: #{dqn_conv_forward.4} parent=23 // pred_region
        %s131 = smul.u32 26, %s9
        %p132 = scmp.lt.s32.totalorder %s131, 103
        %s133 = scalar_select %p132, %s131, 103
        %s134 = smul.addr %s133, 2
        %s135 = smul.addr %s134, 4
        %s136 = scalar_lea.vmem %s0, %s135
        %s137 = smul.u32 26, %s9
      $region28: #{dqn_conv_forward.4} parent=23 // pred_fallthru
        _
    $region24: #{dqn_conv_forward.4} parent=5 // pred_fallthru
      _
    %p138 = scmp.le.s32.totalorder 1, %s9
    %p139 = scmp.lt.s32.totalorder %s9, 5
    %p140 = pnand %p138, %p139
    %p141 = pneg %p140
    // Predicated region
    $region29: #{dqn_conv_forward.4} parent=5 // pred_check
      _
    $region30: #{dqn_conv_forward.4} parent=5 // pred_check_branch
      %143 = sbr.rel (%p140) target = $region32
    $region31: #{dqn_conv_forward.4} parent=5 // pred_region
      %s144 = ssub.s32 %s9, 1
      %s145 = smul.u32 26, %s14
      %p146 = scmp.lt.s32.totalorder %s145, 103
      %s147 = scalar_select %p146, %s145, 103
      %s148 = smul.addr %s147, 2
      %s149 = smul.addr %s148, 4
      %s150 = scalar_lea.vmem %s0, %s149
      %p151 = pneg %p35
      %p152 = pneg %p32
      %p153 = pneg %p56
      %p154 = pneg %p53
      %p155 = pneg %p77
      %p156 = pneg %p74
      %p157 = pneg %p103
      %p158 = pneg %p100
      %s159 = smul.u32 26, %s14
      %p160 = scmp.lt.s32.totalorder %s159, 103
      %s161 = scalar_select %p160, %s159, 103
      %s162 = smul.addr %s161, 4
      %s163 = scalar_lea.vmem %s3, %s162
      %s164 = smul.u32 26, %s14
      %p165 = scmp.lt.s32.totalorder %s164, 103
      %s166 = scalar_select %p165, %s164, 103
      %s167 = smul.addr %s166, 2
      %s168 = smul.addr %s167, 4
      %s169 = scalar_lea.vmem %s0, %s168
      %s170 = smul.u32 26, %s14
      %s171 = smul.u32 26, %s14
      %p172 = scmp.lt.s32.totalorder %s171, 103
      %s173 = scalar_select %p172, %s171, 103
      %s174 = smul.addr %s173, 4
      %s175 = scalar_lea.vmem %s3, %s174
      %s176 = smul.u32 26, %s14
      %v178 = vld [vmem:[%s169] sm:$0xff]
      %v179 = vld [vmem:[%s169 + $0x8] sm:$0xff]
      %v180 = vld [vmem:[%s169 + $0x10] sm:$0xff]
      %v181 = vld [vmem:[%s169 + $0x18] sm:$0xff]
      %v182 = vld [vmem:[%s169 + $0x20] sm:$0xff]
      %v183 = vld [vmem:[%s169 + $0x28] sm:$0xff]
      %v184 = vld [vmem:[%s169 + $0x30] sm:$0xff]
      %v185 = vld [vmem:[%s169 + $0x38] sm:$0xff]
      %v186 = vld [vmem:[%s169 + $0x40] sm:$0xff]
      %v187 = vld [vmem:[%s169 + $0x48] sm:$0xff]
      %v188 = vld [vmem:[%s169 + $0x50] sm:$0xff]
      %v189 = vld [vmem:[%s169 + $0x58] sm:$0xff]
      %v190 = vld [vmem:[%s169 + $0x60] sm:$0xff]
      %v191 = vld [vmem:[%s169 + $0x68] sm:$0xff]
      %v192 = vld [vmem:[%s169 + $0x70] sm:$0xff]
      %v193 = vld [vmem:[%s169 + $0x78] sm:$0xff]
      %v194 = vld [vmem:[%s169 + $0x80] sm:$0xff]
      %v195 = vld [vmem:[%s169 + $0x88] sm:$0xff]
      %v196 = vld [vmem:[%s169 + $0x90] sm:$0xff]
      %v197 = vld [vmem:[%s169 + $0x98] sm:$0xff]
      %v198 = vld [vmem:[%s169 + $0xa0] sm:$0xff]
      %v199 = vld [vmem:[%s169 + $0xa8] sm:$0xff]
      %v200 = vld [vmem:[%s169 + $0xb0] sm:$0xff]
      %v201 = vld [vmem:[%s169 + $0xb8] sm:$0xff]
      %v202 = vld [vmem:[%s169 + $0xc0] sm:$0xff]
      %v203 = vld [vmem:[%s169 + $0xc8] sm:$0xff]
      %v204 = vld [vmem:[%s1] sm:$0xf]
      %v205 = vld [vmem:[%s1 + $0x4] sm:$0xf]
      %v206 = vld [vmem:[%s1 + $0x8] sm:$0xf]
      %v207 = vld [vmem:[%s1 + $0xc] sm:$0xf]
      %v208 = vld [vmem:[%s1 + $0x10] sm:$0xf]
      %v209 = vld [vmem:[%s1 + $0x14] sm:$0xf]
      %v210 = vld [vmem:[%s1 + $0x18] sm:$0xf]
      %v211 = vld [vmem:[%s1 + $0x1c] sm:$0xf]
      %v212 = vld [vmem:[%s1 + $0x20] sm:$0xf]
      %v213 = vld [vmem:[%s1 + $0x24] sm:$0xf]
      %v214 = vld [vmem:[%s1 + $0x28] sm:$0xf]
      %v215 = vld [vmem:[%s1 + $0x2c] sm:$0xf]
      %v216 = vld [vmem:[%s1 + $0x30] sm:$0xf]
      %v217 = vld [vmem:[%s1 + $0x34] sm:$0xf]
      %v218 = vld [vmem:[%s1 + $0x38] sm:$0xf]
      %v219 = vld [vmem:[%s1 + $0x3c] sm:$0xf]
      %v220 = vld [vmem:[%s1 + $0x40] sm:$0xf]
      %v221 = vld [vmem:[%s1 + $0x44] sm:$0xf]
      %v222 = vld [vmem:[%s1 + $0x48] sm:$0xf]
      %v223 = vld [vmem:[%s1 + $0x4c] sm:$0xf]
      %v224 = vld [vmem:[%s1 + $0x50] sm:$0xf]
      %v225 = vld [vmem:[%s1 + $0x54] sm:$0xf]
      %v226 = vld [vmem:[%s1 + $0x58] sm:$0xf]
      %v227 = vld [vmem:[%s1 + $0x5c] sm:$0xf]
      %v228 = vld [vmem:[%s1 + $0x60] sm:$0xf]
      %v229 = vld [vmem:[%s1 + $0x64] sm:$0xf]
      %v230 = vld [vmem:[%s1 + $0x68] sm:$0xf]
      %v231 = vld [vmem:[%s1 + $0x6c] sm:$0xf]
      %v232 = vld [vmem:[%s1 + $0x70] sm:$0xf]
      %v233 = vld [vmem:[%s1 + $0x74] sm:$0xf]
      %v234 = vld [vmem:[%s1 + $0x78] sm:$0xf]
      %v235 = vld [vmem:[%s1 + $0x7c] sm:$0xf]
      %v236 = vld [vmem:[%s2] sm:$0x1]
      %v238 = vlaneseq
      %v239 = vshrl.u32 %v238, 7
      %v240 = vsub.s32 0, %v239
      %v241 = vrot.slane %v236, %v240
      %v269 = vunpack.c.l.b16 %v178
      %v270 = vunpack.c.h.b16 %v178
      %v271 = vunpack.c.l.b16 %v179
      %v272 = vunpack.c.h.b16 %v179
      %v273 = vunpack.c.l.b16 %v180
      %v274 = vunpack.c.h.b16 %v180
      %v275 = vunpack.c.l.b16 %v181
      %v276 = vunpack.c.h.b16 %v181
      %v277 = vunpack.c.l.b16 %v182
      %v278 = vunpack.c.h.b16 %v182
      %v279 = vunpack.c.l.b16 %v183
      %v280 = vunpack.c.h.b16 %v183
      %v281 = vunpack.c.l.b16 %v184
      %v282 = vunpack.c.h.b16 %v184
      %v283 = vunpack.c.l.b16 %v185
      %v284 = vunpack.c.h.b16 %v185
      %v285 = vunpack.c.l.b16 %v186
      %v286 = vunpack.c.h.b16 %v186
      %v287 = vunpack.c.l.b16 %v187
      %v288 = vunpack.c.h.b16 %v187
      %v289 = vunpack.c.l.b16 %v188
      %v290 = vunpack.c.h.b16 %v188
      %v291 = vunpack.c.l.b16 %v189
      %v292 = vunpack.c.h.b16 %v189
      %v293 = vunpack.c.l.b16 %v190
      %v294 = vunpack.c.h.b16 %v190
      %v295 = vunpack.c.l.b16 %v191
      %v296 = vunpack.c.h.b16 %v191
      %v297 = vunpack.c.l.b16 %v192
      %v298 = vunpack.c.h.b16 %v192
      %v299 = vunpack.c.l.b16 %v193
      %v300 = vunpack.c.h.b16 %v193
      %v301 = vunpack.c.l.b16 %v194
      %v302 = vunpack.c.h.b16 %v194
      %v303 = vunpack.c.l.b16 %v195
      %v304 = vunpack.c.h.b16 %v195
      %v305 = vunpack.c.l.b16 %v196
      %v306 = vunpack.c.h.b16 %v196
      %v307 = vunpack.c.l.b16 %v197
      %v308 = vunpack.c.h.b16 %v197
      %v309 = vunpack.c.l.b16 %v198
      %v310 = vunpack.c.h.b16 %v198
      %v311 = vunpack.c.l.b16 %v199
      %v312 = vunpack.c.h.b16 %v199
      %v313 = vunpack.c.l.b16 %v200
      %v314 = vunpack.c.h.b16 %v200
      %v315 = vunpack.c.l.b16 %v201
      %v316 = vunpack.c.h.b16 %v201
      %v317 = vunpack.c.l.b16 %v202
      %v318 = vunpack.c.h.b16 %v202
      %v319 = vunpack.c.l.b16 %v203
      %v320 = vunpack.c.h.b16 %v203
      %v321 = vpack.c.b16 %v271, %v269
      %v322 = vpack.c.b16 %v272, %v270
      %v323 = vpack.c.b16 %v275, %v273
      %v324 = vpack.c.b16 %v276, %v274
      %v325 = vpack.c.b16 %v279, %v277
      %v326 = vpack.c.b16 %v280, %v278
      %v327 = vpack.c.b16 %v283, %v281
      %v328 = vpack.c.b16 %v284, %v282
      %v329 = vpack.c.b16 %v287, %v285
      %v330 = vpack.c.b16 %v288, %v286
      %v331 = vpack.c.b16 %v291, %v289
      %v332 = vpack.c.b16 %v292, %v290
      %v333 = vpack.c.b16 %v295, %v293
      %v334 = vpack.c.b16 %v296, %v294
      %v335 = vpack.c.b16 %v299, %v297
      %v336 = vpack.c.b16 %v300, %v298
      %v337 = vpack.c.b16 %v303, %v301
      %v338 = vpack.c.b16 %v304, %v302
      %v339 = vpack.c.b16 %v307, %v305
      %v340 = vpack.c.b16 %v308, %v306
      %v341 = vpack.c.b16 %v311, %v309
      %v342 = vpack.c.b16 %v312, %v310
      %v343 = vpack.c.b16 %v315, %v313
      %v344 = vpack.c.b16 %v316, %v314
      %v345 = vpack.c.b16 %v319, %v317
      %v346 = vpack.c.b16 %v320, %v318
      %v405 = vunpack.c.l.b16 %v204
      %v406 = vunpack.c.l.b16 %v205
      %v407 = vunpack.c.l.b16 %v206
      %v408 = vunpack.c.l.b16 %v207
      %v409 = vunpack.c.l.b16 %v208
      %v410 = vunpack.c.l.b16 %v209
      %v411 = vunpack.c.l.b16 %v210
      %v412 = vunpack.c.l.b16 %v211
      %v413 = vunpack.c.l.b16 %v212
      %v414 = vunpack.c.l.b16 %v213
      %v415 = vunpack.c.l.b16 %v214
      %v416 = vunpack.c.l.b16 %v215
      %v417 = vunpack.c.l.b16 %v216
      %v418 = vunpack.c.l.b16 %v217
      %v419 = vunpack.c.l.b16 %v218
      %v420 = vunpack.c.l.b16 %v219
      %v421 = vunpack.c.l.b16 %v220
      %v422 = vunpack.c.l.b16 %v221
      %v423 = vunpack.c.l.b16 %v222
      %v424 = vunpack.c.l.b16 %v223
      %v425 = vunpack.c.l.b16 %v224
      %v426 = vunpack.c.l.b16 %v225
      %v427 = vunpack.c.l.b16 %v226
      %v428 = vunpack.c.l.b16 %v227
      %v429 = vunpack.c.l.b16 %v228
      %v430 = vunpack.c.l.b16 %v229
      %v431 = vunpack.c.l.b16 %v230
      %v432 = vunpack.c.l.b16 %v231
      %v433 = vunpack.c.l.b16 %v232
      %v434 = vunpack.c.l.b16 %v233
      %v435 = vunpack.c.l.b16 %v234
      %v436 = vunpack.c.l.b16 %v235
      %v437 = vpack.c.b16 %v406, %v405
      %v438 = vpack.c.b16 %v408, %v407
      %v439 = vpack.c.b16 %v410, %v409
      %v440 = vpack.c.b16 %v412, %v411
      %v441 = vpack.c.b16 %v414, %v413
      %v442 = vpack.c.b16 %v416, %v415
      %v443 = vpack.c.b16 %v418, %v417
      %v444 = vpack.c.b16 %v420, %v419
      %v445 = vpack.c.b16 %v422, %v421
      %v446 = vpack.c.b16 %v424, %v423
      %v447 = vpack.c.b16 %v426, %v425
      %v448 = vpack.c.b16 %v428, %v427
      %v449 = vpack.c.b16 %v430, %v429
      %v450 = vpack.c.b16 %v432, %v431
      %v451 = vpack.c.b16 %v434, %v433
      %v452 = vpack.c.b16 %v436, %v435
      %469 = vmatprep.subr.bf16.mxu0 0
      %470 = vmatpush1.bf16.msra.mxu0 %v437
      %471 = vmatprep.subr.bf16.mxu0 0
      %472 = vmatpush1.bf16.msra.mxu0 %v438
      %473 = vmatprep.subr.bf16.mxu0 0
      %474 = vmatpush1.bf16.msra.mxu0 %v439
      %475 = vmatprep.subr.bf16.mxu0 0
      %476 = vmatpush1.bf16.msra.mxu0 %v440
      %477 = vmatprep.subr.bf16.mxu0 0
      %478 = vmatpush1.bf16.msra.mxu0 %v441
      %479 = vmatprep.subr.bf16.mxu0 0
      %480 = vmatpush1.bf16.msra.mxu0 %v442
      %481 = vmatprep.subr.bf16.mxu0 0
      %482 = vmatpush1.bf16.msra.mxu0 %v443
      %483 = vmatprep.subr.bf16.mxu0 0
      %484 = vmatpush1.bf16.msra.mxu0 %v444
      %485 = vmatprep.subr.bf16.mxu0 0
      %486 = vmatpush1.bf16.msra.mxu0 %v445
      %487 = vmatprep.subr.bf16.mxu0 0
      %488 = vmatpush1.bf16.msra.mxu0 %v446
      %489 = vmatprep.subr.bf16.mxu0 0
      %490 = vmatpush1.bf16.msra.mxu0 %v447
      %491 = vmatprep.subr.bf16.mxu0 0
      %492 = vmatpush1.bf16.msra.mxu0 %v448
      %493 = vmatprep.subr.bf16.mxu0 0
      %494 = vmatpush1.bf16.msra.mxu0 %v449
      %495 = vmatprep.subr.bf16.mxu0 0
      %496 = vmatpush1.bf16.msra.mxu0 %v450
      %497 = vmatprep.subr.bf16.mxu0 0
      %498 = vmatpush1.bf16.msra.mxu0 %v451
      %499 = vmatprep.subr.bf16.mxu0 0
      %500 = vmatpush1.bf16.msra.mxu0 %v452
      %501 = vmatprep.mubr.bf16.mxu0 %v322
      %502 = vmatmul.mubr.bf16.gmra.mrb[0].mxu0 %v321
      %v503 = vpop.f32.mrb[0].mxu0
      %v504 = vadd.f32 %v241, %v503
      %v505 = vpop.f32.mrb[0].mxu0
      %v506 = vpop.f32.mrb[0].mxu0
      %v507 = vadd.f32 %v241, %v506
      %v508 = vpop.f32.mrb[0].mxu0
      %509 = vmatprep.mubr.bf16.mxu0 %v324
      %510 = vmatmul.mubr.bf16.gmra.mrb[0].mxu0 %v323
      %v511 = vpop.f32.mrb[0].mxu0
      %v512 = vadd.f32 %v241, %v511
      %v513 = vpop.f32.mrb[0].mxu0
      %v514 = vpop.f32.mrb[0].mxu0
      %v515 = vadd.f32 %v241, %v514
      %v516 = vpop.f32.mrb[0].mxu0
      %517 = vmatprep.mubr.bf16.mxu0 %v326
      %518 = vmatmul.mubr.bf16.gmra.mrb[0].mxu0 %v325
      %v519 = vpop.f32.mrb[0].mxu0
      %v520 = vadd.f32 %v241, %v519
      %v521 = vpop.f32.mrb[0].mxu0
      %v522 = vpop.f32.mrb[0].mxu0
      %v523 = vadd.f32 %v241, %v522
      %v524 = vpop.f32.mrb[0].mxu0
      %525 = vmatprep.mubr.bf16.mxu0 %v328
      %526 = vmatmul.mubr.bf16.gmra.mrb[0].mxu0 %v327
      %v527 = vpop.f32.mrb[0].mxu0
      %v528 = vadd.f32 %v241, %v527
      %v529 = vpop.f32.mrb[0].mxu0
      %v530 = vpop.f32.mrb[0].mxu0
      %v531 = vadd.f32 %v241, %v530
      %v532 = vpop.f32.mrb[0].mxu0
      %533 = vmatprep.mubr.bf16.mxu0 %v330
      %534 = vmatmul.mubr.bf16.gmra.mrb[0].mxu0 %v329
      %v535 = vpop.f32.mrb[0].mxu0
      %v536 = vadd.f32 %v241, %v535
      %v537 = vpop.f32.mrb[0].mxu0
      %v538 = vpop.f32.mrb[0].mxu0
      %v539 = vadd.f32 %v241, %v538
      %v540 = vpop.f32.mrb[0].mxu0
      %541 = vmatprep.mubr.bf16.mxu0 %v332
      %542 = vmatmul.mubr.bf16.gmra.mrb[0].mxu0 %v331
      %v543 = vpop.f32.mrb[0].mxu0
      %v544 = vadd.f32 %v241, %v543
      %v545 = vpop.f32.mrb[0].mxu0
      %v546 = vpop.f32.mrb[0].mxu0
      %v547 = vadd.f32 %v241, %v546
      %v548 = vpop.f32.mrb[0].mxu0
      %549 = vmatprep.mubr.bf16.mxu0 %v334
      %550 = vmatmul.mubr.bf16.gmra.mrb[0].mxu0 %v333
      %v551 = vpop.f32.mrb[0].mxu0
      %v552 = vadd.f32 %v241, %v551
      %v553 = vpop.f32.mrb[0].mxu0
      %v554 = vpop.f32.mrb[0].mxu0
      %v555 = vadd.f32 %v241, %v554
      %v556 = vpop.f32.mrb[0].mxu0
      %557 = vmatprep.mubr.bf16.mxu0 %v336
      %558 = vmatmul.mubr.bf16.gmra.mrb[0].mxu0 %v335
      %v559 = vpop.f32.mrb[0].mxu0
      %v560 = vadd.f32 %v241, %v559
      %v561 = vpop.f32.mrb[0].mxu0
      %v562 = vpop.f32.mrb[0].mxu0
      %v563 = vadd.f32 %v241, %v562
      %v564 = vpop.f32.mrb[0].mxu0
      %565 = vmatprep.mubr.bf16.mxu0 %v338
      %566 = vmatmul.mubr.bf16.gmra.mrb[0].mxu0 %v337
      %v567 = vpop.f32.mrb[0].mxu0
      %v568 = vadd.f32 %v241, %v567
      %v569 = vpop.f32.mrb[0].mxu0
      %v570 = vpop.f32.mrb[0].mxu0
      %v571 = vadd.f32 %v241, %v570
      %v572 = vpop.f32.mrb[0].mxu0
      %573 = vmatprep.mubr.bf16.mxu0 %v340
      %574 = vmatmul.mubr.bf16.gmra.mrb[0].mxu0 %v339
      %v575 = vpop.f32.mrb[0].mxu0
      %v576 = vadd.f32 %v241, %v575
      %v577 = vpop.f32.mrb[0].mxu0
      %v578 = vpop.f32.mrb[0].mxu0
      %v579 = vadd.f32 %v241, %v578
      %v580 = vpop.f32.mrb[0].mxu0
      %581 = vmatprep.mubr.bf16.mxu0 %v342
      %582 = vmatmul.mubr.bf16.gmra.mrb[0].mxu0 %v341
      %v583 = vpop.f32.mrb[0].mxu0
      %v584 = vadd.f32 %v241, %v583
      %v585 = vpop.f32.mrb[0].mxu0
      %v586 = vpop.f32.mrb[0].mxu0
      %v587 = vadd.f32 %v241, %v586
      %v588 = vpop.f32.mrb[0].mxu0
      %589 = vmatprep.mubr.bf16.mxu0 %v344
      %590 = vmatmul.mubr.bf16.gmra.mrb[0].mxu0 %v343
      %v591 = vpop.f32.mrb[0].mxu0
      %v592 = vadd.f32 %v241, %v591
      %v593 = vpop.f32.mrb[0].mxu0
      %v594 = vpop.f32.mrb[0].mxu0
      %v595 = vadd.f32 %v241, %v594
      %v596 = vpop.f32.mrb[0].mxu0
      %597 = vmatprep.mubr.bf16.mxu0 %v346
      %598 = vmatmul.mubr.bf16.gmra.mrb[0].mxu0 %v345
      %v599 = vpop.f32.mrb[0].mxu0
      %v600 = vadd.f32 %v241, %v599
      %v601 = vpop.f32.mrb[0].mxu0
      %v602 = vpop.f32.mrb[0].mxu0
      %v603 = vadd.f32 %v241, %v602
      %v604 = vpop.f32.mrb[0].mxu0
      %605 = vdwg.mxu0
      %v606 = vmax.f32 %v504, 0.0
      %v607 = vmax.f32 %v507, 0.0
      %v608 = vmax.f32 %v512, 0.0
      %v609 = vmax.f32 %v515, 0.0
      %v610 = vmax.f32 %v520, 0.0
      %v611 = vmax.f32 %v523, 0.0
      %v612 = vmax.f32 %v528, 0.0
      %v613 = vmax.f32 %v531, 0.0
      %v614 = vmax.f32 %v536, 0.0
      %v615 = vmax.f32 %v539, 0.0
      %v616 = vmax.f32 %v544, 0.0
      %v617 = vmax.f32 %v547, 0.0
      %v618 = vmax.f32 %v552, 0.0
      %v619 = vmax.f32 %v555, 0.0
      %v620 = vmax.f32 %v560, 0.0
      %v621 = vmax.f32 %v563, 0.0
      %v622 = vmax.f32 %v568, 0.0
      %v623 = vmax.f32 %v571, 0.0
      %v624 = vmax.f32 %v576, 0.0
      %v625 = vmax.f32 %v579, 0.0
      %v626 = vmax.f32 %v584, 0.0
      %v627 = vmax.f32 %v587, 0.0
      %v628 = vmax.f32 %v592, 0.0
      %v629 = vmax.f32 %v595, 0.0
      %v630 = vmax.f32 %v600, 0.0
      %v631 = vmax.f32 %v603, 0.0
      %v632 = vpack.c.bf16 %v607, %v606
      %v633 = vpack.c.bf16 %v609, %v608
      %v634 = vpack.c.bf16 %v611, %v610
      %v635 = vpack.c.bf16 %v613, %v612
      %v636 = vpack.c.bf16 %v615, %v614
      %v637 = vpack.c.bf16 %v617, %v616
      %v638 = vpack.c.bf16 %v619, %v618
      %v639 = vpack.c.bf16 %v621, %v620
      %v640 = vpack.c.bf16 %v623, %v622
      %v641 = vpack.c.bf16 %v625, %v624
      %v642 = vpack.c.bf16 %v627, %v626
      %v643 = vpack.c.bf16 %v629, %v628
      %v644 = vpack.c.bf16 %v631, %v630
      %v658 = vunpack.c.l.b16 %v632
      %v659 = vunpack.c.h.b16 %v632
      %v660 = vunpack.c.l.b16 %v633
      %v661 = vunpack.c.h.b16 %v633
      %v662 = vunpack.c.l.b16 %v634
      %v663 = vunpack.c.h.b16 %v634
      %v664 = vunpack.c.l.b16 %v635
      %v665 = vunpack.c.h.b16 %v635
      %v666 = vunpack.c.l.b16 %v636
      %v667 = vunpack.c.h.b16 %v636
      %v668 = vunpack.c.l.b16 %v637
      %v669 = vunpack.c.h.b16 %v637
      %v670 = vunpack.c.l.b16 %v638
      %v671 = vunpack.c.h.b16 %v638
      %v672 = vunpack.c.l.b16 %v639
      %v673 = vunpack.c.h.b16 %v639
      %v674 = vunpack.c.l.b16 %v640
      %v675 = vunpack.c.h.b16 %v640
      %v676 = vunpack.c.l.b16 %v641
      %v677 = vunpack.c.h.b16 %v641
      %v678 = vunpack.c.l.b16 %v642
      %v679 = vunpack.c.h.b16 %v642
      %v680 = vunpack.c.l.b16 %v643
      %v681 = vunpack.c.h.b16 %v643
      %v682 = vunpack.c.l.b16 %v644
      %v683 = vunpack.c.h.b16 %v644
      %v684 = vpack.c.b16 %v658, %v658
      %v685 = vpack.c.b16 %v659, %v659
      %v686 = vpack.c.b16 %v660, %v660
      %v687 = vpack.c.b16 %v661, %v661
      %v688 = vpack.c.b16 %v662, %v662
      %v689 = vpack.c.b16 %v663, %v663
      %v690 = vpack.c.b16 %v664, %v664
      %v691 = vpack.c.b16 %v665, %v665
      %v692 = vpack.c.b16 %v666, %v666
      %v693 = vpack.c.b16 %v667, %v667
      %v694 = vpack.c.b16 %v668, %v668
      %v695 = vpack.c.b16 %v669, %v669
      %v696 = vpack.c.b16 %v670, %v670
      %v697 = vpack.c.b16 %v671, %v671
      %v698 = vpack.c.b16 %v672, %v672
      %v699 = vpack.c.b16 %v673, %v673
      %v700 = vpack.c.b16 %v674, %v674
      %v701 = vpack.c.b16 %v675, %v675
      %v702 = vpack.c.b16 %v676, %v676
      %v703 = vpack.c.b16 %v677, %v677
      %v704 = vpack.c.b16 %v678, %v678
      %v705 = vpack.c.b16 %v679, %v679
      %v706 = vpack.c.b16 %v680, %v680
      %v707 = vpack.c.b16 %v681, %v681
      %v708 = vpack.c.b16 %v682, %v682
      %v709 = vpack.c.b16 %v683, %v683
      %736 = vst [vmem:[%s175] sm:$0xf] %v684
      %737 = vst [vmem:[%s175 + $0x4] sm:$0xf] %v685
      %738 = vst [vmem:[%s175 + $0x8] sm:$0xf] %v686
      %739 = vst [vmem:[%s175 + $0xc] sm:$0xf] %v687
      %740 = vst [vmem:[%s175 + $0x10] sm:$0xf] %v688
      %741 = vst [vmem:[%s175 + $0x14] sm:$0xf] %v689
      %742 = vst [vmem:[%s175 + $0x18] sm:$0xf] %v690
      %743 = vst [vmem:[%s175 + $0x1c] sm:$0xf] %v691
      %744 = vst [vmem:[%s175 + $0x20] sm:$0xf] %v692
      %745 = vst [vmem:[%s175 + $0x24] sm:$0xf] %v693
      %746 = vst [vmem:[%s175 + $0x28] sm:$0xf] %v694
      %747 = vst [vmem:[%s175 + $0x2c] sm:$0xf] %v695
      %748 = vst [vmem:[%s175 + $0x30] sm:$0xf] %v696
      %749 = vst [vmem:[%s175 + $0x34] sm:$0xf] %v697
      %750 = vst [vmem:[%s175 + $0x38] sm:$0xf] %v698
      %751 = vst [vmem:[%s175 + $0x3c] sm:$0xf] %v699
      %752 = vst [vmem:[%s175 + $0x40] sm:$0xf] %v700
      %753 = vst [vmem:[%s175 + $0x44] sm:$0xf] %v701
      %754 = vst [vmem:[%s175 + $0x48] sm:$0xf] %v702
      %755 = vst [vmem:[%s175 + $0x4c] sm:$0xf] %v703
      %756 = vst [vmem:[%s175 + $0x50] sm:$0xf] %v704
      %757 = vst [vmem:[%s175 + $0x54] sm:$0xf] %v705
      %758 = vst [vmem:[%s175 + $0x58] sm:$0xf] %v706
      %759 = vst [vmem:[%s175 + $0x5c] sm:$0xf] %v707
      %760 = vst [vmem:[%s175 + $0x60] sm:$0xf] %v708
      %761 = vst [vmem:[%s175 + $0x64] sm:$0xf] %v709
      %s762 = smul.u32 26, %s14
      %p763 = scmp.lt.s32.totalorder %s762, 103
      %s764 = scalar_select %p763, %s762, 103
      %s765 = smul.addr %s764, 4
      %s766 = scalar_lea.vmem %s3, %s765
      // Predicated region
      $region33: #{dqn_conv_forward.4} parent=31 // pred_check
        %p767 = pneg %p100
      $region34: #{dqn_conv_forward.4} parent=31 // pred_check_branch
        %769 = sbr.rel (%p767) target = $region36
      $region35: #{dqn_conv_forward.4} parent=31 // pred_region
        %s770 = smul.u32 26, %s14
      $region36: #{dqn_conv_forward.4} parent=31 // pred_fallthru
        _
    $region32: #{dqn_conv_forward.4} parent=5 // pred_fallthru
      _
    %p771 = scmp.le.s32.totalorder 2, %s9
    // Predicated region
    $region37: #{dqn_conv_forward.4} parent=5 // pred_check
      %p772 = pneg %p771
    $region38: #{dqn_conv_forward.4} parent=5 // pred_check_branch
      %774 = sbr.rel (%p772) target = $region40
    $region39: #{dqn_conv_forward.4} parent=5 // pred_region
      %s775 = ssub.s32 %s9, 2
      // Predicated region
      $region41: #{dqn_conv_forward.4} parent=39 // pred_check
        %p776 = pneg %p106
      $region42: #{dqn_conv_forward.4} parent=39 // pred_check_branch
        %778 = sbr.rel (%p776) target = $region44
      $region43: #{dqn_conv_forward.4} parent=39 // pred_region
        %s779 = smul.u32 26, %s15
        %p780 = scmp.lt.s32.totalorder %s779, 103
        %s781 = scalar_select %p780, %s779, 103
        %s782 = smul.addr %s781, 4
        %s783 = scalar_lea.vmem %s3, %s782
      $region44: #{dqn_conv_forward.4} parent=39 // pred_fallthru
        _
    $region40: #{dqn_conv_forward.4} parent=5 // pred_fallthru
      _
  $region6: #{dqn_conv_forward.4} parent=0 // loop_footer
    %s13 = sadd.s32 1, %s9
  $region7: #{dqn_conv_forward.4} parent=0 // loop_footer_branch
    %8 = sbr.rel target = $region3
  $region8: #{dqn_conv_forward.4} parent=0 // loop_exit
    _

// kernel: dqn_conv_forward.5
$region0: #{dqn_conv_forward.5}
  #allocation0 [shape = 'u32[]', space=smem, size = 0x4, offset = 0x4, fixed_abs, tag = 'smem constant byte address 0x4 - core index']
  #allocation1 [shape = 'u32[144,128]{1,0:T(1,128)}', space=vmem, size = 0x12000, scoped, tag = 'internal scratch']
  %s0 = inlined_call_operand.vmem [shape: bf16[192,512], index: 0, kind: input, shape index: {}]
  %s1 = inlined_call_operand.vmem [shape: bf16[512,128], index: 1, kind: input, shape index: {}]
  %s2 = inlined_call_operand.vmem [shape: f32[1,128], index: 2, kind: input, shape index: {}]
  %s3 = inlined_call_operand.vmem [shape: bf16[192,128], index: 3, kind: output, shape index: {}]
  %s4 = sld [smem:[#allocation0]]
  $region45: #{dqn_conv_forward.5} parent=0
    _
  %s6 = ssub.s32 1, %s4
  %s7 = scalar_select 0, %s6, %s4
  loop: start=0, step=1, limit=4
  $region2: #{dqn_conv_forward.5} parent=0 // loop_pre_header
    _
  $region3: #{dqn_conv_forward.5} parent=0 // loop_header
    %s9 = sphi 0, %s13
    %p10 = scmp.ge.s32.totalorder %s9, 4
    %s19 = sphi 0, %s21
    %s22 = sphi 0, %s19
    %s23 = sphi 0, %s22
    %s39 = sphi 0, %s23
    %s43 = sphi 0, %s43
    %s45 = sphi 0, %s43
    %s46 = sphi 0, %s45
    %s60 = sphi 0, %s46
    %s64 = sphi 0, %s64
    %s66 = sphi 0, %s64
    %s67 = sphi 0, %s66
    %s81 = sphi 0, %s67
    %s87 = sphi 0, %s89
    %s90 = sphi 0, %s87
    %s91 = sphi 0, %s90
    %s107 = sphi 0, %s91
  $region4: #{dqn_conv_forward.5} parent=0 // loop_header_branch
    %12 = sbr.rel (%p10) target = $region8
  $region5: #{dqn_conv_forward.5} parent=0 // loop_body
    %s14 = ssub.s32 %s9, 1
    %s15 = ssub.s32 %s9, 2
    %s16 = sadd.s32 %s9, 1
    %s17 = ssub.s32 %s9, %s16
    %p18 = scmp.eq.s32.totalorder %s17, 0
    %s20 = sadd.s32 %s19, 1
    %s21 = scalar_select %p18, %s19, %s20
    %p24 = pneg %p18
    %p25 = scmp.eq.s32.totalorder %s9, 1
    %p26 = por %p24, %p25
    %p27 = scmp.ne.s32.totalorder %s19, %s22
    %p28 = scmp.eq.s32.totalorder %s9, 0
    %p29 = por %p27, %p28
    %p30 = scmp.ne.s32.totalorder %s19, %s22
    %p31 = scmp.eq.s32.totalorder %s14, 1
    %p32 = por %p30, %p31
    %p33 = scmp.ne.s32.totalorder %s22, %s23
    %p34 = scmp.eq.s32.totalorder %s14, 0
    %p35 = por %p33, %p34
    %p36 = scmp.ne.s32.totalorder %s22, %s23
    %p37 = scmp.eq.s32.totalorder %s15, 1
    %p38 = por %p36, %p37
    %p40 = scmp.ne.s32.totalorder %s23, %s39
    %p41 = scmp.eq.s32.totalorder %s15, 0
    %p42 = por %p40, %p41
    %s44 = sadd.s32 %s43, 1
    %p47 = scmp.eq.s32.totalorder %s9, 1
    %p48 = scmp.ne.s32.totalorder %s43, %s45
    %p49 = scmp.eq.s32.totalorder %s9, 0
    %p50 = por %p48, %p49
    %p51 = scmp.ne.s32.totalorder %s43, %s45
    %p52 = scmp.eq.s32.totalorder %s14, 1
    %p53 = por %p51, %p52
    %p54 = scmp.ne.s32.totalorder %s45, %s46
    %p55 = scmp.eq.s32.totalorder %s14, 0
    %p56 = por %p54, %p55
    %p57 = scmp.ne.s32.totalorder %s45, %s46
    %p58 = scmp.eq.s32.totalorder %s15, 1
    %p59 = por %p57, %p58
    %p61 = scmp.ne.s32.totalorder %s46, %s60
    %p62 = scmp.eq.s32.totalorder %s15, 0
    %p63 = por %p61, %p62
    %s65 = sadd.s32 %s64, 1
    %p68 = scmp.eq.s32.totalorder %s9, 1
    %p69 = scmp.ne.s32.totalorder %s64, %s66
    %p70 = scmp.eq.s32.totalorder %s9, 0
    %p71 = por %p69, %p70
    %p72 = scmp.ne.s32.totalorder %s64, %s66
    %p73 = scmp.eq.s32.totalorder %s14, 1
    %p74 = por %p72, %p73
    %p75 = scmp.ne.s32.totalorder %s66, %s67
    %p76 = scmp.eq.s32.totalorder %s14, 0
    %p77 = por %p75, %p76
    %p78 = scmp.ne.s32.totalorder %s66, %s67
    %p79 = scmp.eq.s32.totalorder %s15, 1
    %p80 = por %p78, %p79
    %p82 = scmp.ne.s32.totalorder %s67, %s81
    %p83 = scmp.eq.s32.totalorder %s15, 0
    %p84 = por %p82, %p83
    %s85 = ssub.s32 %s9, %s16
    %p86 = scmp.eq.s32.totalorder %s85, 0
    %s88 = sadd.s32 %s87, 1
    %s89 = scalar_select %p86, %s87, %s88
    %p92 = pneg %p86
    %p93 = scmp.eq.s32.totalorder %s9, 1
    %p94 = por %p92, %p93
    %p95 = scmp.ne.s32.totalorder %s87, %s90
    %p96 = scmp.eq.s32.totalorder %s9, 0
    %p97 = por %p95, %p96
    %p98 = scmp.ne.s32.totalorder %s87, %s90
    %p99 = scmp.eq.s32.totalorder %s14, 1
    %p100 = por %p98, %p99
    %p101 = scmp.ne.s32.totalorder %s90, %s91
    %p102 = scmp.eq.s32.totalorder %s14, 0
    %p103 = por %p101, %p102
    %p104 = scmp.ne.s32.totalorder %s90, %s91
    %p105 = scmp.eq.s32.totalorder %s15, 1
    %p106 = por %p104, %p105
    %p108 = scmp.ne.s32.totalorder %s91, %s107
    %p109 = scmp.eq.s32.totalorder %s15, 0
    %p110 = por %p108, %p109
    %p111 = scmp.le.s32.totalorder 1, %s9
    %p112 = scmp.lt.s32.totalorder %s9, 3
    %p113 = pnand %p111, %p112
    %p114 = pneg %p113
    // Predicated region
    $region9: #{dqn_conv_forward.5} parent=5 // pred_check
      _
    $region10: #{dqn_conv_forward.5} parent=5 // pred_check_branch
      %116 = sbr.rel (%p113) target = $region12
    $region11: #{dqn_conv_forward.5} parent=5 // pred_region
      %s117 = ssub.s32 %s9, 1
      // Predicated region
      $region13: #{dqn_conv_forward.5} parent=11 // pred_check
        %p118 = pneg %p56
      $region14: #{dqn_conv_forward.5} parent=11 // pred_check_branch
        %120 = sbr.rel (%p118) target = $region16
      $region15: #{dqn_conv_forward.5} parent=11 // pred_region
        _
      $region16: #{dqn_conv_forward.5} parent=11 // pred_fallthru
        _
      // Predicated region
      $region17: #{dqn_conv_forward.5} parent=11 // pred_check
        %p121 = pneg %p77
      $region18: #{dqn_conv_forward.5} parent=11 // pred_check_branch
        %123 = sbr.rel (%p121) target = $region20
      $region19: #{dqn_conv_forward.5} parent=11 // pred_region
        _
      $region20: #{dqn_conv_forward.5} parent=11 // pred_fallthru
        _
    $region12: #{dqn_conv_forward.5} parent=5 // pred_fallthru
      _
    %p124 = scmp.lt.s32.totalorder %s9, 2
    // Predicated region
    $region21: #{dqn_conv_forward.5} parent=5 // pred_check
      %p125 = pneg %p124
    $region22: #{dqn_conv_forward.5} parent=5 // pred_check_branch
      %127 = sbr.rel (%p125) target = $region24
    $region23: #{dqn_conv_forward.5} parent=5 // pred_region
      // Predicated region
      $region25: #{dqn_conv_forward.5} parent=23 // pred_check
        %p128 = pneg %p29
      $region26: #{dqn_conv_forward.5} parent=23 // pred_check_branch
        %130 = sbr.rel (%p128) target = $region28
      $region27: #{dqn_conv_forward.5} parent=23 // pred_region
        %s131 = smul.u32 12, %s9
        %p132 = scmp.lt.s32.totalorder %s131, 23
        %s133 = scalar_select %p132, %s131, 23
        %s134 = smul.addr %s133, 4
        %s135 = smul.addr %s134, 4
        %s136 = scalar_lea.vmem %s0, %s135
        %s137 = smul.u32 12, %s9
      $region28: #{dqn_conv_forward.5} parent=23 // pred_fallthru
        _
    $region24: #{dqn_conv_forward.5} parent=5 // pred_fallthru
      _
    %p138 = scmp.le.s32.totalorder 1, %s9
    %p139 = scmp.lt.s32.totalorder %s9, 3
    %p140 = pnand %p138, %p139
    %p141 = pneg %p140
    // Predicated region
    $region29: #{dqn_conv_forward.5} parent=5 // pred_check
      _
    $region30: #{dqn_conv_forward.5} parent=5 // pred_check_branch
      %143 = sbr.rel (%p140) target = $region32
    $region31: #{dqn_conv_forward.5} parent=5 // pred_region
      %s144 = ssub.s32 %s9, 1
      %s145 = smul.u32 12, %s14
      %p146 = scmp.lt.s32.totalorder %s145, 23
      %s147 = scalar_select %p146, %s145, 23
      %s148 = smul.addr %s147, 4
      %s149 = smul.addr %s148, 4
      %s150 = scalar_lea.vmem %s0, %s149
      %p151 = pneg %p35
      %p152 = pneg %p32
      %p153 = pneg %p56
      %p154 = pneg %p53
      %p155 = pneg %p77
      %p156 = pneg %p74
      %p157 = pneg %p103
      %p158 = pneg %p100
      %s159 = smul.u32 12, %s14
      %p160 = scmp.lt.s32.totalorder %s159, 23
      %s161 = scalar_select %p160, %s159, 23
      %s162 = smul.addr %s161, 4
      %s163 = scalar_lea.vmem %s3, %s162
      %s164 = smul.u32 12, %s14
      %p165 = scmp.lt.s32.totalorder %s164, 23
      %s166 = scalar_select %p165, %s164, 23
      %s167 = smul.addr %s166, 4
      %s168 = smul.addr %s167, 4
      %s169 = scalar_lea.vmem %s0, %s168
      %s170 = smul.u32 12, %s14
      %s171 = smul.u32 12, %s14
      %p172 = scmp.lt.s32.totalorder %s171, 23
      %s173 = scalar_select %p172, %s171, 23
      %s174 = smul.addr %s173, 4
      %s175 = scalar_lea.vmem %s3, %s174
      %s176 = smul.u32 12, %s14
      %v178 = vld [vmem:[%s169] sm:$0xff]
      %v179 = vld [vmem:[%s169 + $0x8] sm:$0xff]
      %v180 = vld [vmem:[%s169 + $0x10] sm:$0xff]
      %v181 = vld [vmem:[%s169 + $0x18] sm:$0xff]
      %v182 = vld [vmem:[%s169 + $0x20] sm:$0xff]
      %v183 = vld [vmem:[%s169 + $0x28] sm:$0xff]
      %v184 = vld [vmem:[%s169 + $0x30] sm:$0xff]
      %v185 = vld [vmem:[%s169 + $0x38] sm:$0xff]
      %v186 = vld [vmem:[%s169 + $0x40] sm:$0xff]
      %v187 = vld [vmem:[%s169 + $0x48] sm:$0xff]
      %v188 = vld [vmem:[%s169 + $0x50] sm:$0xff]
      %v189 = vld [vmem:[%s169 + $0x58] sm:$0xff]
      %v190 = vld [vmem:[%s169 + $0x60] sm:$0xff]
      %v191 = vld [vmem:[%s169 + $0x68] sm:$0xff]
      %v192 = vld [vmem:[%s169 + $0x70] sm:$0xff]
      %v193 = vld [vmem:[%s169 + $0x78] sm:$0xff]
      %v194 = vld [vmem:[%s169 + $0x80] sm:$0xff]
      %v195 = vld [vmem:[%s169 + $0x88] sm:$0xff]
      %v196 = vld [vmem:[%s169 + $0x90] sm:$0xff]
      %v197 = vld [vmem:[%s169 + $0x98] sm:$0xff]
      %v198 = vld [vmem:[%s169 + $0xa0] sm:$0xff]
      %v199 = vld [vmem:[%s169 + $0xa8] sm:$0xff]
      %v200 = vld [vmem:[%s169 + $0xb0] sm:$0xff]
      %v201 = vld [vmem:[%s169 + $0xb8] sm:$0xff]
      %v202 = vld [vmem:[%s1] sm:$0xf]
      %v203 = vld [vmem:[%s1 + $0x4] sm:$0xf]
      %v204 = vld [vmem:[%s1 + $0x8] sm:$0xf]
      %v205 = vld [vmem:[%s1 + $0xc] sm:$0xf]
      %v206 = vld [vmem:[%s1 + $0x10] sm:$0xf]
      %v207 = vld [vmem:[%s1 + $0x14] sm:$0xf]
      %v208 = vld [vmem:[%s1 + $0x18] sm:$0xf]
      %v209 = vld [vmem:[%s1 + $0x1c] sm:$0xf]
      %v210 = vld [vmem:[%s1 + $0x20] sm:$0xf]
      %v211 = vld [vmem:[%s1 + $0x24] sm:$0xf]
      %v212 = vld [vmem:[%s1 + $0x28] sm:$0xf]
      %v213 = vld [vmem:[%s1 + $0x2c] sm:$0xf]
      %v214 = vld [vmem:[%s1 + $0x30] sm:$0xf]
      %v215 = vld [vmem:[%s1 + $0x34] sm:$0xf]
      %v216 = vld [vmem:[%s1 + $0x38] sm:$0xf]
      %v217 = vld [vmem:[%s1 + $0x3c] sm:$0xf]
      %v218 = vld [vmem:[%s1 + $0x40] sm:$0xf]
      %v219 = vld [vmem:[%s1 + $0x44] sm:$0xf]
      %v220 = vld [vmem:[%s1 + $0x48] sm:$0xf]
      %v221 = vld [vmem:[%s1 + $0x4c] sm:$0xf]
      %v222 = vld [vmem:[%s1 + $0x50] sm:$0xf]
      %v223 = vld [vmem:[%s1 + $0x54] sm:$0xf]
      %v224 = vld [vmem:[%s1 + $0x58] sm:$0xf]
      %v225 = vld [vmem:[%s1 + $0x5c] sm:$0xf]
      %v226 = vld [vmem:[%s1 + $0x60] sm:$0xf]
      %v227 = vld [vmem:[%s1 + $0x64] sm:$0xf]
      %v228 = vld [vmem:[%s1 + $0x68] sm:$0xf]
      %v229 = vld [vmem:[%s1 + $0x6c] sm:$0xf]
      %v230 = vld [vmem:[%s1 + $0x70] sm:$0xf]
      %v231 = vld [vmem:[%s1 + $0x74] sm:$0xf]
      %v232 = vld [vmem:[%s1 + $0x78] sm:$0xf]
      %v233 = vld [vmem:[%s1 + $0x7c] sm:$0xf]
      %v234 = vld [vmem:[%s1 + $0x80] sm:$0xf]
      %v235 = vld [vmem:[%s1 + $0x84] sm:$0xf]
      %v236 = vld [vmem:[%s1 + $0x88] sm:$0xf]
      %v237 = vld [vmem:[%s1 + $0x8c] sm:$0xf]
      %v238 = vld [vmem:[%s1 + $0x90] sm:$0xf]
      %v239 = vld [vmem:[%s1 + $0x94] sm:$0xf]
      %v240 = vld [vmem:[%s1 + $0x98] sm:$0xf]
      %v241 = vld [vmem:[%s1 + $0x9c] sm:$0xf]
      %v242 = vld [vmem:[%s1 + $0xa0] sm:$0xf]
      %v243 = vld [vmem:[%s1 + $0xa4] sm:$0xf]
      %v244 = vld [vmem:[%s1 + $0xa8] sm:$0xf]
      %v245 = vld [vmem:[%s1 + $0xac] sm:$0xf]
      %v246 = vld [vmem:[%s1 + $0xb0] sm:$0xf]
      %v247 = vld [vmem:[%s1 + $0xb4] sm:$0xf]
      %v248 = vld [vmem:[%s1 + $0xb8] sm:$0xf]
      %v249 = vld [vmem:[%s1 + $0xbc] sm:$0xf]
      %v250 = vld [vmem:[%s1 + $0xc0] sm:$0xf]
      %v251 = vld [vmem:[%s1 + $0xc4] sm:$0xf]
      %v252 = vld [vmem:[%s1 + $0xc8] sm:$0xf]
      %v253 = vld [vmem:[%s1 + $0xcc] sm:$0xf]
      %v254 = vld [vmem:[%s1 + $0xd0] sm:$0xf]
      %v255 = vld [vmem:[%s1 + $0xd4] sm:$0xf]
      %v256 = vld [vmem:[%s1 + $0xd8] sm:$0xf]
      %v257 = vld [vmem:[%s1 + $0xdc] sm:$0xf]
      %v258 = vld [vmem:[%s1 + $0xe0] sm:$0xf]
      %v259 = vld [vmem:[%s1 + $0xe4] sm:$0xf]
      %v260 = vld [vmem:[%s1 + $0xe8] sm:$0xf]
      %v261 = vld [vmem:[%s1 + $0xec] sm:$0xf]
      %v262 = vld [vmem:[%s1 + $0xf0] sm:$0xf]
      %v263 = vld [vmem:[%s1 + $0xf4] sm:$0xf]
      %v264 = vld [vmem:[%s1 + $0xf8] sm:$0xf]
      %v265 = vld [vmem:[%s1 + $0xfc] sm:$0xf]
      %v266 = vld [vmem:[%s2] sm:$0x1]
      %v268 = vlaneseq
      %v269 = vshrl.u32 %v268, 7
      %v270 = vsub.s32 0, %v269
      %v271 = vrot.slane %v266, %v270
      %v297 = vunpack.c.l.b16 %v178
      %v298 = vunpack.c.h.b16 %v178
      %v299 = vunpack.c.l.b16 %v179
      %v300 = vunpack.c.h.b16 %v179
      %v301 = vunpack.c.l.b16 %v180
      %v302 = vunpack.c.h.b16 %v180
      %v303 = vunpack.c.l.b16 %v181
      %v304 = vunpack.c.h.b16 %v181
      %v305 = vunpack.c.l.b16 %v182
      %v306 = vunpack.c.h.b16 %v182
      %v307 = vunpack.c.l.b16 %v183
      %v308 = vunpack.c.h.b16 %v183
      %v309 = vunpack.c.l.b16 %v184
      %v310 = vunpack.c.h.b16 %v184
      %v311 = vunpack.c.l.b16 %v185
      %v312 = vunpack.c.h.b16 %v185
      %v313 = vunpack.c.l.b16 %v186
      %v314 = vunpack.c.h.b16 %v186
      %v315 = vunpack.c.l.b16 %v187
      %v316 = vunpack.c.h.b16 %v187
      %v317 = vunpack.c.l.b16 %v188
      %v318 = vunpack.c.h.b16 %v188
      %v319 = vunpack.c.l.b16 %v189
      %v320 = vunpack.c.h.b16 %v189
      %v321 = vunpack.c.l.b16 %v190
      %v322 = vunpack.c.h.b16 %v190
      %v323 = vunpack.c.l.b16 %v191
      %v324 = vunpack.c.h.b16 %v191
      %v325 = vunpack.c.l.b16 %v192
      %v326 = vunpack.c.h.b16 %v192
      %v327 = vunpack.c.l.b16 %v193
      %v328 = vunpack.c.h.b16 %v193
      %v329 = vunpack.c.l.b16 %v194
      %v330 = vunpack.c.h.b16 %v194
      %v331 = vunpack.c.l.b16 %v195
      %v332 = vunpack.c.h.b16 %v195
      %v333 = vunpack.c.l.b16 %v196
      %v334 = vunpack.c.h.b16 %v196
      %v335 = vunpack.c.l.b16 %v197
      %v336 = vunpack.c.h.b16 %v197
      %v337 = vunpack.c.l.b16 %v198
      %v338 = vunpack.c.h.b16 %v198
      %v339 = vunpack.c.l.b16 %v199
      %v340 = vunpack.c.h.b16 %v199
      %v341 = vunpack.c.l.b16 %v200
      %v342 = vunpack.c.h.b16 %v200
      %v343 = vunpack.c.l.b16 %v201
      %v344 = vunpack.c.h.b16 %v201
      %v345 = vpack.c.b16 %v301, %v297
      %v346 = vpack.c.b16 %v302, %v298
      %v347 = vpack.c.b16 %v303, %v299
      %v348 = vpack.c.b16 %v304, %v300
      %v349 = vpack.c.b16 %v309, %v305
      %v350 = vpack.c.b16 %v310, %v306
      %v351 = vpack.c.b16 %v311, %v307
      %v352 = vpack.c.b16 %v312, %v308
      %v353 = vpack.c.b16 %v317, %v313
      %v354 = vpack.c.b16 %v318, %v314
      %v355 = vpack.c.b16 %v319, %v315
      %v356 = vpack.c.b16 %v320, %v316
      %v357 = vpack.c.b16 %v325, %v321
      %v358 = vpack.c.b16 %v326, %v322
      %v359 = vpack.c.b16 %v327, %v323
      %v360 = vpack.c.b16 %v328, %v324
      %v361 = vpack.c.b16 %v333, %v329
      %v362 = vpack.c.b16 %v334, %v330
      %v363 = vpack.c.b16 %v335, %v331
      %v364 = vpack.c.b16 %v336, %v332
      %v365 = vpack.c.b16 %v341, %v337
      %v366 = vpack.c.b16 %v342, %v338
      %v367 = vpack.c.b16 %v343, %v339
      %v368 = vpack.c.b16 %v344, %v340
      %v457 = vunpack.c.l.b16 %v202
      %v458 = vunpack.c.l.b16 %v203
      %v459 = vunpack.c.l.b16 %v204
      %v460 = vunpack.c.l.b16 %v205
      %v461 = vunpack.c.l.b16 %v206
      %v462 = vunpack.c.l.b16 %v207
      %v463 = vunpack.c.l.b16 %v208
      %v464 = vunpack.c.l.b16 %v209
      %v465 = vunpack.c.l.b16 %v210
      %v466 = vunpack.c.l.b16 %v211
      %v467 = vunpack.c.l.b16 %v212
      %v468 = vunpack.c.l.b16 %v213
      %v469 = vunpack.c.l.b16 %v214
      %v470 = vunpack.c.l.b16 %v215
      %v471 = vunpack.c.l.b16 %v216
      %v472 = vunpack.c.l.b16 %v217
      %v473 = vunpack.c.l.b16 %v218
      %v474 = vunpack.c.l.b16 %v219
      %v475 = vunpack.c.l.b16 %v220
      %v476 = vunpack.c.l.b16 %v221
      %v477 = vunpack.c.l.b16 %v222
      %v478 = vunpack.c.l.b16 %v223
      %v479 = vunpack.c.l.b16 %v224
      %v480 = vunpack.c.l.b16 %v225
      %v481 = vunpack.c.l.b16 %v226
      %v482 = vunpack.c.l.b16 %v227
      %v483 = vunpack.c.l.b16 %v228
      %v484 = vunpack.c.l.b16 %v229
      %v485 = vunpack.c.l.b16 %v230
      %v486 = vunpack.c.l.b16 %v231
      %v487 = vunpack.c.l.b16 %v232
      %v488 = vunpack.c.l.b16 %v233
      %v489 = vunpack.c.l.b16 %v234
      %v490 = vunpack.c.l.b16 %v235
      %v491 = vunpack.c.l.b16 %v236
      %v492 = vunpack.c.l.b16 %v237
      %v493 = vunpack.c.l.b16 %v238
      %v494 = vunpack.c.l.b16 %v239
      %v495 = vunpack.c.l.b16 %v240
      %v496 = vunpack.c.l.b16 %v241
      %v497 = vunpack.c.l.b16 %v242
      %v498 = vunpack.c.l.b16 %v243
      %v499 = vunpack.c.l.b16 %v244
      %v500 = vunpack.c.l.b16 %v245
      %v501 = vunpack.c.l.b16 %v246
      %v502 = vunpack.c.l.b16 %v247
      %v503 = vunpack.c.l.b16 %v248
      %v504 = vunpack.c.l.b16 %v249
      %v505 = vunpack.c.l.b16 %v250
      %v506 = vunpack.c.l.b16 %v251
      %v507 = vunpack.c.l.b16 %v252
      %v508 = vunpack.c.l.b16 %v253
      %v509 = vunpack.c.l.b16 %v254
      %v510 = vunpack.c.l.b16 %v255
      %v511 = vunpack.c.l.b16 %v256
      %v512 = vunpack.c.l.b16 %v257
      %v513 = vunpack.c.l.b16 %v258
      %v514 = vunpack.c.l.b16 %v259
      %v515 = vunpack.c.l.b16 %v260
      %v516 = vunpack.c.l.b16 %v261
      %v517 = vunpack.c.l.b16 %v262
      %v518 = vunpack.c.l.b16 %v263
      %v519 = vunpack.c.l.b16 %v264
      %v520 = vunpack.c.l.b16 %v265
      %v521 = vpack.c.b16 %v458, %v457
      %v522 = vpack.c.b16 %v460, %v459
      %v523 = vpack.c.b16 %v462, %v461
      %v524 = vpack.c.b16 %v464, %v463
      %v525 = vpack.c.b16 %v466, %v465
      %v526 = vpack.c.b16 %v468, %v467
      %v527 = vpack.c.b16 %v470, %v469
      %v528 = vpack.c.b16 %v472, %v471
      %v529 = vpack.c.b16 %v474, %v473
      %v530 = vpack.c.b16 %v476, %v475
      %v531 = vpack.c.b16 %v478, %v477
      %v532 = vpack.c.b16 %v480, %v479
      %v533 = vpack.c.b16 %v482, %v481
      %v534 = vpack.c.b16 %v484, %v483
      %v535 = vpack.c.b16 %v486, %v485
      %v536 = vpack.c.b16 %v488, %v487
      %v537 = vpack.c.b16 %v490, %v489
      %v538 = vpack.c.b16 %v492, %v491
      %v539 = vpack.c.b16 %v494, %v493
      %v540 = vpack.c.b16 %v496, %v495
      %v541 = vpack.c.b16 %v498, %v497
      %v542 = vpack.c.b16 %v500, %v499
      %v543 = vpack.c.b16 %v502, %v501
      %v544 = vpack.c.b16 %v504, %v503
      %v545 = vpack.c.b16 %v506, %v505
      %v546 = vpack.c.b16 %v508, %v507
      %v547 = vpack.c.b16 %v510, %v509
      %v548 = vpack.c.b16 %v512, %v511
      %v549 = vpack.c.b16 %v514, %v513
      %v550 = vpack.c.b16 %v516, %v515
      %v551 = vpack.c.b16 %v518, %v517
      %v552 = vpack.c.b16 %v520, %v519
      %585 = vmatprep.subr.bf16.mxu0 0
      %586 = vmatpush1.bf16.msra.mxu0 %v521
      %587 = vmatprep.subr.bf16.mxu0 0
      %588 = vmatpush1.bf16.msra.mxu0 %v522
      %589 = vmatprep.subr.bf16.mxu0 0
      %590 = vmatpush1.bf16.msra.mxu0 %v523
      %591 = vmatprep.subr.bf16.mxu0 0
      %592 = vmatpush1.bf16.msra.mxu0 %v524
      %593 = vmatprep.subr.bf16.mxu0 0
      %594 = vmatpush1.bf16.msra.mxu0 %v525
      %595 = vmatprep.subr.bf16.mxu0 0
      %596 = vmatpush1.bf16.msra.mxu0 %v526
      %597 = vmatprep.subr.bf16.mxu0 0
      %598 = vmatpush1.bf16.msra.mxu0 %v527
      %599 = vmatprep.subr.bf16.mxu0 0
      %600 = vmatpush1.bf16.msra.mxu0 %v528
      %601 = vmatprep.subr.bf16.mxu0 0
      %602 = vmatpush1.bf16.msra.mxu0 %v529
      %603 = vmatprep.subr.bf16.mxu0 0
      %604 = vmatpush1.bf16.msra.mxu0 %v530
      %605 = vmatprep.subr.bf16.mxu0 0
      %606 = vmatpush1.bf16.msra.mxu0 %v531
      %607 = vmatprep.subr.bf16.mxu0 0
      %608 = vmatpush1.bf16.msra.mxu0 %v532
      %609 = vmatprep.subr.bf16.mxu0 0
      %610 = vmatpush1.bf16.msra.mxu0 %v533
      %611 = vmatprep.subr.bf16.mxu0 0
      %612 = vmatpush1.bf16.msra.mxu0 %v534
      %613 = vmatprep.subr.bf16.mxu0 0
      %614 = vmatpush1.bf16.msra.mxu0 %v535
      %615 = vmatprep.subr.bf16.mxu0 0
      %616 = vmatpush1.bf16.msra.mxu0 %v536
      %617 = vmatprep.mubr.bf16.mxu0 %v346
      %618 = vmatmul.mubr.bf16.gmra.mrb[0].mxu0 %v345
      %v619 = vpop.f32.mrb[0].mxu0
      %v620 = vadd.f32 %v271, %v619
      %v621 = vpop.f32.mrb[0].mxu0
      %v622 = vpop.f32.mrb[0].mxu0
      %v623 = vadd.f32 %v271, %v622
      %v624 = vpop.f32.mrb[0].mxu0
      %625 = vmatprep.mubr.bf16.mxu0 %v350
      %626 = vmatmul.mubr.bf16.gmra.mrb[0].mxu0 %v349
      %v627 = vpop.f32.mrb[0].mxu0
      %v628 = vadd.f32 %v271, %v627
      %v629 = vpop.f32.mrb[0].mxu0
      %v630 = vpop.f32.mrb[0].mxu0
      %v631 = vadd.f32 %v271, %v630
      %v632 = vpop.f32.mrb[0].mxu0
      %633 = vmatprep.mubr.bf16.mxu0 %v354
      %634 = vmatmul.mubr.bf16.gmra.mrb[0].mxu0 %v353
      %v635 = vpop.f32.mrb[0].mxu0
      %v636 = vadd.f32 %v271, %v635
      %v637 = vpop.f32.mrb[0].mxu0
      %v638 = vpop.f32.mrb[0].mxu0
      %v639 = vadd.f32 %v271, %v638
      %v640 = vpop.f32.mrb[0].mxu0
      %641 = vmatprep.mubr.bf16.mxu0 %v358
      %642 = vmatmul.mubr.bf16.gmra.mrb[0].mxu0 %v357
      %v643 = vpop.f32.mrb[0].mxu0
      %v644 = vadd.f32 %v271, %v643
      %v645 = vpop.f32.mrb[0].mxu0
      %v646 = vpop.f32.mrb[0].mxu0
      %v647 = vadd.f32 %v271, %v646
      %v648 = vpop.f32.mrb[0].mxu0
      %649 = vmatprep.mubr.bf16.mxu0 %v362
      %650 = vmatmul.mubr.bf16.gmra.mrb[0].mxu0 %v361
      %v651 = vpop.f32.mrb[0].mxu0
      %v652 = vadd.f32 %v271, %v651
      %v653 = vpop.f32.mrb[0].mxu0
      %v654 = vpop.f32.mrb[0].mxu0
      %v655 = vadd.f32 %v271, %v654
      %v656 = vpop.f32.mrb[0].mxu0
      %657 = vmatprep.mubr.bf16.mxu0 %v366
      %658 = vmatmul.mubr.bf16.gmra.mrb[0].mxu0 %v365
      %v659 = vpop.f32.mrb[0].mxu0
      %v660 = vadd.f32 %v271, %v659
      %v661 = vpop.f32.mrb[0].mxu0
      %v662 = vpop.f32.mrb[0].mxu0
      %v663 = vadd.f32 %v271, %v662
      %v664 = vpop.f32.mrb[0].mxu0
      %665 = vdwg.mxu0
      %666 = vmatprep.subr.bf16.mxu0 0
      %667 = vmatpush1.bf16.msra.mxu0 %v537
      %668 = vmatprep.subr.bf16.mxu0 0
      %669 = vmatpush1.bf16.msra.mxu0 %v538
      %670 = vmatprep.subr.bf16.mxu0 0
      %671 = vmatpush1.bf16.msra.mxu0 %v539
      %672 = vmatprep.subr.bf16.mxu0 0
      %673 = vmatpush1.bf16.msra.mxu0 %v540
      %674 = vmatprep.subr.bf16.mxu0 0
      %675 = vmatpush1.bf16.msra.mxu0 %v541
      %676 = vmatprep.subr.bf16.mxu0 0
      %677 = vmatpush1.bf16.msra.mxu0 %v542
      %678 = vmatprep.subr.bf16.mxu0 0
      %679 = vmatpush1.bf16.msra.mxu0 %v543
      %680 = vmatprep.subr.bf16.mxu0 0
      %681 = vmatpush1.bf16.msra.mxu0 %v544
      %682 = vmatprep.subr.bf16.mxu0 0
      %683 = vmatpush1.bf16.msra.mxu0 %v545
      %684 = vmatprep.subr.bf16.mxu0 0
      %685 = vmatpush1.bf16.msra.mxu0 %v546
      %686 = vmatprep.subr.bf16.mxu0 0
      %687 = vmatpush1.bf16.msra.mxu0 %v547
      %688 = vmatprep.subr.bf16.mxu0 0
      %689 = vmatpush1.bf16.msra.mxu0 %v548
      %690 = vmatprep.subr.bf16.mxu0 0
      %691 = vmatpush1.bf16.msra.mxu0 %v549
      %692 = vmatprep.subr.bf16.mxu0 0
      %693 = vmatpush1.bf16.msra.mxu0 %v550
      %694 = vmatprep.subr.bf16.mxu0 0
      %695 = vmatpush1.bf16.msra.mxu0 %v551
      %696 = vmatprep.subr.bf16.mxu0 0
      %697 = vmatpush1.bf16.msra.mxu0 %v552
      %698 = vmatprep.mubr.bf16.mxu0 %v348
      %699 = vmatmul.mubr.bf16.gmra.mrb[0].mxu0 %v347
      %v700 = vpop.f32.mrb[0].mxu0
      %v701 = vadd.f32 %v620, %v700
      %v702 = vpop.f32.mrb[0].mxu0
      %v703 = vpop.f32.mrb[0].mxu0
      %v704 = vadd.f32 %v623, %v703
      %v705 = vpop.f32.mrb[0].mxu0
      %706 = vmatprep.mubr.bf16.mxu0 %v352
      %707 = vmatmul.mubr.bf16.gmra.mrb[0].mxu0 %v351
      %v708 = vpop.f32.mrb[0].mxu0
      %v709 = vadd.f32 %v628, %v708
      %v710 = vpop.f32.mrb[0].mxu0
      %v711 = vpop.f32.mrb[0].mxu0
      %v712 = vadd.f32 %v631, %v711
      %v713 = vpop.f32.mrb[0].mxu0
      %714 = vmatprep.mubr.bf16.mxu0 %v356
      %715 = vmatmul.mubr.bf16.gmra.mrb[0].mxu0 %v355
      %v716 = vpop.f32.mrb[0].mxu0
      %v717 = vadd.f32 %v636, %v716
      %v718 = vpop.f32.mrb[0].mxu0
      %v719 = vpop.f32.mrb[0].mxu0
      %v720 = vadd.f32 %v639, %v719
      %v721 = vpop.f32.mrb[0].mxu0
      %722 = vmatprep.mubr.bf16.mxu0 %v360
      %723 = vmatmul.mubr.bf16.gmra.mrb[0].mxu0 %v359
      %v724 = vpop.f32.mrb[0].mxu0
      %v725 = vadd.f32 %v644, %v724
      %v726 = vpop.f32.mrb[0].mxu0
      %v727 = vpop.f32.mrb[0].mxu0
      %v728 = vadd.f32 %v647, %v727
      %v729 = vpop.f32.mrb[0].mxu0
      %730 = vmatprep.mubr.bf16.mxu0 %v364
      %731 = vmatmul.mubr.bf16.gmra.mrb[0].mxu0 %v363
      %v732 = vpop.f32.mrb[0].mxu0
      %v733 = vadd.f32 %v652, %v732
      %v734 = vpop.f32.mrb[0].mxu0
      %v735 = vpop.f32.mrb[0].mxu0
      %v736 = vadd.f32 %v655, %v735
      %v737 = vpop.f32.mrb[0].mxu0
      %738 = vmatprep.mubr.bf16.mxu0 %v368
      %739 = vmatmul.mubr.bf16.gmra.mrb[0].mxu0 %v367
      %v740 = vpop.f32.mrb[0].mxu0
      %v741 = vadd.f32 %v660, %v740
      %v742 = vpop.f32.mrb[0].mxu0
      %v743 = vpop.f32.mrb[0].mxu0
      %v744 = vadd.f32 %v663, %v743
      %v745 = vpop.f32.mrb[0].mxu0
      %746 = vdwg.mxu0
      %v747 = vmax.f32 %v701, 0.0
      %v748 = vmax.f32 %v704, 0.0
      %v749 = vmax.f32 %v709, 0.0
      %v750 = vmax.f32 %v712, 0.0
      %v751 = vmax.f32 %v717, 0.0
      %v752 = vmax.f32 %v720, 0.0
      %v753 = vmax.f32 %v725, 0.0
      %v754 = vmax.f32 %v728, 0.0
      %v755 = vmax.f32 %v733, 0.0
      %v756 = vmax.f32 %v736, 0.0
      %v757 = vmax.f32 %v741, 0.0
      %v758 = vmax.f32 %v744, 0.0
      %v759 = vpack.c.bf16 %v748, %v747
      %v760 = vpack.c.bf16 %v750, %v749
      %v761 = vpack.c.bf16 %v752, %v751
      %v762 = vpack.c.bf16 %v754, %v753
      %v763 = vpack.c.bf16 %v756, %v755
      %v764 = vpack.c.bf16 %v758, %v757
      %v771 = vunpack.c.l.b16 %v759
      %v772 = vunpack.c.h.b16 %v759
      %v773 = vunpack.c.l.b16 %v760
      %v774 = vunpack.c.h.b16 %v760
      %v775 = vunpack.c.l.b16 %v761
      %v776 = vunpack.c.h.b16 %v761
      %v777 = vunpack.c.l.b16 %v762
      %v778 = vunpack.c.h.b16 %v762
      %v779 = vunpack.c.l.b16 %v763
      %v780 = vunpack.c.h.b16 %v763
      %v781 = vunpack.c.l.b16 %v764
      %v782 = vunpack.c.h.b16 %v764
      %v783 = vpack.c.b16 %v771, %v771
      %v784 = vpack.c.b16 %v772, %v772
      %v785 = vpack.c.b16 %v773, %v773
      %v786 = vpack.c.b16 %v774, %v774
      %v787 = vpack.c.b16 %v775, %v775
      %v788 = vpack.c.b16 %v776, %v776
      %v789 = vpack.c.b16 %v777, %v777
      %v790 = vpack.c.b16 %v778, %v778
      %v791 = vpack.c.b16 %v779, %v779
      %v792 = vpack.c.b16 %v780, %v780
      %v793 = vpack.c.b16 %v781, %v781
      %v794 = vpack.c.b16 %v782, %v782
      %807 = vst [vmem:[%s175] sm:$0xf] %v783
      %808 = vst [vmem:[%s175 + $0x4] sm:$0xf] %v784
      %809 = vst [vmem:[%s175 + $0x8] sm:$0xf] %v785
      %810 = vst [vmem:[%s175 + $0xc] sm:$0xf] %v786
      %811 = vst [vmem:[%s175 + $0x10] sm:$0xf] %v787
      %812 = vst [vmem:[%s175 + $0x14] sm:$0xf] %v788
      %813 = vst [vmem:[%s175 + $0x18] sm:$0xf] %v789
      %814 = vst [vmem:[%s175 + $0x1c] sm:$0xf] %v790
      %815 = vst [vmem:[%s175 + $0x20] sm:$0xf] %v791
      %816 = vst [vmem:[%s175 + $0x24] sm:$0xf] %v792
      %817 = vst [vmem:[%s175 + $0x28] sm:$0xf] %v793
      %818 = vst [vmem:[%s175 + $0x2c] sm:$0xf] %v794
      %s819 = smul.u32 12, %s14
      %p820 = scmp.lt.s32.totalorder %s819, 23
      %s821 = scalar_select %p820, %s819, 23
      %s822 = smul.addr %s821, 4
      %s823 = scalar_lea.vmem %s3, %s822
      // Predicated region
      $region33: #{dqn_conv_forward.5} parent=31 // pred_check
        %p824 = pneg %p100
      $region34: #{dqn_conv_forward.5} parent=31 // pred_check_branch
        %826 = sbr.rel (%p824) target = $region36
      $region35: #{dqn_conv_forward.5} parent=31 // pred_region
        %s827 = smul.u32 12, %s14
      $region36: #{dqn_conv_forward.5} parent=31 // pred_fallthru
        _
    $region32: #{dqn_conv_forward.5} parent=5 // pred_fallthru
      _
    %p828 = scmp.le.s32.totalorder 2, %s9
    // Predicated region
    $region37: #{dqn_conv_forward.5} parent=5 // pred_check
      %p829 = pneg %p828
    $region38: #{dqn_conv_forward.5} parent=5 // pred_check_branch
      %831 = sbr.rel (%p829) target = $region40
    $region39: #{dqn_conv_forward.5} parent=5 // pred_region
      %s832 = ssub.s32 %s9, 2
      // Predicated region
      $region41: #{dqn_conv_forward.5} parent=39 // pred_check
        %p833 = pneg %p106
      $region42: #{dqn_conv_forward.5} parent=39 // pred_check_branch
        %835 = sbr.rel (%p833) target = $region44
      $region43: #{dqn_conv_forward.5} parent=39 // pred_region
        %s836 = smul.u32 12, %s15
        %p837 = scmp.lt.s32.totalorder %s836, 23
        %s838 = scalar_select %p837, %s836, 23
        %s839 = smul.addr %s838, 4
        %s840 = scalar_lea.vmem %s3, %s839
      $region44: #{dqn_conv_forward.5} parent=39 // pred_fallthru
        _
    $region40: #{dqn_conv_forward.5} parent=5 // pred_fallthru
      _
  $region6: #{dqn_conv_forward.5} parent=0 // loop_footer
    %s13 = sadd.s32 1, %s9
  $region7: #{dqn_conv_forward.5} parent=0 // loop_footer_branch
    %8 = sbr.rel target = $region3
  $region8: #{dqn_conv_forward.5} parent=0 // loop_exit
    _

// kernel: dqn_conv_forward.6
$region0: #{dqn_conv_forward.6}
  #allocation0 [shape = 'u32[]', space=smem, size = 0x4, offset = 0x4, fixed_abs, tag = 'smem constant byte address 0x4 - core index']
  #allocation1 [shape = 'u32[144,128]{1,0:T(1,128)}', space=vmem, size = 0x12000, scoped, tag = 'internal scratch']
  %s0 = inlined_call_operand.vmem [shape: bf16[128,576], index: 0, kind: input, shape index: {}]
  %s1 = inlined_call_operand.vmem [shape: bf16[576,128], index: 1, kind: input, shape index: {}]
  %s2 = inlined_call_operand.vmem [shape: f32[1,128], index: 2, kind: input, shape index: {}]
  %s3 = inlined_call_operand.vmem [shape: bf16[128,128], index: 3, kind: output, shape index: {}]
  %s4 = sld [smem:[#allocation0]]
  $region45: #{dqn_conv_forward.6} parent=0
    _
  %s6 = ssub.s32 1, %s4
  %s7 = scalar_select 0, %s6, %s4
  loop: start=0, step=1, limit=4
  $region2: #{dqn_conv_forward.6} parent=0 // loop_pre_header
    _
  $region3: #{dqn_conv_forward.6} parent=0 // loop_header
    %s9 = sphi 0, %s13
    %p10 = scmp.ge.s32.totalorder %s9, 4
    %s19 = sphi 0, %s21
    %s22 = sphi 0, %s19
    %s23 = sphi 0, %s22
    %s39 = sphi 0, %s23
    %s43 = sphi 0, %s43
    %s45 = sphi 0, %s43
    %s46 = sphi 0, %s45
    %s60 = sphi 0, %s46
    %s64 = sphi 0, %s64
    %s66 = sphi 0, %s64
    %s67 = sphi 0, %s66
    %s81 = sphi 0, %s67
    %s87 = sphi 0, %s89
    %s90 = sphi 0, %s87
    %s91 = sphi 0, %s90
    %s107 = sphi 0, %s91
  $region4: #{dqn_conv_forward.6} parent=0 // loop_header_branch
    %12 = sbr.rel (%p10) target = $region8
  $region5: #{dqn_conv_forward.6} parent=0 // loop_body
    %s14 = ssub.s32 %s9, 1
    %s15 = ssub.s32 %s9, 2
    %s16 = sadd.s32 %s9, 1
    %s17 = ssub.s32 %s9, %s16
    %p18 = scmp.eq.s32.totalorder %s17, 0
    %s20 = sadd.s32 %s19, 1
    %s21 = scalar_select %p18, %s19, %s20
    %p24 = pneg %p18
    %p25 = scmp.eq.s32.totalorder %s9, 1
    %p26 = por %p24, %p25
    %p27 = scmp.ne.s32.totalorder %s19, %s22
    %p28 = scmp.eq.s32.totalorder %s9, 0
    %p29 = por %p27, %p28
    %p30 = scmp.ne.s32.totalorder %s19, %s22
    %p31 = scmp.eq.s32.totalorder %s14, 1
    %p32 = por %p30, %p31
    %p33 = scmp.ne.s32.totalorder %s22, %s23
    %p34 = scmp.eq.s32.totalorder %s14, 0
    %p35 = por %p33, %p34
    %p36 = scmp.ne.s32.totalorder %s22, %s23
    %p37 = scmp.eq.s32.totalorder %s15, 1
    %p38 = por %p36, %p37
    %p40 = scmp.ne.s32.totalorder %s23, %s39
    %p41 = scmp.eq.s32.totalorder %s15, 0
    %p42 = por %p40, %p41
    %s44 = sadd.s32 %s43, 1
    %p47 = scmp.eq.s32.totalorder %s9, 1
    %p48 = scmp.ne.s32.totalorder %s43, %s45
    %p49 = scmp.eq.s32.totalorder %s9, 0
    %p50 = por %p48, %p49
    %p51 = scmp.ne.s32.totalorder %s43, %s45
    %p52 = scmp.eq.s32.totalorder %s14, 1
    %p53 = por %p51, %p52
    %p54 = scmp.ne.s32.totalorder %s45, %s46
    %p55 = scmp.eq.s32.totalorder %s14, 0
    %p56 = por %p54, %p55
    %p57 = scmp.ne.s32.totalorder %s45, %s46
    %p58 = scmp.eq.s32.totalorder %s15, 1
    %p59 = por %p57, %p58
    %p61 = scmp.ne.s32.totalorder %s46, %s60
    %p62 = scmp.eq.s32.totalorder %s15, 0
    %p63 = por %p61, %p62
    %s65 = sadd.s32 %s64, 1
    %p68 = scmp.eq.s32.totalorder %s9, 1
    %p69 = scmp.ne.s32.totalorder %s64, %s66
    %p70 = scmp.eq.s32.totalorder %s9, 0
    %p71 = por %p69, %p70
    %p72 = scmp.ne.s32.totalorder %s64, %s66
    %p73 = scmp.eq.s32.totalorder %s14, 1
    %p74 = por %p72, %p73
    %p75 = scmp.ne.s32.totalorder %s66, %s67
    %p76 = scmp.eq.s32.totalorder %s14, 0
    %p77 = por %p75, %p76
    %p78 = scmp.ne.s32.totalorder %s66, %s67
    %p79 = scmp.eq.s32.totalorder %s15, 1
    %p80 = por %p78, %p79
    %p82 = scmp.ne.s32.totalorder %s67, %s81
    %p83 = scmp.eq.s32.totalorder %s15, 0
    %p84 = por %p82, %p83
    %s85 = ssub.s32 %s9, %s16
    %p86 = scmp.eq.s32.totalorder %s85, 0
    %s88 = sadd.s32 %s87, 1
    %s89 = scalar_select %p86, %s87, %s88
    %p92 = pneg %p86
    %p93 = scmp.eq.s32.totalorder %s9, 1
    %p94 = por %p92, %p93
    %p95 = scmp.ne.s32.totalorder %s87, %s90
    %p96 = scmp.eq.s32.totalorder %s9, 0
    %p97 = por %p95, %p96
    %p98 = scmp.ne.s32.totalorder %s87, %s90
    %p99 = scmp.eq.s32.totalorder %s14, 1
    %p100 = por %p98, %p99
    %p101 = scmp.ne.s32.totalorder %s90, %s91
    %p102 = scmp.eq.s32.totalorder %s14, 0
    %p103 = por %p101, %p102
    %p104 = scmp.ne.s32.totalorder %s90, %s91
    %p105 = scmp.eq.s32.totalorder %s15, 1
    %p106 = por %p104, %p105
    %p108 = scmp.ne.s32.totalorder %s91, %s107
    %p109 = scmp.eq.s32.totalorder %s15, 0
    %p110 = por %p108, %p109
    %p111 = scmp.le.s32.totalorder 1, %s9
    %p112 = scmp.lt.s32.totalorder %s9, 3
    %p113 = pnand %p111, %p112
    %p114 = pneg %p113
    // Predicated region
    $region9: #{dqn_conv_forward.6} parent=5 // pred_check
      _
    $region10: #{dqn_conv_forward.6} parent=5 // pred_check_branch
      %116 = sbr.rel (%p113) target = $region12
    $region11: #{dqn_conv_forward.6} parent=5 // pred_region
      %s117 = ssub.s32 %s9, 1
      // Predicated region
      $region13: #{dqn_conv_forward.6} parent=11 // pred_check
        %p118 = pneg %p56
      $region14: #{dqn_conv_forward.6} parent=11 // pred_check_branch
        %120 = sbr.rel (%p118) target = $region16
      $region15: #{dqn_conv_forward.6} parent=11 // pred_region
        _
      $region16: #{dqn_conv_forward.6} parent=11 // pred_fallthru
        _
      // Predicated region
      $region17: #{dqn_conv_forward.6} parent=11 // pred_check
        %p121 = pneg %p77
      $region18: #{dqn_conv_forward.6} parent=11 // pred_check_branch
        %123 = sbr.rel (%p121) target = $region20
      $region19: #{dqn_conv_forward.6} parent=11 // pred_region
        _
      $region20: #{dqn_conv_forward.6} parent=11 // pred_fallthru
        _
    $region12: #{dqn_conv_forward.6} parent=5 // pred_fallthru
      _
    %p124 = scmp.lt.s32.totalorder %s9, 2
    // Predicated region
    $region21: #{dqn_conv_forward.6} parent=5 // pred_check
      %p125 = pneg %p124
    $region22: #{dqn_conv_forward.6} parent=5 // pred_check_branch
      %127 = sbr.rel (%p125) target = $region24
    $region23: #{dqn_conv_forward.6} parent=5 // pred_region
      // Predicated region
      $region25: #{dqn_conv_forward.6} parent=23 // pred_check
        %p128 = pneg %p29
      $region26: #{dqn_conv_forward.6} parent=23 // pred_check_branch
        %130 = sbr.rel (%p128) target = $region28
      $region27: #{dqn_conv_forward.6} parent=23 // pred_region
        %s131 = smul.u32 8, %s9
        %p132 = scmp.lt.s32.totalorder %s131, 15
        %s133 = scalar_select %p132, %s131, 15
        %s134 = smul.addr %s133, 5
        %s135 = smul.addr %s134, 4
        %s136 = scalar_lea.vmem %s0, %s135
        %s137 = smul.u32 8, %s9
      $region28: #{dqn_conv_forward.6} parent=23 // pred_fallthru
        _
    $region24: #{dqn_conv_forward.6} parent=5 // pred_fallthru
      _
    %p138 = scmp.le.s32.totalorder 1, %s9
    %p139 = scmp.lt.s32.totalorder %s9, 3
    %p140 = pnand %p138, %p139
    %p141 = pneg %p140
    // Predicated region
    $region29: #{dqn_conv_forward.6} parent=5 // pred_check
      _
    $region30: #{dqn_conv_forward.6} parent=5 // pred_check_branch
      %143 = sbr.rel (%p140) target = $region32
    $region31: #{dqn_conv_forward.6} parent=5 // pred_region
      %s144 = ssub.s32 %s9, 1
      %s145 = smul.u32 8, %s14
      %p146 = scmp.lt.s32.totalorder %s145, 15
      %s147 = scalar_select %p146, %s145, 15
      %s148 = smul.addr %s147, 5
      %s149 = smul.addr %s148, 4
      %s150 = scalar_lea.vmem %s0, %s149
      %p151 = pneg %p35
      %p152 = pneg %p32
      %p153 = pneg %p56
      %p154 = pneg %p53
      %p155 = pneg %p77
      %p156 = pneg %p74
      %p157 = pneg %p103
      %p158 = pneg %p100
      %s159 = smul.u32 8, %s14
      %p160 = scmp.lt.s32.totalorder %s159, 15
      %s161 = scalar_select %p160, %s159, 15
      %s162 = smul.addr %s161, 4
      %s163 = scalar_lea.vmem %s3, %s162
      %s164 = smul.u32 8, %s14
      %p165 = scmp.lt.s32.totalorder %s164, 15
      %s166 = scalar_select %p165, %s164, 15
      %s167 = smul.addr %s166, 5
      %s168 = smul.addr %s167, 4
      %s169 = scalar_lea.vmem %s0, %s168
      %s170 = smul.u32 8, %s14
      %s171 = smul.u32 8, %s14
      %p172 = scmp.lt.s32.totalorder %s171, 15
      %s173 = scalar_select %p172, %s171, 15
      %s174 = smul.addr %s173, 4
      %s175 = scalar_lea.vmem %s3, %s174
      %s176 = smul.u32 8, %s14
      %v178 = vld [vmem:[%s169] sm:$0xff]
      %v179 = vld [vmem:[%s169 + $0x8] sm:$0xff]
      %v180 = vld [vmem:[%s169 + $0x10] sm:$0xf]
      %v181 = vld [vmem:[%s169 + $0x14] sm:$0xff]
      %v182 = vld [vmem:[%s169 + $0x1c] sm:$0xff]
      %v183 = vld [vmem:[%s169 + $0x24] sm:$0xf]
      %v184 = vld [vmem:[%s169 + $0x28] sm:$0xff]
      %v185 = vld [vmem:[%s169 + $0x30] sm:$0xff]
      %v186 = vld [vmem:[%s169 + $0x38] sm:$0xf]
      %v187 = vld [vmem:[%s169 + $0x3c] sm:$0xff]
      %v188 = vld [vmem:[%s169 + $0x44] sm:$0xff]
      %v189 = vld [vmem:[%s169 + $0x4c] sm:$0xf]
      %v190 = vld [vmem:[%s169 + $0x50] sm:$0xff]
      %v191 = vld [vmem:[%s169 + $0x58] sm:$0xff]
      %v192 = vld [vmem:[%s169 + $0x60] sm:$0xf]
      %v193 = vld [vmem:[%s169 + $0x64] sm:$0xff]
      %v194 = vld [vmem:[%s169 + $0x6c] sm:$0xff]
      %v195 = vld [vmem:[%s169 + $0x74] sm:$0xf]
      %v196 = vld [vmem:[%s169 + $0x78] sm:$0xff]
      %v197 = vld [vmem:[%s169 + $0x80] sm:$0xff]
      %v198 = vld [vmem:[%s169 + $0x88] sm:$0xf]
      %v199 = vld [vmem:[%s169 + $0x8c] sm:$0xff]
      %v200 = vld [vmem:[%s169 + $0x94] sm:$0xff]
      %v201 = vld [vmem:[%s169 + $0x9c] sm:$0xf]
      %v202 = vld [vmem:[%s1] sm:$0xf]
      %v203 = vld [vmem:[%s1 + $0x4] sm:$0xf]
      %v204 = vld [vmem:[%s1 + $0x8] sm:$0xf]
      %v205 = vld [vmem:[%s1 + $0xc] sm:$0xf]
      %v206 = vld [vmem:[%s1 + $0x10] sm:$0xf]
      %v207 = vld [vmem:[%s1 + $0x14] sm:$0xf]
      %v208 = vld [vmem:[%s1 + $0x18] sm:$0xf]
      %v209 = vld [vmem:[%s1 + $0x1c] sm:$0xf]
      %v210 = vld [vmem:[%s1 + $0x20] sm:$0xf]
      %v211 = vld [vmem:[%s1 + $0x24] sm:$0xf]
      %v212 = vld [vmem:[%s1 + $0x28] sm:$0xf]
      %v213 = vld [vmem:[%s1 + $0x2c] sm:$0xf]
      %v214 = vld [vmem:[%s1 + $0x30] sm:$0xf]
      %v215 = vld [vmem:[%s1 + $0x34] sm:$0xf]
      %v216 = vld [vmem:[%s1 + $0x38] sm:$0xf]
      %v217 = vld [vmem:[%s1 + $0x3c] sm:$0xf]
      %v218 = vld [vmem:[%s1 + $0x40] sm:$0xf]
      %v219 = vld [vmem:[%s1 + $0x44] sm:$0xf]
      %v220 = vld [vmem:[%s1 + $0x48] sm:$0xf]
      %v221 = vld [vmem:[%s1 + $0x4c] sm:$0xf]
      %v222 = vld [vmem:[%s1 + $0x50] sm:$0xf]
      %v223 = vld [vmem:[%s1 + $0x54] sm:$0xf]
      %v224 = vld [vmem:[%s1 + $0x58] sm:$0xf]
      %v225 = vld [vmem:[%s1 + $0x5c] sm:$0xf]
      %v226 = vld [vmem:[%s1 + $0x60] sm:$0xf]
      %v227 = vld [vmem:[%s1 + $0x64] sm:$0xf]
      %v228 = vld [vmem:[%s1 + $0x68] sm:$0xf]
      %v229 = vld [vmem:[%s1 + $0x6c] sm:$0xf]
      %v230 = vld [vmem:[%s1 + $0x70] sm:$0xf]
      %v231 = vld [vmem:[%s1 + $0x74] sm:$0xf]
      %v232 = vld [vmem:[%s1 + $0x78] sm:$0xf]
      %v233 = vld [vmem:[%s1 + $0x7c] sm:$0xf]
      %v234 = vld [vmem:[%s1 + $0x80] sm:$0xf]
      %v235 = vld [vmem:[%s1 + $0x84] sm:$0xf]
      %v236 = vld [vmem:[%s1 + $0x88] sm:$0xf]
      %v237 = vld [vmem:[%s1 + $0x8c] sm:$0xf]
      %v238 = vld [vmem:[%s1 + $0x90] sm:$0xf]
      %v239 = vld [vmem:[%s1 + $0x94] sm:$0xf]
      %v240 = vld [vmem:[%s1 + $0x98] sm:$0xf]
      %v241 = vld [vmem:[%s1 + $0x9c] sm:$0xf]
      %v242 = vld [vmem:[%s1 + $0xa0] sm:$0xf]
      %v243 = vld [vmem:[%s1 + $0xa4] sm:$0xf]
      %v244 = vld [vmem:[%s1 + $0xa8] sm:$0xf]
      %v245 = vld [vmem:[%s1 + $0xac] sm:$0xf]
      %v246 = vld [vmem:[%s1 + $0xb0] sm:$0xf]
      %v247 = vld [vmem:[%s1 + $0xb4] sm:$0xf]
      %v248 = vld [vmem:[%s1 + $0xb8] sm:$0xf]
      %v249 = vld [vmem:[%s1 + $0xbc] sm:$0xf]
      %v250 = vld [vmem:[%s1 + $0xc0] sm:$0xf]
      %v251 = vld [vmem:[%s1 + $0xc4] sm:$0xf]
      %v252 = vld [vmem:[%s1 + $0xc8] sm:$0xf]
      %v253 = vld [vmem:[%s1 + $0xcc] sm:$0xf]
      %v254 = vld [vmem:[%s1 + $0xd0] sm:$0xf]
      %v255 = vld [vmem:[%s1 + $0xd4] sm:$0xf]
      %v256 = vld [vmem:[%s1 + $0xd8] sm:$0xf]
      %v257 = vld [vmem:[%s1 + $0xdc] sm:$0xf]
      %v258 = vld [vmem:[%s1 + $0xe0] sm:$0xf]
      %v259 = vld [vmem:[%s1 + $0xe4] sm:$0xf]
      %v260 = vld [vmem:[%s1 + $0xe8] sm:$0xf]
      %v261 = vld [vmem:[%s1 + $0xec] sm:$0xf]
      %v262 = vld [vmem:[%s1 + $0xf0] sm:$0xf]
      %v263 = vld [vmem:[%s1 + $0xf4] sm:$0xf]
      %v264 = vld [vmem:[%s1 + $0xf8] sm:$0xf]
      %v265 = vld [vmem:[%s1 + $0xfc] sm:$0xf]
      %v266 = vld [vmem:[%s1 + $0x100] sm:$0xf]
      %v267 = vld [vmem:[%s1 + $0x104] sm:$0xf]
      %v268 = vld [vmem:[%s1 + $0x108] sm:$0xf]
      %v269 = vld [vmem:[%s1 + $0x10c] sm:$0xf]
      %v270 = vld [vmem:[%s1 + $0x110] sm:$0xf]
      %v271 = vld [vmem:[%s1 + $0x114] sm:$0xf]
      %v272 = vld [vmem:[%s1 + $0x118] sm:$0xf]
      %v273 = vld [vmem:[%s1 + $0x11c] sm:$0xf]
      %v274 = vld [vmem:[%s2] sm:$0x1]
      %v276 = vlaneseq
      %v277 = vshrl.u32 %v276, 7
      %v278 = vsub.s32 0, %v277
      %v279 = vrot.slane %v274, %v278
      %v305 = vunpack.c.l.b16 %v178
      %v306 = vunpack.c.h.b16 %v178
      %v307 = vunpack.c.l.b16 %v179
      %v308 = vunpack.c.h.b16 %v179
      %v309 = vunpack.c.l.b16 %v180
      %v310 = vunpack.c.l.b16 %v181
      %v311 = vunpack.c.h.b16 %v181
      %v312 = vunpack.c.l.b16 %v182
      %v313 = vunpack.c.h.b16 %v182
      %v314 = vunpack.c.l.b16 %v183
      %v315 = vunpack.c.l.b16 %v184
      %v316 = vunpack.c.h.b16 %v184
      %v317 = vunpack.c.l.b16 %v185
      %v318 = vunpack.c.h.b16 %v185
      %v319 = vunpack.c.l.b16 %v186
      %v320 = vunpack.c.l.b16 %v187
      %v321 = vunpack.c.h.b16 %v187
      %v322 = vunpack.c.l.b16 %v188
      %v323 = vunpack.c.h.b16 %v188
      %v324 = vunpack.c.l.b16 %v189
      %v325 = vunpack.c.l.b16 %v190
      %v326 = vunpack.c.h.b16 %v190
      %v327 = vunpack.c.l.b16 %v191
      %v328 = vunpack.c.h.b16 %v191
      %v329 = vunpack.c.l.b16 %v192
      %v330 = vunpack.c.l.b16 %v193
      %v331 = vunpack.c.h.b16 %v193
      %v332 = vunpack.c.l.b16 %v194
      %v333 = vunpack.c.h.b16 %v194
      %v334 = vunpack.c.l.b16 %v195
      %v335 = vunpack.c.l.b16 %v196
      %v336 = vunpack.c.h.b16 %v196
      %v337 = vunpack.c.l.b16 %v197
      %v338 = vunpack.c.h.b16 %v197
      %v339 = vunpack.c.l.b16 %v198
      %v340 = vunpack.c.l.b16 %v199
      %v341 = vunpack.c.h.b16 %v199
      %v342 = vunpack.c.l.b16 %v200
      %v343 = vunpack.c.h.b16 %v200
      %v344 = vunpack.c.l.b16 %v201
      %v345 = vpack.c.b16 %v310, %v305
      %v346 = vpack.c.b16 %v311, %v306
      %v347 = vpack.c.b16 %v312, %v307
      %v348 = vpack.c.b16 %v313, %v308
      %v349 = vpack.c.b16 %v314, %v309
      %v350 = vpack.c.b16 %v320, %v315
      %v351 = vpack.c.b16 %v321, %v316
      %v352 = vpack.c.b16 %v322, %v317
      %v353 = vpack.c.b16 %v323, %v318
      %v354 = vpack.c.b16 %v324, %v319
      %v355 = vpack.c.b16 %v330, %v325
      %v356 = vpack.c.b16 %v331, %v326
      %v357 = vpack.c.b16 %v332, %v327
      %v358 = vpack.c.b16 %v333, %v328
      %v359 = vpack.c.b16 %v334, %v329
      %v360 = vpack.c.b16 %v340, %v335
      %v361 = vpack.c.b16 %v341, %v336
      %v362 = vpack.c.b16 %v342, %v337
      %v363 = vpack.c.b16 %v343, %v338
      %v364 = vpack.c.b16 %v344, %v339
      %v453 = vunpack.c.l.b16 %v202
      %v454 = vunpack.c.l.b16 %v203
      %v455 = vunpack.c.l.b16 %v204
      %v456 = vunpack.c.l.b16 %v205
      %v457 = vunpack.c.l.b16 %v206
      %v458 = vunpack.c.l.b16 %v207
      %v459 = vunpack.c.l.b16 %v208
      %v460 = vunpack.c.l.b16 %v209
      %v461 = vunpack.c.l.b16 %v210
      %v462 = vunpack.c.l.b16 %v211
      %v463 = vunpack.c.l.b16 %v212
      %v464 = vunpack.c.l.b16 %v213
      %v465 = vunpack.c.l.b16 %v214
      %v466 = vunpack.c.l.b16 %v215
      %v467 = vunpack.c.l.b16 %v216
      %v468 = vunpack.c.l.b16 %v217
      %v469 = vunpack.c.l.b16 %v218
      %v470 = vunpack.c.l.b16 %v219
      %v471 = vunpack.c.l.b16 %v220
      %v472 = vunpack.c.l.b16 %v221
      %v473 = vunpack.c.l.b16 %v222
      %v474 = vunpack.c.l.b16 %v223
      %v475 = vunpack.c.l.b16 %v224
      %v476 = vunpack.c.l.b16 %v225
      %v477 = vunpack.c.l.b16 %v226
      %v478 = vunpack.c.l.b16 %v227
      %v479 = vunpack.c.l.b16 %v228
      %v480 = vunpack.c.l.b16 %v229
      %v481 = vunpack.c.l.b16 %v230
      %v482 = vunpack.c.l.b16 %v231
      %v483 = vunpack.c.l.b16 %v232
      %v484 = vunpack.c.l.b16 %v233
      %v485 = vunpack.c.l.b16 %v234
      %v486 = vunpack.c.l.b16 %v235
      %v487 = vunpack.c.l.b16 %v236
      %v488 = vunpack.c.l.b16 %v237
      %v489 = vunpack.c.l.b16 %v238
      %v490 = vunpack.c.l.b16 %v239
      %v491 = vunpack.c.l.b16 %v240
      %v492 = vunpack.c.l.b16 %v241
      %v493 = vunpack.c.l.b16 %v242
      %v494 = vunpack.c.l.b16 %v243
      %v495 = vunpack.c.l.b16 %v244
      %v496 = vunpack.c.l.b16 %v245
      %v497 = vunpack.c.l.b16 %v246
      %v498 = vunpack.c.l.b16 %v247
      %v499 = vunpack.c.l.b16 %v248
      %v500 = vunpack.c.l.b16 %v249
      %v501 = vunpack.c.l.b16 %v250
      %v502 = vunpack.c.l.b16 %v251
      %v503 = vunpack.c.l.b16 %v252
      %v504 = vunpack.c.l.b16 %v253
      %v505 = vunpack.c.l.b16 %v254
      %v506 = vunpack.c.l.b16 %v255
      %v507 = vunpack.c.l.b16 %v256
      %v508 = vunpack.c.l.b16 %v257
      %v509 = vunpack.c.l.b16 %v258
      %v510 = vunpack.c.l.b16 %v259
      %v511 = vunpack.c.l.b16 %v260
      %v512 = vunpack.c.l.b16 %v261
      %v513 = vunpack.c.l.b16 %v262
      %v514 = vunpack.c.l.b16 %v263
      %v515 = vunpack.c.l.b16 %v264
      %v516 = vunpack.c.l.b16 %v265
      %v517 = vunpack.c.l.b16 %v266
      %v518 = vunpack.c.l.b16 %v267
      %v519 = vunpack.c.l.b16 %v268
      %v520 = vunpack.c.l.b16 %v269
      %v521 = vunpack.c.l.b16 %v270
      %v522 = vunpack.c.l.b16 %v271
      %v523 = vunpack.c.l.b16 %v272
      %v524 = vunpack.c.l.b16 %v273
      %v525 = vpack.c.b16 %v454, %v453
      %v526 = vpack.c.b16 %v456, %v455
      %v527 = vpack.c.b16 %v458, %v457
      %v528 = vpack.c.b16 %v460, %v459
      %v529 = vpack.c.b16 %v462, %v461
      %v530 = vpack.c.b16 %v464, %v463
      %v531 = vpack.c.b16 %v466, %v465
      %v532 = vpack.c.b16 %v468, %v467
      %v533 = vpack.c.b16 %v470, %v469
      %v534 = vpack.c.b16 %v472, %v471
      %v535 = vpack.c.b16 %v474, %v473
      %v536 = vpack.c.b16 %v476, %v475
      %v537 = vpack.c.b16 %v478, %v477
      %v538 = vpack.c.b16 %v480, %v479
      %v539 = vpack.c.b16 %v482, %v481
      %v540 = vpack.c.b16 %v484, %v483
      %v541 = vpack.c.b16 %v486, %v485
      %v542 = vpack.c.b16 %v488, %v487
      %v543 = vpack.c.b16 %v490, %v489
      %v544 = vpack.c.b16 %v492, %v491
      %v545 = vpack.c.b16 %v494, %v493
      %v546 = vpack.c.b16 %v496, %v495
      %v547 = vpack.c.b16 %v498, %v497
      %v548 = vpack.c.b16 %v500, %v499
      %v549 = vpack.c.b16 %v502, %v501
      %v550 = vpack.c.b16 %v504, %v503
      %v551 = vpack.c.b16 %v506, %v505
      %v552 = vpack.c.b16 %v508, %v507
      %v553 = vpack.c.b16 %v510, %v509
      %v554 = vpack.c.b16 %v512, %v511
      %v555 = vpack.c.b16 %v514, %v513
      %v556 = vpack.c.b16 %v516, %v515
      %v557 = vpack.c.b16 %v518, %v517
      %v558 = vpack.c.b16 %v520, %v519
      %v559 = vpack.c.b16 %v522, %v521
      %v560 = vpack.c.b16 %v524, %v523
      %vm597 = vcmask 523264
      %v599 = vsel %vm597, %v349, 0
      %v602 = vsel %vm597, %v354, 0
      %v605 = vsel %vm597, %v359, 0
      %v608 = vsel %vm597, %v364, 0
      %610 = vmatprep.subr.bf16.mxu0 0
      %611 = vmatpush1.bf16.msra.mxu0 %v525
      %612 = vmatprep.subr.bf16.mxu0 0
      %613 = vmatpush1.bf16.msra.mxu0 %v526
      %614 = vmatprep.subr.bf16.mxu0 0
      %615 = vmatpush1.bf16.msra.mxu0 %v527
      %616 = vmatprep.subr.bf16.mxu0 0
      %617 = vmatpush1.bf16.msra.mxu0 %v528
      %618 = vmatprep.subr.bf16.mxu0 0
      %619 = vmatpush1.bf16.msra.mxu0 %v529
      %620 = vmatprep.subr.bf16.mxu0 0
      %621 = vmatpush1.bf16.msra.mxu0 %v530
      %622 = vmatprep.subr.bf16.mxu0 0
      %623 = vmatpush1.bf16.msra.mxu0 %v531
      %624 = vmatprep.subr.bf16.mxu0 0
      %625 = vmatpush1.bf16.msra.mxu0 %v532
      %626 = vmatprep.subr.bf16.mxu0 0
      %627 = vmatpush1.bf16.msra.mxu0 %v533
      %628 = vmatprep.subr.bf16.mxu0 0
      %629 = vmatpush1.bf16.msra.mxu0 %v534
      %630 = vmatprep.subr.bf16.mxu0 0
      %631 = vmatpush1.bf16.msra.mxu0 %v535
      %632 = vmatprep.subr.bf16.mxu0 0
      %633 = vmatpush1.bf16.msra.mxu0 %v536
      %634 = vmatprep.subr.bf16.mxu0 0
      %635 = vmatpush1.bf16.msra.mxu0 %v537
      %636 = vmatprep.subr.bf16.mxu0 0
      %637 = vmatpush1.bf16.msra.mxu0 %v538
      %638 = vmatprep.subr.bf16.mxu0 0
      %639 = vmatpush1.bf16.msra.mxu0 %v539
      %640 = vmatprep.subr.bf16.mxu0 0
      %641 = vmatpush1.bf16.msra.mxu0 %v540
      %642 = vmatprep.mubr.bf16.mxu0 %v346
      %643 = vmatmul.mubr.bf16.gmra.mrb[0].mxu0 %v345
      %v644 = vpop.f32.mrb[0].mxu0
      %v645 = vadd.f32 %v279, %v644
      %v646 = vpop.f32.mrb[0].mxu0
      %v647 = vpop.f32.mrb[0].mxu0
      %v648 = vadd.f32 %v279, %v647
      %v649 = vpop.f32.mrb[0].mxu0
      %650 = vmatprep.mubr.bf16.mxu0 %v351
      %651 = vmatmul.mubr.bf16.gmra.mrb[0].mxu0 %v350
      %v652 = vpop.f32.mrb[0].mxu0
      %v653 = vadd.f32 %v279, %v652
      %v654 = vpop.f32.mrb[0].mxu0
      %v655 = vpop.f32.mrb[0].mxu0
      %v656 = vadd.f32 %v279, %v655
      %v657 = vpop.f32.mrb[0].mxu0
      %658 = vmatprep.mubr.bf16.mxu0 %v356
      %659 = vmatmul.mubr.bf16.gmra.mrb[0].mxu0 %v355
      %v660 = vpop.f32.mrb[0].mxu0
      %v661 = vadd.f32 %v279, %v660
      %v662 = vpop.f32.mrb[0].mxu0
      %v663 = vpop.f32.mrb[0].mxu0
      %v664 = vadd.f32 %v279, %v663
      %v665 = vpop.f32.mrb[0].mxu0
      %666 = vmatprep.mubr.bf16.mxu0 %v361
      %667 = vmatmul.mubr.bf16.gmra.mrb[0].mxu0 %v360
      %v668 = vpop.f32.mrb[0].mxu0
      %v669 = vadd.f32 %v279, %v668
      %v670 = vpop.f32.mrb[0].mxu0
      %v671 = vpop.f32.mrb[0].mxu0
      %v672 = vadd.f32 %v279, %v671
      %v673 = vpop.f32.mrb[0].mxu0
      %674 = vdwg.mxu0
      %675 = vmatprep.subr.bf16.mxu0 0
      %676 = vmatpush1.bf16.msra.mxu0 %v541
      %677 = vmatprep.subr.bf16.mxu0 0
      %678 = vmatpush1.bf16.msra.mxu0 %v542
      %679 = vmatprep.subr.bf16.mxu0 0
      %680 = vmatpush1.bf16.msra.mxu0 %v543
      %681 = vmatprep.subr.bf16.mxu0 0
      %682 = vmatpush1.bf16.msra.mxu0 %v544
      %683 = vmatprep.subr.bf16.mxu0 0
      %684 = vmatpush1.bf16.msra.mxu0 %v545
      %685 = vmatprep.subr.bf16.mxu0 0
      %686 = vmatpush1.bf16.msra.mxu0 %v546
      %687 = vmatprep.subr.bf16.mxu0 0
      %688 = vmatpush1.bf16.msra.mxu0 %v547
      %689 = vmatprep.subr.bf16.mxu0 0
      %690 = vmatpush1.bf16.msra.mxu0 %v548
      %691 = vmatprep.subr.bf16.mxu0 0
      %692 = vmatpush1.bf16.msra.mxu0 %v549
      %693 = vmatprep.subr.bf16.mxu0 0
      %694 = vmatpush1.bf16.msra.mxu0 %v550
      %695 = vmatprep.subr.bf16.mxu0 0
      %696 = vmatpush1.bf16.msra.mxu0 %v551
      %697 = vmatprep.subr.bf16.mxu0 0
      %698 = vmatpush1.bf16.msra.mxu0 %v552
      %699 = vmatprep.subr.bf16.mxu0 0
      %700 = vmatpush1.bf16.msra.mxu0 %v553
      %701 = vmatprep.subr.bf16.mxu0 0
      %702 = vmatpush1.bf16.msra.mxu0 %v554
      %703 = vmatprep.subr.bf16.mxu0 0
      %704 = vmatpush1.bf16.msra.mxu0 %v555
      %705 = vmatprep.subr.bf16.mxu0 0
      %706 = vmatpush1.bf16.msra.mxu0 %v556
      %707 = vmatprep.mubr.bf16.mxu0 %v348
      %708 = vmatmul.mubr.bf16.gmra.mrb[0].mxu0 %v347
      %v709 = vpop.f32.mrb[0].mxu0
      %v710 = vadd.f32 %v645, %v709
      %v711 = vpop.f32.mrb[0].mxu0
      %v712 = vpop.f32.mrb[0].mxu0
      %v713 = vadd.f32 %v648, %v712
      %v714 = vpop.f32.mrb[0].mxu0
      %715 = vmatprep.mubr.bf16.mxu0 %v353
      %716 = vmatmul.mubr.bf16.gmra.mrb[0].mxu0 %v352
      %v717 = vpop.f32.mrb[0].mxu0
      %v718 = vadd.f32 %v653, %v717
      %v719 = vpop.f32.mrb[0].mxu0
      %v720 = vpop.f32.mrb[0].mxu0
      %v721 = vadd.f32 %v656, %v720
      %v722 = vpop.f32.mrb[0].mxu0
      %723 = vmatprep.mubr.bf16.mxu0 %v358
      %724 = vmatmul.mubr.bf16.gmra.mrb[0].mxu0 %v357
      %v725 = vpop.f32.mrb[0].mxu0
      %v726 = vadd.f32 %v661, %v725
      %v727 = vpop.f32.mrb[0].mxu0
      %v728 = vpop.f32.mrb[0].mxu0
      %v729 = vadd.f32 %v664, %v728
      %v730 = vpop.f32.mrb[0].mxu0
      %731 = vmatprep.mubr.bf16.mxu0 %v363
      %732 = vmatmul.mubr.bf16.gmra.mrb[0].mxu0 %v362
      %v733 = vpop.f32.mrb[0].mxu0
      %v734 = vadd.f32 %v669, %v733
      %v735 = vpop.f32.mrb[0].mxu0
      %v736 = vpop.f32.mrb[0].mxu0
      %v737 = vadd.f32 %v672, %v736
      %v738 = vpop.f32.mrb[0].mxu0
      %739 = vdwg.mxu0
      %740 = vmatprep.subr.bf16.mxu0 0
      %741 = vmatpush1.bf16.msra.mxu0 %v557
      %742 = vmatprep.subr.bf16.mxu0 0
      %743 = vmatpush1.bf16.msra.mxu0 %v558
      %744 = vmatprep.subr.bf16.mxu0 0
      %745 = vmatpush1.bf16.msra.mxu0 %v559
      %746 = vmatprep.subr.bf16.mxu0 0
      %747 = vmatpush1.bf16.msra.mxu0 %v560
      %748 = vmatprep.subr.bf16.mxu0 0
      %749 = vmatpush1.bf16.msra.mxu0 0
      %750 = vmatprep.subr.bf16.mxu0 0
      %751 = vmatpush1.bf16.msra.mxu0 0
      %752 = vmatprep.subr.bf16.mxu0 0
      %753 = vmatpush1.bf16.msra.mxu0 0
      %754 = vmatprep.subr.bf16.mxu0 0
      %755 = vmatpush1.bf16.msra.mxu0 0
      %756 = vmatprep.subr.bf16.mxu0 0
      %757 = vmatpush1.bf16.msra.mxu0 0
      %758 = vmatprep.subr.bf16.mxu0 0
      %759 = vmatpush1.bf16.msra.mxu0 0
      %760 = vmatprep.subr.bf16.mxu0 0
      %761 = vmatpush1.bf16.msra.mxu0 0
      %762 = vmatprep.subr.bf16.mxu0 0
      %763 = vmatpush1.bf16.msra.mxu0 0
      %764 = vmatprep.subr.bf16.mxu0 0
      %765 = vmatpush1.bf16.msra.mxu0 0
      %766 = vmatprep.subr.bf16.mxu0 0
      %767 = vmatpush1.bf16.msra.mxu0 0
      %768 = vmatprep.subr.bf16.mxu0 0
      %769 = vmatpush1.bf16.msra.mxu0 0
      %770 = vmatprep.subr.bf16.mxu0 0
      %771 = vmatpush1.bf16.msra.mxu0 0
      %772 = vmatprep.mubr.bf16.mxu0 0
      %773 = vmatmul.mubr.bf16.gmra.mrb[0].mxu0 %v599
      %v774 = vpop.f32.mrb[0].mxu0
      %v775 = vadd.f32 %v710, %v774
      %v776 = vpop.f32.mrb[0].mxu0
      %v777 = vpop.f32.mrb[0].mxu0
      %v778 = vadd.f32 %v713, %v777
      %v779 = vpop.f32.mrb[0].mxu0
      %780 = vmatprep.mubr.bf16.mxu0 0
      %781 = vmatmul.mubr.bf16.gmra.mrb[0].mxu0 %v602
      %v782 = vpop.f32.mrb[0].mxu0
      %v783 = vadd.f32 %v718, %v782
      %v784 = vpop.f32.mrb[0].mxu0
      %v785 = vpop.f32.mrb[0].mxu0
      %v786 = vadd.f32 %v721, %v785
      %v787 = vpop.f32.mrb[0].mxu0
      %788 = vmatprep.mubr.bf16.mxu0 0
      %789 = vmatmul.mubr.bf16.gmra.mrb[0].mxu0 %v605
      %v790 = vpop.f32.mrb[0].mxu0
      %v791 = vadd.f32 %v726, %v790
      %v792 = vpop.f32.mrb[0].mxu0
      %v793 = vpop.f32.mrb[0].mxu0
      %v794 = vadd.f32 %v729, %v793
      %v795 = vpop.f32.mrb[0].mxu0
      %796 = vmatprep.mubr.bf16.mxu0 0
      %797 = vmatmul.mubr.bf16.gmra.mrb[0].mxu0 %v608
      %v798 = vpop.f32.mrb[0].mxu0
      %v799 = vadd.f32 %v734, %v798
      %v800 = vpop.f32.mrb[0].mxu0
      %v801 = vpop.f32.mrb[0].mxu0
      %v802 = vadd.f32 %v737, %v801
      %v803 = vpop.f32.mrb[0].mxu0
      %804 = vdwg.mxu0
      %v805 = vmax.f32 %v775, 0.0
      %v806 = vmax.f32 %v778, 0.0
      %v807 = vmax.f32 %v783, 0.0
      %v808 = vmax.f32 %v786, 0.0
      %v809 = vmax.f32 %v791, 0.0
      %v810 = vmax.f32 %v794, 0.0
      %v811 = vmax.f32 %v799, 0.0
      %v812 = vmax.f32 %v802, 0.0
      %v813 = vpack.c.bf16 %v806, %v805
      %v814 = vpack.c.bf16 %v808, %v807
      %v815 = vpack.c.bf16 %v810, %v809
      %v816 = vpack.c.bf16 %v812, %v811
      %v821 = vunpack.c.l.b16 %v813
      %v822 = vunpack.c.h.b16 %v813
      %v823 = vunpack.c.l.b16 %v814
      %v824 = vunpack.c.h.b16 %v814
      %v825 = vunpack.c.l.b16 %v815
      %v826 = vunpack.c.h.b16 %v815
      %v827 = vunpack.c.l.b16 %v816
      %v828 = vunpack.c.h.b16 %v816
      %v829 = vpack.c.b16 %v821, %v821
      %v830 = vpack.c.b16 %v822, %v822
      %v831 = vpack.c.b16 %v823, %v823
      %v832 = vpack.c.b16 %v824, %v824
      %v833 = vpack.c.b16 %v825, %v825
      %v834 = vpack.c.b16 %v826, %v826
      %v835 = vpack.c.b16 %v827, %v827
      %v836 = vpack.c.b16 %v828, %v828
      %845 = vst [vmem:[%s175] sm:$0xf] %v829
      %846 = vst [vmem:[%s175 + $0x4] sm:$0xf] %v830
      %847 = vst [vmem:[%s175 + $0x8] sm:$0xf] %v831
      %848 = vst [vmem:[%s175 + $0xc] sm:$0xf] %v832
      %849 = vst [vmem:[%s175 + $0x10] sm:$0xf] %v833
      %850 = vst [vmem:[%s175 + $0x14] sm:$0xf] %v834
      %851 = vst [vmem:[%s175 + $0x18] sm:$0xf] %v835
      %852 = vst [vmem:[%s175 + $0x1c] sm:$0xf] %v836
      %s853 = smul.u32 8, %s14
      %p854 = scmp.lt.s32.totalorder %s853, 15
      %s855 = scalar_select %p854, %s853, 15
      %s856 = smul.addr %s855, 4
      %s857 = scalar_lea.vmem %s3, %s856
      // Predicated region
      $region33: #{dqn_conv_forward.6} parent=31 // pred_check
        %p858 = pneg %p100
      $region34: #{dqn_conv_forward.6} parent=31 // pred_check_branch
        %860 = sbr.rel (%p858) target = $region36
      $region35: #{dqn_conv_forward.6} parent=31 // pred_region
        %s861 = smul.u32 8, %s14
      $region36: #{dqn_conv_forward.6} parent=31 // pred_fallthru
        _
    $region32: #{dqn_conv_forward.6} parent=5 // pred_fallthru
      _
    %p862 = scmp.le.s32.totalorder 2, %s9
    // Predicated region
    $region37: #{dqn_conv_forward.6} parent=5 // pred_check
      %p863 = pneg %p862
    $region38: #{dqn_conv_forward.6} parent=5 // pred_check_branch
      %865 = sbr.rel (%p863) target = $region40
    $region39: #{dqn_conv_forward.6} parent=5 // pred_region
      %s866 = ssub.s32 %s9, 2
      // Predicated region
      $region41: #{dqn_conv_forward.6} parent=39 // pred_check
        %p867 = pneg %p106
      $region42: #{dqn_conv_forward.6} parent=39 // pred_check_branch
        %869 = sbr.rel (%p867) target = $region44
      $region43: #{dqn_conv_forward.6} parent=39 // pred_region
        %s870 = smul.u32 8, %s15
        %p871 = scmp.lt.s32.totalorder %s870, 15
        %s872 = scalar_select %p871, %s870, 15
        %s873 = smul.addr %s872, 4
        %s874 = scalar_lea.vmem %s3, %s873
      $region44: #{dqn_conv_forward.6} parent=39 // pred_fallthru
        _
    $region40: #{dqn_conv_forward.6} parent=5 // pred_fallthru
      _
  $region6: #{dqn_conv_forward.6} parent=0 // loop_footer
    %s13 = sadd.s32 1, %s9
  $region7: #{dqn_conv_forward.6} parent=0 // loop_footer_branch
    %8 = sbr.rel target = $region3
  $region8: #{dqn_conv_forward.6} parent=0 // loop_exit
    _

// kernel: dqn_conv_forward.7
$region0: #{dqn_conv_forward.7}
  #allocation0 [shape = 'u32[]', space=smem, size = 0x4, offset = 0x4, fixed_abs, tag = 'smem constant byte address 0x4 - core index']
  #allocation1 [shape = 'u32[144,128]{1,0:T(1,128)}', space=vmem, size = 0x12000, scoped, tag = 'internal scratch']
  %s0 = inlined_call_operand.vmem [shape: bf16[32,3136], index: 0, kind: input, shape index: {}]
  %s1 = inlined_call_operand.vmem [shape: bf16[3136,512], index: 1, kind: input, shape index: {}]
  %s2 = inlined_call_operand.vmem [shape: f32[1,512], index: 2, kind: input, shape index: {}]
  %s3 = inlined_call_operand.vmem [shape: bf16[512,128], index: 3, kind: input, shape index: {}]
  %s4 = inlined_call_operand.vmem [shape: f32[1,128], index: 4, kind: input, shape index: {}]
  %s5 = inlined_call_operand.vmem [shape: f32[32,128], index: 5, kind: output, shape index: {}]
  %s6 = sld [smem:[#allocation0]]
  $region53: #{dqn_conv_forward.7} parent=0
    _
  %s8 = ssub.s32 1, %s6
  %s9 = scalar_select 0, %s8, %s6
  loop: start=0, step=1, limit=4
  $region2: #{dqn_conv_forward.7} parent=0 // loop_pre_header
    _
  $region3: #{dqn_conv_forward.7} parent=0 // loop_header
    %s11 = sphi 0, %s15
    %p12 = scmp.ge.s32.totalorder %s11, 4
    %s21 = sphi 0, %s23
    %s24 = sphi 0, %s21
    %s25 = sphi 0, %s24
    %s41 = sphi 0, %s25
    %s45 = sphi 0, %s45
    %s47 = sphi 0, %s45
    %s48 = sphi 0, %s47
    %s62 = sphi 0, %s48
    %s66 = sphi 0, %s66
    %s68 = sphi 0, %s66
    %s69 = sphi 0, %s68
    %s83 = sphi 0, %s69
    %s87 = sphi 0, %s87
    %s89 = sphi 0, %s87
    %s90 = sphi 0, %s89
    %s104 = sphi 0, %s90
    %s108 = sphi 0, %s108
    %s110 = sphi 0, %s108
    %s111 = sphi 0, %s110
    %s125 = sphi 0, %s111
    %s131 = sphi 0, %s133
    %s134 = sphi 0, %s131
    %s135 = sphi 0, %s134
    %s151 = sphi 0, %s135
  $region4: #{dqn_conv_forward.7} parent=0 // loop_header_branch
    %14 = sbr.rel (%p12) target = $region8
  $region5: #{dqn_conv_forward.7} parent=0 // loop_body
    %s16 = ssub.s32 %s11, 1
    %s17 = ssub.s32 %s11, 2
    %s18 = sadd.s32 %s11, 1
    %s19 = ssub.s32 %s11, %s18
    %p20 = scmp.eq.s32.totalorder %s19, 0
    %s22 = sadd.s32 %s21, 1
    %s23 = scalar_select %p20, %s21, %s22
    %p26 = pneg %p20
    %p27 = scmp.eq.s32.totalorder %s11, 1
    %p28 = por %p26, %p27
    %p29 = scmp.ne.s32.totalorder %s21, %s24
    %p30 = scmp.eq.s32.totalorder %s11, 0
    %p31 = por %p29, %p30
    %p32 = scmp.ne.s32.totalorder %s21, %s24
    %p33 = scmp.eq.s32.totalorder %s16, 1
    %p34 = por %p32, %p33
    %p35 = scmp.ne.s32.totalorder %s24, %s25
    %p36 = scmp.eq.s32.totalorder %s16, 0
    %p37 = por %p35, %p36
    %p38 = scmp.ne.s32.totalorder %s24, %s25
    %p39 = scmp.eq.s32.totalorder %s17, 1
    %p40 = por %p38, %p39
    %p42 = scmp.ne.s32.totalorder %s25, %s41
    %p43 = scmp.eq.s32.totalorder %s17, 0
    %p44 = por %p42, %p43
    %s46 = sadd.s32 %s45, 1
    %p49 = scmp.eq.s32.totalorder %s11, 1
    %p50 = scmp.ne.s32.totalorder %s45, %s47
    %p51 = scmp.eq.s32.totalorder %s11, 0
    %p52 = por %p50, %p51
    %p53 = scmp.ne.s32.totalorder %s45, %s47
    %p54 = scmp.eq.s32.totalorder %s16, 1
    %p55 = por %p53, %p54
    %p56 = scmp.ne.s32.totalorder %s47, %s48
    %p57 = scmp.eq.s32.totalorder %s16, 0
    %p58 = por %p56, %p57
    %p59 = scmp.ne.s32.totalorder %s47, %s48
    %p60 = scmp.eq.s32.totalorder %s17, 1
    %p61 = por %p59, %p60
    %p63 = scmp.ne.s32.totalorder %s48, %s62
    %p64 = scmp.eq.s32.totalorder %s17, 0
    %p65 = por %p63, %p64
    %s67 = sadd.s32 %s66, 1
    %p70 = scmp.eq.s32.totalorder %s11, 1
    %p71 = scmp.ne.s32.totalorder %s66, %s68
    %p72 = scmp.eq.s32.totalorder %s11, 0
    %p73 = por %p71, %p72
    %p74 = scmp.ne.s32.totalorder %s66, %s68
    %p75 = scmp.eq.s32.totalorder %s16, 1
    %p76 = por %p74, %p75
    %p77 = scmp.ne.s32.totalorder %s68, %s69
    %p78 = scmp.eq.s32.totalorder %s16, 0
    %p79 = por %p77, %p78
    %p80 = scmp.ne.s32.totalorder %s68, %s69
    %p81 = scmp.eq.s32.totalorder %s17, 1
    %p82 = por %p80, %p81
    %p84 = scmp.ne.s32.totalorder %s69, %s83
    %p85 = scmp.eq.s32.totalorder %s17, 0
    %p86 = por %p84, %p85
    %s88 = sadd.s32 %s87, 1
    %p91 = scmp.eq.s32.totalorder %s11, 1
    %p92 = scmp.ne.s32.totalorder %s87, %s89
    %p93 = scmp.eq.s32.totalorder %s11, 0
    %p94 = por %p92, %p93
    %p95 = scmp.ne.s32.totalorder %s87, %s89
    %p96 = scmp.eq.s32.totalorder %s16, 1
    %p97 = por %p95, %p96
    %p98 = scmp.ne.s32.totalorder %s89, %s90
    %p99 = scmp.eq.s32.totalorder %s16, 0
    %p100 = por %p98, %p99
    %p101 = scmp.ne.s32.totalorder %s89, %s90
    %p102 = scmp.eq.s32.totalorder %s17, 1
    %p103 = por %p101, %p102
    %p105 = scmp.ne.s32.totalorder %s90, %s104
    %p106 = scmp.eq.s32.totalorder %s17, 0
    %p107 = por %p105, %p106
    %s109 = sadd.s32 %s108, 1
    %p112 = scmp.eq.s32.totalorder %s11, 1
    %p113 = scmp.ne.s32.totalorder %s108, %s110
    %p114 = scmp.eq.s32.totalorder %s11, 0
    %p115 = por %p113, %p114
    %p116 = scmp.ne.s32.totalorder %s108, %s110
    %p117 = scmp.eq.s32.totalorder %s16, 1
    %p118 = por %p116, %p117
    %p119 = scmp.ne.s32.totalorder %s110, %s111
    %p120 = scmp.eq.s32.totalorder %s16, 0
    %p121 = por %p119, %p120
    %p122 = scmp.ne.s32.totalorder %s110, %s111
    %p123 = scmp.eq.s32.totalorder %s17, 1
    %p124 = por %p122, %p123
    %p126 = scmp.ne.s32.totalorder %s111, %s125
    %p127 = scmp.eq.s32.totalorder %s17, 0
    %p128 = por %p126, %p127
    %s129 = ssub.s32 %s11, %s18
    %p130 = scmp.eq.s32.totalorder %s129, 0
    %s132 = sadd.s32 %s131, 1
    %s133 = scalar_select %p130, %s131, %s132
    %p136 = pneg %p130
    %p137 = scmp.eq.s32.totalorder %s11, 1
    %p138 = por %p136, %p137
    %p139 = scmp.ne.s32.totalorder %s131, %s134
    %p140 = scmp.eq.s32.totalorder %s11, 0
    %p141 = por %p139, %p140
    %p142 = scmp.ne.s32.totalorder %s131, %s134
    %p143 = scmp.eq.s32.totalorder %s16, 1
    %p144 = por %p142, %p143
    %p145 = scmp.ne.s32.totalorder %s134, %s135
    %p146 = scmp.eq.s32.totalorder %s16, 0
    %p147 = por %p145, %p146
    %p148 = scmp.ne.s32.totalorder %s134, %s135
    %p149 = scmp.eq.s32.totalorder %s17, 1
    %p150 = por %p148, %p149
    %p152 = scmp.ne.s32.totalorder %s135, %s151
    %p153 = scmp.eq.s32.totalorder %s17, 0
    %p154 = por %p152, %p153
    %p155 = scmp.le.s32.totalorder 1, %s11
    %p156 = scmp.lt.s32.totalorder %s11, 3
    %p157 = pnand %p155, %p156
    %p158 = pneg %p157
    // Predicated region
    $region9: #{dqn_conv_forward.7} parent=5 // pred_check
      _
    $region10: #{dqn_conv_forward.7} parent=5 // pred_check_branch
      %160 = sbr.rel (%p157) target = $region12
    $region11: #{dqn_conv_forward.7} parent=5 // pred_region
      %s161 = ssub.s32 %s11, 1
      // Predicated region
      $region13: #{dqn_conv_forward.7} parent=11 // pred_check
        %p162 = pneg %p58
      $region14: #{dqn_conv_forward.7} parent=11 // pred_check_branch
        %164 = sbr.rel (%p162) target = $region16
      $region15: #{dqn_conv_forward.7} parent=11 // pred_region
        _
      $region16: #{dqn_conv_forward.7} parent=11 // pred_fallthru
        _
      // Predicated region
      $region17: #{dqn_conv_forward.7} parent=11 // pred_check
        %p165 = pneg %p79
      $region18: #{dqn_conv_forward.7} parent=11 // pred_check_branch
        %167 = sbr.rel (%p165) target = $region20
      $region19: #{dqn_conv_forward.7} parent=11 // pred_region
        _
      $region20: #{dqn_conv_forward.7} parent=11 // pred_fallthru
        _
      // Predicated region
      $region21: #{dqn_conv_forward.7} parent=11 // pred_check
        %p168 = pneg %p100
      $region22: #{dqn_conv_forward.7} parent=11 // pred_check_branch
        %170 = sbr.rel (%p168) target = $region24
      $region23: #{dqn_conv_forward.7} parent=11 // pred_region
        _
      $region24: #{dqn_conv_forward.7} parent=11 // pred_fallthru
        _
      // Predicated region
      $region25: #{dqn_conv_forward.7} parent=11 // pred_check
        %p171 = pneg %p121
      $region26: #{dqn_conv_forward.7} parent=11 // pred_check_branch
        %173 = sbr.rel (%p171) target = $region28
      $region27: #{dqn_conv_forward.7} parent=11 // pred_region
        _
      $region28: #{dqn_conv_forward.7} parent=11 // pred_fallthru
        _
    $region12: #{dqn_conv_forward.7} parent=5 // pred_fallthru
      _
    %p174 = scmp.lt.s32.totalorder %s11, 2
    // Predicated region
    $region29: #{dqn_conv_forward.7} parent=5 // pred_check
      %p175 = pneg %p174
    $region30: #{dqn_conv_forward.7} parent=5 // pred_check_branch
      %177 = sbr.rel (%p175) target = $region32
    $region31: #{dqn_conv_forward.7} parent=5 // pred_region
      // Predicated region
      $region33: #{dqn_conv_forward.7} parent=31 // pred_check
        %p178 = pneg %p31
      $region34: #{dqn_conv_forward.7} parent=31 // pred_check_branch
        %180 = sbr.rel (%p178) target = $region36
      $region35: #{dqn_conv_forward.7} parent=31 // pred_region
        %s181 = smul.u32 2, %s11
        %p182 = scmp.lt.s32.totalorder %s181, 3
        %s183 = scalar_select %p182, %s181, 3
        %s184 = smul.addr %s183, 25
        %s185 = smul.addr %s184, 4
        %s186 = scalar_lea.vmem %s0, %s185
        %s187 = smul.u32 2, %s11
      $region36: #{dqn_conv_forward.7} parent=31 // pred_fallthru
        _
    $region32: #{dqn_conv_forward.7} parent=5 // pred_fallthru
      _
    %p188 = scmp.le.s32.totalorder 1, %s11
    %p189 = scmp.lt.s32.totalorder %s11, 3
    %p190 = pnand %p188, %p189
    %p191 = pneg %p190
    // Predicated region
    $region37: #{dqn_conv_forward.7} parent=5 // pred_check
      _
    $region38: #{dqn_conv_forward.7} parent=5 // pred_check_branch
      %193 = sbr.rel (%p190) target = $region40
    $region39: #{dqn_conv_forward.7} parent=5 // pred_region
      %s194 = ssub.s32 %s11, 1
      %s195 = smul.u32 2, %s16
      %p196 = scmp.lt.s32.totalorder %s195, 3
      %s197 = scalar_select %p196, %s195, 3
      %s198 = smul.addr %s197, 25
      %s199 = smul.addr %s198, 4
      %s200 = scalar_lea.vmem %s0, %s199
      %p201 = pneg %p37
      %p202 = pneg %p34
      %p203 = pneg %p58
      %p204 = pneg %p55
      %p205 = pneg %p79
      %p206 = pneg %p76
      %p207 = pneg %p100
      %p208 = pneg %p97
      %p209 = pneg %p121
      %p210 = pneg %p118
      %p211 = pneg %p147
      %p212 = pneg %p144
      %s213 = smul.u32 2, %s16
      %p214 = scmp.lt.s32.totalorder %s213, 3
      %s215 = scalar_select %p214, %s213, 3
      %s216 = smul.addr %s215, 8
      %s217 = scalar_lea.vmem %s5, %s216
      %s218 = smul.u32 2, %s16
      %p219 = scmp.lt.s32.totalorder %s218, 3
      %s220 = scalar_select %p219, %s218, 3
      %s221 = smul.addr %s220, 25
      %s222 = smul.addr %s221, 4
      %s223 = scalar_lea.vmem %s0, %s222
      %s224 = smul.u32 2, %s16
      %s225 = smul.u32 2, %s16
      %p226 = scmp.lt.s32.totalorder %s225, 3
      %s227 = scalar_select %p226, %s225, 3
      %s228 = smul.addr %s227, 8
      %s229 = scalar_lea.vmem %s5, %s228
      %s230 = smul.u32 2, %s16
      %v232 = vld [vmem:[%s223] sm:$0xff]
      %v233 = vld [vmem:[%s223 + $0x8] sm:$0xff]
      %v234 = vld [vmem:[%s223 + $0x10] sm:$0xff]
      %v235 = vld [vmem:[%s223 + $0x18] sm:$0xff]
      %v236 = vld [vmem:[%s223 + $0x20] sm:$0xff]
      %v237 = vld [vmem:[%s223 + $0x28] sm:$0xff]
      %v238 = vld [vmem:[%s223 + $0x30] sm:$0xff]
      %v239 = vld [vmem:[%s223 + $0x38] sm:$0xff]
      %v240 = vld [vmem:[%s223 + $0x40] sm:$0xff]
      %v241 = vld [vmem:[%s223 + $0x48] sm:$0xff]
      %v242 = vld [vmem:[%s223 + $0x50] sm:$0xff]
      %v243 = vld [vmem:[%s223 + $0x58] sm:$0xff]
      %v244 = vld [vmem:[%s223 + $0x60] sm:$0xf]
      %v245 = vld [vmem:[%s223 + $0x64] sm:$0xff]
      %v246 = vld [vmem:[%s223 + $0x6c] sm:$0xff]
      %v247 = vld [vmem:[%s223 + $0x74] sm:$0xff]
      %v248 = vld [vmem:[%s223 + $0x7c] sm:$0xff]
      %v249 = vld [vmem:[%s223 + $0x84] sm:$0xff]
      %v250 = vld [vmem:[%s223 + $0x8c] sm:$0xff]
      %v251 = vld [vmem:[%s223 + $0x94] sm:$0xff]
      %v252 = vld [vmem:[%s223 + $0x9c] sm:$0xff]
      %v253 = vld [vmem:[%s223 + $0xa4] sm:$0xff]
      %v254 = vld [vmem:[%s223 + $0xac] sm:$0xff]
      %v255 = vld [vmem:[%s223 + $0xb4] sm:$0xff]
      %v256 = vld [vmem:[%s223 + $0xbc] sm:$0xff]
      %v257 = vld [vmem:[%s223 + $0xc4] sm:$0xf]
      %v258 = vld [vmem:[%s1] sm:$0xff]
      %v259 = vld [vmem:[%s1 + $0x8] sm:$0xff]
      %v260 = vld [vmem:[%s1 + $0x10] sm:$0xff]
      %v261 = vld [vmem:[%s1 + $0x18] sm:$0xff]
      %v262 = vld [vmem:[%s1 + $0x20] sm:$0xff]
      %v263 = vld [vmem:[%s1 + $0x28] sm:$0xff]
      %v264 = vld [vmem:[%s1 + $0x30] sm:$0xff]
      %v265 = vld [vmem:[%s1 + $0x38] sm:$0xff]
      %v266 = vld [vmem:[%s1 + $0x40] sm:$0xff]
      %v267 = vld [vmem:[%s1 + $0x48] sm:$0xff]
      %v268 = vld [vmem:[%s1 + $0x50] sm:$0xff]
      %v269 = vld [vmem:[%s1 + $0x58] sm:$0xff]
      %v270 = vld [vmem:[%s1 + $0x60] sm:$0xff]
      %v271 = vld [vmem:[%s1 + $0x68] sm:$0xff]
      %v272 = vld [vmem:[%s1 + $0x70] sm:$0xff]
      %v273 = vld [vmem:[%s1 + $0x78] sm:$0xff]
      %v274 = vld [vmem:[%s1 + $0x80] sm:$0xff]
      %v275 = vld [vmem:[%s1 + $0x88] sm:$0xff]
      %v276 = vld [vmem:[%s1 + $0x90] sm:$0xff]
      %v277 = vld [vmem:[%s1 + $0x98] sm:$0xff]
      %v278 = vld [vmem:[%s1 + $0xa0] sm:$0xff]
      %v279 = vld [vmem:[%s1 + $0xa8] sm:$0xff]
      %v280 = vld [vmem:[%s1 + $0xb0] sm:$0xff]
      %v281 = vld [vmem:[%s1 + $0xb8] sm:$0xff]
      %v282 = vld [vmem:[%s1 + $0xc0] sm:$0xff]
      %v283 = vld [vmem:[%s1 + $0xc8] sm:$0xff]
      %v284 = vld [vmem:[%s1 + $0xd0] sm:$0xff]
      %v285 = vld [vmem:[%s1 + $0xd8] sm:$0xff]
      %v286 = vld [vmem:[%s1 + $0xe0] sm:$0xff]
      %v287 = vld [vmem:[%s1 + $0xe8] sm:$0xff]
      %v288 = vld [vmem:[%s1 + $0xf0] sm:$0xff]
      %v289 = vld [vmem:[%s1 + $0xf8] sm:$0xff]
      %v290 = vld [vmem:[%s1 + $0x100] sm:$0xff]
      %v291 = vld [vmem:[%s1 + $0x108] sm:$0xff]
      %v292 = vld [vmem:[%s1 + $0x110] sm:$0xff]
      %v293 = vld [vmem:[%s1 + $0x118] sm:$0xff]
      %v294 = vld [vmem:[%s1 + $0x120] sm:$0xff]
      %v295 = vld [vmem:[%s1 + $0x128] sm:$0xff]
      %v296 = vld [vmem:[%s1 + $0x130] sm:$0xff]
      %v297 = vld [vmem:[%s1 + $0x138] sm:$0xff]
      %v298 = vld [vmem:[%s1 + $0x140] sm:$0xff]
      %v299 = vld [vmem:[%s1 + $0x148] sm:$0xff]
      %v300 = vld [vmem:[%s1 + $0x150] sm:$0xff]
      %v301 = vld [vmem:[%s1 + $0x158] sm:$0xff]
      %v302 = vld [vmem:[%s1 + $0x160] sm:$0xff]
      %v303 = vld [vmem:[%s1 + $0x168] sm:$0xff]
      %v304 = vld [vmem:[%s1 + $0x170] sm:$0xff]
      %v305 = vld [vmem:[%s1 + $0x178] sm:$0xff]
      %v306 = vld [vmem:[%s1 + $0x180] sm:$0xff]
      %v307 = vld [vmem:[%s1 + $0x188] sm:$0xff]
      %v308 = vld [vmem:[%s1 + $0x190] sm:$0xff]
      %v309 = vld [vmem:[%s1 + $0x198] sm:$0xff]
      %v310 = vld [vmem:[%s1 + $0x1a0] sm:$0xff]
      %v311 = vld [vmem:[%s1 + $0x1a8] sm:$0xff]
      %v312 = vld [vmem:[%s1 + $0x1b0] sm:$0xff]
      %v313 = vld [vmem:[%s1 + $0x1b8] sm:$0xff]
      %v314 = vld [vmem:[%s1 + $0x1c0] sm:$0xff]
      %v315 = vld [vmem:[%s1 + $0x1c8] sm:$0xff]
      %v316 = vld [vmem:[%s1 + $0x1d0] sm:$0xff]
      %v317 = vld [vmem:[%s1 + $0x1d8] sm:$0xff]
      %v318 = vld [vmem:[%s1 + $0x1e0] sm:$0xff]
      %v319 = vld [vmem:[%s1 + $0x1e8] sm:$0xff]
      %v320 = vld [vmem:[%s1 + $0x1f0] sm:$0xff]
      %v321 = vld [vmem:[%s1 + $0x1f8] sm:$0xff]
      %v322 = vld [vmem:[%s1 + $0x200] sm:$0xff]
      %v323 = vld [vmem:[%s1 + $0x208] sm:$0xff]
      %v324 = vld [vmem:[%s1 + $0x210] sm:$0xff]
      %v325 = vld [vmem:[%s1 + $0x218] sm:$0xff]
      %v326 = vld [vmem:[%s1 + $0x220] sm:$0xff]
      %v327 = vld [vmem:[%s1 + $0x228] sm:$0xff]
      %v328 = vld [vmem:[%s1 + $0x230] sm:$0xff]
      %v329 = vld [vmem:[%s1 + $0x238] sm:$0xff]
      %v330 = vld [vmem:[%s1 + $0x240] sm:$0xff]
      %v331 = vld [vmem:[%s1 + $0x248] sm:$0xff]
      %v332 = vld [vmem:[%s1 + $0x250] sm:$0xff]
      %v333 = vld [vmem:[%s1 + $0x258] sm:$0xff]
      %v334 = vld [vmem:[%s1 + $0x260] sm:$0xff]
      %v335 = vld [vmem:[%s1 + $0x268] sm:$0xff]
      %v336 = vld [vmem:[%s1 + $0x270] sm:$0xff]
      %v337 = vld [vmem:[%s1 + $0x278] sm:$0xff]
      %v338 = vld [vmem:[%s1 + $0x280] sm:$0xff]
      %v339 = vld [vmem:[%s1 + $0x288] sm:$0xff]
      %v340 = vld [vmem:[%s1 + $0x290] sm:$0xff]
      %v341 = vld [vmem:[%s1 + $0x298] sm:$0xff]
      %v342 = vld [vmem:[%s1 + $0x2a0] sm:$0xff]
      %v343 = vld [vmem:[%s1 + $0x2a8] sm:$0xff]
      %v344 = vld [vmem:[%s1 + $0x2b0] sm:$0xff]
      %v345 = vld [vmem:[%s1 + $0x2b8] sm:$0xff]
      %v346 = vld [vmem:[%s1 + $0x2c0] sm:$0xff]
      %v347 = vld [vmem:[%s1 + $0x2c8] sm:$0xff]
      %v348 = vld [vmem:[%s1 + $0x2d0] sm:$0xff]
      %v349 = vld [vmem:[%s1 + $0x2d8] sm:$0xff]
      %v350 = vld [vmem:[%s1 + $0x2e0] sm:$0xff]
      %v351 = vld [vmem:[%s1 + $0x2e8] sm:$0xff]
      %v352 = vld [vmem:[%s1 + $0x2f0] sm:$0xff]
      %v353 = vld [vmem:[%s1 + $0x2f8] sm:$0xff]
      %v354 = vld [vmem:[%s1 + $0x300] sm:$0xff]
      %v355 = vld [vmem:[%s1 + $0x308] sm:$0xff]
      %v356 = vld [vmem:[%s1 + $0x310] sm:$0xff]
      %v357 = vld [vmem:[%s1 + $0x318] sm:$0xff]
      %v358 = vld [vmem:[%s1 + $0x320] sm:$0xff]
      %v359 = vld [vmem:[%s1 + $0x328] sm:$0xff]
      %v360 = vld [vmem:[%s1 + $0x330] sm:$0xff]
      %v361 = vld [vmem:[%s1 + $0x338] sm:$0xff]
      %v362 = vld [vmem:[%s1 + $0x340] sm:$0xff]
      %v363 = vld [vmem:[%s1 + $0x348] sm:$0xff]
      %v364 = vld [vmem:[%s1 + $0x350] sm:$0xff]
      %v365 = vld [vmem:[%s1 + $0x358] sm:$0xff]
      %v366 = vld [vmem:[%s1 + $0x360] sm:$0xff]
      %v367 = vld [vmem:[%s1 + $0x368] sm:$0xff]
      %v368 = vld [vmem:[%s1 + $0x370] sm:$0xff]
      %v369 = vld [vmem:[%s1 + $0x378] sm:$0xff]
      %v370 = vld [vmem:[%s1 + $0x380] sm:$0xff]
      %v371 = vld [vmem:[%s1 + $0x388] sm:$0xff]
      %v372 = vld [vmem:[%s1 + $0x390] sm:$0xff]
      %v373 = vld [vmem:[%s1 + $0x398] sm:$0xff]
      %v374 = vld [vmem:[%s1 + $0x3a0] sm:$0xff]
      %v375 = vld [vmem:[%s1 + $0x3a8] sm:$0xff]
      %v376 = vld [vmem:[%s1 + $0x3b0] sm:$0xff]
      %v377 = vld [vmem:[%s1 + $0x3b8] sm:$0xff]
      %v378 = vld [vmem:[%s1 + $0x3c0] sm:$0xff]
      %v379 = vld [vmem:[%s1 + $0x3c8] sm:$0xff]
      %v380 = vld [vmem:[%s1 + $0x3d0] sm:$0xff]
      %v381 = vld [vmem:[%s1 + $0x3d8] sm:$0xff]
      %v382 = vld [vmem:[%s1 + $0x3e0] sm:$0xff]
      %v383 = vld [vmem:[%s1 + $0x3e8] sm:$0xff]
      %v384 = vld [vmem:[%s1 + $0x3f0] sm:$0xff]
      %v385 = vld [vmem:[%s1 + $0x3f8] sm:$0xff]
      %v386 = vld [vmem:[%s1 + $0x400] sm:$0xff]
      %v387 = vld [vmem:[%s1 + $0x408] sm:$0xff]
      %v388 = vld [vmem:[%s1 + $0x410] sm:$0xff]
      %v389 = vld [vmem:[%s1 + $0x418] sm:$0xff]
      %v390 = vld [vmem:[%s1 + $0x420] sm:$0xff]
      %v391 = vld [vmem:[%s1 + $0x428] sm:$0xff]
      %v392 = vld [vmem:[%s1 + $0x430] sm:$0xff]
      %v393 = vld [vmem:[%s1 + $0x438] sm:$0xff]
      %v394 = vld [vmem:[%s1 + $0x440] sm:$0xff]
      %v395 = vld [vmem:[%s1 + $0x448] sm:$0xff]
      %v396 = vld [vmem:[%s1 + $0x450] sm:$0xff]
      %v397 = vld [vmem:[%s1 + $0x458] sm:$0xff]
      %v398 = vld [vmem:[%s1 + $0x460] sm:$0xff]
      %v399 = vld [vmem:[%s1 + $0x468] sm:$0xff]
      %v400 = vld [vmem:[%s1 + $0x470] sm:$0xff]
      %v401 = vld [vmem:[%s1 + $0x478] sm:$0xff]
      %v402 = vld [vmem:[%s1 + $0x480] sm:$0xff]
      %v403 = vld [vmem:[%s1 + $0x488] sm:$0xff]
      %v404 = vld [vmem:[%s1 + $0x490] sm:$0xff]
      %v405 = vld [vmem:[%s1 + $0x498] sm:$0xff]
      %v406 = vld [vmem:[%s1 + $0x4a0] sm:$0xff]
      %v407 = vld [vmem:[%s1 + $0x4a8] sm:$0xff]
      %v408 = vld [vmem:[%s1 + $0x4b0] sm:$0xff]
      %v409 = vld [vmem:[%s1 + $0x4b8] sm:$0xff]
      %v410 = vld [vmem:[%s1 + $0x4c0] sm:$0xff]
      %v411 = vld [vmem:[%s1 + $0x4c8] sm:$0xff]
      %v412 = vld [vmem:[%s1 + $0x4d0] sm:$0xff]
      %v413 = vld [vmem:[%s1 + $0x4d8] sm:$0xff]
      %v414 = vld [vmem:[%s1 + $0x4e0] sm:$0xff]
      %v415 = vld [vmem:[%s1 + $0x4e8] sm:$0xff]
      %v416 = vld [vmem:[%s1 + $0x4f0] sm:$0xff]
      %v417 = vld [vmem:[%s1 + $0x4f8] sm:$0xff]
      %v418 = vld [vmem:[%s1 + $0x500] sm:$0xff]
      %v419 = vld [vmem:[%s1 + $0x508] sm:$0xff]
      %v420 = vld [vmem:[%s1 + $0x510] sm:$0xff]
      %v421 = vld [vmem:[%s1 + $0x518] sm:$0xff]
      %v422 = vld [vmem:[%s1 + $0x520] sm:$0xff]
      %v423 = vld [vmem:[%s1 + $0x528] sm:$0xff]
      %v424 = vld [vmem:[%s1 + $0x530] sm:$0xff]
      %v425 = vld [vmem:[%s1 + $0x538] sm:$0xff]
      %v426 = vld [vmem:[%s1 + $0x540] sm:$0xff]
      %v427 = vld [vmem:[%s1 + $0x548] sm:$0xff]
      %v428 = vld [vmem:[%s1 + $0x550] sm:$0xff]
      %v429 = vld [vmem:[%s1 + $0x558] sm:$0xff]
      %v430 = vld [vmem:[%s1 + $0x560] sm:$0xff]
      %v431 = vld [vmem:[%s1 + $0x568] sm:$0xff]
      %v432 = vld [vmem:[%s1 + $0x570] sm:$0xff]
      %v433 = vld [vmem:[%s1 + $0x578] sm:$0xff]
      %v434 = vld [vmem:[%s1 + $0x580] sm:$0xff]
      %v435 = vld [vmem:[%s1 + $0x588] sm:$0xff]
      %v436 = vld [vmem:[%s1 + $0x590] sm:$0xff]
      %v437 = vld [vmem:[%s1 + $0x598] sm:$0xff]
      %v438 = vld [vmem:[%s1 + $0x5a0] sm:$0xff]
      %v439 = vld [vmem:[%s1 + $0x5a8] sm:$0xff]
      %v440 = vld [vmem:[%s1 + $0x5b0] sm:$0xff]
      %v441 = vld [vmem:[%s1 + $0x5b8] sm:$0xff]
      %v442 = vld [vmem:[%s1 + $0x5c0] sm:$0xff]
      %v443 = vld [vmem:[%s1 + $0x5c8] sm:$0xff]
      %v444 = vld [vmem:[%s1 + $0x5d0] sm:$0xff]
      %v445 = vld [vmem:[%s1 + $0x5d8] sm:$0xff]
      %v446 = vld [vmem:[%s1 + $0x5e0] sm:$0xff]
      %v447 = vld [vmem:[%s1 + $0x5e8] sm:$0xff]
      %v448 = vld [vmem:[%s1 + $0x5f0] sm:$0xff]
      %v449 = vld [vmem:[%s1 + $0x5f8] sm:$0xff]
      %v450 = vld [vmem:[%s1 + $0x600] sm:$0xff]
      %v451 = vld [vmem:[%s1 + $0x608] sm:$0xff]
      %v452 = vld [vmem:[%s1 + $0x610] sm:$0xff]
      %v453 = vld [vmem:[%s1 + $0x618] sm:$0xff]
      %v454 = vld [vmem:[%s1 + $0x620] sm:$0xff]
      %v455 = vld [vmem:[%s1 + $0x628] sm:$0xff]
      %v456 = vld [vmem:[%s1 + $0x630] sm:$0xff]
      %v457 = vld [vmem:[%s1 + $0x638] sm:$0xff]
      %v458 = vld [vmem:[%s1 + $0x640] sm:$0xff]
      %v459 = vld [vmem:[%s1 + $0x648] sm:$0xff]
      %v460 = vld [vmem:[%s1 + $0x650] sm:$0xff]
      %v461 = vld [vmem:[%s1 + $0x658] sm:$0xff]
      %v462 = vld [vmem:[%s1 + $0x660] sm:$0xff]
      %v463 = vld [vmem:[%s1 + $0x668] sm:$0xff]
      %v464 = vld [vmem:[%s1 + $0x670] sm:$0xff]
      %v465 = vld [vmem:[%s1 + $0x678] sm:$0xff]
      %v466 = vld [vmem:[%s1 + $0x680] sm:$0xff]
      %v467 = vld [vmem:[%s1 + $0x688] sm:$0xff]
      %v468 = vld [vmem:[%s1 + $0x690] sm:$0xff]
      %v469 = vld [vmem:[%s1 + $0x698] sm:$0xff]
      %v470 = vld [vmem:[%s1 + $0x6a0] sm:$0xff]
      %v471 = vld [vmem:[%s1 + $0x6a8] sm:$0xff]
      %v472 = vld [vmem:[%s1 + $0x6b0] sm:$0xff]
      %v473 = vld [vmem:[%s1 + $0x6b8] sm:$0xff]
      %v474 = vld [vmem:[%s1 + $0x6c0] sm:$0xff]
      %v475 = vld [vmem:[%s1 + $0x6c8] sm:$0xff]
      %v476 = vld [vmem:[%s1 + $0x6d0] sm:$0xff]
      %v477 = vld [vmem:[%s1 + $0x6d8] sm:$0xff]
      %v478 = vld [vmem:[%s1 + $0x6e0] sm:$0xff]
      %v479 = vld [vmem:[%s1 + $0x6e8] sm:$0xff]
      %v480 = vld [vmem:[%s1 + $0x6f0] sm:$0xff]
      %v481 = vld [vmem:[%s1 + $0x6f8] sm:$0xff]
      %v482 = vld [vmem:[%s1 + $0x700] sm:$0xff]
      %v483 = vld [vmem:[%s1 + $0x708] sm:$0xff]
      %v484 = vld [vmem:[%s1 + $0x710] sm:$0xff]
      %v485 = vld [vmem:[%s1 + $0x718] sm:$0xff]
      %v486 = vld [vmem:[%s1 + $0x720] sm:$0xff]
      %v487 = vld [vmem:[%s1 + $0x728] sm:$0xff]
      %v488 = vld [vmem:[%s1 + $0x730] sm:$0xff]
      %v489 = vld [vmem:[%s1 + $0x738] sm:$0xff]
      %v490 = vld [vmem:[%s1 + $0x740] sm:$0xff]
      %v491 = vld [vmem:[%s1 + $0x748] sm:$0xff]
      %v492 = vld [vmem:[%s1 + $0x750] sm:$0xff]
      %v493 = vld [vmem:[%s1 + $0x758] sm:$0xff]
      %v494 = vld [vmem:[%s1 + $0x760] sm:$0xff]
      %v495 = vld [vmem:[%s1 + $0x768] sm:$0xff]
      %v496 = vld [vmem:[%s1 + $0x770] sm:$0xff]
      %v497 = vld [vmem:[%s1 + $0x778] sm:$0xff]
      %v498 = vld [vmem:[%s1 + $0x780] sm:$0xff]
      %v499 = vld [vmem:[%s1 + $0x788] sm:$0xff]
      %v500 = vld [vmem:[%s1 + $0x790] sm:$0xff]
      %v501 = vld [vmem:[%s1 + $0x798] sm:$0xff]
      %v502 = vld [vmem:[%s1 + $0x7a0] sm:$0xff]
      %v503 = vld [vmem:[%s1 + $0x7a8] sm:$0xff]
      %v504 = vld [vmem:[%s1 + $0x7b0] sm:$0xff]
      %v505 = vld [vmem:[%s1 + $0x7b8] sm:$0xff]
      %v506 = vld [vmem:[%s1 + $0x7c0] sm:$0xff]
      %v507 = vld [vmem:[%s1 + $0x7c8] sm:$0xff]
      %v508 = vld [vmem:[%s1 + $0x7d0] sm:$0xff]
      %v509 = vld [vmem:[%s1 + $0x7d8] sm:$0xff]
      %v510 = vld [vmem:[%s1 + $0x7e0] sm:$0xff]
      %v511 = vld [vmem:[%s1 + $0x7e8] sm:$0xff]
      %v512 = vld [vmem:[%s1 + $0x7f0] sm:$0xff]
      %v513 = vld [vmem:[%s1 + $0x7f8] sm:$0xff]
      %v514 = vld [vmem:[%s1 + $0x800] sm:$0xff]
      %v515 = vld [vmem:[%s1 + $0x808] sm:$0xff]
      %v516 = vld [vmem:[%s1 + $0x810] sm:$0xff]
      %v517 = vld [vmem:[%s1 + $0x818] sm:$0xff]
      %v518 = vld [vmem:[%s1 + $0x820] sm:$0xff]
      %v519 = vld [vmem:[%s1 + $0x828] sm:$0xff]
      %v520 = vld [vmem:[%s1 + $0x830] sm:$0xff]
      %v521 = vld [vmem:[%s1 + $0x838] sm:$0xff]
      %v522 = vld [vmem:[%s1 + $0x840] sm:$0xff]
      %v523 = vld [vmem:[%s1 + $0x848] sm:$0xff]
      %v524 = vld [vmem:[%s1 + $0x850] sm:$0xff]
      %v525 = vld [vmem:[%s1 + $0x858] sm:$0xff]
      %v526 = vld [vmem:[%s1 + $0x860] sm:$0xff]
      %v527 = vld [vmem:[%s1 + $0x868] sm:$0xff]
      %v528 = vld [vmem:[%s1 + $0x870] sm:$0xff]
      %v529 = vld [vmem:[%s1 + $0x878] sm:$0xff]
      %v530 = vld [vmem:[%s1 + $0x880] sm:$0xff]
      %v531 = vld [vmem:[%s1 + $0x888] sm:$0xff]
      %v532 = vld [vmem:[%s1 + $0x890] sm:$0xff]
      %v533 = vld [vmem:[%s1 + $0x898] sm:$0xff]
      %v534 = vld [vmem:[%s1 + $0x8a0] sm:$0xff]
      %v535 = vld [vmem:[%s1 + $0x8a8] sm:$0xff]
      %v536 = vld [vmem:[%s1 + $0x8b0] sm:$0xff]
      %v537 = vld [vmem:[%s1 + $0x8b8] sm:$0xff]
      %v538 = vld [vmem:[%s1 + $0x8c0] sm:$0xff]
      %v539 = vld [vmem:[%s1 + $0x8c8] sm:$0xff]
      %v540 = vld [vmem:[%s1 + $0x8d0] sm:$0xff]
      %v541 = vld [vmem:[%s1 + $0x8d8] sm:$0xff]
      %v542 = vld [vmem:[%s1 + $0x8e0] sm:$0xff]
      %v543 = vld [vmem:[%s1 + $0x8e8] sm:$0xff]
      %v544 = vld [vmem:[%s1 + $0x8f0] sm:$0xff]
      %v545 = vld [vmem:[%s1 + $0x8f8] sm:$0xff]
      %v546 = vld [vmem:[%s1 + $0x900] sm:$0xff]
      %v547 = vld [vmem:[%s1 + $0x908] sm:$0xff]
      %v548 = vld [vmem:[%s1 + $0x910] sm:$0xff]
      %v549 = vld [vmem:[%s1 + $0x918] sm:$0xff]
      %v550 = vld [vmem:[%s1 + $0x920] sm:$0xff]
      %v551 = vld [vmem:[%s1 + $0x928] sm:$0xff]
      %v552 = vld [vmem:[%s1 + $0x930] sm:$0xff]
      %v553 = vld [vmem:[%s1 + $0x938] sm:$0xff]
      %v554 = vld [vmem:[%s1 + $0x940] sm:$0xff]
      %v555 = vld [vmem:[%s1 + $0x948] sm:$0xff]
      %v556 = vld [vmem:[%s1 + $0x950] sm:$0xff]
      %v557 = vld [vmem:[%s1 + $0x958] sm:$0xff]
      %v558 = vld [vmem:[%s1 + $0x960] sm:$0xff]
      %v559 = vld [vmem:[%s1 + $0x968] sm:$0xff]
      %v560 = vld [vmem:[%s1 + $0x970] sm:$0xff]
      %v561 = vld [vmem:[%s1 + $0x978] sm:$0xff]
      %v562 = vld [vmem:[%s1 + $0x980] sm:$0xff]
      %v563 = vld [vmem:[%s1 + $0x988] sm:$0xff]
      %v564 = vld [vmem:[%s1 + $0x990] sm:$0xff]
      %v565 = vld [vmem:[%s1 + $0x998] sm:$0xff]
      %v566 = vld [vmem:[%s1 + $0x9a0] sm:$0xff]
      %v567 = vld [vmem:[%s1 + $0x9a8] sm:$0xff]
      %v568 = vld [vmem:[%s1 + $0x9b0] sm:$0xff]
      %v569 = vld [vmem:[%s1 + $0x9b8] sm:$0xff]
      %v570 = vld [vmem:[%s1 + $0x9c0] sm:$0xff]
      %v571 = vld [vmem:[%s1 + $0x9c8] sm:$0xff]
      %v572 = vld [vmem:[%s1 + $0x9d0] sm:$0xff]
      %v573 = vld [vmem:[%s1 + $0x9d8] sm:$0xff]
      %v574 = vld [vmem:[%s1 + $0x9e0] sm:$0xff]
      %v575 = vld [vmem:[%s1 + $0x9e8] sm:$0xff]
      %v576 = vld [vmem:[%s1 + $0x9f0] sm:$0xff]
      %v577 = vld [vmem:[%s1 + $0x9f8] sm:$0xff]
      %v578 = vld [vmem:[%s1 + $0xa00] sm:$0xff]
      %v579 = vld [vmem:[%s1 + $0xa08] sm:$0xff]
      %v580 = vld [vmem:[%s1 + $0xa10] sm:$0xff]
      %v581 = vld [vmem:[%s1 + $0xa18] sm:$0xff]
      %v582 = vld [vmem:[%s1 + $0xa20] sm:$0xff]
      %v583 = vld [vmem:[%s1 + $0xa28] sm:$0xff]
      %v584 = vld [vmem:[%s1 + $0xa30] sm:$0xff]
      %v585 = vld [vmem:[%s1 + $0xa38] sm:$0xff]
      %v586 = vld [vmem:[%s1 + $0xa40] sm:$0xff]
      %v587 = vld [vmem:[%s1 + $0xa48] sm:$0xff]
      %v588 = vld [vmem:[%s1 + $0xa50] sm:$0xff]
      %v589 = vld [vmem:[%s1 + $0xa58] sm:$0xff]
      %v590 = vld [vmem:[%s1 + $0xa60] sm:$0xff]
      %v591 = vld [vmem:[%s1 + $0xa68] sm:$0xff]
      %v592 = vld [vmem:[%s1 + $0xa70] sm:$0xff]
      %v593 = vld [vmem:[%s1 + $0xa78] sm:$0xff]
      %v594 = vld [vmem:[%s1 + $0xa80] sm:$0xff]
      %v595 = vld [vmem:[%s1 + $0xa88] sm:$0xff]
      %v596 = vld [vmem:[%s1 + $0xa90] sm:$0xff]
      %v597 = vld [vmem:[%s1 + $0xa98] sm:$0xff]
      %v598 = vld [vmem:[%s1 + $0xaa0] sm:$0xff]
      %v599 = vld [vmem:[%s1 + $0xaa8] sm:$0xff]
      %v600 = vld [vmem:[%s1 + $0xab0] sm:$0xff]
      %v601 = vld [vmem:[%s1 + $0xab8] sm:$0xff]
      %v602 = vld [vmem:[%s1 + $0xac0] sm:$0xff]
      %v603 = vld [vmem:[%s1 + $0xac8] sm:$0xff]
      %v604 = vld [vmem:[%s1 + $0xad0] sm:$0xff]
      %v605 = vld [vmem:[%s1 + $0xad8] sm:$0xff]
      %v606 = vld [vmem:[%s1 + $0xae0] sm:$0xff]
      %v607 = vld [vmem:[%s1 + $0xae8] sm:$0xff]
      %v608 = vld [vmem:[%s1 + $0xaf0] sm:$0xff]
      %v609 = vld [vmem:[%s1 + $0xaf8] sm:$0xff]
      %v610 = vld [vmem:[%s1 + $0xb00] sm:$0xff]
      %v611 = vld [vmem:[%s1 + $0xb08] sm:$0xff]
      %v612 = vld [vmem:[%s1 + $0xb10] sm:$0xff]
      %v613 = vld [vmem:[%s1 + $0xb18] sm:$0xff]
      %v614 = vld [vmem:[%s1 + $0xb20] sm:$0xff]
      %v615 = vld [vmem:[%s1 + $0xb28] sm:$0xff]
      %v616 = vld [vmem:[%s1 + $0xb30] sm:$0xff]
      %v617 = vld [vmem:[%s1 + $0xb38] sm:$0xff]
      %v618 = vld [vmem:[%s1 + $0xb40] sm:$0xff]
      %v619 = vld [vmem:[%s1 + $0xb48] sm:$0xff]
      %v620 = vld [vmem:[%s1 + $0xb50] sm:$0xff]
      %v621 = vld [vmem:[%s1 + $0xb58] sm:$0xff]
      %v622 = vld [vmem:[%s1 + $0xb60] sm:$0xff]
      %v623 = vld [vmem:[%s1 + $0xb68] sm:$0xff]
      %v624 = vld [vmem:[%s1 + $0xb70] sm:$0xff]
      %v625 = vld [vmem:[%s1 + $0xb78] sm:$0xff]
      %v626 = vld [vmem:[%s1 + $0xb80] sm:$0xff]
      %v627 = vld [vmem:[%s1 + $0xb88] sm:$0xff]
      %v628 = vld [vmem:[%s1 + $0xb90] sm:$0xff]
      %v629 = vld [vmem:[%s1 + $0xb98] sm:$0xff]
      %v630 = vld [vmem:[%s1 + $0xba0] sm:$0xff]
      %v631 = vld [vmem:[%s1 + $0xba8] sm:$0xff]
      %v632 = vld [vmem:[%s1 + $0xbb0] sm:$0xff]
      %v633 = vld [vmem:[%s1 + $0xbb8] sm:$0xff]
      %v634 = vld [vmem:[%s1 + $0xbc0] sm:$0xff]
      %v635 = vld [vmem:[%s1 + $0xbc8] sm:$0xff]
      %v636 = vld [vmem:[%s1 + $0xbd0] sm:$0xff]
      %v637 = vld [vmem:[%s1 + $0xbd8] sm:$0xff]
      %v638 = vld [vmem:[%s1 + $0xbe0] sm:$0xff]
      %v639 = vld [vmem:[%s1 + $0xbe8] sm:$0xff]
      %v640 = vld [vmem:[%s1 + $0xbf0] sm:$0xff]
      %v641 = vld [vmem:[%s1 + $0xbf8] sm:$0xff]
      %v642 = vld [vmem:[%s1 + $0xc00] sm:$0xff]
      %v643 = vld [vmem:[%s1 + $0xc08] sm:$0xff]
      %v644 = vld [vmem:[%s1 + $0xc10] sm:$0xff]
      %v645 = vld [vmem:[%s1 + $0xc18] sm:$0xff]
      %v646 = vld [vmem:[%s1 + $0xc20] sm:$0xff]
      %v647 = vld [vmem:[%s1 + $0xc28] sm:$0xff]
      %v648 = vld [vmem:[%s1 + $0xc30] sm:$0xff]
      %v649 = vld [vmem:[%s1 + $0xc38] sm:$0xff]
      %v650 = vld [vmem:[%s1 + $0xc40] sm:$0xff]
      %v651 = vld [vmem:[%s1 + $0xc48] sm:$0xff]
      %v652 = vld [vmem:[%s1 + $0xc50] sm:$0xff]
      %v653 = vld [vmem:[%s1 + $0xc58] sm:$0xff]
      %v654 = vld [vmem:[%s1 + $0xc60] sm:$0xff]
      %v655 = vld [vmem:[%s1 + $0xc68] sm:$0xff]
      %v656 = vld [vmem:[%s1 + $0xc70] sm:$0xff]
      %v657 = vld [vmem:[%s1 + $0xc78] sm:$0xff]
      %v658 = vld [vmem:[%s1 + $0xc80] sm:$0xff]
      %v659 = vld [vmem:[%s1 + $0xc88] sm:$0xff]
      %v660 = vld [vmem:[%s1 + $0xc90] sm:$0xff]
      %v661 = vld [vmem:[%s1 + $0xc98] sm:$0xff]
      %v662 = vld [vmem:[%s1 + $0xca0] sm:$0xff]
      %v663 = vld [vmem:[%s1 + $0xca8] sm:$0xff]
      %v664 = vld [vmem:[%s1 + $0xcb0] sm:$0xff]
      %v665 = vld [vmem:[%s1 + $0xcb8] sm:$0xff]
      %v666 = vld [vmem:[%s1 + $0xcc0] sm:$0xff]
      %v667 = vld [vmem:[%s1 + $0xcc8] sm:$0xff]
      %v668 = vld [vmem:[%s1 + $0xcd0] sm:$0xff]
      %v669 = vld [vmem:[%s1 + $0xcd8] sm:$0xff]
      %v670 = vld [vmem:[%s1 + $0xce0] sm:$0xff]
      %v671 = vld [vmem:[%s1 + $0xce8] sm:$0xff]
      %v672 = vld [vmem:[%s1 + $0xcf0] sm:$0xff]
      %v673 = vld [vmem:[%s1 + $0xcf8] sm:$0xff]
      %v674 = vld [vmem:[%s1 + $0xd00] sm:$0xff]
      %v675 = vld [vmem:[%s1 + $0xd08] sm:$0xff]
      %v676 = vld [vmem:[%s1 + $0xd10] sm:$0xff]
      %v677 = vld [vmem:[%s1 + $0xd18] sm:$0xff]
      %v678 = vld [vmem:[%s1 + $0xd20] sm:$0xff]
      %v679 = vld [vmem:[%s1 + $0xd28] sm:$0xff]
      %v680 = vld [vmem:[%s1 + $0xd30] sm:$0xff]
      %v681 = vld [vmem:[%s1 + $0xd38] sm:$0xff]
      %v682 = vld [vmem:[%s1 + $0xd40] sm:$0xff]
      %v683 = vld [vmem:[%s1 + $0xd48] sm:$0xff]
      %v684 = vld [vmem:[%s1 + $0xd50] sm:$0xff]
      %v685 = vld [vmem:[%s1 + $0xd58] sm:$0xff]
      %v686 = vld [vmem:[%s1 + $0xd60] sm:$0xff]
      %v687 = vld [vmem:[%s1 + $0xd68] sm:$0xff]
      %v688 = vld [vmem:[%s1 + $0xd70] sm:$0xff]
      %v689 = vld [vmem:[%s1 + $0xd78] sm:$0xff]
      %v690 = vld [vmem:[%s1 + $0xd80] sm:$0xff]
      %v691 = vld [vmem:[%s1 + $0xd88] sm:$0xff]
      %v692 = vld [vmem:[%s1 + $0xd90] sm:$0xff]
      %v693 = vld [vmem:[%s1 + $0xd98] sm:$0xff]
      %v694 = vld [vmem:[%s1 + $0xda0] sm:$0xff]
      %v695 = vld [vmem:[%s1 + $0xda8] sm:$0xff]
      %v696 = vld [vmem:[%s1 + $0xdb0] sm:$0xff]
      %v697 = vld [vmem:[%s1 + $0xdb8] sm:$0xff]
      %v698 = vld [vmem:[%s1 + $0xdc0] sm:$0xff]
      %v699 = vld [vmem:[%s1 + $0xdc8] sm:$0xff]
      %v700 = vld [vmem:[%s1 + $0xdd0] sm:$0xff]
      %v701 = vld [vmem:[%s1 + $0xdd8] sm:$0xff]
      %v702 = vld [vmem:[%s1 + $0xde0] sm:$0xff]
      %v703 = vld [vmem:[%s1 + $0xde8] sm:$0xff]
      %v704 = vld [vmem:[%s1 + $0xdf0] sm:$0xff]
      %v705 = vld [vmem:[%s1 + $0xdf8] sm:$0xff]
      %v706 = vld [vmem:[%s1 + $0xe00] sm:$0xff]
      %v707 = vld [vmem:[%s1 + $0xe08] sm:$0xff]
      %v708 = vld [vmem:[%s1 + $0xe10] sm:$0xff]
      %v709 = vld [vmem:[%s1 + $0xe18] sm:$0xff]
      %v710 = vld [vmem:[%s1 + $0xe20] sm:$0xff]
      %v711 = vld [vmem:[%s1 + $0xe28] sm:$0xff]
      %v712 = vld [vmem:[%s1 + $0xe30] sm:$0xff]
      %v713 = vld [vmem:[%s1 + $0xe38] sm:$0xff]
      %v714 = vld [vmem:[%s1 + $0xe40] sm:$0xff]
      %v715 = vld [vmem:[%s1 + $0xe48] sm:$0xff]
      %v716 = vld [vmem:[%s1 + $0xe50] sm:$0xff]
      %v717 = vld [vmem:[%s1 + $0xe58] sm:$0xff]
      %v718 = vld [vmem:[%s1 + $0xe60] sm:$0xff]
      %v719 = vld [vmem:[%s1 + $0xe68] sm:$0xff]
      %v720 = vld [vmem:[%s1 + $0xe70] sm:$0xff]
      %v721 = vld [vmem:[%s1 + $0xe78] sm:$0xff]
      %v722 = vld [vmem:[%s1 + $0xe80] sm:$0xff]
      %v723 = vld [vmem:[%s1 + $0xe88] sm:$0xff]
      %v724 = vld [vmem:[%s1 + $0xe90] sm:$0xff]
      %v725 = vld [vmem:[%s1 + $0xe98] sm:$0xff]
      %v726 = vld [vmem:[%s1 + $0xea0] sm:$0xff]
      %v727 = vld [vmem:[%s1 + $0xea8] sm:$0xff]
      %v728 = vld [vmem:[%s1 + $0xeb0] sm:$0xff]
      %v729 = vld [vmem:[%s1 + $0xeb8] sm:$0xff]
      %v730 = vld [vmem:[%s1 + $0xec0] sm:$0xff]
      %v731 = vld [vmem:[%s1 + $0xec8] sm:$0xff]
      %v732 = vld [vmem:[%s1 + $0xed0] sm:$0xff]
      %v733 = vld [vmem:[%s1 + $0xed8] sm:$0xff]
      %v734 = vld [vmem:[%s1 + $0xee0] sm:$0xff]
      %v735 = vld [vmem:[%s1 + $0xee8] sm:$0xff]
      %v736 = vld [vmem:[%s1 + $0xef0] sm:$0xff]
      %v737 = vld [vmem:[%s1 + $0xef8] sm:$0xff]
      %v738 = vld [vmem:[%s1 + $0xf00] sm:$0xff]
      %v739 = vld [vmem:[%s1 + $0xf08] sm:$0xff]
      %v740 = vld [vmem:[%s1 + $0xf10] sm:$0xff]
      %v741 = vld [vmem:[%s1 + $0xf18] sm:$0xff]
      %v742 = vld [vmem:[%s1 + $0xf20] sm:$0xff]
      %v743 = vld [vmem:[%s1 + $0xf28] sm:$0xff]
      %v744 = vld [vmem:[%s1 + $0xf30] sm:$0xff]
      %v745 = vld [vmem:[%s1 + $0xf38] sm:$0xff]
      %v746 = vld [vmem:[%s1 + $0xf40] sm:$0xff]
      %v747 = vld [vmem:[%s1 + $0xf48] sm:$0xff]
      %v748 = vld [vmem:[%s1 + $0xf50] sm:$0xff]
      %v749 = vld [vmem:[%s1 + $0xf58] sm:$0xff]
      %v750 = vld [vmem:[%s1 + $0xf60] sm:$0xff]
      %v751 = vld [vmem:[%s1 + $0xf68] sm:$0xff]
      %v752 = vld [vmem:[%s1 + $0xf70] sm:$0xff]
      %v753 = vld [vmem:[%s1 + $0xf78] sm:$0xff]
      %v754 = vld [vmem:[%s1 + $0xf80] sm:$0xff]
      %v755 = vld [vmem:[%s1 + $0xf88] sm:$0xff]
      %v756 = vld [vmem:[%s1 + $0xf90] sm:$0xff]
      %v757 = vld [vmem:[%s1 + $0xf98] sm:$0xff]
      %v758 = vld [vmem:[%s1 + $0xfa0] sm:$0xff]
      %v759 = vld [vmem:[%s1 + $0xfa8] sm:$0xff]
      %v760 = vld [vmem:[%s1 + $0xfb0] sm:$0xff]
      %v761 = vld [vmem:[%s1 + $0xfb8] sm:$0xff]
      %v762 = vld [vmem:[%s1 + $0xfc0] sm:$0xff]
      %v763 = vld [vmem:[%s1 + $0xfc8] sm:$0xff]
      %v764 = vld [vmem:[%s1 + $0xfd0] sm:$0xff]
      %v765 = vld [vmem:[%s1 + $0xfd8] sm:$0xff]
      %v766 = vld [vmem:[%s1 + $0xfe0] sm:$0xff]
      %v767 = vld [vmem:[%s1 + $0xfe8] sm:$0xff]
      %v768 = vld [vmem:[%s1 + $0xff0] sm:$0xff]
      %v769 = vld [vmem:[%s1 + $0xff8] sm:$0xff]
      %v770 = vld [vmem:[%s1 + $0x1000] sm:$0xff]
      %v771 = vld [vmem:[%s1 + $0x1008] sm:$0xff]
      %v772 = vld [vmem:[%s1 + $0x1010] sm:$0xff]
      %v773 = vld [vmem:[%s1 + $0x1018] sm:$0xff]
      %v774 = vld [vmem:[%s1 + $0x1020] sm:$0xff]
      %v775 = vld [vmem:[%s1 + $0x1028] sm:$0xff]
      %v776 = vld [vmem:[%s1 + $0x1030] sm:$0xff]
      %v777 = vld [vmem:[%s1 + $0x1038] sm:$0xff]
      %v778 = vld [vmem:[%s1 + $0x1040] sm:$0xff]
      %v779 = vld [vmem:[%s1 + $0x1048] sm:$0xff]
      %v780 = vld [vmem:[%s1 + $0x1050] sm:$0xff]
      %v781 = vld [vmem:[%s1 + $0x1058] sm:$0xff]
      %v782 = vld [vmem:[%s1 + $0x1060] sm:$0xff]
      %v783 = vld [vmem:[%s1 + $0x1068] sm:$0xff]
      %v784 = vld [vmem:[%s1 + $0x1070] sm:$0xff]
      %v785 = vld [vmem:[%s1 + $0x1078] sm:$0xff]
      %v786 = vld [vmem:[%s1 + $0x1080] sm:$0xff]
      %v787 = vld [vmem:[%s1 + $0x1088] sm:$0xff]
      %v788 = vld [vmem:[%s1 + $0x1090] sm:$0xff]
      %v789 = vld [vmem:[%s1 + $0x1098] sm:$0xff]
      %v790 = vld [vmem:[%s1 + $0x10a0] sm:$0xff]
      %v791 = vld [vmem:[%s1 + $0x10a8] sm:$0xff]
      %v792 = vld [vmem:[%s1 + $0x10b0] sm:$0xff]
      %v793 = vld [vmem:[%s1 + $0x10b8] sm:$0xff]
      %v794 = vld [vmem:[%s1 + $0x10c0] sm:$0xff]
      %v795 = vld [vmem:[%s1 + $0x10c8] sm:$0xff]
      %v796 = vld [vmem:[%s1 + $0x10d0] sm:$0xff]
      %v797 = vld [vmem:[%s1 + $0x10d8] sm:$0xff]
      %v798 = vld [vmem:[%s1 + $0x10e0] sm:$0xff]
      %v799 = vld [vmem:[%s1 + $0x10e8] sm:$0xff]
      %v800 = vld [vmem:[%s1 + $0x10f0] sm:$0xff]
      %v801 = vld [vmem:[%s1 + $0x10f8] sm:$0xff]
      %v802 = vld [vmem:[%s1 + $0x1100] sm:$0xff]
      %v803 = vld [vmem:[%s1 + $0x1108] sm:$0xff]
      %v804 = vld [vmem:[%s1 + $0x1110] sm:$0xff]
      %v805 = vld [vmem:[%s1 + $0x1118] sm:$0xff]
      %v806 = vld [vmem:[%s1 + $0x1120] sm:$0xff]
      %v807 = vld [vmem:[%s1 + $0x1128] sm:$0xff]
      %v808 = vld [vmem:[%s1 + $0x1130] sm:$0xff]
      %v809 = vld [vmem:[%s1 + $0x1138] sm:$0xff]
      %v810 = vld [vmem:[%s1 + $0x1140] sm:$0xff]
      %v811 = vld [vmem:[%s1 + $0x1148] sm:$0xff]
      %v812 = vld [vmem:[%s1 + $0x1150] sm:$0xff]
      %v813 = vld [vmem:[%s1 + $0x1158] sm:$0xff]
      %v814 = vld [vmem:[%s1 + $0x1160] sm:$0xff]
      %v815 = vld [vmem:[%s1 + $0x1168] sm:$0xff]
      %v816 = vld [vmem:[%s1 + $0x1170] sm:$0xff]
      %v817 = vld [vmem:[%s1 + $0x1178] sm:$0xff]
      %v818 = vld [vmem:[%s1 + $0x1180] sm:$0xff]
      %v819 = vld [vmem:[%s1 + $0x1188] sm:$0xff]
      %v820 = vld [vmem:[%s1 + $0x1190] sm:$0xff]
      %v821 = vld [vmem:[%s1 + $0x1198] sm:$0xff]
      %v822 = vld [vmem:[%s1 + $0x11a0] sm:$0xff]
      %v823 = vld [vmem:[%s1 + $0x11a8] sm:$0xff]
      %v824 = vld [vmem:[%s1 + $0x11b0] sm:$0xff]
      %v825 = vld [vmem:[%s1 + $0x11b8] sm:$0xff]
      %v826 = vld [vmem:[%s1 + $0x11c0] sm:$0xff]
      %v827 = vld [vmem:[%s1 + $0x11c8] sm:$0xff]
      %v828 = vld [vmem:[%s1 + $0x11d0] sm:$0xff]
      %v829 = vld [vmem:[%s1 + $0x11d8] sm:$0xff]
      %v830 = vld [vmem:[%s1 + $0x11e0] sm:$0xff]
      %v831 = vld [vmem:[%s1 + $0x11e8] sm:$0xff]
      %v832 = vld [vmem:[%s1 + $0x11f0] sm:$0xff]
      %v833 = vld [vmem:[%s1 + $0x11f8] sm:$0xff]
      %v834 = vld [vmem:[%s1 + $0x1200] sm:$0xff]
      %v835 = vld [vmem:[%s1 + $0x1208] sm:$0xff]
      %v836 = vld [vmem:[%s1 + $0x1210] sm:$0xff]
      %v837 = vld [vmem:[%s1 + $0x1218] sm:$0xff]
      %v838 = vld [vmem:[%s1 + $0x1220] sm:$0xff]
      %v839 = vld [vmem:[%s1 + $0x1228] sm:$0xff]
      %v840 = vld [vmem:[%s1 + $0x1230] sm:$0xff]
      %v841 = vld [vmem:[%s1 + $0x1238] sm:$0xff]
      %v842 = vld [vmem:[%s1 + $0x1240] sm:$0xff]
      %v843 = vld [vmem:[%s1 + $0x1248] sm:$0xff]
      %v844 = vld [vmem:[%s1 + $0x1250] sm:$0xff]
      %v845 = vld [vmem:[%s1 + $0x1258] sm:$0xff]
      %v846 = vld [vmem:[%s1 + $0x1260] sm:$0xff]
      %v847 = vld [vmem:[%s1 + $0x1268] sm:$0xff]
      %v848 = vld [vmem:[%s1 + $0x1270] sm:$0xff]
      %v849 = vld [vmem:[%s1 + $0x1278] sm:$0xff]
      %v850 = vld [vmem:[%s1 + $0x1280] sm:$0xff]
      %v851 = vld [vmem:[%s1 + $0x1288] sm:$0xff]
      %v852 = vld [vmem:[%s1 + $0x1290] sm:$0xff]
      %v853 = vld [vmem:[%s1 + $0x1298] sm:$0xff]
      %v854 = vld [vmem:[%s1 + $0x12a0] sm:$0xff]
      %v855 = vld [vmem:[%s1 + $0x12a8] sm:$0xff]
      %v856 = vld [vmem:[%s1 + $0x12b0] sm:$0xff]
      %v857 = vld [vmem:[%s1 + $0x12b8] sm:$0xff]
      %v858 = vld [vmem:[%s1 + $0x12c0] sm:$0xff]
      %v859 = vld [vmem:[%s1 + $0x12c8] sm:$0xff]
      %v860 = vld [vmem:[%s1 + $0x12d0] sm:$0xff]
      %v861 = vld [vmem:[%s1 + $0x12d8] sm:$0xff]
      %v862 = vld [vmem:[%s1 + $0x12e0] sm:$0xff]
      %v863 = vld [vmem:[%s1 + $0x12e8] sm:$0xff]
      %v864 = vld [vmem:[%s1 + $0x12f0] sm:$0xff]
      %v865 = vld [vmem:[%s1 + $0x12f8] sm:$0xff]
      %v866 = vld [vmem:[%s1 + $0x1300] sm:$0xff]
      %v867 = vld [vmem:[%s1 + $0x1308] sm:$0xff]
      %v868 = vld [vmem:[%s1 + $0x1310] sm:$0xff]
      %v869 = vld [vmem:[%s1 + $0x1318] sm:$0xff]
      %v870 = vld [vmem:[%s1 + $0x1320] sm:$0xff]
      %v871 = vld [vmem:[%s1 + $0x1328] sm:$0xff]
      %v872 = vld [vmem:[%s1 + $0x1330] sm:$0xff]
      %v873 = vld [vmem:[%s1 + $0x1338] sm:$0xff]
      %v874 = vld [vmem:[%s1 + $0x1340] sm:$0xff]
      %v875 = vld [vmem:[%s1 + $0x1348] sm:$0xff]
      %v876 = vld [vmem:[%s1 + $0x1350] sm:$0xff]
      %v877 = vld [vmem:[%s1 + $0x1358] sm:$0xff]
      %v878 = vld [vmem:[%s1 + $0x1360] sm:$0xff]
      %v879 = vld [vmem:[%s1 + $0x1368] sm:$0xff]
      %v880 = vld [vmem:[%s1 + $0x1370] sm:$0xff]
      %v881 = vld [vmem:[%s1 + $0x1378] sm:$0xff]
      %v882 = vld [vmem:[%s1 + $0x1380] sm:$0xff]
      %v883 = vld [vmem:[%s1 + $0x1388] sm:$0xff]
      %v884 = vld [vmem:[%s1 + $0x1390] sm:$0xff]
      %v885 = vld [vmem:[%s1 + $0x1398] sm:$0xff]
      %v886 = vld [vmem:[%s1 + $0x13a0] sm:$0xff]
      %v887 = vld [vmem:[%s1 + $0x13a8] sm:$0xff]
      %v888 = vld [vmem:[%s1 + $0x13b0] sm:$0xff]
      %v889 = vld [vmem:[%s1 + $0x13b8] sm:$0xff]
      %v890 = vld [vmem:[%s1 + $0x13c0] sm:$0xff]
      %v891 = vld [vmem:[%s1 + $0x13c8] sm:$0xff]
      %v892 = vld [vmem:[%s1 + $0x13d0] sm:$0xff]
      %v893 = vld [vmem:[%s1 + $0x13d8] sm:$0xff]
      %v894 = vld [vmem:[%s1 + $0x13e0] sm:$0xff]
      %v895 = vld [vmem:[%s1 + $0x13e8] sm:$0xff]
      %v896 = vld [vmem:[%s1 + $0x13f0] sm:$0xff]
      %v897 = vld [vmem:[%s1 + $0x13f8] sm:$0xff]
      %v898 = vld [vmem:[%s1 + $0x1400] sm:$0xff]
      %v899 = vld [vmem:[%s1 + $0x1408] sm:$0xff]
      %v900 = vld [vmem:[%s1 + $0x1410] sm:$0xff]
      %v901 = vld [vmem:[%s1 + $0x1418] sm:$0xff]
      %v902 = vld [vmem:[%s1 + $0x1420] sm:$0xff]
      %v903 = vld [vmem:[%s1 + $0x1428] sm:$0xff]
      %v904 = vld [vmem:[%s1 + $0x1430] sm:$0xff]
      %v905 = vld [vmem:[%s1 + $0x1438] sm:$0xff]
      %v906 = vld [vmem:[%s1 + $0x1440] sm:$0xff]
      %v907 = vld [vmem:[%s1 + $0x1448] sm:$0xff]
      %v908 = vld [vmem:[%s1 + $0x1450] sm:$0xff]
      %v909 = vld [vmem:[%s1 + $0x1458] sm:$0xff]
      %v910 = vld [vmem:[%s1 + $0x1460] sm:$0xff]
      %v911 = vld [vmem:[%s1 + $0x1468] sm:$0xff]
      %v912 = vld [vmem:[%s1 + $0x1470] sm:$0xff]
      %v913 = vld [vmem:[%s1 + $0x1478] sm:$0xff]
      %v914 = vld [vmem:[%s1 + $0x1480] sm:$0xff]
      %v915 = vld [vmem:[%s1 + $0x1488] sm:$0xff]
      %v916 = vld [vmem:[%s1 + $0x1490] sm:$0xff]
      %v917 = vld [vmem:[%s1 + $0x1498] sm:$0xff]
      %v918 = vld [vmem:[%s1 + $0x14a0] sm:$0xff]
      %v919 = vld [vmem:[%s1 + $0x14a8] sm:$0xff]
      %v920 = vld [vmem:[%s1 + $0x14b0] sm:$0xff]
      %v921 = vld [vmem:[%s1 + $0x14b8] sm:$0xff]
      %v922 = vld [vmem:[%s1 + $0x14c0] sm:$0xff]
      %v923 = vld [vmem:[%s1 + $0x14c8] sm:$0xff]
      %v924 = vld [vmem:[%s1 + $0x14d0] sm:$0xff]
      %v925 = vld [vmem:[%s1 + $0x14d8] sm:$0xff]
      %v926 = vld [vmem:[%s1 + $0x14e0] sm:$0xff]
      %v927 = vld [vmem:[%s1 + $0x14e8] sm:$0xff]
      %v928 = vld [vmem:[%s1 + $0x14f0] sm:$0xff]
      %v929 = vld [vmem:[%s1 + $0x14f8] sm:$0xff]
      %v930 = vld [vmem:[%s1 + $0x1500] sm:$0xff]
      %v931 = vld [vmem:[%s1 + $0x1508] sm:$0xff]
      %v932 = vld [vmem:[%s1 + $0x1510] sm:$0xff]
      %v933 = vld [vmem:[%s1 + $0x1518] sm:$0xff]
      %v934 = vld [vmem:[%s1 + $0x1520] sm:$0xff]
      %v935 = vld [vmem:[%s1 + $0x1528] sm:$0xff]
      %v936 = vld [vmem:[%s1 + $0x1530] sm:$0xff]
      %v937 = vld [vmem:[%s1 + $0x1538] sm:$0xff]
      %v938 = vld [vmem:[%s1 + $0x1540] sm:$0xff]
      %v939 = vld [vmem:[%s1 + $0x1548] sm:$0xff]
      %v940 = vld [vmem:[%s1 + $0x1550] sm:$0xff]
      %v941 = vld [vmem:[%s1 + $0x1558] sm:$0xff]
      %v942 = vld [vmem:[%s1 + $0x1560] sm:$0xff]
      %v943 = vld [vmem:[%s1 + $0x1568] sm:$0xff]
      %v944 = vld [vmem:[%s1 + $0x1570] sm:$0xff]
      %v945 = vld [vmem:[%s1 + $0x1578] sm:$0xff]
      %v946 = vld [vmem:[%s1 + $0x1580] sm:$0xff]
      %v947 = vld [vmem:[%s1 + $0x1588] sm:$0xff]
      %v948 = vld [vmem:[%s1 + $0x1590] sm:$0xff]
      %v949 = vld [vmem:[%s1 + $0x1598] sm:$0xff]
      %v950 = vld [vmem:[%s1 + $0x15a0] sm:$0xff]
      %v951 = vld [vmem:[%s1 + $0x15a8] sm:$0xff]
      %v952 = vld [vmem:[%s1 + $0x15b0] sm:$0xff]
      %v953 = vld [vmem:[%s1 + $0x15b8] sm:$0xff]
      %v954 = vld [vmem:[%s1 + $0x15c0] sm:$0xff]
      %v955 = vld [vmem:[%s1 + $0x15c8] sm:$0xff]
      %v956 = vld [vmem:[%s1 + $0x15d0] sm:$0xff]
      %v957 = vld [vmem:[%s1 + $0x15d8] sm:$0xff]
      %v958 = vld [vmem:[%s1 + $0x15e0] sm:$0xff]
      %v959 = vld [vmem:[%s1 + $0x15e8] sm:$0xff]
      %v960 = vld [vmem:[%s1 + $0x15f0] sm:$0xff]
      %v961 = vld [vmem:[%s1 + $0x15f8] sm:$0xff]
      %v962 = vld [vmem:[%s1 + $0x1600] sm:$0xff]
      %v963 = vld [vmem:[%s1 + $0x1608] sm:$0xff]
      %v964 = vld [vmem:[%s1 + $0x1610] sm:$0xff]
      %v965 = vld [vmem:[%s1 + $0x1618] sm:$0xff]
      %v966 = vld [vmem:[%s1 + $0x1620] sm:$0xff]
      %v967 = vld [vmem:[%s1 + $0x1628] sm:$0xff]
      %v968 = vld [vmem:[%s1 + $0x1630] sm:$0xff]
      %v969 = vld [vmem:[%s1 + $0x1638] sm:$0xff]
      %v970 = vld [vmem:[%s1 + $0x1640] sm:$0xff]
      %v971 = vld [vmem:[%s1 + $0x1648] sm:$0xff]
      %v972 = vld [vmem:[%s1 + $0x1650] sm:$0xff]
      %v973 = vld [vmem:[%s1 + $0x1658] sm:$0xff]
      %v974 = vld [vmem:[%s1 + $0x1660] sm:$0xff]
      %v975 = vld [vmem:[%s1 + $0x1668] sm:$0xff]
      %v976 = vld [vmem:[%s1 + $0x1670] sm:$0xff]
      %v977 = vld [vmem:[%s1 + $0x1678] sm:$0xff]
      %v978 = vld [vmem:[%s1 + $0x1680] sm:$0xff]
      %v979 = vld [vmem:[%s1 + $0x1688] sm:$0xff]
      %v980 = vld [vmem:[%s1 + $0x1690] sm:$0xff]
      %v981 = vld [vmem:[%s1 + $0x1698] sm:$0xff]
      %v982 = vld [vmem:[%s1 + $0x16a0] sm:$0xff]
      %v983 = vld [vmem:[%s1 + $0x16a8] sm:$0xff]
      %v984 = vld [vmem:[%s1 + $0x16b0] sm:$0xff]
      %v985 = vld [vmem:[%s1 + $0x16b8] sm:$0xff]
      %v986 = vld [vmem:[%s1 + $0x16c0] sm:$0xff]
      %v987 = vld [vmem:[%s1 + $0x16c8] sm:$0xff]
      %v988 = vld [vmem:[%s1 + $0x16d0] sm:$0xff]
      %v989 = vld [vmem:[%s1 + $0x16d8] sm:$0xff]
      %v990 = vld [vmem:[%s1 + $0x16e0] sm:$0xff]
      %v991 = vld [vmem:[%s1 + $0x16e8] sm:$0xff]
      %v992 = vld [vmem:[%s1 + $0x16f0] sm:$0xff]
      %v993 = vld [vmem:[%s1 + $0x16f8] sm:$0xff]
      %v994 = vld [vmem:[%s1 + $0x1700] sm:$0xff]
      %v995 = vld [vmem:[%s1 + $0x1708] sm:$0xff]
      %v996 = vld [vmem:[%s1 + $0x1710] sm:$0xff]
      %v997 = vld [vmem:[%s1 + $0x1718] sm:$0xff]
      %v998 = vld [vmem:[%s1 + $0x1720] sm:$0xff]
      %v999 = vld [vmem:[%s1 + $0x1728] sm:$0xff]
      %v1000 = vld [vmem:[%s1 + $0x1730] sm:$0xff]
      %v1001 = vld [vmem:[%s1 + $0x1738] sm:$0xff]
      %v1002 = vld [vmem:[%s1 + $0x1740] sm:$0xff]
      %v1003 = vld [vmem:[%s1 + $0x1748] sm:$0xff]
      %v1004 = vld [vmem:[%s1 + $0x1750] sm:$0xff]
      %v1005 = vld [vmem:[%s1 + $0x1758] sm:$0xff]
      %v1006 = vld [vmem:[%s1 + $0x1760] sm:$0xff]
      %v1007 = vld [vmem:[%s1 + $0x1768] sm:$0xff]
      %v1008 = vld [vmem:[%s1 + $0x1770] sm:$0xff]
      %v1009 = vld [vmem:[%s1 + $0x1778] sm:$0xff]
      %v1010 = vld [vmem:[%s1 + $0x1780] sm:$0xff]
      %v1011 = vld [vmem:[%s1 + $0x1788] sm:$0xff]
      %v1012 = vld [vmem:[%s1 + $0x1790] sm:$0xff]
      %v1013 = vld [vmem:[%s1 + $0x1798] sm:$0xff]
      %v1014 = vld [vmem:[%s1 + $0x17a0] sm:$0xff]
      %v1015 = vld [vmem:[%s1 + $0x17a8] sm:$0xff]
      %v1016 = vld [vmem:[%s1 + $0x17b0] sm:$0xff]
      %v1017 = vld [vmem:[%s1 + $0x17b8] sm:$0xff]
      %v1018 = vld [vmem:[%s1 + $0x17c0] sm:$0xff]
      %v1019 = vld [vmem:[%s1 + $0x17c8] sm:$0xff]
      %v1020 = vld [vmem:[%s1 + $0x17d0] sm:$0xff]
      %v1021 = vld [vmem:[%s1 + $0x17d8] sm:$0xff]
      %v1022 = vld [vmem:[%s1 + $0x17e0] sm:$0xff]
      %v1023 = vld [vmem:[%s1 + $0x17e8] sm:$0xff]
      %v1024 = vld [vmem:[%s1 + $0x17f0] sm:$0xff]
      %v1025 = vld [vmem:[%s1 + $0x17f8] sm:$0xff]
      %v1026 = vld [vmem:[%s1 + $0x1800] sm:$0xff]
      %v1027 = vld [vmem:[%s1 + $0x1808] sm:$0xff]
      %v1028 = vld [vmem:[%s1 + $0x1810] sm:$0xff]
      %v1029 = vld [vmem:[%s1 + $0x1818] sm:$0xff]
      %v1030 = vld [vmem:[%s1 + $0x1820] sm:$0xff]
      %v1031 = vld [vmem:[%s1 + $0x1828] sm:$0xff]
      %v1032 = vld [vmem:[%s1 + $0x1830] sm:$0xff]
      %v1033 = vld [vmem:[%s1 + $0x1838] sm:$0xff]
      %v1034 = vld [vmem:[%s1 + $0x1840] sm:$0xff]
      %v1035 = vld [vmem:[%s1 + $0x1848] sm:$0xff]
      %v1036 = vld [vmem:[%s1 + $0x1850] sm:$0xff]
      %v1037 = vld [vmem:[%s1 + $0x1858] sm:$0xff]
      %v1038 = vld [vmem:[%s1 + $0x1860] sm:$0xff]
      %v1039 = vld [vmem:[%s1 + $0x1868] sm:$0xff]
      %v1040 = vld [vmem:[%s1 + $0x1870] sm:$0xff]
      %v1041 = vld [vmem:[%s1 + $0x1878] sm:$0xff]
      %v1042 = vld [vmem:[%s2] sm:$0xf]
      %v1044 = vlaneseq
      %v1045 = vshrl.u32 %v1044, 7
      %v1046 = vsub.s32 0, %v1045
      %v1047 = vrot.slane %v1042, %v1046
      %v1048 = vlaneseq
      %v1049 = vshrl.u32 %v1048, 7
      %v1050 = vsub.s32 1, %v1049
      %v1051 = vrot.slane %v1042, %v1050
      %v1052 = vlaneseq
      %v1053 = vshrl.u32 %v1052, 7
      %v1054 = vsub.s32 2, %v1053
      %v1055 = vrot.slane %v1042, %v1054
      %v1056 = vlaneseq
      %v1057 = vshrl.u32 %v1056, 7
      %v1058 = vsub.s32 3, %v1057
      %v1059 = vrot.slane %v1042, %v1058
      %v1090 = vunpack.c.l.b16 %v232
      %v1091 = vunpack.c.h.b16 %v232
      %v1092 = vunpack.c.l.b16 %v233
      %v1093 = vunpack.c.h.b16 %v233
      %v1094 = vunpack.c.l.b16 %v234
      %v1095 = vunpack.c.h.b16 %v234
      %v1096 = vunpack.c.l.b16 %v235
      %v1097 = vunpack.c.h.b16 %v235
      %v1098 = vunpack.c.l.b16 %v236
      %v1099 = vunpack.c.h.b16 %v236
      %v1100 = vunpack.c.l.b16 %v237
      %v1101 = vunpack.c.h.b16 %v237
      %v1102 = vunpack.c.l.b16 %v238
      %v1103 = vunpack.c.h.b16 %v238
      %v1104 = vunpack.c.l.b16 %v239
      %v1105 = vunpack.c.h.b16 %v239
      %v1106 = vunpack.c.l.b16 %v240
      %v1107 = vunpack.c.h.b16 %v240
      %v1108 = vunpack.c.l.b16 %v241
      %v1109 = vunpack.c.h.b16 %v241
      %v1110 = vunpack.c.l.b16 %v242
      %v1111 = vunpack.c.h.b16 %v242
      %v1112 = vunpack.c.l.b16 %v243
      %v1113 = vunpack.c.h.b16 %v243
      %v1114 = vunpack.c.l.b16 %v244
      %v1115 = vunpack.c.l.b16 %v245
      %v1116 = vunpack.c.h.b16 %v245
      %v1117 = vunpack.c.l.b16 %v246
      %v1118 = vunpack.c.h.b16 %v246
      %v1119 = vunpack.c.l.b16 %v247
      %v1120 = vunpack.c.h.b16 %v247
      %v1121 = vunpack.c.l.b16 %v248
      %v1122 = vunpack.c.h.b16 %v248
      %v1123 = vunpack.c.l.b16 %v249
      %v1124 = vunpack.c.h.b16 %v249
      %v1125 = vunpack.c.l.b16 %v250
      %v1126 = vunpack.c.h.b16 %v250
      %v1127 = vunpack.c.l.b16 %v251
      %v1128 = vunpack.c.h.b16 %v251
      %v1129 = vunpack.c.l.b16 %v252
      %v1130 = vunpack.c.h.b16 %v252
      %v1131 = vunpack.c.l.b16 %v253
      %v1132 = vunpack.c.h.b16 %v253
      %v1133 = vunpack.c.l.b16 %v254
      %v1134 = vunpack.c.h.b16 %v254
      %v1135 = vunpack.c.l.b16 %v255
      %v1136 = vunpack.c.h.b16 %v255
      %v1137 = vunpack.c.l.b16 %v256
      %v1138 = vunpack.c.h.b16 %v256
      %v1139 = vunpack.c.l.b16 %v257
      %v1140 = vpack.c.b16 %v1115, %v1090
      %v1141 = vpack.c.b16 %v1116, %v1091
      %v1142 = vpack.c.b16 %v1117, %v1092
      %v1143 = vpack.c.b16 %v1118, %v1093
      %v1144 = vpack.c.b16 %v1119, %v1094
      %v1145 = vpack.c.b16 %v1120, %v1095
      %v1146 = vpack.c.b16 %v1121, %v1096
      %v1147 = vpack.c.b16 %v1122, %v1097
      %v1148 = vpack.c.b16 %v1123, %v1098
      %v1149 = vpack.c.b16 %v1124, %v1099
      %v1150 = vpack.c.b16 %v1125, %v1100
      %v1151 = vpack.c.b16 %v1126, %v1101
      %v1152 = vpack.c.b16 %v1127, %v1102
      %v1153 = vpack.c.b16 %v1128, %v1103
      %v1154 = vpack.c.b16 %v1129, %v1104
      %v1155 = vpack.c.b16 %v1130, %v1105
      %v1156 = vpack.c.b16 %v1131, %v1106
      %v1157 = vpack.c.b16 %v1132, %v1107
      %v1158 = vpack.c.b16 %v1133, %v1108
      %v1159 = vpack.c.b16 %v1134, %v1109
      %v1160 = vpack.c.b16 %v1135, %v1110
      %v1161 = vpack.c.b16 %v1136, %v1111
      %v1162 = vpack.c.b16 %v1137, %v1112
      %v1163 = vpack.c.b16 %v1138, %v1113
      %v1164 = vpack.c.b16 %v1139, %v1114
      %v1973 = vunpack.c.l.b16 %v258
      %v1974 = vunpack.c.h.b16 %v258
      %v1975 = vunpack.c.l.b16 %v259
      %v1976 = vunpack.c.h.b16 %v259
      %v1977 = vunpack.c.l.b16 %v260
      %v1978 = vunpack.c.h.b16 %v260
      %v1979 = vunpack.c.l.b16 %v261
      %v1980 = vunpack.c.h.b16 %v261
      %v1981 = vunpack.c.l.b16 %v262
      %v1982 = vunpack.c.h.b16 %v262
      %v1983 = vunpack.c.l.b16 %v263
      %v1984 = vunpack.c.h.b16 %v263
      %v1985 = vunpack.c.l.b16 %v264
      %v1986 = vunpack.c.h.b16 %v264
      %v1987 = vunpack.c.l.b16 %v265
      %v1988 = vunpack.c.h.b16 %v265
      %v1989 = vunpack.c.l.b16 %v266
      %v1990 = vunpack.c.h.b16 %v266
      %v1991 = vunpack.c.l.b16 %v267
      %v1992 = vunpack.c.h.b16 %v267
      %v1993 = vunpack.c.l.b16 %v268
      %v1994 = vunpack.c.h.b16 %v268
      %v1995 = vunpack.c.l.b16 %v269
      %v1996 = vunpack.c.h.b16 %v269
      %v1997 = vunpack.c.l.b16 %v270
      %v1998 = vunpack.c.h.b16 %v270
      %v1999 = vunpack.c.l.b16 %v271
      %v2000 = vunpack.c.h.b16 %v271
      %v2001 = vunpack.c.l.b16 %v272
      %v2002 = vunpack.c.h.b16 %v272
      %v2003 = vunpack.c.l.b16 %v273
      %v2004 = vunpack.c.h.b16 %v273
      %v2005 = vunpack.c.l.b16 %v274
      %v2006 = vunpack.c.h.b16 %v274
      %v2007 = vunpack.c.l.b16 %v275
      %v2008 = vunpack.c.h.b16 %v275
      %v2009 = vunpack.c.l.b16 %v276
      %v2010 = vunpack.c.h.b16 %v276
      %v2011 = vunpack.c.l.b16 %v277
      %v2012 = vunpack.c.h.b16 %v277
      %v2013 = vunpack.c.l.b16 %v278
      %v2014 = vunpack.c.h.b16 %v278
      %v2015 = vunpack.c.l.b16 %v279
      %v2016 = vunpack.c.h.b16 %v279
      %v2017 = vunpack.c.l.b16 %v280
      %v2018 = vunpack.c.h.b16 %v280
      %v2019 = vunpack.c.l.b16 %v281
      %v2020 = vunpack.c.h.b16 %v281
      %v2021 = vunpack.c.l.b16 %v282
      %v2022 = vunpack.c.h.b16 %v282
      %v2023 = vunpack.c.l.b16 %v283
      %v2024 = vunpack.c.h.b16 %v283
      %v2025 = vunpack.c.l.b16 %v284
      %v2026 = vunpack.c.h.b16 %v284
      %v2027 = vunpack.c.l.b16 %v285
      %v2028 = vunpack.c.h.b16 %v285
      %v2029 = vunpack.c.l.b16 %v286
      %v2030 = vunpack.c.h.b16 %v286
      %v2031 = vunpack.c.l.b16 %v287
      %v2032 = vunpack.c.h.b16 %v287
      %v2033 = vunpack.c.l.b16 %v288
      %v2034 = vunpack.c.h.b16 %v288
      %v2035 = vunpack.c.l.b16 %v289
      %v2036 = vunpack.c.h.b16 %v289
      %v2037 = vunpack.c.l.b16 %v290
      %v2038 = vunpack.c.h.b16 %v290
      %v2039 = vunpack.c.l.b16 %v291
      %v2040 = vunpack.c.h.b16 %v291
      %v2041 = vunpack.c.l.b16 %v292
      %v2042 = vunpack.c.h.b16 %v292
      %v2043 = vunpack.c.l.b16 %v293
      %v2044 = vunpack.c.h.b16 %v293
      %v2045 = vunpack.c.l.b16 %v294
      %v2046 = vunpack.c.h.b16 %v294
      %v2047 = vunpack.c.l.b16 %v295
      %v2048 = vunpack.c.h.b16 %v295
      %v2049 = vunpack.c.l.b16 %v296
      %v2050 = vunpack.c.h.b16 %v296
      %v2051 = vunpack.c.l.b16 %v297
      %v2052 = vunpack.c.h.b16 %v297
      %v2053 = vunpack.c.l.b16 %v298
      %v2054 = vunpack.c.h.b16 %v298
      %v2055 = vunpack.c.l.b16 %v299
      %v2056 = vunpack.c.h.b16 %v299
      %v2057 = vunpack.c.l.b16 %v300
      %v2058 = vunpack.c.h.b16 %v300
      %v2059 = vunpack.c.l.b16 %v301
      %v2060 = vunpack.c.h.b16 %v301
      %v2061 = vunpack.c.l.b16 %v302
      %v2062 = vunpack.c.h.b16 %v302
      %v2063 = vunpack.c.l.b16 %v303
      %v2064 = vunpack.c.h.b16 %v303
      %v2065 = vunpack.c.l.b16 %v304
      %v2066 = vunpack.c.h.b16 %v304
      %v2067 = vunpack.c.l.b16 %v305
      %v2068 = vunpack.c.h.b16 %v305
      %v2069 = vunpack.c.l.b16 %v306
      %v2070 = vunpack.c.h.b16 %v306
      %v2071 = vunpack.c.l.b16 %v307
      %v2072 = vunpack.c.h.b16 %v307
      %v2073 = vunpack.c.l.b16 %v308
      %v2074 = vunpack.c.h.b16 %v308
      %v2075 = vunpack.c.l.b16 %v309
      %v2076 = vunpack.c.h.b16 %v309
      %v2077 = vunpack.c.l.b16 %v310
      %v2078 = vunpack.c.h.b16 %v310
      %v2079 = vunpack.c.l.b16 %v311
      %v2080 = vunpack.c.h.b16 %v311
      %v2081 = vunpack.c.l.b16 %v312
      %v2082 = vunpack.c.h.b16 %v312
      %v2083 = vunpack.c.l.b16 %v313
      %v2084 = vunpack.c.h.b16 %v313
      %v2085 = vunpack.c.l.b16 %v314
      %v2086 = vunpack.c.h.b16 %v314
      %v2087 = vunpack.c.l.b16 %v315
      %v2088 = vunpack.c.h.b16 %v315
      %v2089 = vunpack.c.l.b16 %v316
      %v2090 = vunpack.c.h.b16 %v316
      %v2091 = vunpack.c.l.b16 %v317
      %v2092 = vunpack.c.h.b16 %v317
      %v2093 = vunpack.c.l.b16 %v318
      %v2094 = vunpack.c.h.b16 %v318
      %v2095 = vunpack.c.l.b16 %v319
      %v2096 = vunpack.c.h.b16 %v319
      %v2097 = vunpack.c.l.b16 %v320
      %v2098 = vunpack.c.h.b16 %v320
      %v2099 = vunpack.c.l.b16 %v321
      %v2100 = vunpack.c.h.b16 %v321
      %v2101 = vunpack.c.l.b16 %v322
      %v2102 = vunpack.c.h.b16 %v322
      %v2103 = vunpack.c.l.b16 %v323
      %v2104 = vunpack.c.h.b16 %v323
      %v2105 = vunpack.c.l.b16 %v324
      %v2106 = vunpack.c.h.b16 %v324
      %v2107 = vunpack.c.l.b16 %v325
      %v2108 = vunpack.c.h.b16 %v325
      %v2109 = vunpack.c.l.b16 %v326
      %v2110 = vunpack.c.h.b16 %v326
      %v2111 = vunpack.c.l.b16 %v327
      %v2112 = vunpack.c.h.b16 %v327
      %v2113 = vunpack.c.l.b16 %v328
      %v2114 = vunpack.c.h.b16 %v328
      %v2115 = vunpack.c.l.b16 %v329
      %v2116 = vunpack.c.h.b16 %v329
      %v2117 = vunpack.c.l.b16 %v330
      %v2118 = vunpack.c.h.b16 %v330
      %v2119 = vunpack.c.l.b16 %v331
      %v2120 = vunpack.c.h.b16 %v331
      %v2121 = vunpack.c.l.b16 %v332
      %v2122 = vunpack.c.h.b16 %v332
      %v2123 = vunpack.c.l.b16 %v333
      %v2124 = vunpack.c.h.b16 %v333
      %v2125 = vunpack.c.l.b16 %v334
      %v2126 = vunpack.c.h.b16 %v334
      %v2127 = vunpack.c.l.b16 %v335
      %v2128 = vunpack.c.h.b16 %v335
      %v2129 = vunpack.c.l.b16 %v336
      %v2130 = vunpack.c.h.b16 %v336
      %v2131 = vunpack.c.l.b16 %v337
      %v2132 = vunpack.c.h.b16 %v337
      %v2133 = vunpack.c.l.b16 %v338
      %v2134 = vunpack.c.h.b16 %v338
      %v2135 = vunpack.c.l.b16 %v339
      %v2136 = vunpack.c.h.b16 %v339
      %v2137 = vunpack.c.l.b16 %v340
      %v2138 = vunpack.c.h.b16 %v340
      %v2139 = vunpack.c.l.b16 %v341
      %v2140 = vunpack.c.h.b16 %v341
      %v2141 = vunpack.c.l.b16 %v342
      %v2142 = vunpack.c.h.b16 %v342
      %v2143 = vunpack.c.l.b16 %v343
      %v2144 = vunpack.c.h.b16 %v343
      %v2145 = vunpack.c.l.b16 %v344
      %v2146 = vunpack.c.h.b16 %v344
      %v2147 = vunpack.c.l.b16 %v345
      %v2148 = vunpack.c.h.b16 %v345
      %v2149 = vunpack.c.l.b16 %v346
      %v2150 = vunpack.c.h.b16 %v346
      %v2151 = vunpack.c.l.b16 %v347
      %v2152 = vunpack.c.h.b16 %v347
      %v2153 = vunpack.c.l.b16 %v348
      %v2154 = vunpack.c.h.b16 %v348
      %v2155 = vunpack.c.l.b16 %v349
      %v2156 = vunpack.c.h.b16 %v349
      %v2157 = vunpack.c.l.b16 %v350
      %v2158 = vunpack.c.h.b16 %v350
      %v2159 = vunpack.c.l.b16 %v351
      %v2160 = vunpack.c.h.b16 %v351
      %v2161 = vunpack.c.l.b16 %v352
      %v2162 = vunpack.c.h.b16 %v352
      %v2163 = vunpack.c.l.b16 %v353
      %v2164 = vunpack.c.h.b16 %v353
      %v2165 = vunpack.c.l.b16 %v354
      %v2166 = vunpack.c.h.b16 %v354
      %v2167 = vunpack.c.l.b16 %v355
      %v2168 = vunpack.c.h.b16 %v355
      %v2169 = vunpack.c.l.b16 %v356
      %v2170 = vunpack.c.h.b16 %v356
      %v2171 = vunpack.c.l.b16 %v357
      %v2172 = vunpack.c.h.b16 %v357
      %v2173 = vunpack.c.l.b16 %v358
      %v2174 = vunpack.c.h.b16 %v358
      %v2175 = vunpack.c.l.b16 %v359
      %v2176 = vunpack.c.h.b16 %v359
      %v2177 = vunpack.c.l.b16 %v360
      %v2178 = vunpack.c.h.b16 %v360
      %v2179 = vunpack.c.l.b16 %v361
      %v2180 = vunpack.c.h.b16 %v361
      %v2181 = vunpack.c.l.b16 %v362
      %v2182 = vunpack.c.h.b16 %v362
      %v2183 = vunpack.c.l.b16 %v363
      %v2184 = vunpack.c.h.b16 %v363
      %v2185 = vunpack.c.l.b16 %v364
      %v2186 = vunpack.c.h.b16 %v364
      %v2187 = vunpack.c.l.b16 %v365
      %v2188 = vunpack.c.h.b16 %v365
      %v2189 = vunpack.c.l.b16 %v366
      %v2190 = vunpack.c.h.b16 %v366
      %v2191 = vunpack.c.l.b16 %v367
      %v2192 = vunpack.c.h.b16 %v367
      %v2193 = vunpack.c.l.b16 %v368
      %v2194 = vunpack.c.h.b16 %v368
      %v2195 = vunpack.c.l.b16 %v369
      %v2196 = vunpack.c.h.b16 %v369
      %v2197 = vunpack.c.l.b16 %v370
      %v2198 = vunpack.c.h.b16 %v370
      %v2199 = vunpack.c.l.b16 %v371
      %v2200 = vunpack.c.h.b16 %v371
      %v2201 = vunpack.c.l.b16 %v372
      %v2202 = vunpack.c.h.b16 %v372
      %v2203 = vunpack.c.l.b16 %v373
      %v2204 = vunpack.c.h.b16 %v373
      %v2205 = vunpack.c.l.b16 %v374
      %v2206 = vunpack.c.h.b16 %v374
      %v2207 = vunpack.c.l.b16 %v375
      %v2208 = vunpack.c.h.b16 %v375
      %v2209 = vunpack.c.l.b16 %v376
      %v2210 = vunpack.c.h.b16 %v376
      %v2211 = vunpack.c.l.b16 %v377
      %v2212 = vunpack.c.h.b16 %v377
      %v2213 = vunpack.c.l.b16 %v378
      %v2214 = vunpack.c.h.b16 %v378
      %v2215 = vunpack.c.l.b16 %v379
      %v2216 = vunpack.c.h.b16 %v379
      %v2217 = vunpack.c.l.b16 %v380
      %v2218 = vunpack.c.h.b16 %v380
      %v2219 = vunpack.c.l.b16 %v381
      %v2220 = vunpack.c.h.b16 %v381
      %v2221 = vunpack.c.l.b16 %v382
      %v2222 = vunpack.c.h.b16 %v382
      %v2223 = vunpack.c.l.b16 %v383
      %v2224 = vunpack.c.h.b16 %v383
      %v2225 = vunpack.c.l.b16 %v384
      %v2226 = vunpack.c.h.b16 %v384
      %v2227 = vunpack.c.l.b16 %v385
      %v2228 = vunpack.c.h.b16 %v385
      %v2229 = vunpack.c.l.b16 %v386
      %v2230 = vunpack.c.h.b16 %v386
      %v2231 = vunpack.c.l.b16 %v387
      %v2232 = vunpack.c.h.b16 %v387
      %v2233 = vunpack.c.l.b16 %v388
      %v2234 = vunpack.c.h.b16 %v388
      %v2235 = vunpack.c.l.b16 %v389
      %v2236 = vunpack.c.h.b16 %v389
      %v2237 = vunpack.c.l.b16 %v390
      %v2238 = vunpack.c.h.b16 %v390
      %v2239 = vunpack.c.l.b16 %v391
      %v2240 = vunpack.c.h.b16 %v391
      %v2241 = vunpack.c.l.b16 %v392
      %v2242 = vunpack.c.h.b16 %v392
      %v2243 = vunpack.c.l.b16 %v393
      %v2244 = vunpack.c.h.b16 %v393
      %v2245 = vunpack.c.l.b16 %v394
      %v2246 = vunpack.c.h.b16 %v394
      %v2247 = vunpack.c.l.b16 %v395
      %v2248 = vunpack.c.h.b16 %v395
      %v2249 = vunpack.c.l.b16 %v396
      %v2250 = vunpack.c.h.b16 %v396
      %v2251 = vunpack.c.l.b16 %v397
      %v2252 = vunpack.c.h.b16 %v397
      %v2253 = vunpack.c.l.b16 %v398
      %v2254 = vunpack.c.h.b16 %v398
      %v2255 = vunpack.c.l.b16 %v399
      %v2256 = vunpack.c.h.b16 %v399
      %v2257 = vunpack.c.l.b16 %v400
      %v2258 = vunpack.c.h.b16 %v400
      %v2259 = vunpack.c.l.b16 %v401
      %v2260 = vunpack.c.h.b16 %v401
      %v2261 = vunpack.c.l.b16 %v402
      %v2262 = vunpack.c.h.b16 %v402
      %v2263 = vunpack.c.l.b16 %v403
      %v2264 = vunpack.c.h.b16 %v403
      %v2265 = vunpack.c.l.b16 %v404
      %v2266 = vunpack.c.h.b16 %v404
      %v2267 = vunpack.c.l.b16 %v405
      %v2268 = vunpack.c.h.b16 %v405
      %v2269 = vunpack.c.l.b16 %v406
      %v2270 = vunpack.c.h.b16 %v406
      %v2271 = vunpack.c.l.b16 %v407
      %v2272 = vunpack.c.h.b16 %v407
      %v2273 = vunpack.c.l.b16 %v408
      %v2274 = vunpack.c.h.b16 %v408
      %v2275 = vunpack.c.l.b16 %v409
      %v2276 = vunpack.c.h.b16 %v409
      %v2277 = vunpack.c.l.b16 %v410
      %v2278 = vunpack.c.h.b16 %v410
      %v2279 = vunpack.c.l.b16 %v411
      %v2280 = vunpack.c.h.b16 %v411
      %v2281 = vunpack.c.l.b16 %v412
      %v2282 = vunpack.c.h.b16 %v412
      %v2283 = vunpack.c.l.b16 %v413
      %v2284 = vunpack.c.h.b16 %v413
      %v2285 = vunpack.c.l.b16 %v414
      %v2286 = vunpack.c.h.b16 %v414
      %v2287 = vunpack.c.l.b16 %v415
      %v2288 = vunpack.c.h.b16 %v415
      %v2289 = vunpack.c.l.b16 %v416
      %v2290 = vunpack.c.h.b16 %v416
      %v2291 = vunpack.c.l.b16 %v417
      %v2292 = vunpack.c.h.b16 %v417
      %v2293 = vunpack.c.l.b16 %v418
      %v2294 = vunpack.c.h.b16 %v418
      %v2295 = vunpack.c.l.b16 %v419
      %v2296 = vunpack.c.h.b16 %v419
      %v2297 = vunpack.c.l.b16 %v420
      %v2298 = vunpack.c.h.b16 %v420
      %v2299 = vunpack.c.l.b16 %v421
      %v2300 = vunpack.c.h.b16 %v421
      %v2301 = vunpack.c.l.b16 %v422
      %v2302 = vunpack.c.h.b16 %v422
      %v2303 = vunpack.c.l.b16 %v423
      %v2304 = vunpack.c.h.b16 %v423
      %v2305 = vunpack.c.l.b16 %v424
      %v2306 = vunpack.c.h.b16 %v424
      %v2307 = vunpack.c.l.b16 %v425
      %v2308 = vunpack.c.h.b16 %v425
      %v2309 = vunpack.c.l.b16 %v426
      %v2310 = vunpack.c.h.b16 %v426
      %v2311 = vunpack.c.l.b16 %v427
      %v2312 = vunpack.c.h.b16 %v427
      %v2313 = vunpack.c.l.b16 %v428
      %v2314 = vunpack.c.h.b16 %v428
      %v2315 = vunpack.c.l.b16 %v429
      %v2316 = vunpack.c.h.b16 %v429
      %v2317 = vunpack.c.l.b16 %v430
      %v2318 = vunpack.c.h.b16 %v430
      %v2319 = vunpack.c.l.b16 %v431
      %v2320 = vunpack.c.h.b16 %v431
      %v2321 = vunpack.c.l.b16 %v432
      %v2322 = vunpack.c.h.b16 %v432
      %v2323 = vunpack.c.l.b16 %v433
      %v2324 = vunpack.c.h.b16 %v433
      %v2325 = vunpack.c.l.b16 %v434
      %v2326 = vunpack.c.h.b16 %v434
      %v2327 = vunpack.c.l.b16 %v435
      %v2328 = vunpack.c.h.b16 %v435
      %v2329 = vunpack.c.l.b16 %v436
      %v2330 = vunpack.c.h.b16 %v436
      %v2331 = vunpack.c.l.b16 %v437
      %v2332 = vunpack.c.h.b16 %v437
      %v2333 = vunpack.c.l.b16 %v438
      %v2334 = vunpack.c.h.b16 %v438
      %v2335 = vunpack.c.l.b16 %v439
      %v2336 = vunpack.c.h.b16 %v439
      %v2337 = vunpack.c.l.b16 %v440
      %v2338 = vunpack.c.h.b16 %v440
      %v2339 = vunpack.c.l.b16 %v441
      %v2340 = vunpack.c.h.b16 %v441
      %v2341 = vunpack.c.l.b16 %v442
      %v2342 = vunpack.c.h.b16 %v442
      %v2343 = vunpack.c.l.b16 %v443
      %v2344 = vunpack.c.h.b16 %v443
      %v2345 = vunpack.c.l.b16 %v444
      %v2346 = vunpack.c.h.b16 %v444
      %v2347 = vunpack.c.l.b16 %v445
      %v2348 = vunpack.c.h.b16 %v445
      %v2349 = vunpack.c.l.b16 %v446
      %v2350 = vunpack.c.h.b16 %v446
      %v2351 = vunpack.c.l.b16 %v447
      %v2352 = vunpack.c.h.b16 %v447
      %v2353 = vunpack.c.l.b16 %v448
      %v2354 = vunpack.c.h.b16 %v448
      %v2355 = vunpack.c.l.b16 %v449
      %v2356 = vunpack.c.h.b16 %v449
      %v2357 = vunpack.c.l.b16 %v450
      %v2358 = vunpack.c.h.b16 %v450
      %v2359 = vunpack.c.l.b16 %v451
      %v2360 = vunpack.c.h.b16 %v451
      %v2361 = vunpack.c.l.b16 %v452
      %v2362 = vunpack.c.h.b16 %v452
      %v2363 = vunpack.c.l.b16 %v453
      %v2364 = vunpack.c.h.b16 %v453
      %v2365 = vunpack.c.l.b16 %v454
      %v2366 = vunpack.c.h.b16 %v454
      %v2367 = vunpack.c.l.b16 %v455
      %v2368 = vunpack.c.h.b16 %v455
      %v2369 = vunpack.c.l.b16 %v456
      %v2370 = vunpack.c.h.b16 %v456
      %v2371 = vunpack.c.l.b16 %v457
      %v2372 = vunpack.c.h.b16 %v457
      %v2373 = vunpack.c.l.b16 %v458
      %v2374 = vunpack.c.h.b16 %v458
      %v2375 = vunpack.c.l.b16 %v459
      %v2376 = vunpack.c.h.b16 %v459
      %v2377 = vunpack.c.l.b16 %v460
      %v2378 = vunpack.c.h.b16 %v460
      %v2379 = vunpack.c.l.b16 %v461
      %v2380 = vunpack.c.h.b16 %v461
      %v2381 = vunpack.c.l.b16 %v462
      %v2382 = vunpack.c.h.b16 %v462
      %v2383 = vunpack.c.l.b16 %v463
      %v2384 = vunpack.c.h.b16 %v463
      %v2385 = vunpack.c.l.b16 %v464
      %v2386 = vunpack.c.h.b16 %v464
      %v2387 = vunpack.c.l.b16 %v465
      %v2388 = vunpack.c.h.b16 %v465
      %v2389 = vunpack.c.l.b16 %v466
      %v2390 = vunpack.c.h.b16 %v466
      %v2391 = vunpack.c.l.b16 %v467
      %v2392 = vunpack.c.h.b16 %v467
      %v2393 = vunpack.c.l.b16 %v468
      %v2394 = vunpack.c.h.b16 %v468
      %v2395 = vunpack.c.l.b16 %v469
      %v2396 = vunpack.c.h.b16 %v469
      %v2397 = vunpack.c.l.b16 %v470
      %v2398 = vunpack.c.h.b16 %v470
      %v2399 = vunpack.c.l.b16 %v471
      %v2400 = vunpack.c.h.b16 %v471
      %v2401 = vunpack.c.l.b16 %v472
      %v2402 = vunpack.c.h.b16 %v472
      %v2403 = vunpack.c.l.b16 %v473
      %v2404 = vunpack.c.h.b16 %v473
      %v2405 = vunpack.c.l.b16 %v474
      %v2406 = vunpack.c.h.b16 %v474
      %v2407 = vunpack.c.l.b16 %v475
      %v2408 = vunpack.c.h.b16 %v475
      %v2409 = vunpack.c.l.b16 %v476
      %v2410 = vunpack.c.h.b16 %v476
      %v2411 = vunpack.c.l.b16 %v477
      %v2412 = vunpack.c.h.b16 %v477
      %v2413 = vunpack.c.l.b16 %v478
      %v2414 = vunpack.c.h.b16 %v478
      %v2415 = vunpack.c.l.b16 %v479
      %v2416 = vunpack.c.h.b16 %v479
      %v2417 = vunpack.c.l.b16 %v480
      %v2418 = vunpack.c.h.b16 %v480
      %v2419 = vunpack.c.l.b16 %v481
      %v2420 = vunpack.c.h.b16 %v481
      %v2421 = vunpack.c.l.b16 %v482
      %v2422 = vunpack.c.h.b16 %v482
      %v2423 = vunpack.c.l.b16 %v483
      %v2424 = vunpack.c.h.b16 %v483
      %v2425 = vunpack.c.l.b16 %v484
      %v2426 = vunpack.c.h.b16 %v484
      %v2427 = vunpack.c.l.b16 %v485
      %v2428 = vunpack.c.h.b16 %v485
      %v2429 = vunpack.c.l.b16 %v486
      %v2430 = vunpack.c.h.b16 %v486
      %v2431 = vunpack.c.l.b16 %v487
      %v2432 = vunpack.c.h.b16 %v487
      %v2433 = vunpack.c.l.b16 %v488
      %v2434 = vunpack.c.h.b16 %v488
      %v2435 = vunpack.c.l.b16 %v489
      %v2436 = vunpack.c.h.b16 %v489
      %v2437 = vunpack.c.l.b16 %v490
      %v2438 = vunpack.c.h.b16 %v490
      %v2439 = vunpack.c.l.b16 %v491
      %v2440 = vunpack.c.h.b16 %v491
      %v2441 = vunpack.c.l.b16 %v492
      %v2442 = vunpack.c.h.b16 %v492
      %v2443 = vunpack.c.l.b16 %v493
      %v2444 = vunpack.c.h.b16 %v493
      %v2445 = vunpack.c.l.b16 %v494
      %v2446 = vunpack.c.h.b16 %v494
      %v2447 = vunpack.c.l.b16 %v495
      %v2448 = vunpack.c.h.b16 %v495
      %v2449 = vunpack.c.l.b16 %v496
      %v2450 = vunpack.c.h.b16 %v496
      %v2451 = vunpack.c.l.b16 %v497
      %v2452 = vunpack.c.h.b16 %v497
      %v2453 = vunpack.c.l.b16 %v498
      %v2454 = vunpack.c.h.b16 %v498
      %v2455 = vunpack.c.l.b16 %v499
      %v2456 = vunpack.c.h.b16 %v499
      %v2457 = vunpack.c.l.b16 %v500
      %v2458 = vunpack.c.h.b16 %v500
      %v2459 = vunpack.c.l.b16 %v501
      %v2460 = vunpack.c.h.b16 %v501
      %v2461 = vunpack.c.l.b16 %v502
      %v2462 = vunpack.c.h.b16 %v502
      %v2463 = vunpack.c.l.b16 %v503
      %v2464 = vunpack.c.h.b16 %v503
      %v2465 = vunpack.c.l.b16 %v504
      %v2466 = vunpack.c.h.b16 %v504
      %v2467 = vunpack.c.l.b16 %v505
      %v2468 = vunpack.c.h.b16 %v505
      %v2469 = vunpack.c.l.b16 %v506
      %v2470 = vunpack.c.h.b16 %v506
      %v2471 = vunpack.c.l.b16 %v507
      %v2472 = vunpack.c.h.b16 %v507
      %v2473 = vunpack.c.l.b16 %v508
      %v2474 = vunpack.c.h.b16 %v508
      %v2475 = vunpack.c.l.b16 %v509
      %v2476 = vunpack.c.h.b16 %v509
      %v2477 = vunpack.c.l.b16 %v510
      %v2478 = vunpack.c.h.b16 %v510
      %v2479 = vunpack.c.l.b16 %v511
      %v2480 = vunpack.c.h.b16 %v511
      %v2481 = vunpack.c.l.b16 %v512
      %v2482 = vunpack.c.h.b16 %v512
      %v2483 = vunpack.c.l.b16 %v513
      %v2484 = vunpack.c.h.b16 %v513
      %v2485 = vunpack.c.l.b16 %v514
      %v2486 = vunpack.c.h.b16 %v514
      %v2487 = vunpack.c.l.b16 %v515
      %v2488 = vunpack.c.h.b16 %v515
      %v2489 = vunpack.c.l.b16 %v516
      %v2490 = vunpack.c.h.b16 %v516
      %v2491 = vunpack.c.l.b16 %v517
      %v2492 = vunpack.c.h.b16 %v517
      %v2493 = vunpack.c.l.b16 %v518
      %v2494 = vunpack.c.h.b16 %v518
      %v2495 = vunpack.c.l.b16 %v519
      %v2496 = vunpack.c.h.b16 %v519
      %v2497 = vunpack.c.l.b16 %v520
      %v2498 = vunpack.c.h.b16 %v520
      %v2499 = vunpack.c.l.b16 %v521
      %v2500 = vunpack.c.h.b16 %v521
      %v2501 = vunpack.c.l.b16 %v522
      %v2502 = vunpack.c.h.b16 %v522
      %v2503 = vunpack.c.l.b16 %v523
      %v2504 = vunpack.c.h.b16 %v523
      %v2505 = vunpack.c.l.b16 %v524
      %v2506 = vunpack.c.h.b16 %v524
      %v2507 = vunpack.c.l.b16 %v525
      %v2508 = vunpack.c.h.b16 %v525
      %v2509 = vunpack.c.l.b16 %v526
      %v2510 = vunpack.c.h.b16 %v526
      %v2511 = vunpack.c.l.b16 %v527
      %v2512 = vunpack.c.h.b16 %v527
      %v2513 = vunpack.c.l.b16 %v528
      %v2514 = vunpack.c.h.b16 %v528
      %v2515 = vunpack.c.l.b16 %v529
      %v2516 = vunpack.c.h.b16 %v529
      %v2517 = vunpack.c.l.b16 %v530
      %v2518 = vunpack.c.h.b16 %v530
      %v2519 = vunpack.c.l.b16 %v531
      %v2520 = vunpack.c.h.b16 %v531
      %v2521 = vunpack.c.l.b16 %v532
      %v2522 = vunpack.c.h.b16 %v532
      %v2523 = vunpack.c.l.b16 %v533
      %v2524 = vunpack.c.h.b16 %v533
      %v2525 = vunpack.c.l.b16 %v534
      %v2526 = vunpack.c.h.b16 %v534
      %v2527 = vunpack.c.l.b16 %v535
      %v2528 = vunpack.c.h.b16 %v535
      %v2529 = vunpack.c.l.b16 %v536
      %v2530 = vunpack.c.h.b16 %v536
      %v2531 = vunpack.c.l.b16 %v537
      %v2532 = vunpack.c.h.b16 %v537
      %v2533 = vunpack.c.l.b16 %v538
      %v2534 = vunpack.c.h.b16 %v538
      %v2535 = vunpack.c.l.b16 %v539
      %v2536 = vunpack.c.h.b16 %v539
      %v2537 = vunpack.c.l.b16 %v540
      %v2538 = vunpack.c.h.b16 %v540
      %v2539 = vunpack.c.l.b16 %v541
      %v2540 = vunpack.c.h.b16 %v541
      %v2541 = vunpack.c.l.b16 %v542
      %v2542 = vunpack.c.h.b16 %v542
      %v2543 = vunpack.c.l.b16 %v543
      %v2544 = vunpack.c.h.b16 %v543
      %v2545 = vunpack.c.l.b16 %v544
      %v2546 = vunpack.c.h.b16 %v544
      %v2547 = vunpack.c.l.b16 %v545
      %v2548 = vunpack.c.h.b16 %v545
      %v2549 = vunpack.c.l.b16 %v546
      %v2550 = vunpack.c.h.b16 %v546
      %v2551 = vunpack.c.l.b16 %v547
      %v2552 = vunpack.c.h.b16 %v547
      %v2553 = vunpack.c.l.b16 %v548
      %v2554 = vunpack.c.h.b16 %v548
      %v2555 = vunpack.c.l.b16 %v549
      %v2556 = vunpack.c.h.b16 %v549
      %v2557 = vunpack.c.l.b16 %v550
      %v2558 = vunpack.c.h.b16 %v550
      %v2559 = vunpack.c.l.b16 %v551
      %v2560 = vunpack.c.h.b16 %v551
      %v2561 = vunpack.c.l.b16 %v552
      %v2562 = vunpack.c.h.b16 %v552
      %v2563 = vunpack.c.l.b16 %v553
      %v2564 = vunpack.c.h.b16 %v553
      %v2565 = vunpack.c.l.b16 %v554
      %v2566 = vunpack.c.h.b16 %v554
      %v2567 = vunpack.c.l.b16 %v555
      %v2568 = vunpack.c.h.b16 %v555
      %v2569 = vunpack.c.l.b16 %v556
      %v2570 = vunpack.c.h.b16 %v556
      %v2571 = vunpack.c.l.b16 %v557
      %v2572 = vunpack.c.h.b16 %v557
      %v2573 = vunpack.c.l.b16 %v558
      %v2574 = vunpack.c.h.b16 %v558
      %v2575 = vunpack.c.l.b16 %v559
      %v2576 = vunpack.c.h.b16 %v559
      %v2577 = vunpack.c.l.b16 %v560
      %v2578 = vunpack.c.h.b16 %v560
      %v2579 = vunpack.c.l.b16 %v561
      %v2580 = vunpack.c.h.b16 %v561
      %v2581 = vunpack.c.l.b16 %v562
      %v2582 = vunpack.c.h.b16 %v562
      %v2583 = vunpack.c.l.b16 %v563
      %v2584 = vunpack.c.h.b16 %v563
      %v2585 = vunpack.c.l.b16 %v564
      %v2586 = vunpack.c.h.b16 %v564
      %v2587 = vunpack.c.l.b16 %v565
      %v2588 = vunpack.c.h.b16 %v565
      %v2589 = vunpack.c.l.b16 %v566
      %v2590 = vunpack.c.h.b16 %v566
      %v2591 = vunpack.c.l.b16 %v567
      %v2592 = vunpack.c.h.b16 %v567
      %v2593 = vunpack.c.l.b16 %v568
      %v2594 = vunpack.c.h.b16 %v568
      %v2595 = vunpack.c.l.b16 %v569
      %v2596 = vunpack.c.h.b16 %v569
      %v2597 = vunpack.c.l.b16 %v570
      %v2598 = vunpack.c.h.b16 %v570
      %v2599 = vunpack.c.l.b16 %v571
      %v2600 = vunpack.c.h.b16 %v571
      %v2601 = vunpack.c.l.b16 %v572
      %v2602 = vunpack.c.h.b16 %v572
      %v2603 = vunpack.c.l.b16 %v573
      %v2604 = vunpack.c.h.b16 %v573
      %v2605 = vunpack.c.l.b16 %v574
      %v2606 = vunpack.c.h.b16 %v574
      %v2607 = vunpack.c.l.b16 %v575
      %v2608 = vunpack.c.h.b16 %v575
      %v2609 = vunpack.c.l.b16 %v576
      %v2610 = vunpack.c.h.b16 %v576
      %v2611 = vunpack.c.l.b16 %v577
      %v2612 = vunpack.c.h.b16 %v577
      %v2613 = vunpack.c.l.b16 %v578
      %v2614 = vunpack.c.h.b16 %v578
      %v2615 = vunpack.c.l.b16 %v579
      %v2616 = vunpack.c.h.b16 %v579
      %v2617 = vunpack.c.l.b16 %v580
      %v2618 = vunpack.c.h.b16 %v580
      %v2619 = vunpack.c.l.b16 %v581
      %v2620 = vunpack.c.h.b16 %v581
      %v2621 = vunpack.c.l.b16 %v582
      %v2622 = vunpack.c.h.b16 %v582
      %v2623 = vunpack.c.l.b16 %v583
      %v2624 = vunpack.c.h.b16 %v583
      %v2625 = vunpack.c.l.b16 %v584
      %v2626 = vunpack.c.h.b16 %v584
      %v2627 = vunpack.c.l.b16 %v585
      %v2628 = vunpack.c.h.b16 %v585
      %v2629 = vunpack.c.l.b16 %v586
      %v2630 = vunpack.c.h.b16 %v586
      %v2631 = vunpack.c.l.b16 %v587
      %v2632 = vunpack.c.h.b16 %v587
      %v2633 = vunpack.c.l.b16 %v588
      %v2634 = vunpack.c.h.b16 %v588
      %v2635 = vunpack.c.l.b16 %v589
      %v2636 = vunpack.c.h.b16 %v589
      %v2637 = vunpack.c.l.b16 %v590
      %v2638 = vunpack.c.h.b16 %v590
      %v2639 = vunpack.c.l.b16 %v591
      %v2640 = vunpack.c.h.b16 %v591
      %v2641 = vunpack.c.l.b16 %v592
      %v2642 = vunpack.c.h.b16 %v592
      %v2643 = vunpack.c.l.b16 %v593
      %v2644 = vunpack.c.h.b16 %v593
      %v2645 = vunpack.c.l.b16 %v594
      %v2646 = vunpack.c.h.b16 %v594
      %v2647 = vunpack.c.l.b16 %v595
      %v2648 = vunpack.c.h.b16 %v595
      %v2649 = vunpack.c.l.b16 %v596
      %v2650 = vunpack.c.h.b16 %v596
      %v2651 = vunpack.c.l.b16 %v597
      %v2652 = vunpack.c.h.b16 %v597
      %v2653 = vunpack.c.l.b16 %v598
      %v2654 = vunpack.c.h.b16 %v598
      %v2655 = vunpack.c.l.b16 %v599
      %v2656 = vunpack.c.h.b16 %v599
      %v2657 = vunpack.c.l.b16 %v600
      %v2658 = vunpack.c.h.b16 %v600
      %v2659 = vunpack.c.l.b16 %v601
      %v2660 = vunpack.c.h.b16 %v601
      %v2661 = vunpack.c.l.b16 %v602
      %v2662 = vunpack.c.h.b16 %v602
      %v2663 = vunpack.c.l.b16 %v603
      %v2664 = vunpack.c.h.b16 %v603
      %v2665 = vunpack.c.l.b16 %v604
      %v2666 = vunpack.c.h.b16 %v604
      %v2667 = vunpack.c.l.b16 %v605
      %v2668 = vunpack.c.h.b16 %v605
      %v2669 = vunpack.c.l.b16 %v606
      %v2670 = vunpack.c.h.b16 %v606
      %v2671 = vunpack.c.l.b16 %v607
      %v2672 = vunpack.c.h.b16 %v607
      %v2673 = vunpack.c.l.b16 %v608
      %v2674 = vunpack.c.h.b16 %v608
      %v2675 = vunpack.c.l.b16 %v609
      %v2676 = vunpack.c.h.b16 %v609
      %v2677 = vunpack.c.l.b16 %v610
      %v2678 = vunpack.c.h.b16 %v610
      %v2679 = vunpack.c.l.b16 %v611
      %v2680 = vunpack.c.h.b16 %v611
      %v2681 = vunpack.c.l.b16 %v612
      %v2682 = vunpack.c.h.b16 %v612
      %v2683 = vunpack.c.l.b16 %v613
      %v2684 = vunpack.c.h.b16 %v613
      %v2685 = vunpack.c.l.b16 %v614
      %v2686 = vunpack.c.h.b16 %v614
      %v2687 = vunpack.c.l.b16 %v615
      %v2688 = vunpack.c.h.b16 %v615
      %v2689 = vunpack.c.l.b16 %v616
      %v2690 = vunpack.c.h.b16 %v616
      %v2691 = vunpack.c.l.b16 %v617
      %v2692 = vunpack.c.h.b16 %v617
      %v2693 = vunpack.c.l.b16 %v618
      %v2694 = vunpack.c.h.b16 %v618
      %v2695 = vunpack.c.l.b16 %v619
      %v2696 = vunpack.c.h.b16 %v619
      %v2697 = vunpack.c.l.b16 %v620
      %v2698 = vunpack.c.h.b16 %v620
      %v2699 = vunpack.c.l.b16 %v621
      %v2700 = vunpack.c.h.b16 %v621
      %v2701 = vunpack.c.l.b16 %v622
      %v2702 = vunpack.c.h.b16 %v622
      %v2703 = vunpack.c.l.b16 %v623
      %v2704 = vunpack.c.h.b16 %v623
      %v2705 = vunpack.c.l.b16 %v624
      %v2706 = vunpack.c.h.b16 %v624
      %v2707 = vunpack.c.l.b16 %v625
      %v2708 = vunpack.c.h.b16 %v625
      %v2709 = vunpack.c.l.b16 %v626
      %v2710 = vunpack.c.h.b16 %v626
      %v2711 = vunpack.c.l.b16 %v627
      %v2712 = vunpack.c.h.b16 %v627
      %v2713 = vunpack.c.l.b16 %v628
      %v2714 = vunpack.c.h.b16 %v628
      %v2715 = vunpack.c.l.b16 %v629
      %v2716 = vunpack.c.h.b16 %v629
      %v2717 = vunpack.c.l.b16 %v630
      %v2718 = vunpack.c.h.b16 %v630
      %v2719 = vunpack.c.l.b16 %v631
      %v2720 = vunpack.c.h.b16 %v631
      %v2721 = vunpack.c.l.b16 %v632
      %v2722 = vunpack.c.h.b16 %v632
      %v2723 = vunpack.c.l.b16 %v633
      %v2724 = vunpack.c.h.b16 %v633
      %v2725 = vunpack.c.l.b16 %v634
      %v2726 = vunpack.c.h.b16 %v634
      %v2727 = vunpack.c.l.b16 %v635
      %v2728 = vunpack.c.h.b16 %v635
      %v2729 = vunpack.c.l.b16 %v636
      %v2730 = vunpack.c.h.b16 %v636
      %v2731 = vunpack.c.l.b16 %v637
      %v2732 = vunpack.c.h.b16 %v637
      %v2733 = vunpack.c.l.b16 %v638
      %v2734 = vunpack.c.h.b16 %v638
      %v2735 = vunpack.c.l.b16 %v639
      %v2736 = vunpack.c.h.b16 %v639
      %v2737 = vunpack.c.l.b16 %v640
      %v2738 = vunpack.c.h.b16 %v640
      %v2739 = vunpack.c.l.b16 %v641
      %v2740 = vunpack.c.h.b16 %v641
      %v2741 = vunpack.c.l.b16 %v642
      %v2742 = vunpack.c.h.b16 %v642
      %v2743 = vunpack.c.l.b16 %v643
      %v2744 = vunpack.c.h.b16 %v643
      %v2745 = vunpack.c.l.b16 %v644
      %v2746 = vunpack.c.h.b16 %v644
      %v2747 = vunpack.c.l.b16 %v645
      %v2748 = vunpack.c.h.b16 %v645
      %v2749 = vunpack.c.l.b16 %v646
      %v2750 = vunpack.c.h.b16 %v646
      %v2751 = vunpack.c.l.b16 %v647
      %v2752 = vunpack.c.h.b16 %v647
      %v2753 = vunpack.c.l.b16 %v648
      %v2754 = vunpack.c.h.b16 %v648
      %v2755 = vunpack.c.l.b16 %v649
      %v2756 = vunpack.c.h.b16 %v649
      %v2757 = vunpack.c.l.b16 %v650
      %v2758 = vunpack.c.h.b16 %v650
      %v2759 = vunpack.c.l.b16 %v651
      %v2760 = vunpack.c.h.b16 %v651
      %v2761 = vunpack.c.l.b16 %v652
      %v2762 = vunpack.c.h.b16 %v652
      %v2763 = vunpack.c.l.b16 %v653
      %v2764 = vunpack.c.h.b16 %v653
      %v2765 = vunpack.c.l.b16 %v654
      %v2766 = vunpack.c.h.b16 %v654
      %v2767 = vunpack.c.l.b16 %v655
      %v2768 = vunpack.c.h.b16 %v655
      %v2769 = vunpack.c.l.b16 %v656
      %v2770 = vunpack.c.h.b16 %v656
      %v2771 = vunpack.c.l.b16 %v657
      %v2772 = vunpack.c.h.b16 %v657
      %v2773 = vunpack.c.l.b16 %v658
      %v2774 = vunpack.c.h.b16 %v658
      %v2775 = vunpack.c.l.b16 %v659
      %v2776 = vunpack.c.h.b16 %v659
      %v2777 = vunpack.c.l.b16 %v660
      %v2778 = vunpack.c.h.b16 %v660
      %v2779 = vunpack.c.l.b16 %v661
      %v2780 = vunpack.c.h.b16 %v661
      %v2781 = vunpack.c.l.b16 %v662
      %v2782 = vunpack.c.h.b16 %v662
      %v2783 = vunpack.c.l.b16 %v663
      %v2784 = vunpack.c.h.b16 %v663
      %v2785 = vunpack.c.l.b16 %v664
      %v2786 = vunpack.c.h.b16 %v664
      %v2787 = vunpack.c.l.b16 %v665
      %v2788 = vunpack.c.h.b16 %v665
      %v2789 = vunpack.c.l.b16 %v666
      %v2790 = vunpack.c.h.b16 %v666
      %v2791 = vunpack.c.l.b16 %v667
      %v2792 = vunpack.c.h.b16 %v667
      %v2793 = vunpack.c.l.b16 %v668
      %v2794 = vunpack.c.h.b16 %v668
      %v2795 = vunpack.c.l.b16 %v669
      %v2796 = vunpack.c.h.b16 %v669
      %v2797 = vunpack.c.l.b16 %v670
      %v2798 = vunpack.c.h.b16 %v670
      %v2799 = vunpack.c.l.b16 %v671
      %v2800 = vunpack.c.h.b16 %v671
      %v2801 = vunpack.c.l.b16 %v672
      %v2802 = vunpack.c.h.b16 %v672
      %v2803 = vunpack.c.l.b16 %v673
      %v2804 = vunpack.c.h.b16 %v673
      %v2805 = vunpack.c.l.b16 %v674
      %v2806 = vunpack.c.h.b16 %v674
      %v2807 = vunpack.c.l.b16 %v675
      %v2808 = vunpack.c.h.b16 %v675
      %v2809 = vunpack.c.l.b16 %v676
      %v2810 = vunpack.c.h.b16 %v676
      %v2811 = vunpack.c.l.b16 %v677
      %v2812 = vunpack.c.h.b16 %v677
      %v2813 = vunpack.c.l.b16 %v678
      %v2814 = vunpack.c.h.b16 %v678
      %v2815 = vunpack.c.l.b16 %v679
      %v2816 = vunpack.c.h.b16 %v679
      %v2817 = vunpack.c.l.b16 %v680
      %v2818 = vunpack.c.h.b16 %v680
      %v2819 = vunpack.c.l.b16 %v681
      %v2820 = vunpack.c.h.b16 %v681
      %v2821 = vunpack.c.l.b16 %v682
      %v2822 = vunpack.c.h.b16 %v682
      %v2823 = vunpack.c.l.b16 %v683
      %v2824 = vunpack.c.h.b16 %v683
      %v2825 = vunpack.c.l.b16 %v684
      %v2826 = vunpack.c.h.b16 %v684
      %v2827 = vunpack.c.l.b16 %v685
      %v2828 = vunpack.c.h.b16 %v685
      %v2829 = vunpack.c.l.b16 %v686
      %v2830 = vunpack.c.h.b16 %v686
      %v2831 = vunpack.c.l.b16 %v687
      %v2832 = vunpack.c.h.b16 %v687
      %v2833 = vunpack.c.l.b16 %v688
      %v2834 = vunpack.c.h.b16 %v688
      %v2835 = vunpack.c.l.b16 %v689
      %v2836 = vunpack.c.h.b16 %v689
      %v2837 = vunpack.c.l.b16 %v690
      %v2838 = vunpack.c.h.b16 %v690
      %v2839 = vunpack.c.l.b16 %v691
      %v2840 = vunpack.c.h.b16 %v691
      %v2841 = vunpack.c.l.b16 %v692
      %v2842 = vunpack.c.h.b16 %v692
      %v2843 = vunpack.c.l.b16 %v693
      %v2844 = vunpack.c.h.b16 %v693
      %v2845 = vunpack.c.l.b16 %v694
      %v2846 = vunpack.c.h.b16 %v694
      %v2847 = vunpack.c.l.b16 %v695
      %v2848 = vunpack.c.h.b16 %v695
      %v2849 = vunpack.c.l.b16 %v696
      %v2850 = vunpack.c.h.b16 %v696
      %v2851 = vunpack.c.l.b16 %v697
      %v2852 = vunpack.c.h.b16 %v697
      %v2853 = vunpack.c.l.b16 %v698
      %v2854 = vunpack.c.h.b16 %v698
      %v2855 = vunpack.c.l.b16 %v699
      %v2856 = vunpack.c.h.b16 %v699
      %v2857 = vunpack.c.l.b16 %v700
      %v2858 = vunpack.c.h.b16 %v700
      %v2859 = vunpack.c.l.b16 %v701
      %v2860 = vunpack.c.h.b16 %v701
      %v2861 = vunpack.c.l.b16 %v702
      %v2862 = vunpack.c.h.b16 %v702
      %v2863 = vunpack.c.l.b16 %v703
      %v2864 = vunpack.c.h.b16 %v703
      %v2865 = vunpack.c.l.b16 %v704
      %v2866 = vunpack.c.h.b16 %v704
      %v2867 = vunpack.c.l.b16 %v705
      %v2868 = vunpack.c.h.b16 %v705
      %v2869 = vunpack.c.l.b16 %v706
      %v2870 = vunpack.c.h.b16 %v706
      %v2871 = vunpack.c.l.b16 %v707
      %v2872 = vunpack.c.h.b16 %v707
      %v2873 = vunpack.c.l.b16 %v708
      %v2874 = vunpack.c.h.b16 %v708
      %v2875 = vunpack.c.l.b16 %v709
      %v2876 = vunpack.c.h.b16 %v709
      %v2877 = vunpack.c.l.b16 %v710
      %v2878 = vunpack.c.h.b16 %v710
      %v2879 = vunpack.c.l.b16 %v711
      %v2880 = vunpack.c.h.b16 %v711
      %v2881 = vunpack.c.l.b16 %v712
      %v2882 = vunpack.c.h.b16 %v712
      %v2883 = vunpack.c.l.b16 %v713
      %v2884 = vunpack.c.h.b16 %v713
      %v2885 = vunpack.c.l.b16 %v714
      %v2886 = vunpack.c.h.b16 %v714
      %v2887 = vunpack.c.l.b16 %v715
      %v2888 = vunpack.c.h.b16 %v715
      %v2889 = vunpack.c.l.b16 %v716
      %v2890 = vunpack.c.h.b16 %v716
      %v2891 = vunpack.c.l.b16 %v717
      %v2892 = vunpack.c.h.b16 %v717
      %v2893 = vunpack.c.l.b16 %v718
      %v2894 = vunpack.c.h.b16 %v718
      %v2895 = vunpack.c.l.b16 %v719
      %v2896 = vunpack.c.h.b16 %v719
      %v2897 = vunpack.c.l.b16 %v720
      %v2898 = vunpack.c.h.b16 %v720
      %v2899 = vunpack.c.l.b16 %v721
      %v2900 = vunpack.c.h.b16 %v721
      %v2901 = vunpack.c.l.b16 %v722
      %v2902 = vunpack.c.h.b16 %v722
      %v2903 = vunpack.c.l.b16 %v723
      %v2904 = vunpack.c.h.b16 %v723
      %v2905 = vunpack.c.l.b16 %v724
      %v2906 = vunpack.c.h.b16 %v724
      %v2907 = vunpack.c.l.b16 %v725
      %v2908 = vunpack.c.h.b16 %v725
      %v2909 = vunpack.c.l.b16 %v726
      %v2910 = vunpack.c.h.b16 %v726
      %v2911 = vunpack.c.l.b16 %v727
      %v2912 = vunpack.c.h.b16 %v727
      %v2913 = vunpack.c.l.b16 %v728
      %v2914 = vunpack.c.h.b16 %v728
      %v2915 = vunpack.c.l.b16 %v729
      %v2916 = vunpack.c.h.b16 %v729
      %v2917 = vunpack.c.l.b16 %v730
      %v2918 = vunpack.c.h.b16 %v730
      %v2919 = vunpack.c.l.b16 %v731
      %v2920 = vunpack.c.h.b16 %v731
      %v2921 = vunpack.c.l.b16 %v732
      %v2922 = vunpack.c.h.b16 %v732
      %v2923 = vunpack.c.l.b16 %v733
      %v2924 = vunpack.c.h.b16 %v733
      %v2925 = vunpack.c.l.b16 %v734
      %v2926 = vunpack.c.h.b16 %v734
      %v2927 = vunpack.c.l.b16 %v735
      %v2928 = vunpack.c.h.b16 %v735
      %v2929 = vunpack.c.l.b16 %v736
      %v2930 = vunpack.c.h.b16 %v736
      %v2931 = vunpack.c.l.b16 %v737
      %v2932 = vunpack.c.h.b16 %v737
      %v2933 = vunpack.c.l.b16 %v738
      %v2934 = vunpack.c.h.b16 %v738
      %v2935 = vunpack.c.l.b16 %v739
      %v2936 = vunpack.c.h.b16 %v739
      %v2937 = vunpack.c.l.b16 %v740
      %v2938 = vunpack.c.h.b16 %v740
      %v2939 = vunpack.c.l.b16 %v741
      %v2940 = vunpack.c.h.b16 %v741
      %v2941 = vunpack.c.l.b16 %v742
      %v2942 = vunpack.c.h.b16 %v742
      %v2943 = vunpack.c.l.b16 %v743
      %v2944 = vunpack.c.h.b16 %v743
      %v2945 = vunpack.c.l.b16 %v744
      %v2946 = vunpack.c.h.b16 %v744
      %v2947 = vunpack.c.l.b16 %v745
      %v2948 = vunpack.c.h.b16 %v745
      %v2949 = vunpack.c.l.b16 %v746
      %v2950 = vunpack.c.h.b16 %v746
      %v2951 = vunpack.c.l.b16 %v747
      %v2952 = vunpack.c.h.b16 %v747
      %v2953 = vunpack.c.l.b16 %v748
      %v2954 = vunpack.c.h.b16 %v748
      %v2955 = vunpack.c.l.b16 %v749
      %v2956 = vunpack.c.h.b16 %v749
      %v2957 = vunpack.c.l.b16 %v750
      %v2958 = vunpack.c.h.b16 %v750
      %v2959 = vunpack.c.l.b16 %v751
      %v2960 = vunpack.c.h.b16 %v751
      %v2961 = vunpack.c.l.b16 %v752
      %v2962 = vunpack.c.h.b16 %v752
      %v2963 = vunpack.c.l.b16 %v753
      %v2964 = vunpack.c.h.b16 %v753
      %v2965 = vunpack.c.l.b16 %v754
      %v2966 = vunpack.c.h.b16 %v754
      %v2967 = vunpack.c.l.b16 %v755
      %v2968 = vunpack.c.h.b16 %v755
      %v2969 = vunpack.c.l.b16 %v756
      %v2970 = vunpack.c.h.b16 %v756
      %v2971 = vunpack.c.l.b16 %v757
      %v2972 = vunpack.c.h.b16 %v757
      %v2973 = vunpack.c.l.b16 %v758
      %v2974 = vunpack.c.h.b16 %v758
      %v2975 = vunpack.c.l.b16 %v759
      %v2976 = vunpack.c.h.b16 %v759
      %v2977 = vunpack.c.l.b16 %v760
      %v2978 = vunpack.c.h.b16 %v760
      %v2979 = vunpack.c.l.b16 %v761
      %v2980 = vunpack.c.h.b16 %v761
      %v2981 = vunpack.c.l.b16 %v762
      %v2982 = vunpack.c.h.b16 %v762
      %v2983 = vunpack.c.l.b16 %v763
      %v2984 = vunpack.c.h.b16 %v763
      %v2985 = vunpack.c.l.b16 %v764
      %v2986 = vunpack.c.h.b16 %v764
      %v2987 = vunpack.c.l.b16 %v765
      %v2988 = vunpack.c.h.b16 %v765
      %v2989 = vunpack.c.l.b16 %v766
      %v2990 = vunpack.c.h.b16 %v766
      %v2991 = vunpack.c.l.b16 %v767
      %v2992 = vunpack.c.h.b16 %v767
      %v2993 = vunpack.c.l.b16 %v768
      %v2994 = vunpack.c.h.b16 %v768
      %v2995 = vunpack.c.l.b16 %v769
      %v2996 = vunpack.c.h.b16 %v769
      %v2997 = vunpack.c.l.b16 %v770
      %v2998 = vunpack.c.h.b16 %v770
      %v2999 = vunpack.c.l.b16 %v771
      %v3000 = vunpack.c.h.b16 %v771
      %v3001 = vunpack.c.l.b16 %v772
      %v3002 = vunpack.c.h.b16 %v772
      %v3003 = vunpack.c.l.b16 %v773
      %v3004 = vunpack.c.h.b16 %v773
      %v3005 = vunpack.c.l.b16 %v774
      %v3006 = vunpack.c.h.b16 %v774
      %v3007 = vunpack.c.l.b16 %v775
      %v3008 = vunpack.c.h.b16 %v775
      %v3009 = vunpack.c.l.b16 %v776
      %v3010 = vunpack.c.h.b16 %v776
      %v3011 = vunpack.c.l.b16 %v777
      %v3012 = vunpack.c.h.b16 %v777
      %v3013 = vunpack.c.l.b16 %v778
      %v3014 = vunpack.c.h.b16 %v778
      %v3015 = vunpack.c.l.b16 %v779
      %v3016 = vunpack.c.h.b16 %v779
      %v3017 = vunpack.c.l.b16 %v780
      %v3018 = vunpack.c.h.b16 %v780
      %v3019 = vunpack.c.l.b16 %v781
      %v3020 = vunpack.c.h.b16 %v781
      %v3021 = vunpack.c.l.b16 %v782
      %v3022 = vunpack.c.h.b16 %v782
      %v3023 = vunpack.c.l.b16 %v783
      %v3024 = vunpack.c.h.b16 %v783
      %v3025 = vunpack.c.l.b16 %v784
      %v3026 = vunpack.c.h.b16 %v784
      %v3027 = vunpack.c.l.b16 %v785
      %v3028 = vunpack.c.h.b16 %v785
      %v3029 = vunpack.c.l.b16 %v786
      %v3030 = vunpack.c.h.b16 %v786
      %v3031 = vunpack.c.l.b16 %v787
      %v3032 = vunpack.c.h.b16 %v787
      %v3033 = vunpack.c.l.b16 %v788
      %v3034 = vunpack.c.h.b16 %v788
      %v3035 = vunpack.c.l.b16 %v789
      %v3036 = vunpack.c.h.b16 %v789
      %v3037 = vunpack.c.l.b16 %v790
      %v3038 = vunpack.c.h.b16 %v790
      %v3039 = vunpack.c.l.b16 %v791
      %v3040 = vunpack.c.h.b16 %v791
      %v3041 = vunpack.c.l.b16 %v792
      %v3042 = vunpack.c.h.b16 %v792
      %v3043 = vunpack.c.l.b16 %v793
      %v3044 = vunpack.c.h.b16 %v793
      %v3045 = vunpack.c.l.b16 %v794
      %v3046 = vunpack.c.h.b16 %v794
      %v3047 = vunpack.c.l.b16 %v795
      %v3048 = vunpack.c.h.b16 %v795
      %v3049 = vunpack.c.l.b16 %v796
      %v3050 = vunpack.c.h.b16 %v796
      %v3051 = vunpack.c.l.b16 %v797
      %v3052 = vunpack.c.h.b16 %v797
      %v3053 = vunpack.c.l.b16 %v798
      %v3054 = vunpack.c.h.b16 %v798
      %v3055 = vunpack.c.l.b16 %v799
      %v3056 = vunpack.c.h.b16 %v799
      %v3057 = vunpack.c.l.b16 %v800
      %v3058 = vunpack.c.h.b16 %v800
      %v3059 = vunpack.c.l.b16 %v801
      %v3060 = vunpack.c.h.b16 %v801
      %v3061 = vunpack.c.l.b16 %v802
      %v3062 = vunpack.c.h.b16 %v802
      %v3063 = vunpack.c.l.b16 %v803
      %v3064 = vunpack.c.h.b16 %v803
      %v3065 = vunpack.c.l.b16 %v804
      %v3066 = vunpack.c.h.b16 %v804
      %v3067 = vunpack.c.l.b16 %v805
      %v3068 = vunpack.c.h.b16 %v805
      %v3069 = vunpack.c.l.b16 %v806
      %v3070 = vunpack.c.h.b16 %v806
      %v3071 = vunpack.c.l.b16 %v807
      %v3072 = vunpack.c.h.b16 %v807
      %v3073 = vunpack.c.l.b16 %v808
      %v3074 = vunpack.c.h.b16 %v808
      %v3075 = vunpack.c.l.b16 %v809
      %v3076 = vunpack.c.h.b16 %v809
      %v3077 = vunpack.c.l.b16 %v810
      %v3078 = vunpack.c.h.b16 %v810
      %v3079 = vunpack.c.l.b16 %v811
      %v3080 = vunpack.c.h.b16 %v811
      %v3081 = vunpack.c.l.b16 %v812
      %v3082 = vunpack.c.h.b16 %v812
      %v3083 = vunpack.c.l.b16 %v813
      %v3084 = vunpack.c.h.b16 %v813
      %v3085 = vunpack.c.l.b16 %v814
      %v3086 = vunpack.c.h.b16 %v814
      %v3087 = vunpack.c.l.b16 %v815
      %v3088 = vunpack.c.h.b16 %v815
      %v3089 = vunpack.c.l.b16 %v816
      %v3090 = vunpack.c.h.b16 %v816
      %v3091 = vunpack.c.l.b16 %v817
      %v3092 = vunpack.c.h.b16 %v817
      %v3093 = vunpack.c.l.b16 %v818
      %v3094 = vunpack.c.h.b16 %v818
      %v3095 = vunpack.c.l.b16 %v819
      %v3096 = vunpack.c.h.b16 %v819
      %v3097 = vunpack.c.l.b16 %v820
      %v3098 = vunpack.c.h.b16 %v820
      %v3099 = vunpack.c.l.b16 %v821
      %v3100 = vunpack.c.h.b16 %v821
      %v3101 = vunpack.c.l.b16 %v822
      %v3102 = vunpack.c.h.b16 %v822
      %v3103 = vunpack.c.l.b16 %v823
      %v3104 = vunpack.c.h.b16 %v823
      %v3105 = vunpack.c.l.b16 %v824
      %v3106 = vunpack.c.h.b16 %v824
      %v3107 = vunpack.c.l.b16 %v825
      %v3108 = vunpack.c.h.b16 %v825
      %v3109 = vunpack.c.l.b16 %v826
      %v3110 = vunpack.c.h.b16 %v826
      %v3111 = vunpack.c.l.b16 %v827
      %v3112 = vunpack.c.h.b16 %v827
      %v3113 = vunpack.c.l.b16 %v828
      %v3114 = vunpack.c.h.b16 %v828
      %v3115 = vunpack.c.l.b16 %v829
      %v3116 = vunpack.c.h.b16 %v829
      %v3117 = vunpack.c.l.b16 %v830
      %v3118 = vunpack.c.h.b16 %v830
      %v3119 = vunpack.c.l.b16 %v831
      %v3120 = vunpack.c.h.b16 %v831
      %v3121 = vunpack.c.l.b16 %v832
      %v3122 = vunpack.c.h.b16 %v832
      %v3123 = vunpack.c.l.b16 %v833
      %v3124 = vunpack.c.h.b16 %v833
      %v3125 = vunpack.c.l.b16 %v834
      %v3126 = vunpack.c.h.b16 %v834
      %v3127 = vunpack.c.l.b16 %v835
      %v3128 = vunpack.c.h.b16 %v835
      %v3129 = vunpack.c.l.b16 %v836
      %v3130 = vunpack.c.h.b16 %v836
      %v3131 = vunpack.c.l.b16 %v837
      %v3132 = vunpack.c.h.b16 %v837
      %v3133 = vunpack.c.l.b16 %v838
      %v3134 = vunpack.c.h.b16 %v838
      %v3135 = vunpack.c.l.b16 %v839
      %v3136 = vunpack.c.h.b16 %v839
      %v3137 = vunpack.c.l.b16 %v840
      %v3138 = vunpack.c.h.b16 %v840
      %v3139 = vunpack.c.l.b16 %v841
      %v3140 = vunpack.c.h.b16 %v841
      %v3141 = vunpack.c.l.b16 %v842
      %v3142 = vunpack.c.h.b16 %v842
      %v3143 = vunpack.c.l.b16 %v843
      %v3144 = vunpack.c.h.b16 %v843
      %v3145 = vunpack.c.l.b16 %v844
      %v3146 = vunpack.c.h.b16 %v844
      %v3147 = vunpack.c.l.b16 %v845
      %v3148 = vunpack.c.h.b16 %v845
      %v3149 = vunpack.c.l.b16 %v846
      %v3150 = vunpack.c.h.b16 %v846
      %v3151 = vunpack.c.l.b16 %v847
      %v3152 = vunpack.c.h.b16 %v847
      %v3153 = vunpack.c.l.b16 %v848
      %v3154 = vunpack.c.h.b16 %v848
      %v3155 = vunpack.c.l.b16 %v849
      %v3156 = vunpack.c.h.b16 %v849
      %v3157 = vunpack.c.l.b16 %v850
      %v3158 = vunpack.c.h.b16 %v850
      %v3159 = vunpack.c.l.b16 %v851
      %v3160 = vunpack.c.h.b16 %v851
      %v3161 = vunpack.c.l.b16 %v852
      %v3162 = vunpack.c.h.b16 %v852
      %v3163 = vunpack.c.l.b16 %v853
      %v3164 = vunpack.c.h.b16 %v853
      %v3165 = vunpack.c.l.b16 %v854
      %v3166 = vunpack.c.h.b16 %v854
      %v3167 = vunpack.c.l.b16 %v855
      %v3168 = vunpack.c.h.b16 %v855
      %v3169 = vunpack.c.l.b16 %v856
      %v3170 = vunpack.c.h.b16 %v856
      %v3171 = vunpack.c.l.b16 %v857
      %v3172 = vunpack.c.h.b16 %v857
      %v3173 = vunpack.c.l.b16 %v858
      %v3174 = vunpack.c.h.b16 %v858
      %v3175 = vunpack.c.l.b16 %v859
      %v3176 = vunpack.c.h.b16 %v859
      %v3177 = vunpack.c.l.b16 %v860
      %v3178 = vunpack.c.h.b16 %v860
      %v3179 = vunpack.c.l.b16 %v861
      %v3180 = vunpack.c.h.b16 %v861
      %v3181 = vunpack.c.l.b16 %v862
      %v3182 = vunpack.c.h.b16 %v862
      %v3183 = vunpack.c.l.b16 %v863
      %v3184 = vunpack.c.h.b16 %v863
      %v3185 = vunpack.c.l.b16 %v864
      %v3186 = vunpack.c.h.b16 %v864
      %v3187 = vunpack.c.l.b16 %v865
      %v3188 = vunpack.c.h.b16 %v865
      %v3189 = vunpack.c.l.b16 %v866
      %v3190 = vunpack.c.h.b16 %v866
      %v3191 = vunpack.c.l.b16 %v867
      %v3192 = vunpack.c.h.b16 %v867
      %v3193 = vunpack.c.l.b16 %v868
      %v3194 = vunpack.c.h.b16 %v868
      %v3195 = vunpack.c.l.b16 %v869
      %v3196 = vunpack.c.h.b16 %v869
      %v3197 = vunpack.c.l.b16 %v870
      %v3198 = vunpack.c.h.b16 %v870
      %v3199 = vunpack.c.l.b16 %v871
      %v3200 = vunpack.c.h.b16 %v871
      %v3201 = vunpack.c.l.b16 %v872
      %v3202 = vunpack.c.h.b16 %v872
      %v3203 = vunpack.c.l.b16 %v873
      %v3204 = vunpack.c.h.b16 %v873
      %v3205 = vunpack.c.l.b16 %v874
      %v3206 = vunpack.c.h.b16 %v874
      %v3207 = vunpack.c.l.b16 %v875
      %v3208 = vunpack.c.h.b16 %v875
      %v3209 = vunpack.c.l.b16 %v876
      %v3210 = vunpack.c.h.b16 %v876
      %v3211 = vunpack.c.l.b16 %v877
      %v3212 = vunpack.c.h.b16 %v877
      %v3213 = vunpack.c.l.b16 %v878
      %v3214 = vunpack.c.h.b16 %v878
      %v3215 = vunpack.c.l.b16 %v879
      %v3216 = vunpack.c.h.b16 %v879
      %v3217 = vunpack.c.l.b16 %v880
      %v3218 = vunpack.c.h.b16 %v880
      %v3219 = vunpack.c.l.b16 %v881
      %v3220 = vunpack.c.h.b16 %v881
      %v3221 = vunpack.c.l.b16 %v882
      %v3222 = vunpack.c.h.b16 %v882
      %v3223 = vunpack.c.l.b16 %v883
      %v3224 = vunpack.c.h.b16 %v883
      %v3225 = vunpack.c.l.b16 %v884
      %v3226 = vunpack.c.h.b16 %v884
      %v3227 = vunpack.c.l.b16 %v885
      %v3228 = vunpack.c.h.b16 %v885
      %v3229 = vunpack.c.l.b16 %v886
      %v3230 = vunpack.c.h.b16 %v886
      %v3231 = vunpack.c.l.b16 %v887
      %v3232 = vunpack.c.h.b16 %v887
      %v3233 = vunpack.c.l.b16 %v888
      %v3234 = vunpack.c.h.b16 %v888
      %v3235 = vunpack.c.l.b16 %v889
      %v3236 = vunpack.c.h.b16 %v889
      %v3237 = vunpack.c.l.b16 %v890
      %v3238 = vunpack.c.h.b16 %v890
      %v3239 = vunpack.c.l.b16 %v891
      %v3240 = vunpack.c.h.b16 %v891
      %v3241 = vunpack.c.l.b16 %v892
      %v3242 = vunpack.c.h.b16 %v892
      %v3243 = vunpack.c.l.b16 %v893
      %v3244 = vunpack.c.h.b16 %v893
      %v3245 = vunpack.c.l.b16 %v894
      %v3246 = vunpack.c.h.b16 %v894
      %v3247 = vunpack.c.l.b16 %v895
      %v3248 = vunpack.c.h.b16 %v895
      %v3249 = vunpack.c.l.b16 %v896
      %v3250 = vunpack.c.h.b16 %v896
      %v3251 = vunpack.c.l.b16 %v897
      %v3252 = vunpack.c.h.b16 %v897
      %v3253 = vunpack.c.l.b16 %v898
      %v3254 = vunpack.c.h.b16 %v898
      %v3255 = vunpack.c.l.b16 %v899
      %v3256 = vunpack.c.h.b16 %v899
      %v3257 = vunpack.c.l.b16 %v900
      %v3258 = vunpack.c.h.b16 %v900
      %v3259 = vunpack.c.l.b16 %v901
      %v3260 = vunpack.c.h.b16 %v901
      %v3261 = vunpack.c.l.b16 %v902
      %v3262 = vunpack.c.h.b16 %v902
      %v3263 = vunpack.c.l.b16 %v903
      %v3264 = vunpack.c.h.b16 %v903
      %v3265 = vunpack.c.l.b16 %v904
      %v3266 = vunpack.c.h.b16 %v904
      %v3267 = vunpack.c.l.b16 %v905
      %v3268 = vunpack.c.h.b16 %v905
      %v3269 = vunpack.c.l.b16 %v906
      %v3270 = vunpack.c.h.b16 %v906
      %v3271 = vunpack.c.l.b16 %v907
      %v3272 = vunpack.c.h.b16 %v907
      %v3273 = vunpack.c.l.b16 %v908
      %v3274 = vunpack.c.h.b16 %v908
      %v3275 = vunpack.c.l.b16 %v909
      %v3276 = vunpack.c.h.b16 %v909
      %v3277 = vunpack.c.l.b16 %v910
      %v3278 = vunpack.c.h.b16 %v910
      %v3279 = vunpack.c.l.b16 %v911
      %v3280 = vunpack.c.h.b16 %v911
      %v3281 = vunpack.c.l.b16 %v912
      %v3282 = vunpack.c.h.b16 %v912
      %v3283 = vunpack.c.l.b16 %v913
      %v3284 = vunpack.c.h.b16 %v913
      %v3285 = vunpack.c.l.b16 %v914
      %v3286 = vunpack.c.h.b16 %v914
      %v3287 = vunpack.c.l.b16 %v915
      %v3288 = vunpack.c.h.b16 %v915
      %v3289 = vunpack.c.l.b16 %v916
      %v3290 = vunpack.c.h.b16 %v916
      %v3291 = vunpack.c.l.b16 %v917
      %v3292 = vunpack.c.h.b16 %v917
      %v3293 = vunpack.c.l.b16 %v918
      %v3294 = vunpack.c.h.b16 %v918
      %v3295 = vunpack.c.l.b16 %v919
      %v3296 = vunpack.c.h.b16 %v919
      %v3297 = vunpack.c.l.b16 %v920
      %v3298 = vunpack.c.h.b16 %v920
      %v3299 = vunpack.c.l.b16 %v921
      %v3300 = vunpack.c.h.b16 %v921
      %v3301 = vunpack.c.l.b16 %v922
      %v3302 = vunpack.c.h.b16 %v922
      %v3303 = vunpack.c.l.b16 %v923
      %v3304 = vunpack.c.h.b16 %v923
      %v3305 = vunpack.c.l.b16 %v924
      %v3306 = vunpack.c.h.b16 %v924
      %v3307 = vunpack.c.l.b16 %v925
      %v3308 = vunpack.c.h.b16 %v925
      %v3309 = vunpack.c.l.b16 %v926
      %v3310 = vunpack.c.h.b16 %v926
      %v3311 = vunpack.c.l.b16 %v927
      %v3312 = vunpack.c.h.b16 %v927
      %v3313 = vunpack.c.l.b16 %v928
      %v3314 = vunpack.c.h.b16 %v928
      %v3315 = vunpack.c.l.b16 %v929
      %v3316 = vunpack.c.h.b16 %v929
      %v3317 = vunpack.c.l.b16 %v930
      %v3318 = vunpack.c.h.b16 %v930
      %v3319 = vunpack.c.l.b16 %v931
      %v3320 = vunpack.c.h.b16 %v931
      %v3321 = vunpack.c.l.b16 %v932
      %v3322 = vunpack.c.h.b16 %v932
      %v3323 = vunpack.c.l.b16 %v933
      %v3324 = vunpack.c.h.b16 %v933
      %v3325 = vunpack.c.l.b16 %v934
      %v3326 = vunpack.c.h.b16 %v934
      %v3327 = vunpack.c.l.b16 %v935
      %v3328 = vunpack.c.h.b16 %v935
      %v3329 = vunpack.c.l.b16 %v936
      %v3330 = vunpack.c.h.b16 %v936
      %v3331 = vunpack.c.l.b16 %v937
      %v3332 = vunpack.c.h.b16 %v937
      %v3333 = vunpack.c.l.b16 %v938
      %v3334 = vunpack.c.h.b16 %v938
      %v3335 = vunpack.c.l.b16 %v939
      %v3336 = vunpack.c.h.b16 %v939
      %v3337 = vunpack.c.l.b16 %v940
      %v3338 = vunpack.c.h.b16 %v940
      %v3339 = vunpack.c.l.b16 %v941
      %v3340 = vunpack.c.h.b16 %v941
      %v3341 = vunpack.c.l.b16 %v942
      %v3342 = vunpack.c.h.b16 %v942
      %v3343 = vunpack.c.l.b16 %v943
      %v3344 = vunpack.c.h.b16 %v943
      %v3345 = vunpack.c.l.b16 %v944
      %v3346 = vunpack.c.h.b16 %v944
      %v3347 = vunpack.c.l.b16 %v945
      %v3348 = vunpack.c.h.b16 %v945
      %v3349 = vunpack.c.l.b16 %v946
      %v3350 = vunpack.c.h.b16 %v946
      %v3351 = vunpack.c.l.b16 %v947
      %v3352 = vunpack.c.h.b16 %v947
      %v3353 = vunpack.c.l.b16 %v948
      %v3354 = vunpack.c.h.b16 %v948
      %v3355 = vunpack.c.l.b16 %v949
      %v3356 = vunpack.c.h.b16 %v949
      %v3357 = vunpack.c.l.b16 %v950
      %v3358 = vunpack.c.h.b16 %v950
      %v3359 = vunpack.c.l.b16 %v951
      %v3360 = vunpack.c.h.b16 %v951
      %v3361 = vunpack.c.l.b16 %v952
      %v3362 = vunpack.c.h.b16 %v952
      %v3363 = vunpack.c.l.b16 %v953
      %v3364 = vunpack.c.h.b16 %v953
      %v3365 = vunpack.c.l.b16 %v954
      %v3366 = vunpack.c.h.b16 %v954
      %v3367 = vunpack.c.l.b16 %v955
      %v3368 = vunpack.c.h.b16 %v955
      %v3369 = vunpack.c.l.b16 %v956
      %v3370 = vunpack.c.h.b16 %v956
      %v3371 = vunpack.c.l.b16 %v957
      %v3372 = vunpack.c.h.b16 %v957
      %v3373 = vunpack.c.l.b16 %v958
      %v3374 = vunpack.c.h.b16 %v958
      %v3375 = vunpack.c.l.b16 %v959
      %v3376 = vunpack.c.h.b16 %v959
      %v3377 = vunpack.c.l.b16 %v960
      %v3378 = vunpack.c.h.b16 %v960
      %v3379 = vunpack.c.l.b16 %v961
      %v3380 = vunpack.c.h.b16 %v961
      %v3381 = vunpack.c.l.b16 %v962
      %v3382 = vunpack.c.h.b16 %v962
      %v3383 = vunpack.c.l.b16 %v963
      %v3384 = vunpack.c.h.b16 %v963
      %v3385 = vunpack.c.l.b16 %v964
      %v3386 = vunpack.c.h.b16 %v964
      %v3387 = vunpack.c.l.b16 %v965
      %v3388 = vunpack.c.h.b16 %v965
      %v3389 = vunpack.c.l.b16 %v966
      %v3390 = vunpack.c.h.b16 %v966
      %v3391 = vunpack.c.l.b16 %v967
      %v3392 = vunpack.c.h.b16 %v967
      %v3393 = vunpack.c.l.b16 %v968
      %v3394 = vunpack.c.h.b16 %v968
      %v3395 = vunpack.c.l.b16 %v969
      %v3396 = vunpack.c.h.b16 %v969
      %v3397 = vunpack.c.l.b16 %v970
      %v3398 = vunpack.c.h.b16 %v970
      %v3399 = vunpack.c.l.b16 %v971
      %v3400 = vunpack.c.h.b16 %v971
      %v3401 = vunpack.c.l.b16 %v972
      %v3402 = vunpack.c.h.b16 %v972
      %v3403 = vunpack.c.l.b16 %v973
      %v3404 = vunpack.c.h.b16 %v973
      %v3405 = vunpack.c.l.b16 %v974
      %v3406 = vunpack.c.h.b16 %v974
      %v3407 = vunpack.c.l.b16 %v975
      %v3408 = vunpack.c.h.b16 %v975
      %v3409 = vunpack.c.l.b16 %v976
      %v3410 = vunpack.c.h.b16 %v976
      %v3411 = vunpack.c.l.b16 %v977
      %v3412 = vunpack.c.h.b16 %v977
      %v3413 = vunpack.c.l.b16 %v978
      %v3414 = vunpack.c.h.b16 %v978
      %v3415 = vunpack.c.l.b16 %v979
      %v3416 = vunpack.c.h.b16 %v979
      %v3417 = vunpack.c.l.b16 %v980
      %v3418 = vunpack.c.h.b16 %v980
      %v3419 = vunpack.c.l.b16 %v981
      %v3420 = vunpack.c.h.b16 %v981
      %v3421 = vunpack.c.l.b16 %v982
      %v3422 = vunpack.c.h.b16 %v982
      %v3423 = vunpack.c.l.b16 %v983
      %v3424 = vunpack.c.h.b16 %v983
      %v3425 = vunpack.c.l.b16 %v984
      %v3426 = vunpack.c.h.b16 %v984
      %v3427 = vunpack.c.l.b16 %v985
      %v3428 = vunpack.c.h.b16 %v985
      %v3429 = vunpack.c.l.b16 %v986
      %v3430 = vunpack.c.h.b16 %v986
      %v3431 = vunpack.c.l.b16 %v987
      %v3432 = vunpack.c.h.b16 %v987
      %v3433 = vunpack.c.l.b16 %v988
      %v3434 = vunpack.c.h.b16 %v988
      %v3435 = vunpack.c.l.b16 %v989
      %v3436 = vunpack.c.h.b16 %v989
      %v3437 = vunpack.c.l.b16 %v990
      %v3438 = vunpack.c.h.b16 %v990
      %v3439 = vunpack.c.l.b16 %v991
      %v3440 = vunpack.c.h.b16 %v991
      %v3441 = vunpack.c.l.b16 %v992
      %v3442 = vunpack.c.h.b16 %v992
      %v3443 = vunpack.c.l.b16 %v993
      %v3444 = vunpack.c.h.b16 %v993
      %v3445 = vunpack.c.l.b16 %v994
      %v3446 = vunpack.c.h.b16 %v994
      %v3447 = vunpack.c.l.b16 %v995
      %v3448 = vunpack.c.h.b16 %v995
      %v3449 = vunpack.c.l.b16 %v996
      %v3450 = vunpack.c.h.b16 %v996
      %v3451 = vunpack.c.l.b16 %v997
      %v3452 = vunpack.c.h.b16 %v997
      %v3453 = vunpack.c.l.b16 %v998
      %v3454 = vunpack.c.h.b16 %v998
      %v3455 = vunpack.c.l.b16 %v999
      %v3456 = vunpack.c.h.b16 %v999
      %v3457 = vunpack.c.l.b16 %v1000
      %v3458 = vunpack.c.h.b16 %v1000
      %v3459 = vunpack.c.l.b16 %v1001
      %v3460 = vunpack.c.h.b16 %v1001
      %v3461 = vunpack.c.l.b16 %v1002
      %v3462 = vunpack.c.h.b16 %v1002
      %v3463 = vunpack.c.l.b16 %v1003
      %v3464 = vunpack.c.h.b16 %v1003
      %v3465 = vunpack.c.l.b16 %v1004
      %v3466 = vunpack.c.h.b16 %v1004
      %v3467 = vunpack.c.l.b16 %v1005
      %v3468 = vunpack.c.h.b16 %v1005
      %v3469 = vunpack.c.l.b16 %v1006
      %v3470 = vunpack.c.h.b16 %v1006
      %v3471 = vunpack.c.l.b16 %v1007
      %v3472 = vunpack.c.h.b16 %v1007
      %v3473 = vunpack.c.l.b16 %v1008
      %v3474 = vunpack.c.h.b16 %v1008
      %v3475 = vunpack.c.l.b16 %v1009
      %v3476 = vunpack.c.h.b16 %v1009
      %v3477 = vunpack.c.l.b16 %v1010
      %v3478 = vunpack.c.h.b16 %v1010
      %v3479 = vunpack.c.l.b16 %v1011
      %v3480 = vunpack.c.h.b16 %v1011
      %v3481 = vunpack.c.l.b16 %v1012
      %v3482 = vunpack.c.h.b16 %v1012
      %v3483 = vunpack.c.l.b16 %v1013
      %v3484 = vunpack.c.h.b16 %v1013
      %v3485 = vunpack.c.l.b16 %v1014
      %v3486 = vunpack.c.h.b16 %v1014
      %v3487 = vunpack.c.l.b16 %v1015
      %v3488 = vunpack.c.h.b16 %v1015
      %v3489 = vunpack.c.l.b16 %v1016
      %v3490 = vunpack.c.h.b16 %v1016
      %v3491 = vunpack.c.l.b16 %v1017
      %v3492 = vunpack.c.h.b16 %v1017
      %v3493 = vunpack.c.l.b16 %v1018
      %v3494 = vunpack.c.h.b16 %v1018
      %v3495 = vunpack.c.l.b16 %v1019
      %v3496 = vunpack.c.h.b16 %v1019
      %v3497 = vunpack.c.l.b16 %v1020
      %v3498 = vunpack.c.h.b16 %v1020
      %v3499 = vunpack.c.l.b16 %v1021
      %v3500 = vunpack.c.h.b16 %v1021
      %v3501 = vunpack.c.l.b16 %v1022
      %v3502 = vunpack.c.h.b16 %v1022
      %v3503 = vunpack.c.l.b16 %v1023
      %v3504 = vunpack.c.h.b16 %v1023
      %v3505 = vunpack.c.l.b16 %v1024
      %v3506 = vunpack.c.h.b16 %v1024
      %v3507 = vunpack.c.l.b16 %v1025
      %v3508 = vunpack.c.h.b16 %v1025
      %v3509 = vunpack.c.l.b16 %v1026
      %v3510 = vunpack.c.h.b16 %v1026
      %v3511 = vunpack.c.l.b16 %v1027
      %v3512 = vunpack.c.h.b16 %v1027
      %v3513 = vunpack.c.l.b16 %v1028
      %v3514 = vunpack.c.h.b16 %v1028
      %v3515 = vunpack.c.l.b16 %v1029
      %v3516 = vunpack.c.h.b16 %v1029
      %v3517 = vunpack.c.l.b16 %v1030
      %v3518 = vunpack.c.h.b16 %v1030
      %v3519 = vunpack.c.l.b16 %v1031
      %v3520 = vunpack.c.h.b16 %v1031
      %v3521 = vunpack.c.l.b16 %v1032
      %v3522 = vunpack.c.h.b16 %v1032
      %v3523 = vunpack.c.l.b16 %v1033
      %v3524 = vunpack.c.h.b16 %v1033
      %v3525 = vunpack.c.l.b16 %v1034
      %v3526 = vunpack.c.h.b16 %v1034
      %v3527 = vunpack.c.l.b16 %v1035
      %v3528 = vunpack.c.h.b16 %v1035
      %v3529 = vunpack.c.l.b16 %v1036
      %v3530 = vunpack.c.h.b16 %v1036
      %v3531 = vunpack.c.l.b16 %v1037
      %v3532 = vunpack.c.h.b16 %v1037
      %v3533 = vunpack.c.l.b16 %v1038
      %v3534 = vunpack.c.h.b16 %v1038
      %v3535 = vunpack.c.l.b16 %v1039
      %v3536 = vunpack.c.h.b16 %v1039
      %v3537 = vunpack.c.l.b16 %v1040
      %v3538 = vunpack.c.h.b16 %v1040
      %v3539 = vunpack.c.l.b16 %v1041
      %v3540 = vunpack.c.h.b16 %v1041
      %v3541 = vpack.c.b16 %v1977, %v1973
      %v3542 = vpack.c.b16 %v1978, %v1974
      %v3543 = vpack.c.b16 %v1979, %v1975
      %v3544 = vpack.c.b16 %v1980, %v1976
      %v3545 = vpack.c.b16 %v1985, %v1981
      %v3546 = vpack.c.b16 %v1986, %v1982
      %v3547 = vpack.c.b16 %v1987, %v1983
      %v3548 = vpack.c.b16 %v1988, %v1984
      %v3549 = vpack.c.b16 %v1993, %v1989
      %v3550 = vpack.c.b16 %v1994, %v1990
      %v3551 = vpack.c.b16 %v1995, %v1991
      %v3552 = vpack.c.b16 %v1996, %v1992
      %v3553 = vpack.c.b16 %v2001, %v1997
      %v3554 = vpack.c.b16 %v2002, %v1998
      %v3555 = vpack.c.b16 %v2003, %v1999
      %v3556 = vpack.c.b16 %v2004, %v2000
      %v3557 = vpack.c.b16 %v2009, %v2005
      %v3558 = vpack.c.b16 %v2010, %v2006
      %v3559 = vpack.c.b16 %v2011, %v2007
      %v3560 = vpack.c.b16 %v2012, %v2008
      %v3561 = vpack.c.b16 %v2017, %v2013
      %v3562 = vpack.c.b16 %v2018, %v2014
      %v3563 = vpack.c.b16 %v2019, %v2015
      %v3564 = vpack.c.b16 %v2020, %v2016
      %v3565 = vpack.c.b16 %v2025, %v2021
      %v3566 = vpack.c.b16 %v2026, %v2022
      %v3567 = vpack.c.b16 %v2027, %v2023
      %v3568 = vpack.c.b16 %v2028, %v2024
      %v3569 = vpack.c.b16 %v2033, %v2029
      %v3570 = vpack.c.b16 %v2034, %v2030
      %v3571 = vpack.c.b16 %v2035, %v2031
      %v3572 = vpack.c.b16 %v2036, %v2032
      %v3573 = vpack.c.b16 %v2041, %v2037
      %v3574 = vpack.c.b16 %v2042, %v2038
      %v3575 = vpack.c.b16 %v2043, %v2039
      %v3576 = vpack.c.b16 %v2044, %v2040
      %v3577 = vpack.c.b16 %v2049, %v2045
      %v3578 = vpack.c.b16 %v2050, %v2046
      %v3579 = vpack.c.b16 %v2051, %v2047
      %v3580 = vpack.c.b16 %v2052, %v2048
      %v3581 = vpack.c.b16 %v2057, %v2053
      %v3582 = vpack.c.b16 %v2058, %v2054
      %v3583 = vpack.c.b16 %v2059, %v2055
      %v3584 = vpack.c.b16 %v2060, %v2056
      %v3585 = vpack.c.b16 %v2065, %v2061
      %v3586 = vpack.c.b16 %v2066, %v2062
      %v3587 = vpack.c.b16 %v2067, %v2063
      %v3588 = vpack.c.b16 %v2068, %v2064
      %v3589 = vpack.c.b16 %v2073, %v2069
      %v3590 = vpack.c.b16 %v2074, %v2070
      %v3591 = vpack.c.b16 %v2075, %v2071
      %v3592 = vpack.c.b16 %v2076, %v2072
      %v3593 = vpack.c.b16 %v2081, %v2077
      %v3594 = vpack.c.b16 %v2082, %v2078
      %v3595 = vpack.c.b16 %v2083, %v2079
      %v3596 = vpack.c.b16 %v2084, %v2080
      %v3597 = vpack.c.b16 %v2089, %v2085
      %v3598 = vpack.c.b16 %v2090, %v2086
      %v3599 = vpack.c.b16 %v2091, %v2087
      %v3600 = vpack.c.b16 %v2092, %v2088
      %v3601 = vpack.c.b16 %v2097, %v2093
      %v3602 = vpack.c.b16 %v2098, %v2094
      %v3603 = vpack.c.b16 %v2099, %v2095
      %v3604 = vpack.c.b16 %v2100, %v2096
      %v3605 = vpack.c.b16 %v2105, %v2101
      %v3606 = vpack.c.b16 %v2106, %v2102
      %v3607 = vpack.c.b16 %v2107, %v2103
      %v3608 = vpack.c.b16 %v2108, %v2104
      %v3609 = vpack.c.b16 %v2113, %v2109
      %v3610 = vpack.c.b16 %v2114, %v2110
      %v3611 = vpack.c.b16 %v2115, %v2111
      %v3612 = vpack.c.b16 %v2116, %v2112
      %v3613 = vpack.c.b16 %v2121, %v2117
      %v3614 = vpack.c.b16 %v2122, %v2118
      %v3615 = vpack.c.b16 %v2123, %v2119
      %v3616 = vpack.c.b16 %v2124, %v2120
      %v3617 = vpack.c.b16 %v2129, %v2125
      %v3618 = vpack.c.b16 %v2130, %v2126
      %v3619 = vpack.c.b16 %v2131, %v2127
      %v3620 = vpack.c.b16 %v2132, %v2128
      %v3621 = vpack.c.b16 %v2137, %v2133
      %v3622 = vpack.c.b16 %v2138, %v2134
      %v3623 = vpack.c.b16 %v2139, %v2135
      %v3624 = vpack.c.b16 %v2140, %v2136
      %v3625 = vpack.c.b16 %v2145, %v2141
      %v3626 = vpack.c.b16 %v2146, %v2142
      %v3627 = vpack.c.b16 %v2147, %v2143
      %v3628 = vpack.c.b16 %v2148, %v2144
      %v3629 = vpack.c.b16 %v2153, %v2149
      %v3630 = vpack.c.b16 %v2154, %v2150
      %v3631 = vpack.c.b16 %v2155, %v2151
      %v3632 = vpack.c.b16 %v2156, %v2152
      %v3633 = vpack.c.b16 %v2161, %v2157
      %v3634 = vpack.c.b16 %v2162, %v2158
      %v3635 = vpack.c.b16 %v2163, %v2159
      %v3636 = vpack.c.b16 %v2164, %v2160
      %v3637 = vpack.c.b16 %v2169, %v2165
      %v3638 = vpack.c.b16 %v2170, %v2166
      %v3639 = vpack.c.b16 %v2171, %v2167
      %v3640 = vpack.c.b16 %v2172, %v2168
      %v3641 = vpack.c.b16 %v2177, %v2173
      %v3642 = vpack.c.b16 %v2178, %v2174
      %v3643 = vpack.c.b16 %v2179, %v2175
      %v3644 = vpack.c.b16 %v2180, %v2176
      %v3645 = vpack.c.b16 %v2185, %v2181
      %v3646 = vpack.c.b16 %v2186, %v2182
      %v3647 = vpack.c.b16 %v2187, %v2183
      %v3648 = vpack.c.b16 %v2188, %v2184
      %v3649 = vpack.c.b16 %v2193, %v2189
      %v3650 = vpack.c.b16 %v2194, %v2190
      %v3651 = vpack.c.b16 %v2195, %v2191
      %v3652 = vpack.c.b16 %v2196, %v2192
      %v3653 = vpack.c.b16 %v2201, %v2197
      %v3654 = vpack.c.b16 %v2202, %v2198
      %v3655 = vpack.c.b16 %v2203, %v2199
      %v3656 = vpack.c.b16 %v2204, %v2200
      %v3657 = vpack.c.b16 %v2209, %v2205
      %v3658 = vpack.c.b16 %v2210, %v2206
      %v3659 = vpack.c.b16 %v2211, %v2207
      %v3660 = vpack.c.b16 %v2212, %v2208
      %v3661 = vpack.c.b16 %v2217, %v2213
      %v3662 = vpack.c.b16 %v2218, %v2214
      %v3663 = vpack.c.b16 %v2219, %v2215
      %v3664 = vpack.c.b16 %v2220, %v2216
      %v3665 = vpack.c.b16 %v2225, %v2221
      %v3666 = vpack.c.b16 %v2226, %v2222
      %v3667 = vpack.c.b16 %v2227, %v2223
      %v3668 = vpack.c.b16 %v2228, %v2224
      %v3669 = vpack.c.b16 %v2233, %v2229
      %v3670 = vpack.c.b16 %v2234, %v2230
      %v3671 = vpack.c.b16 %v2235, %v2231
      %v3672 = vpack.c.b16 %v2236, %v2232
      %v3673 = vpack.c.b16 %v2241, %v2237
      %v3674 = vpack.c.b16 %v2242, %v2238
      %v3675 = vpack.c.b16 %v2243, %v2239
      %v3676 = vpack.c.b16 %v2244, %v2240
      %v3677 = vpack.c.b16 %v2249, %v2245
      %v3678 = vpack.c.b16 %v2250, %v2246
      %v3679 = vpack.c.b16 %v2251, %v2247
      %v3680 = vpack.c.b16 %v2252, %v2248
      %v3681 = vpack.c.b16 %v2257, %v2253
      %v3682 = vpack.c.b16 %v2258, %v2254
      %v3683 = vpack.c.b16 %v2259, %v2255
      %v3684 = vpack.c.b16 %v2260, %v2256
      %v3685 = vpack.c.b16 %v2265, %v2261
      %v3686 = vpack.c.b16 %v2266, %v2262
      %v3687 = vpack.c.b16 %v2267, %v2263
      %v3688 = vpack.c.b16 %v2268, %v2264
      %v3689 = vpack.c.b16 %v2273, %v2269
      %v3690 = vpack.c.b16 %v2274, %v2270
      %v3691 = vpack.c.b16 %v2275, %v2271
      %v3692 = vpack.c.b16 %v2276, %v2272
      %v3693 = vpack.c.b16 %v2281, %v2277
      %v3694 = vpack.c.b16 %v2282, %v2278
      %v3695 = vpack.c.b16 %v2283, %v2279
      %v3696 = vpack.c.b16 %v2284, %v2280
      %v3697 = vpack.c.b16 %v2289, %v2285
      %v3698 = vpack.c.b16 %v2290, %v2286
      %v3699 = vpack.c.b16 %v2291, %v2287
      %v3700 = vpack.c.b16 %v2292, %v2288
      %v3701 = vpack.c.b16 %v2297, %v2293
      %v3702 = vpack.c.b16 %v2298, %v2294
      %v3703 = vpack.c.b16 %v2299, %v2295
      %v3704 = vpack.c.b16 %v2300, %v2296
      %v3705 = vpack.c.b16 %v2305, %v2301
      %v3706 = vpack.c.b16 %v2306, %v2302
      %v3707 = vpack.c.b16 %v2307, %v2303
      %v3708 = vpack.c.b16 %v2308, %v2304
      %v3709 = vpack.c.b16 %v2313, %v2309
      %v3710 = vpack.c.b16 %v2314, %v2310
      %v3711 = vpack.c.b16 %v2315, %v2311
      %v3712 = vpack.c.b16 %v2316, %v2312
      %v3713 = vpack.c.b16 %v2321, %v2317
      %v3714 = vpack.c.b16 %v2322, %v2318
      %v3715 = vpack.c.b16 %v2323, %v2319
      %v3716 = vpack.c.b16 %v2324, %v2320
      %v3717 = vpack.c.b16 %v2329, %v2325
      %v3718 = vpack.c.b16 %v2330, %v2326
      %v3719 = vpack.c.b16 %v2331, %v2327
      %v3720 = vpack.c.b16 %v2332, %v2328
      %v3721 = vpack.c.b16 %v2337, %v2333
      %v3722 = vpack.c.b16 %v2338, %v2334
      %v3723 = vpack.c.b16 %v2339, %v2335
      %v3724 = vpack.c.b16 %v2340, %v2336
      %v3725 = vpack.c.b16 %v2345, %v2341
      %v3726 = vpack.c.b16 %v2346, %v2342
      %v3727 = vpack.c.b16 %v2347, %v2343
      %v3728 = vpack.c.b16 %v2348, %v2344
      %v3729 = vpack.c.b16 %v2353, %v2349
      %v3730 = vpack.c.b16 %v2354, %v2350
      %v3731 = vpack.c.b16 %v2355, %v2351
      %v3732 = vpack.c.b16 %v2356, %v2352
      %v3733 = vpack.c.b16 %v2361, %v2357
      %v3734 = vpack.c.b16 %v2362, %v2358
      %v3735 = vpack.c.b16 %v2363, %v2359
      %v3736 = vpack.c.b16 %v2364, %v2360
      %v3737 = vpack.c.b16 %v2369, %v2365
      %v3738 = vpack.c.b16 %v2370, %v2366
      %v3739 = vpack.c.b16 %v2371, %v2367
      %v3740 = vpack.c.b16 %v2372, %v2368
      %v3741 = vpack.c.b16 %v2377, %v2373
      %v3742 = vpack.c.b16 %v2378, %v2374
      %v3743 = vpack.c.b16 %v2379, %v2375
      %v3744 = vpack.c.b16 %v2380, %v2376
      %v3745 = vpack.c.b16 %v2385, %v2381
      %v3746 = vpack.c.b16 %v2386, %v2382
      %v3747 = vpack.c.b16 %v2387, %v2383
      %v3748 = vpack.c.b16 %v2388, %v2384
      %v3749 = vpack.c.b16 %v2393, %v2389
      %v3750 = vpack.c.b16 %v2394, %v2390
      %v3751 = vpack.c.b16 %v2395, %v2391
      %v3752 = vpack.c.b16 %v2396, %v2392
      %v3753 = vpack.c.b16 %v2401, %v2397
      %v3754 = vpack.c.b16 %v2402, %v2398
      %v3755 = vpack.c.b16 %v2403, %v2399
      %v3756 = vpack.c.b16 %v2404, %v2400
      %v3757 = vpack.c.b16 %v2409, %v2405
      %v3758 = vpack.c.b16 %v2410, %v2406
      %v3759 = vpack.c.b16 %v2411, %v2407
      %v3760 = vpack.c.b16 %v2412, %v2408
      %v3761 = vpack.c.b16 %v2417, %v2413
      %v3762 = vpack.c.b16 %v2418, %v2414
      %v3763 = vpack.c.b16 %v2419, %v2415
      %v3764 = vpack.c.b16 %v2420, %v2416
      %v3765 = vpack.c.b16 %v2425, %v2421
      %v3766 = vpack.c.b16 %v2426, %v2422
      %v3767 = vpack.c.b16 %v2427, %v2423
      %v3768 = vpack.c.b16 %v2428, %v2424
      %v3769 = vpack.c.b16 %v2433, %v2429
      %v3770 = vpack.c.b16 %v2434, %v2430
      %v3771 = vpack.c.b16 %v2435, %v2431
      %v3772 = vpack.c.b16 %v2436, %v2432
      %v3773 = vpack.c.b16 %v2441, %v2437
      %v3774 = vpack.c.b16 %v2442, %v2438
      %v3775 = vpack.c.b16 %v2443, %v2439
      %v3776 = vpack.c.b16 %v2444, %v2440
      %v3777 = vpack.c.b16 %v2449, %v2445
      %v3778 = vpack.c.b16 %v2450, %v2446
      %v3779 = vpack.c.b16 %v2451, %v2447
      %v3780 = vpack.c.b16 %v2452, %v2448
      %v3781 = vpack.c.b16 %v2457, %v2453
      %v3782 = vpack.c.b16 %v2458, %v2454
      %v3783 = vpack.c.b16 %v2459, %v2455
      %v3784 = vpack.c.b16 %v2460, %v2456
      %v3785 = vpack.c.b16 %v2465, %v2461
      %v3786 = vpack.c.b16 %v2466, %v2462
      %v3787 = vpack.c.b16 %v2467, %v2463
      %v3788 = vpack.c.b16 %v2468, %v2464
      %v3789 = vpack.c.b16 %v2473, %v2469
      %v3790 = vpack.c.b16 %v2474, %v2470
      %v3791 = vpack.c.b16 %v2475, %v2471
      %v3792 = vpack.c.b16 %v2476, %v2472
      %v3793 = vpack.c.b16 %v2481, %v2477
      %v3794 = vpack.c.b16 %v2482, %v2478
      %v3795 = vpack.c.b16 %v2483, %v2479
      %v3796 = vpack.c.b16 %v2484, %v2480
      %v3797 = vpack.c.b16 %v2489, %v2485
      %v3798 = vpack.c.b16 %v2490, %v2486
      %v3799 = vpack.c.b16 %v2491, %v2487
      %v3800 = vpack.c.b16 %v2492, %v2488
      %v3801 = vpack.c.b16 %v2497, %v2493
      %v3802 = vpack.c.b16 %v2498, %v2494
      %v3803 = vpack.c.b16 %v2499, %v2495
      %v3804 = vpack.c.b16 %v2500, %v2496
      %v3805 = vpack.c.b16 %v2505, %v2501
      %v3806 = vpack.c.b16 %v2506, %v2502
      %v3807 = vpack.c.b16 %v2507, %v2503
      %v3808 = vpack.c.b16 %v2508, %v2504
      %v3809 = vpack.c.b16 %v2513, %v2509
      %v3810 = vpack.c.b16 %v2514, %v2510
      %v3811 = vpack.c.b16 %v2515, %v2511
      %v3812 = vpack.c.b16 %v2516, %v2512
      %v3813 = vpack.c.b16 %v2521, %v2517
      %v3814 = vpack.c.b16 %v2522, %v2518
      %v3815 = vpack.c.b16 %v2523, %v2519
      %v3816 = vpack.c.b16 %v2524, %v2520
      %v3817 = vpack.c.b16 %v2529, %v2525
      %v3818 = vpack.c.b16 %v2530, %v2526
      %v3819 = vpack.c.b16 %v2531, %v2527
      %v3820 = vpack.c.b16 %v2532, %v2528
      %v3821 = vpack.c.b16 %v2537, %v2533
      %v3822 = vpack.c.b16 %v2538, %v2534
      %v3823 = vpack.c.b16 %v2539, %v2535
      %v3824 = vpack.c.b16 %v2540, %v2536
      %v3825 = vpack.c.b16 %v2545, %v2541
      %v3826 = vpack.c.b16 %v2546, %v2542
      %v3827 = vpack.c.b16 %v2547, %v2543
      %v3828 = vpack.c.b16 %v2548, %v2544
      %v3829 = vpack.c.b16 %v2553, %v2549
      %v3830 = vpack.c.b16 %v2554, %v2550
      %v3831 = vpack.c.b16 %v2555, %v2551
      %v3832 = vpack.c.b16 %v2556, %v2552
      %v3833 = vpack.c.b16 %v2561, %v2557
      %v3834 = vpack.c.b16 %v2562, %v2558
      %v3835 = vpack.c.b16 %v2563, %v2559
      %v3836 = vpack.c.b16 %v2564, %v2560
      %v3837 = vpack.c.b16 %v2569, %v2565
      %v3838 = vpack.c.b16 %v2570, %v2566
      %v3839 = vpack.c.b16 %v2571, %v2567
      %v3840 = vpack.c.b16 %v2572, %v2568
      %v3841 = vpack.c.b16 %v2577, %v2573
      %v3842 = vpack.c.b16 %v2578, %v2574
      %v3843 = vpack.c.b16 %v2579, %v2575
      %v3844 = vpack.c.b16 %v2580, %v2576
      %v3845 = vpack.c.b16 %v2585, %v2581
      %v3846 = vpack.c.b16 %v2586, %v2582
      %v3847 = vpack.c.b16 %v2587, %v2583
      %v3848 = vpack.c.b16 %v2588, %v2584
      %v3849 = vpack.c.b16 %v2593, %v2589
      %v3850 = vpack.c.b16 %v2594, %v2590
      %v3851 = vpack.c.b16 %v2595, %v2591
      %v3852 = vpack.c.b16 %v2596, %v2592
      %v3853 = vpack.c.b16 %v2601, %v2597
      %v3854 = vpack.c.b16 %v2602, %v2598
      %v3855 = vpack.c.b16 %v2603, %v2599
      %v3856 = vpack.c.b16 %v2604, %v2600
      %v3857 = vpack.c.b16 %v2609, %v2605
      %v3858 = vpack.c.b16 %v2610, %v2606
      %v3859 = vpack.c.b16 %v2611, %v2607
      %v3860 = vpack.c.b16 %v2612, %v2608
      %v3861 = vpack.c.b16 %v2617, %v2613
      %v3862 = vpack.c.b16 %v2618, %v2614
      %v3863 = vpack.c.b16 %v2619, %v2615
      %v3864 = vpack.c.b16 %v2620, %v2616
      %v3865 = vpack.c.b16 %v2625, %v2621
      %v3866 = vpack.c.b16 %v2626, %v2622
      %v3867 = vpack.c.b16 %v2627, %v2623
      %v3868 = vpack.c.b16 %v2628, %v2624
      %v3869 = vpack.c.b16 %v2633, %v2629
      %v3870 = vpack.c.b16 %v2634, %v2630
      %v3871 = vpack.c.b16 %v2635, %v2631
      %v3872 = vpack.c.b16 %v2636, %v2632
      %v3873 = vpack.c.b16 %v2641, %v2637
      %v3874 = vpack.c.b16 %v2642, %v2638
      %v3875 = vpack.c.b16 %v2643, %v2639
      %v3876 = vpack.c.b16 %v2644, %v2640
      %v3877 = vpack.c.b16 %v2649, %v2645
      %v3878 = vpack.c.b16 %v2650, %v2646
      %v3879 = vpack.c.b16 %v2651, %v2647
      %v3880 = vpack.c.b16 %v2652, %v2648
      %v3881 = vpack.c.b16 %v2657, %v2653
      %v3882 = vpack.c.b16 %v2658, %v2654
      %v3883 = vpack.c.b16 %v2659, %v2655
      %v3884 = vpack.c.b16 %v2660, %v2656
      %v3885 = vpack.c.b16 %v2665, %v2661
      %v3886 = vpack.c.b16 %v2666, %v2662
      %v3887 = vpack.c.b16 %v2667, %v2663
      %v3888 = vpack.c.b16 %v2668, %v2664
      %v3889 = vpack.c.b16 %v2673, %v2669
      %v3890 = vpack.c.b16 %v2674, %v2670
      %v3891 = vpack.c.b16 %v2675, %v2671
      %v3892 = vpack.c.b16 %v2676, %v2672
      %v3893 = vpack.c.b16 %v2681, %v2677
      %v3894 = vpack.c.b16 %v2682, %v2678
      %v3895 = vpack.c.b16 %v2683, %v2679
      %v3896 = vpack.c.b16 %v2684, %v2680
      %v3897 = vpack.c.b16 %v2689, %v2685
      %v3898 = vpack.c.b16 %v2690, %v2686
      %v3899 = vpack.c.b16 %v2691, %v2687
      %v3900 = vpack.c.b16 %v2692, %v2688
      %v3901 = vpack.c.b16 %v2697, %v2693
      %v3902 = vpack.c.b16 %v2698, %v2694
      %v3903 = vpack.c.b16 %v2699, %v2695
      %v3904 = vpack.c.b16 %v2700, %v2696
      %v3905 = vpack.c.b16 %v2705, %v2701
      %v3906 = vpack.c.b16 %v2706, %v2702
      %v3907 = vpack.c.b16 %v2707, %v2703
      %v3908 = vpack.c.b16 %v2708, %v2704
      %v3909 = vpack.c.b16 %v2713, %v2709
      %v3910 = vpack.c.b16 %v2714, %v2710
      %v3911 = vpack.c.b16 %v2715, %v2711
      %v3912 = vpack.c.b16 %v2716, %v2712
      %v3913 = vpack.c.b16 %v2721, %v2717
      %v3914 = vpack.c.b16 %v2722, %v2718
      %v3915 = vpack.c.b16 %v2723, %v2719
      %v3916 = vpack.c.b16 %v2724, %v2720
      %v3917 = vpack.c.b16 %v2729, %v2725
      %v3918 = vpack.c.b16 %v2730, %v2726
      %v3919 = vpack.c.b16 %v2731, %v2727
      %v3920 = vpack.c.b16 %v2732, %v2728
      %v3921 = vpack.c.b16 %v2737, %v2733
      %v3922 = vpack.c.b16 %v2738, %v2734
      %v3923 = vpack.c.b16 %v2739, %v2735
      %v3924 = vpack.c.b16 %v2740, %v2736
      %v3925 = vpack.c.b16 %v2745, %v2741
      %v3926 = vpack.c.b16 %v2746, %v2742
      %v3927 = vpack.c.b16 %v2747, %v2743
      %v3928 = vpack.c.b16 %v2748, %v2744
      %v3929 = vpack.c.b16 %v2753, %v2749
      %v3930 = vpack.c.b16 %v2754, %v2750
      %v3931 = vpack.c.b16 %v2755, %v2751
      %v3932 = vpack.c.b16 %v2756, %v2752
      %v3933 = vpack.c.b16 %v2761, %v2757
      %v3934 = vpack.c.b16 %v2762, %v2758
      %v3935 = vpack.c.b16 %v2763, %v2759
      %v3936 = vpack.c.b16 %v2764, %v2760
      %v3937 = vpack.c.b16 %v2769, %v2765
      %v3938 = vpack.c.b16 %v2770, %v2766
      %v3939 = vpack.c.b16 %v2771, %v2767
      %v3940 = vpack.c.b16 %v2772, %v2768
      %v3941 = vpack.c.b16 %v2777, %v2773
      %v3942 = vpack.c.b16 %v2778, %v2774
      %v3943 = vpack.c.b16 %v2779, %v2775
      %v3944 = vpack.c.b16 %v2780, %v2776
      %v3945 = vpack.c.b16 %v2785, %v2781
      %v3946 = vpack.c.b16 %v2786, %v2782
      %v3947 = vpack.c.b16 %v2787, %v2783
      %v3948 = vpack.c.b16 %v2788, %v2784
      %v3949 = vpack.c.b16 %v2793, %v2789
      %v3950 = vpack.c.b16 %v2794, %v2790
      %v3951 = vpack.c.b16 %v2795, %v2791
      %v3952 = vpack.c.b16 %v2796, %v2792
      %v3953 = vpack.c.b16 %v2801, %v2797
      %v3954 = vpack.c.b16 %v2802, %v2798
      %v3955 = vpack.c.b16 %v2803, %v2799
      %v3956 = vpack.c.b16 %v2804, %v2800
      %v3957 = vpack.c.b16 %v2809, %v2805
      %v3958 = vpack.c.b16 %v2810, %v2806
      %v3959 = vpack.c.b16 %v2811, %v2807
      %v3960 = vpack.c.b16 %v2812, %v2808
      %v3961 = vpack.c.b16 %v2817, %v2813
      %v3962 = vpack.c.b16 %v2818, %v2814
      %v3963 = vpack.c.b16 %v2819, %v2815
      %v3964 = vpack.c.b16 %v2820, %v2816
      %v3965 = vpack.c.b16 %v2825, %v2821
      %v3966 = vpack.c.b16 %v2826, %v2822
      %v3967 = vpack.c.b16 %v2827, %v2823
      %v3968 = vpack.c.b16 %v2828, %v2824
      %v3969 = vpack.c.b16 %v2833, %v2829
      %v3970 = vpack.c.b16 %v2834, %v2830
      %v3971 = vpack.c.b16 %v2835, %v2831
      %v3972 = vpack.c.b16 %v2836, %v2832
      %v3973 = vpack.c.b16 %v2841, %v2837
      %v3974 = vpack.c.b16 %v2842, %v2838
      %v3975 = vpack.c.b16 %v2843, %v2839
      %v3976 = vpack.c.b16 %v2844, %v2840
      %v3977 = vpack.c.b16 %v2849, %v2845
      %v3978 = vpack.c.b16 %v2850, %v2846
      %v3979 = vpack.c.b16 %v2851, %v2847
      %v3980 = vpack.c.b16 %v2852, %v2848
      %v3981 = vpack.c.b16 %v2857, %v2853
      %v3982 = vpack.c.b16 %v2858, %v2854
      %v3983 = vpack.c.b16 %v2859, %v2855
      %v3984 = vpack.c.b16 %v2860, %v2856
      %v3985 = vpack.c.b16 %v2865, %v2861
      %v3986 = vpack.c.b16 %v2866, %v2862
      %v3987 = vpack.c.b16 %v2867, %v2863
      %v3988 = vpack.c.b16 %v2868, %v2864
      %v3989 = vpack.c.b16 %v2873, %v2869
      %v3990 = vpack.c.b16 %v2874, %v2870
      %v3991 = vpack.c.b16 %v2875, %v2871
      %v3992 = vpack.c.b16 %v2876, %v2872
      %v3993 = vpack.c.b16 %v2881, %v2877
      %v3994 = vpack.c.b16 %v2882, %v2878
      %v3995 = vpack.c.b16 %v2883, %v2879
      %v3996 = vpack.c.b16 %v2884, %v2880
      %v3997 = vpack.c.b16 %v2889, %v2885
      %v3998 = vpack.c.b16 %v2890, %v2886
      %v3999 = vpack.c.b16 %v2891, %v2887
      %v4000 = vpack.c.b16 %v2892, %v2888
      %v4001 = vpack.c.b16 %v2897, %v2893
      %v4002 = vpack.c.b16 %v2898, %v2894
      %v4003 = vpack.c.b16 %v2899, %v2895
      %v4004 = vpack.c.b16 %v2900, %v2896
      %v4005 = vpack.c.b16 %v2905, %v2901
      %v4006 = vpack.c.b16 %v2906, %v2902
      %v4007 = vpack.c.b16 %v2907, %v2903
      %v4008 = vpack.c.b16 %v2908, %v2904
      %v4009 = vpack.c.b16 %v2913, %v2909
      %v4010 = vpack.c.b16 %v2914, %v2910
      %v4011 = vpack.c.b16 %v2915, %v2911
      %v4012 = vpack.c.b16 %v2916, %v2912
      %v4013 = vpack.c.b16 %v2921, %v2917
      %v4014 = vpack.c.b16 %v2922, %v2918
      %v4015 = vpack.c.b16 %v2923, %v2919
      %v4016 = vpack.c.b16 %v2924, %v2920
      %v4017 = vpack.c.b16 %v2929, %v2925
      %v4018 = vpack.c.b16 %v2930, %v2926
      %v4019 = vpack.c.b16 %v2931, %v2927
      %v4020 = vpack.c.b16 %v2932, %v2928
      %v4021 = vpack.c.b16 %v2937, %v2933
      %v4022 = vpack.c.b16 %v2938, %v2934
      %v4023 = vpack.c.b16 %v2939, %v2935
      %v4024 = vpack.c.b16 %v2940, %v2936
      %v4025 = vpack.c.b16 %v2945, %v2941
      %v4026 = vpack.c.b16 %v2946, %v2942
      %v4027 = vpack.c.b16 %v2947, %v2943
      %v4028 = vpack.c.b16 %v2948, %v2944
      %v4029 = vpack.c.b16 %v2953, %v2949
      %v4030 = vpack.c.b16 %v2954, %v2950
      %v4031 = vpack.c.b16 %v2955, %v2951
      %v4032 = vpack.c.b16 %v2956, %v2952
      %v4033 = vpack.c.b16 %v2961, %v2957
      %v4034 = vpack.c.b16 %v2962, %v2958
      %v4035 = vpack.c.b16 %v2963, %v2959
      %v4036 = vpack.c.b16 %v2964, %v2960
      %v4037 = vpack.c.b16 %v2969, %v2965
      %v4038 = vpack.c.b16 %v2970, %v2966
      %v4039 = vpack.c.b16 %v2971, %v2967
      %v4040 = vpack.c.b16 %v2972, %v2968
      %v4041 = vpack.c.b16 %v2977, %v2973
      %v4042 = vpack.c.b16 %v2978, %v2974
      %v4043 = vpack.c.b16 %v2979, %v2975
      %v4044 = vpack.c.b16 %v2980, %v2976
      %v4045 = vpack.c.b16 %v2985, %v2981
      %v4046 = vpack.c.b16 %v2986, %v2982
      %v4047 = vpack.c.b16 %v2987, %v2983
      %v4048 = vpack.c.b16 %v2988, %v2984
      %v4049 = vpack.c.b16 %v2993, %v2989
      %v4050 = vpack.c.b16 %v2994, %v2990
      %v4051 = vpack.c.b16 %v2995, %v2991
      %v4052 = vpack.c.b16 %v2996, %v2992
      %v4053 = vpack.c.b16 %v3001, %v2997
      %v4054 = vpack.c.b16 %v3002, %v2998
      %v4055 = vpack.c.b16 %v3003, %v2999
      %v4056 = vpack.c.b16 %v3004, %v3000
      %v4057 = vpack.c.b16 %v3009, %v3005
      %v4058 = vpack.c.b16 %v3010, %v3006
      %v4059 = vpack.c.b16 %v3011, %v3007
      %v4060 = vpack.c.b16 %v3012, %v3008
      %v4061 = vpack.c.b16 %v3017, %v3013
      %v4062 = vpack.c.b16 %v3018, %v3014
      %v4063 = vpack.c.b16 %v3019, %v3015
      %v4064 = vpack.c.b16 %v3020, %v3016
      %v4065 = vpack.c.b16 %v3025, %v3021
      %v4066 = vpack.c.b16 %v3026, %v3022
      %v4067 = vpack.c.b16 %v3027, %v3023
      %v4068 = vpack.c.b16 %v3028, %v3024
      %v4069 = vpack.c.b16 %v3033, %v3029
      %v4070 = vpack.c.b16 %v3034, %v3030
      %v4071 = vpack.c.b16 %v3035, %v3031
      %v4072 = vpack.c.b16 %v3036, %v3032
      %v4073 = vpack.c.b16 %v3041, %v3037
      %v4074 = vpack.c.b16 %v3042, %v3038
      %v4075 = vpack.c.b16 %v3043, %v3039
      %v4076 = vpack.c.b16 %v3044, %v3040
      %v4077 = vpack.c.b16 %v3049, %v3045
      %v4078 = vpack.c.b16 %v3050, %v3046
      %v4079 = vpack.c.b16 %v3051, %v3047
      %v4080 = vpack.c.b16 %v3052, %v3048
      %v4081 = vpack.c.b16 %v3057, %v3053
      %v4082 = vpack.c.b16 %v3058, %v3054
      %v4083 = vpack.c.b16 %v3059, %v3055
      %v4084 = vpack.c.b16 %v3060, %v3056
      %v4085 = vpack.c.b16 %v3065, %v3061
      %v4086 = vpack.c.b16 %v3066, %v3062
      %v4087 = vpack.c.b16 %v3067, %v3063
      %v4088 = vpack.c.b16 %v3068, %v3064
      %v4089 = vpack.c.b16 %v3073, %v3069
      %v4090 = vpack.c.b16 %v3074, %v3070
      %v4091 = vpack.c.b16 %v3075, %v3071
      %v4092 = vpack.c.b16 %v3076, %v3072
      %v4093 = vpack.c.b16 %v3081, %v3077
      %v4094 = vpack.c.b16 %v3082, %v3078
      %v4095 = vpack.c.b16 %v3083, %v3079
      %v4096 = vpack.c.b16 %v3084, %v3080
      %v4097 = vpack.c.b16 %v3089, %v3085
      %v4098 = vpack.c.b16 %v3090, %v3086
      %v4099 = vpack.c.b16 %v3091, %v3087
      %v4100 = vpack.c.b16 %v3092, %v3088
      %v4101 = vpack.c.b16 %v3097, %v3093
      %v4102 = vpack.c.b16 %v3098, %v3094
      %v4103 = vpack.c.b16 %v3099, %v3095
      %v4104 = vpack.c.b16 %v3100, %v3096
      %v4105 = vpack.c.b16 %v3105, %v3101
      %v4106 = vpack.c.b16 %v3106, %v3102
      %v4107 = vpack.c.b16 %v3107, %v3103
      %v4108 = vpack.c.b16 %v3108, %v3104
      %v4109 = vpack.c.b16 %v3113, %v3109
      %v4110 = vpack.c.b16 %v3114, %v3110
      %v4111 = vpack.c.b16 %v3115, %v3111
      %v4112 = vpack.c.b16 %v3116, %v3112
      %v4113 = vpack.c.b16 %v3121, %v3117
      %v4114 = vpack.c.b16 %v3122, %v3118
      %v4115 = vpack.c.b16 %v3123, %v3119
      %v4116 = vpack.c.b16 %v3124, %v3120
      %v4117 = vpack.c.b16 %v3129, %v3125
      %v4118 = vpack.c.b16 %v3130, %v3126
      %v4119 = vpack.c.b16 %v3131, %v3127
      %v4120 = vpack.c.b16 %v3132, %v3128
      %v4121 = vpack.c.b16 %v3137, %v3133
      %v4122 = vpack.c.b16 %v3138, %v3134
      %v4123 = vpack.c.b16 %v3139, %v3135
      %v4124 = vpack.c.b16 %v3140, %v3136
      %v4125 = vpack.c.b16 %v3145, %v3141
      %v4126 = vpack.c.b16 %v3146, %v3142
      %v4127 = vpack.c.b16 %v3147, %v3143
      %v4128 = vpack.c.b16 %v3148, %v3144
      %v4129 = vpack.c.b16 %v3153, %v3149
      %v4130 = vpack.c.b16 %v3154, %v3150
      %v4131 = vpack.c.b16 %v3155, %v3151
      %v4132 = vpack.c.b16 %v3156, %v3152
      %v4133 = vpack.c.b16 %v3161, %v3157
      %v4134 = vpack.c.b16 %v3162, %v3158
      %v4135 = vpack.c.b16 %v3163, %v3159
      %v4136 = vpack.c.b16 %v3164, %v3160
      %v4137 = vpack.c.b16 %v3169, %v3165
      %v4138 = vpack.c.b16 %v3170, %v3166
      %v4139 = vpack.c.b16 %v3171, %v3167
      %v4140 = vpack.c.b16 %v3172, %v3168
      %v4141 = vpack.c.b16 %v3177, %v3173
      %v4142 = vpack.c.b16 %v3178, %v3174
      %v4143 = vpack.c.b16 %v3179, %v3175
      %v4144 = vpack.c.b16 %v3180, %v3176
      %v4145 = vpack.c.b16 %v3185, %v3181
      %v4146 = vpack.c.b16 %v3186, %v3182
      %v4147 = vpack.c.b16 %v3187, %v3183
      %v4148 = vpack.c.b16 %v3188, %v3184
      %v4149 = vpack.c.b16 %v3193, %v3189
      %v4150 = vpack.c.b16 %v3194, %v3190
      %v4151 = vpack.c.b16 %v3195, %v3191
      %v4152 = vpack.c.b16 %v3196, %v3192
      %v4153 = vpack.c.b16 %v3201, %v3197
      %v4154 = vpack.c.b16 %v3202, %v3198
      %v4155 = vpack.c.b16 %v3203, %v3199
      %v4156 = vpack.c.b16 %v3204, %v3200
      %v4157 = vpack.c.b16 %v3209, %v3205
      %v4158 = vpack.c.b16 %v3210, %v3206
      %v4159 = vpack.c.b16 %v3211, %v3207
      %v4160 = vpack.c.b16 %v3212, %v3208
      %v4161 = vpack.c.b16 %v3217, %v3213
      %v4162 = vpack.c.b16 %v3218, %v3214
      %v4163 = vpack.c.b16 %v3219, %v3215
      %v4164 = vpack.c.b16 %v3220, %v3216
      %v4165 = vpack.c.b16 %v3225, %v3221
      %v4166 = vpack.c.b16 %v3226, %v3222
      %v4167 = vpack.c.b16 %v3227, %v3223
      %v4168 = vpack.c.b16 %v3228, %v3224
      %v4169 = vpack.c.b16 %v3233, %v3229
      %v4170 = vpack.c.b16 %v3234, %v3230
      %v4171 = vpack.c.b16 %v3235, %v3231
      %v4172 = vpack.c.b16 %v3236, %v3232
      %v4173 = vpack.c.b16 %v3241, %v3237
      %v4174 = vpack.c.b16 %v3242, %v3238
      %v4175 = vpack.c.b16 %v3243, %v3239
      %v4176 = vpack.c.b16 %v3244, %v3240
      %v4177 = vpack.c.b16 %v3249, %v3245
      %v4178 = vpack.c.b16 %v3250, %v3246
      %v4179 = vpack.c.b16 %v3251, %v3247
      %v4180 = vpack.c.b16 %v3252, %v3248
      %v4181 = vpack.c.b16 %v3257, %v3253
      %v4182 = vpack.c.b16 %v3258, %v3254
      %v4183 = vpack.c.b16 %v3259, %v3255
      %v4184 = vpack.c.b16 %v3260, %v3256
      %v4185 = vpack.c.b16 %v3265, %v3261
      %v4186 = vpack.c.b16 %v3266, %v3262
      %v4187 = vpack.c.b16 %v3267, %v3263
      %v4188 = vpack.c.b16 %v3268, %v3264
      %v4189 = vpack.c.b16 %v3273, %v3269
      %v4190 = vpack.c.b16 %v3274, %v3270
      %v4191 = vpack.c.b16 %v3275, %v3271
      %v4192 = vpack.c.b16 %v3276, %v3272
      %v4193 = vpack.c.b16 %v3281, %v3277
      %v4194 = vpack.c.b16 %v3282, %v3278
      %v4195 = vpack.c.b16 %v3283, %v3279
      %v4196 = vpack.c.b16 %v3284, %v3280
      %v4197 = vpack.c.b16 %v3289, %v3285
      %v4198 = vpack.c.b16 %v3290, %v3286
      %v4199 = vpack.c.b16 %v3291, %v3287
      %v4200 = vpack.c.b16 %v3292, %v3288
      %v4201 = vpack.c.b16 %v3297, %v3293
      %v4202 = vpack.c.b16 %v3298, %v3294
      %v4203 = vpack.c.b16 %v3299, %v3295
      %v4204 = vpack.c.b16 %v3300, %v3296
      %v4205 = vpack.c.b16 %v3305, %v3301
      %v4206 = vpack.c.b16 %v3306, %v3302
      %v4207 = vpack.c.b16 %v3307, %v3303
      %v4208 = vpack.c.b16 %v3308, %v3304
      %v4209 = vpack.c.b16 %v3313, %v3309
      %v4210 = vpack.c.b16 %v3314, %v3310
      %v4211 = vpack.c.b16 %v3315, %v3311
      %v4212 = vpack.c.b16 %v3316, %v3312
      %v4213 = vpack.c.b16 %v3321, %v3317
      %v4214 = vpack.c.b16 %v3322, %v3318
      %v4215 = vpack.c.b16 %v3323, %v3319
      %v4216 = vpack.c.b16 %v3324, %v3320
      %v4217 = vpack.c.b16 %v3329, %v3325
      %v4218 = vpack.c.b16 %v3330, %v3326
      %v4219 = vpack.c.b16 %v3331, %v3327
      %v4220 = vpack.c.b16 %v3332, %v3328
      %v4221 = vpack.c.b16 %v3337, %v3333
      %v4222 = vpack.c.b16 %v3338, %v3334
      %v4223 = vpack.c.b16 %v3339, %v3335
      %v4224 = vpack.c.b16 %v3340, %v3336
      %v4225 = vpack.c.b16 %v3345, %v3341
      %v4226 = vpack.c.b16 %v3346, %v3342
      %v4227 = vpack.c.b16 %v3347, %v3343
      %v4228 = vpack.c.b16 %v3348, %v3344
      %v4229 = vpack.c.b16 %v3353, %v3349
      %v4230 = vpack.c.b16 %v3354, %v3350
      %v4231 = vpack.c.b16 %v3355, %v3351
      %v4232 = vpack.c.b16 %v3356, %v3352
      %v4233 = vpack.c.b16 %v3361, %v3357
      %v4234 = vpack.c.b16 %v3362, %v3358
      %v4235 = vpack.c.b16 %v3363, %v3359
      %v4236 = vpack.c.b16 %v3364, %v3360
      %v4237 = vpack.c.b16 %v3369, %v3365
      %v4238 = vpack.c.b16 %v3370, %v3366
      %v4239 = vpack.c.b16 %v3371, %v3367
      %v4240 = vpack.c.b16 %v3372, %v3368
      %v4241 = vpack.c.b16 %v3377, %v3373
      %v4242 = vpack.c.b16 %v3378, %v3374
      %v4243 = vpack.c.b16 %v3379, %v3375
      %v4244 = vpack.c.b16 %v3380, %v3376
      %v4245 = vpack.c.b16 %v3385, %v3381
      %v4246 = vpack.c.b16 %v3386, %v3382
      %v4247 = vpack.c.b16 %v3387, %v3383
      %v4248 = vpack.c.b16 %v3388, %v3384
      %v4249 = vpack.c.b16 %v3393, %v3389
      %v4250 = vpack.c.b16 %v3394, %v3390
      %v4251 = vpack.c.b16 %v3395, %v3391
      %v4252 = vpack.c.b16 %v3396, %v3392
      %v4253 = vpack.c.b16 %v3401, %v3397
      %v4254 = vpack.c.b16 %v3402, %v3398
      %v4255 = vpack.c.b16 %v3403, %v3399
      %v4256 = vpack.c.b16 %v3404, %v3400
      %v4257 = vpack.c.b16 %v3409, %v3405
      %v4258 = vpack.c.b16 %v3410, %v3406
      %v4259 = vpack.c.b16 %v3411, %v3407
      %v4260 = vpack.c.b16 %v3412, %v3408
      %v4261 = vpack.c.b16 %v3417, %v3413
      %v4262 = vpack.c.b16 %v3418, %v3414
      %v4263 = vpack.c.b16 %v3419, %v3415
      %v4264 = vpack.c.b16 %v3420, %v3416
      %v4265 = vpack.c.b16 %v3425, %v3421
      %v4266 = vpack.c.b16 %v3426, %v3422
      %v4267 = vpack.c.b16 %v3427, %v3423
      %v4268 = vpack.c.b16 %v3428, %v3424
      %v4269 = vpack.c.b16 %v3433, %v3429
      %v4270 = vpack.c.b16 %v3434, %v3430
      %v4271 = vpack.c.b16 %v3435, %v3431
      %v4272 = vpack.c.b16 %v3436, %v3432
      %v4273 = vpack.c.b16 %v3441, %v3437
      %v4274 = vpack.c.b16 %v3442, %v3438
      %v4275 = vpack.c.b16 %v3443, %v3439
      %v4276 = vpack.c.b16 %v3444, %v3440
      %v4277 = vpack.c.b16 %v3449, %v3445
      %v4278 = vpack.c.b16 %v3450, %v3446
      %v4279 = vpack.c.b16 %v3451, %v3447
      %v4280 = vpack.c.b16 %v3452, %v3448
      %v4281 = vpack.c.b16 %v3457, %v3453
      %v4282 = vpack.c.b16 %v3458, %v3454
      %v4283 = vpack.c.b16 %v3459, %v3455
      %v4284 = vpack.c.b16 %v3460, %v3456
      %v4285 = vpack.c.b16 %v3465, %v3461
      %v4286 = vpack.c.b16 %v3466, %v3462
      %v4287 = vpack.c.b16 %v3467, %v3463
      %v4288 = vpack.c.b16 %v3468, %v3464
      %v4289 = vpack.c.b16 %v3473, %v3469
      %v4290 = vpack.c.b16 %v3474, %v3470
      %v4291 = vpack.c.b16 %v3475, %v3471
      %v4292 = vpack.c.b16 %v3476, %v3472
      %v4293 = vpack.c.b16 %v3481, %v3477
      %v4294 = vpack.c.b16 %v3482, %v3478
      %v4295 = vpack.c.b16 %v3483, %v3479
      %v4296 = vpack.c.b16 %v3484, %v3480
      %v4297 = vpack.c.b16 %v3489, %v3485
      %v4298 = vpack.c.b16 %v3490, %v3486
      %v4299 = vpack.c.b16 %v3491, %v3487
      %v4300 = vpack.c.b16 %v3492, %v3488
      %v4301 = vpack.c.b16 %v3497, %v3493
      %v4302 = vpack.c.b16 %v3498, %v3494
      %v4303 = vpack.c.b16 %v3499, %v3495
      %v4304 = vpack.c.b16 %v3500, %v3496
      %v4305 = vpack.c.b16 %v3505, %v3501
      %v4306 = vpack.c.b16 %v3506, %v3502
      %v4307 = vpack.c.b16 %v3507, %v3503
      %v4308 = vpack.c.b16 %v3508, %v3504
      %v4309 = vpack.c.b16 %v3513, %v3509
      %v4310 = vpack.c.b16 %v3514, %v3510
      %v4311 = vpack.c.b16 %v3515, %v3511
      %v4312 = vpack.c.b16 %v3516, %v3512
      %v4313 = vpack.c.b16 %v3521, %v3517
      %v4314 = vpack.c.b16 %v3522, %v3518
      %v4315 = vpack.c.b16 %v3523, %v3519
      %v4316 = vpack.c.b16 %v3524, %v3520
      %v4317 = vpack.c.b16 %v3529, %v3525
      %v4318 = vpack.c.b16 %v3530, %v3526
      %v4319 = vpack.c.b16 %v3531, %v3527
      %v4320 = vpack.c.b16 %v3532, %v3528
      %v4321 = vpack.c.b16 %v3537, %v3533
      %v4322 = vpack.c.b16 %v3538, %v3534
      %v4323 = vpack.c.b16 %v3539, %v3535
      %v4324 = vpack.c.b16 %v3540, %v3536
      %vm5109 = vcmask 523264
      %v5111 = vsel %vm5109, %v1164, 0
      %5113 = vmatprep.subr.bf16.mxu0 %v3542
      %5114 = vmatpush1.bf16.msra.mxu0 %v3541
      %5115 = vmatprep.subr.bf16.mxu0 %v3546
      %5116 = vmatpush1.bf16.msra.mxu0 %v3545
      %5117 = vmatprep.subr.bf16.mxu0 %v3550
      %5118 = vmatpush1.bf16.msra.mxu0 %v3549
      %5119 = vmatprep.subr.bf16.mxu0 %v3554
      %5120 = vmatpush1.bf16.msra.mxu0 %v3553
      %5121 = vmatprep.subr.bf16.mxu0 %v3558
      %5122 = vmatpush1.bf16.msra.mxu0 %v3557
      %5123 = vmatprep.subr.bf16.mxu0 %v3562
      %5124 = vmatpush1.bf16.msra.mxu0 %v3561
      %5125 = vmatprep.subr.bf16.mxu0 %v3566
      %5126 = vmatpush1.bf16.msra.mxu0 %v3565
      %5127 = vmatprep.subr.bf16.mxu0 %v3570
      %5128 = vmatpush1.bf16.msra.mxu0 %v3569
      %5129 = vmatprep.subr.bf16.mxu0 %v3574
      %5130 = vmatpush1.bf16.msra.mxu0 %v3573
      %5131 = vmatprep.subr.bf16.mxu0 %v3578
      %5132 = vmatpush1.bf16.msra.mxu0 %v3577
      %5133 = vmatprep.subr.bf16.mxu0 %v3582
      %5134 = vmatpush1.bf16.msra.mxu0 %v3581
      %5135 = vmatprep.subr.bf16.mxu0 %v3586
      %5136 = vmatpush1.bf16.msra.mxu0 %v3585
      %5137 = vmatprep.subr.bf16.mxu0 %v3590
      %5138 = vmatpush1.bf16.msra.mxu0 %v3589
      %5139 = vmatprep.subr.bf16.mxu0 %v3594
      %5140 = vmatpush1.bf16.msra.mxu0 %v3593
      %5141 = vmatprep.subr.bf16.mxu0 %v3598
      %5142 = vmatpush1.bf16.msra.mxu0 %v3597
      %5143 = vmatprep.subr.bf16.mxu0 %v3602
      %5144 = vmatpush1.bf16.msra.mxu0 %v3601
      %5145 = vmatprep.mubr.bf16.mxu0 %v1141
      %5146 = vmatmul.mubr.bf16.gmra.mrb[0].mxu0 %v1140
      %v5147 = vpop.f32.mrb[0].mxu0
      %v5148 = vadd.f32 %v1047, %v5147
      %v5149 = vpop.f32.mrb[0].mxu0
      %v5150 = vadd.f32 %v1051, %v5149
      %v5151 = vpop.f32.mrb[0].mxu0
      %v5152 = vadd.f32 %v1047, %v5151
      %v5153 = vpop.f32.mrb[0].mxu0
      %v5154 = vadd.f32 %v1051, %v5153
      %5155 = vdwg.mxu0
      %5156 = vmatprep.subr.bf16.mxu0 %v3606
      %5157 = vmatpush1.bf16.msra.mxu0 %v3605
      %5158 = vmatprep.subr.bf16.mxu0 %v3610
      %5159 = vmatpush1.bf16.msra.mxu0 %v3609
      %5160 = vmatprep.subr.bf16.mxu0 %v3614
      %5161 = vmatpush1.bf16.msra.mxu0 %v3613
      %5162 = vmatprep.subr.bf16.mxu0 %v3618
      %5163 = vmatpush1.bf16.msra.mxu0 %v3617
      %5164 = vmatprep.subr.bf16.mxu0 %v3622
      %5165 = vmatpush1.bf16.msra.mxu0 %v3621
      %5166 = vmatprep.subr.bf16.mxu0 %v3626
      %5167 = vmatpush1.bf16.msra.mxu0 %v3625
      %5168 = vmatprep.subr.bf16.mxu0 %v3630
      %5169 = vmatpush1.bf16.msra.mxu0 %v3629
      %5170 = vmatprep.subr.bf16.mxu0 %v3634
      %5171 = vmatpush1.bf16.msra.mxu0 %v3633
      %5172 = vmatprep.subr.bf16.mxu0 %v3638
      %5173 = vmatpush1.bf16.msra.mxu0 %v3637
      %5174 = vmatprep.subr.bf16.mxu0 %v3642
      %5175 = vmatpush1.bf16.msra.mxu0 %v3641
      %5176 = vmatprep.subr.bf16.mxu0 %v3646
      %5177 = vmatpush1.bf16.msra.mxu0 %v3645
      %5178 = vmatprep.subr.bf16.mxu0 %v3650
      %5179 = vmatpush1.bf16.msra.mxu0 %v3649
      %5180 = vmatprep.subr.bf16.mxu0 %v3654
      %5181 = vmatpush1.bf16.msra.mxu0 %v3653
      %5182 = vmatprep.subr.bf16.mxu0 %v3658
      %5183 = vmatpush1.bf16.msra.mxu0 %v3657
      %5184 = vmatprep.subr.bf16.mxu0 %v3662
      %5185 = vmatpush1.bf16.msra.mxu0 %v3661
      %5186 = vmatprep.subr.bf16.mxu0 %v3666
      %5187 = vmatpush1.bf16.msra.mxu0 %v3665
      %5188 = vmatprep.mubr.bf16.mxu0 %v1143
      %5189 = vmatmul.mubr.bf16.gmra.mrb[0].mxu0 %v1142
      %v5190 = vpop.f32.mrb[0].mxu0
      %v5191 = vadd.f32 %v5148, %v5190
      %v5192 = vpop.f32.mrb[0].mxu0
      %v5193 = vadd.f32 %v5150, %v5192
      %v5194 = vpop.f32.mrb[0].mxu0
      %v5195 = vadd.f32 %v5152, %v5194
      %v5196 = vpop.f32.mrb[0].mxu0
      %v5197 = vadd.f32 %v5154, %v5196
      %5198 = vdwg.mxu0
      %5199 = vmatprep.subr.bf16.mxu0 %v3670
      %5200 = vmatpush1.bf16.msra.mxu0 %v3669
      %5201 = vmatprep.subr.bf16.mxu0 %v3674
      %5202 = vmatpush1.bf16.msra.mxu0 %v3673
      %5203 = vmatprep.subr.bf16.mxu0 %v3678
      %5204 = vmatpush1.bf16.msra.mxu0 %v3677
      %5205 = vmatprep.subr.bf16.mxu0 %v3682
      %5206 = vmatpush1.bf16.msra.mxu0 %v3681
      %5207 = vmatprep.subr.bf16.mxu0 %v3686
      %5208 = vmatpush1.bf16.msra.mxu0 %v3685
      %5209 = vmatprep.subr.bf16.mxu0 %v3690
      %5210 = vmatpush1.bf16.msra.mxu0 %v3689
      %5211 = vmatprep.subr.bf16.mxu0 %v3694
      %5212 = vmatpush1.bf16.msra.mxu0 %v3693
      %5213 = vmatprep.subr.bf16.mxu0 %v3698
      %5214 = vmatpush1.bf16.msra.mxu0 %v3697
      %5215 = vmatprep.subr.bf16.mxu0 %v3702
      %5216 = vmatpush1.bf16.msra.mxu0 %v3701
      %5217 = vmatprep.subr.bf16.mxu0 %v3706
      %5218 = vmatpush1.bf16.msra.mxu0 %v3705
      %5219 = vmatprep.subr.bf16.mxu0 %v3710
      %5220 = vmatpush1.bf16.msra.mxu0 %v3709
      %5221 = vmatprep.subr.bf16.mxu0 %v3714
      %5222 = vmatpush1.bf16.msra.mxu0 %v3713
      %5223 = vmatprep.subr.bf16.mxu0 %v3718
      %5224 = vmatpush1.bf16.msra.mxu0 %v3717
      %5225 = vmatprep.subr.bf16.mxu0 %v3722
      %5226 = vmatpush1.bf16.msra.mxu0 %v3721
      %5227 = vmatprep.subr.bf16.mxu0 %v3726
      %5228 = vmatpush1.bf16.msra.mxu0 %v3725
      %5229 = vmatprep.subr.bf16.mxu0 %v3730
      %5230 = vmatpush1.bf16.msra.mxu0 %v3729
      %5231 = vmatprep.mubr.bf16.mxu0 %v1145
      %5232 = vmatmul.mubr.bf16.gmra.mrb[0].mxu0 %v1144
      %v5233 = vpop.f32.mrb[0].mxu0
      %v5234 = vadd.f32 %v5191, %v5233
      %v5235 = vpop.f32.mrb[0].mxu0
      %v5236 = vadd.f32 %v5193, %v5235
      %v5237 = vpop.f32.mrb[0].mxu0
      %v5238 = vadd.f32 %v5195, %v5237
      %v5239 = vpop.f32.mrb[0].mxu0
      %v5240 = vadd.f32 %v5197, %v5239
      %5241 = vdwg.mxu0
      %5242 = vmatprep.subr.bf16.mxu0 %v3734
      %5243 = vmatpush1.bf16.msra.mxu0 %v3733
      %5244 = vmatprep.subr.bf16.mxu0 %v3738
      %5245 = vmatpush1.bf16.msra.mxu0 %v3737
      %5246 = vmatprep.subr.bf16.mxu0 %v3742
      %5247 = vmatpush1.bf16.msra.mxu0 %v3741
      %5248 = vmatprep.subr.bf16.mxu0 %v3746
      %5249 = vmatpush1.bf16.msra.mxu0 %v3745
      %5250 = vmatprep.subr.bf16.mxu0 %v3750
      %5251 = vmatpush1.bf16.msra.mxu0 %v3749
      %5252 = vmatprep.subr.bf16.mxu0 %v3754
      %5253 = vmatpush1.bf16.msra.mxu0 %v3753
      %5254 = vmatprep.subr.bf16.mxu0 %v3758
      %5255 = vmatpush1.bf16.msra.mxu0 %v3757
      %5256 = vmatprep.subr.bf16.mxu0 %v3762
      %5257 = vmatpush1.bf16.msra.mxu0 %v3761
      %5258 = vmatprep.subr.bf16.mxu0 %v3766
      %5259 = vmatpush1.bf16.msra.mxu0 %v3765
      %5260 = vmatprep.subr.bf16.mxu0 %v3770
      %5261 = vmatpush1.bf16.msra.mxu0 %v3769
      %5262 = vmatprep.subr.bf16.mxu0 %v3774
      %5263 = vmatpush1.bf16.msra.mxu0 %v3773
      %5264 = vmatprep.subr.bf16.mxu0 %v3778
      %5265 = vmatpush1.bf16.msra.mxu0 %v3777
      %5266 = vmatprep.subr.bf16.mxu0 %v3782
      %5267 = vmatpush1.bf16.msra.mxu0 %v3781
      %5268 = vmatprep.subr.bf16.mxu0 %v3786
      %5269 = vmatpush1.bf16.msra.mxu0 %v3785
      %5270 = vmatprep.subr.bf16.mxu0 %v3790
      %5271 = vmatpush1.bf16.msra.mxu0 %v3789
      %5272 = vmatprep.subr.bf16.mxu0 %v3794
      %5273 = vmatpush1.bf16.msra.mxu0 %v3793
      %5274 = vmatprep.mubr.bf16.mxu0 %v1147
      %5275 = vmatmul.mubr.bf16.gmra.mrb[0].mxu0 %v1146
      %v5276 = vpop.f32.mrb[0].mxu0
      %v5277 = vadd.f32 %v5234, %v5276
      %v5278 = vpop.f32.mrb[0].mxu0
      %v5279 = vadd.f32 %v5236, %v5278
      %v5280 = vpop.f32.mrb[0].mxu0
      %v5281 = vadd.f32 %v5238, %v5280
      %v5282 = vpop.f32.mrb[0].mxu0
      %v5283 = vadd.f32 %v5240, %v5282
      %5284 = vdwg.mxu0
      %5285 = vmatprep.subr.bf16.mxu0 %v3798
      %5286 = vmatpush1.bf16.msra.mxu0 %v3797
      %5287 = vmatprep.subr.bf16.mxu0 %v3802
      %5288 = vmatpush1.bf16.msra.mxu0 %v3801
      %5289 = vmatprep.subr.bf16.mxu0 %v3806
      %5290 = vmatpush1.bf16.msra.mxu0 %v3805
      %5291 = vmatprep.subr.bf16.mxu0 %v3810
      %5292 = vmatpush1.bf16.msra.mxu0 %v3809
      %5293 = vmatprep.subr.bf16.mxu0 %v3814
      %5294 = vmatpush1.bf16.msra.mxu0 %v3813
      %5295 = vmatprep.subr.bf16.mxu0 %v3818
      %5296 = vmatpush1.bf16.msra.mxu0 %v3817
      %5297 = vmatprep.subr.bf16.mxu0 %v3822
      %5298 = vmatpush1.bf16.msra.mxu0 %v3821
      %5299 = vmatprep.subr.bf16.mxu0 %v3826
      %5300 = vmatpush1.bf16.msra.mxu0 %v3825
      %5301 = vmatprep.subr.bf16.mxu0 %v3830
      %5302 = vmatpush1.bf16.msra.mxu0 %v3829
      %5303 = vmatprep.subr.bf16.mxu0 %v3834
      %5304 = vmatpush1.bf16.msra.mxu0 %v3833
      %5305 = vmatprep.subr.bf16.mxu0 %v3838
      %5306 = vmatpush1.bf16.msra.mxu0 %v3837
      %5307 = vmatprep.subr.bf16.mxu0 %v3842
      %5308 = vmatpush1.bf16.msra.mxu0 %v3841
      %5309 = vmatprep.subr.bf16.mxu0 %v3846
      %5310 = vmatpush1.bf16.msra.mxu0 %v3845
      %5311 = vmatprep.subr.bf16.mxu0 %v3850
      %5312 = vmatpush1.bf16.msra.mxu0 %v3849
      %5313 = vmatprep.subr.bf16.mxu0 %v3854
      %5314 = vmatpush1.bf16.msra.mxu0 %v3853
      %5315 = vmatprep.subr.bf16.mxu0 %v3858
      %5316 = vmatpush1.bf16.msra.mxu0 %v3857
      %5317 = vmatprep.mubr.bf16.mxu0 %v1149
      %5318 = vmatmul.mubr.bf16.gmra.mrb[0].mxu0 %v1148
      %v5319 = vpop.f32.mrb[0].mxu0
      %v5320 = vadd.f32 %v5277, %v5319
      %v5321 = vpop.f32.mrb[0].mxu0
      %v5322 = vadd.f32 %v5279, %v5321
      %v5323 = vpop.f32.mrb[0].mxu0
      %v5324 = vadd.f32 %v5281, %v5323
      %v5325 = vpop.f32.mrb[0].mxu0
      %v5326 = vadd.f32 %v5283, %v5325
      %5327 = vdwg.mxu0
      %5328 = vmatprep.subr.bf16.mxu0 %v3862
      %5329 = vmatpush1.bf16.msra.mxu0 %v3861
      %5330 = vmatprep.subr.bf16.mxu0 %v3866
      %5331 = vmatpush1.bf16.msra.mxu0 %v3865
      %5332 = vmatprep.subr.bf16.mxu0 %v3870
      %5333 = vmatpush1.bf16.msra.mxu0 %v3869
      %5334 = vmatprep.subr.bf16.mxu0 %v3874
      %5335 = vmatpush1.bf16.msra.mxu0 %v3873
      %5336 = vmatprep.subr.bf16.mxu0 %v3878
      %5337 = vmatpush1.bf16.msra.mxu0 %v3877
      %5338 = vmatprep.subr.bf16.mxu0 %v3882
      %5339 = vmatpush1.bf16.msra.mxu0 %v3881
      %5340 = vmatprep.subr.bf16.mxu0 %v3886
      %5341 = vmatpush1.bf16.msra.mxu0 %v3885
      %5342 = vmatprep.subr.bf16.mxu0 %v3890
      %5343 = vmatpush1.bf16.msra.mxu0 %v3889
      %5344 = vmatprep.subr.bf16.mxu0 %v3894
      %5345 = vmatpush1.bf16.msra.mxu0 %v3893
      %5346 = vmatprep.subr.bf16.mxu0 %v3898
      %5347 = vmatpush1.bf16.msra.mxu0 %v3897
      %5348 = vmatprep.subr.bf16.mxu0 %v3902
      %5349 = vmatpush1.bf16.msra.mxu0 %v3901
      %5350 = vmatprep.subr.bf16.mxu0 %v3906
      %5351 = vmatpush1.bf16.msra.mxu0 %v3905
      %5352 = vmatprep.subr.bf16.mxu0 %v3910
      %5353 = vmatpush1.bf16.msra.mxu0 %v3909
      %5354 = vmatprep.subr.bf16.mxu0 %v3914
      %5355 = vmatpush1.bf16.msra.mxu0 %v3913
      %5356 = vmatprep.subr.bf16.mxu0 %v3918
      %5357 = vmatpush1.bf16.msra.mxu0 %v3917
      %5358 = vmatprep.subr.bf16.mxu0 %v3922
      %5359 = vmatpush1.bf16.msra.mxu0 %v3921
      %5360 = vmatprep.mubr.bf16.mxu0 %v1151
      %5361 = vmatmul.mubr.bf16.gmra.mrb[0].mxu0 %v1150
      %v5362 = vpop.f32.mrb[0].mxu0
      %v5363 = vadd.f32 %v5320, %v5362
      %v5364 = vpop.f32.mrb[0].mxu0
      %v5365 = vadd.f32 %v5322, %v5364
      %v5366 = vpop.f32.mrb[0].mxu0
      %v5367 = vadd.f32 %v5324, %v5366
      %v5368 = vpop.f32.mrb[0].mxu0
      %v5369 = vadd.f32 %v5326, %v5368
      %5370 = vdwg.mxu0
      %5371 = vmatprep.subr.bf16.mxu0 %v3926
      %5372 = vmatpush1.bf16.msra.mxu0 %v3925
      %5373 = vmatprep.subr.bf16.mxu0 %v3930
      %5374 = vmatpush1.bf16.msra.mxu0 %v3929
      %5375 = vmatprep.subr.bf16.mxu0 %v3934
      %5376 = vmatpush1.bf16.msra.mxu0 %v3933
      %5377 = vmatprep.subr.bf16.mxu0 %v3938
      %5378 = vmatpush1.bf16.msra.mxu0 %v3937
      %5379 = vmatprep.subr.bf16.mxu0 %v3942
      %5380 = vmatpush1.bf16.msra.mxu0 %v3941
      %5381 = vmatprep.subr.bf16.mxu0 %v3946
      %5382 = vmatpush1.bf16.msra.mxu0 %v3945
      %5383 = vmatprep.subr.bf16.mxu0 %v3950
      %5384 = vmatpush1.bf16.msra.mxu0 %v3949
      %5385 = vmatprep.subr.bf16.mxu0 %v3954
      %5386 = vmatpush1.bf16.msra.mxu0 %v3953
      %5387 = vmatprep.subr.bf16.mxu0 %v3958
      %5388 = vmatpush1.bf16.msra.mxu0 %v3957
      %5389 = vmatprep.subr.bf16.mxu0 %v3962
      %5390 = vmatpush1.bf16.msra.mxu0 %v3961
      %5391 = vmatprep.subr.bf16.mxu0 %v3966
      %5392 = vmatpush1.bf16.msra.mxu0 %v3965
      %5393 = vmatprep.subr.bf16.mxu0 %v3970
      %5394 = vmatpush1.bf16.msra.mxu0 %v3969
      %5395 = vmatprep.subr.bf16.mxu0 %v3974
      %5396 = vmatpush1.bf16.msra.mxu0 %v3973
      %5397 = vmatprep.subr.bf16.mxu0 %v3978
      %5398 = vmatpush1.bf16.msra.mxu0 %v3977
      %5399 = vmatprep.subr.bf16.mxu0 %v3982
      %5400 = vmatpush1.bf16.msra.mxu0 %v3981
      %5401 = vmatprep.subr.bf16.mxu0 %v3986
      %5402 = vmatpush1.bf16.msra.mxu0 %v3985
      %5403 = vmatprep.mubr.bf16.mxu0 %v1153
      %5404 = vmatmul.mubr.bf16.gmra.mrb[0].mxu0 %v1152
      %v5405 = vpop.f32.mrb[0].mxu0
      %v5406 = vadd.f32 %v5363, %v5405
      %v5407 = vpop.f32.mrb[0].mxu0
      %v5408 = vadd.f32 %v5365, %v5407
      %v5409 = vpop.f32.mrb[0].mxu0
      %v5410 = vadd.f32 %v5367, %v5409
      %v5411 = vpop.f32.mrb[0].mxu0
      %v5412 = vadd.f32 %v5369, %v5411
      %5413 = vdwg.mxu0
      %5414 = vmatprep.subr.bf16.mxu0 %v3990
      %5415 = vmatpush1.bf16.msra.mxu0 %v3989
      %5416 = vmatprep.subr.bf16.mxu0 %v3994
      %5417 = vmatpush1.bf16.msra.mxu0 %v3993
      %5418 = vmatprep.subr.bf16.mxu0 %v3998
      %5419 = vmatpush1.bf16.msra.mxu0 %v3997
      %5420 = vmatprep.subr.bf16.mxu0 %v4002
      %5421 = vmatpush1.bf16.msra.mxu0 %v4001
      %5422 = vmatprep.subr.bf16.mxu0 %v4006
      %5423 = vmatpush1.bf16.msra.mxu0 %v4005
      %5424 = vmatprep.subr.bf16.mxu0 %v4010
      %5425 = vmatpush1.bf16.msra.mxu0 %v4009
      %5426 = vmatprep.subr.bf16.mxu0 %v4014
      %5427 = vmatpush1.bf16.msra.mxu0 %v4013
      %5428 = vmatprep.subr.bf16.mxu0 %v4018
      %5429 = vmatpush1.bf16.msra.mxu0 %v4017
      %5430 = vmatprep.subr.bf16.mxu0 %v4022
      %5431 = vmatpush1.bf16.msra.mxu0 %v4021
      %5432 = vmatprep.subr.bf16.mxu0 %v4026
      %5433 = vmatpush1.bf16.msra.mxu0 %v4025
      %5434 = vmatprep.subr.bf16.mxu0 %v4030
      %5435 = vmatpush1.bf16.msra.mxu0 %v4029
      %5436 = vmatprep.subr.bf16.mxu0 %v4034
      %5437 = vmatpush1.bf16.msra.mxu0 %v4033
      %5438 = vmatprep.subr.bf16.mxu0 %v4038
      %5439 = vmatpush1.bf16.msra.mxu0 %v4037
      %5440 = vmatprep.subr.bf16.mxu0 %v4042
      %5441 = vmatpush1.bf16.msra.mxu0 %v4041
      %5442 = vmatprep.subr.bf16.mxu0 %v4046
      %5443 = vmatpush1.bf16.msra.mxu0 %v4045
      %5444 = vmatprep.subr.bf16.mxu0 %v4050
      %5445 = vmatpush1.bf16.msra.mxu0 %v4049
      %5446 = vmatprep.mubr.bf16.mxu0 %v1155
      %5447 = vmatmul.mubr.bf16.gmra.mrb[0].mxu0 %v1154
      %v5448 = vpop.f32.mrb[0].mxu0
      %v5449 = vadd.f32 %v5406, %v5448
      %v5450 = vpop.f32.mrb[0].mxu0
      %v5451 = vadd.f32 %v5408, %v5450
      %v5452 = vpop.f32.mrb[0].mxu0
      %v5453 = vadd.f32 %v5410, %v5452
      %v5454 = vpop.f32.mrb[0].mxu0
      %v5455 = vadd.f32 %v5412, %v5454
      %5456 = vdwg.mxu0
      %5457 = vmatprep.subr.bf16.mxu0 %v4054
      %5458 = vmatpush1.bf16.msra.mxu0 %v4053
      %5459 = vmatprep.subr.bf16.mxu0 %v4058
      %5460 = vmatpush1.bf16.msra.mxu0 %v4057
      %5461 = vmatprep.subr.bf16.mxu0 %v4062
      %5462 = vmatpush1.bf16.msra.mxu0 %v4061
      %5463 = vmatprep.subr.bf16.mxu0 %v4066
      %5464 = vmatpush1.bf16.msra.mxu0 %v4065
      %5465 = vmatprep.subr.bf16.mxu0 %v4070
      %5466 = vmatpush1.bf16.msra.mxu0 %v4069
      %5467 = vmatprep.subr.bf16.mxu0 %v4074
      %5468 = vmatpush1.bf16.msra.mxu0 %v4073
      %5469 = vmatprep.subr.bf16.mxu0 %v4078
      %5470 = vmatpush1.bf16.msra.mxu0 %v4077
      %5471 = vmatprep.subr.bf16.mxu0 %v4082
      %5472 = vmatpush1.bf16.msra.mxu0 %v4081
      %5473 = vmatprep.subr.bf16.mxu0 %v4086
      %5474 = vmatpush1.bf16.msra.mxu0 %v4085
      %5475 = vmatprep.subr.bf16.mxu0 %v4090
      %5476 = vmatpush1.bf16.msra.mxu0 %v4089
      %5477 = vmatprep.subr.bf16.mxu0 %v4094
      %5478 = vmatpush1.bf16.msra.mxu0 %v4093
      %5479 = vmatprep.subr.bf16.mxu0 %v4098
      %5480 = vmatpush1.bf16.msra.mxu0 %v4097
      %5481 = vmatprep.subr.bf16.mxu0 %v4102
      %5482 = vmatpush1.bf16.msra.mxu0 %v4101
      %5483 = vmatprep.subr.bf16.mxu0 %v4106
      %5484 = vmatpush1.bf16.msra.mxu0 %v4105
      %5485 = vmatprep.subr.bf16.mxu0 %v4110
      %5486 = vmatpush1.bf16.msra.mxu0 %v4109
      %5487 = vmatprep.subr.bf16.mxu0 %v4114
      %5488 = vmatpush1.bf16.msra.mxu0 %v4113
      %5489 = vmatprep.mubr.bf16.mxu0 %v1157
      %5490 = vmatmul.mubr.bf16.gmra.mrb[0].mxu0 %v1156
      %v5491 = vpop.f32.mrb[0].mxu0
      %v5492 = vadd.f32 %v5449, %v5491
      %v5493 = vpop.f32.mrb[0].mxu0
      %v5494 = vadd.f32 %v5451, %v5493
      %v5495 = vpop.f32.mrb[0].mxu0
      %v5496 = vadd.f32 %v5453, %v5495
      %v5497 = vpop.f32.mrb[0].mxu0
      %v5498 = vadd.f32 %v5455, %v5497
      %5499 = vdwg.mxu0
      %5500 = vmatprep.subr.bf16.mxu0 %v4118
      %5501 = vmatpush1.bf16.msra.mxu0 %v4117
      %5502 = vmatprep.subr.bf16.mxu0 %v4122
      %5503 = vmatpush1.bf16.msra.mxu0 %v4121
      %5504 = vmatprep.subr.bf16.mxu0 %v4126
      %5505 = vmatpush1.bf16.msra.mxu0 %v4125
      %5506 = vmatprep.subr.bf16.mxu0 %v4130
      %5507 = vmatpush1.bf16.msra.mxu0 %v4129
      %5508 = vmatprep.subr.bf16.mxu0 %v4134
      %5509 = vmatpush1.bf16.msra.mxu0 %v4133
      %5510 = vmatprep.subr.bf16.mxu0 %v4138
      %5511 = vmatpush1.bf16.msra.mxu0 %v4137
      %5512 = vmatprep.subr.bf16.mxu0 %v4142
      %5513 = vmatpush1.bf16.msra.mxu0 %v4141
      %5514 = vmatprep.subr.bf16.mxu0 %v4146
      %5515 = vmatpush1.bf16.msra.mxu0 %v4145
      %5516 = vmatprep.subr.bf16.mxu0 %v4150
      %5517 = vmatpush1.bf16.msra.mxu0 %v4149
      %5518 = vmatprep.subr.bf16.mxu0 %v4154
      %5519 = vmatpush1.bf16.msra.mxu0 %v4153
      %5520 = vmatprep.subr.bf16.mxu0 %v4158
      %5521 = vmatpush1.bf16.msra.mxu0 %v4157
      %5522 = vmatprep.subr.bf16.mxu0 %v4162
      %5523 = vmatpush1.bf16.msra.mxu0 %v4161
      %5524 = vmatprep.subr.bf16.mxu0 %v4166
      %5525 = vmatpush1.bf16.msra.mxu0 %v4165
      %5526 = vmatprep.subr.bf16.mxu0 %v4170
      %5527 = vmatpush1.bf16.msra.mxu0 %v4169
      %5528 = vmatprep.subr.bf16.mxu0 %v4174
      %5529 = vmatpush1.bf16.msra.mxu0 %v4173
      %5530 = vmatprep.subr.bf16.mxu0 %v4178
      %5531 = vmatpush1.bf16.msra.mxu0 %v4177
      %5532 = vmatprep.mubr.bf16.mxu0 %v1159
      %5533 = vmatmul.mubr.bf16.gmra.mrb[0].mxu0 %v1158
      %v5534 = vpop.f32.mrb[0].mxu0
      %v5535 = vadd.f32 %v5492, %v5534
      %v5536 = vpop.f32.mrb[0].mxu0
      %v5537 = vadd.f32 %v5494, %v5536
      %v5538 = vpop.f32.mrb[0].mxu0
      %v5539 = vadd.f32 %v5496, %v5538
      %v5540 = vpop.f32.mrb[0].mxu0
      %v5541 = vadd.f32 %v5498, %v5540
      %5542 = vdwg.mxu0
      %5543 = vmatprep.subr.bf16.mxu0 %v4182
      %5544 = vmatpush1.bf16.msra.mxu0 %v4181
      %5545 = vmatprep.subr.bf16.mxu0 %v4186
      %5546 = vmatpush1.bf16.msra.mxu0 %v4185
      %5547 = vmatprep.subr.bf16.mxu0 %v4190
      %5548 = vmatpush1.bf16.msra.mxu0 %v4189
      %5549 = vmatprep.subr.bf16.mxu0 %v4194
      %5550 = vmatpush1.bf16.msra.mxu0 %v4193
      %5551 = vmatprep.subr.bf16.mxu0 %v4198
      %5552 = vmatpush1.bf16.msra.mxu0 %v4197
      %5553 = vmatprep.subr.bf16.mxu0 %v4202
      %5554 = vmatpush1.bf16.msra.mxu0 %v4201
      %5555 = vmatprep.subr.bf16.mxu0 %v4206
      %5556 = vmatpush1.bf16.msra.mxu0 %v4205
      %5557 = vmatprep.subr.bf16.mxu0 %v4210
      %5558 = vmatpush1.bf16.msra.mxu0 %v4209
      %5559 = vmatprep.subr.bf16.mxu0 %v4214
      %5560 = vmatpush1.bf16.msra.mxu0 %v4213
      %5561 = vmatprep.subr.bf16.mxu0 %v4218
      %5562 = vmatpush1.bf16.msra.mxu0 %v4217
      %5563 = vmatprep.subr.bf16.mxu0 %v4222
      %5564 = vmatpush1.bf16.msra.mxu0 %v4221
      %5565 = vmatprep.subr.bf16.mxu0 %v4226
      %5566 = vmatpush1.bf16.msra.mxu0 %v4225
      %5567 = vmatprep.subr.bf16.mxu0 %v4230
      %5568 = vmatpush1.bf16.msra.mxu0 %v4229
      %5569 = vmatprep.subr.bf16.mxu0 %v4234
      %5570 = vmatpush1.bf16.msra.mxu0 %v4233
      %5571 = vmatprep.subr.bf16.mxu0 %v4238
      %5572 = vmatpush1.bf16.msra.mxu0 %v4237
      %5573 = vmatprep.subr.bf16.mxu0 %v4242
      %5574 = vmatpush1.bf16.msra.mxu0 %v4241
      %5575 = vmatprep.mubr.bf16.mxu0 %v1161
      %5576 = vmatmul.mubr.bf16.gmra.mrb[0].mxu0 %v1160
      %v5577 = vpop.f32.mrb[0].mxu0
      %v5578 = vadd.f32 %v5535, %v5577
      %v5579 = vpop.f32.mrb[0].mxu0
      %v5580 = vadd.f32 %v5537, %v5579
      %v5581 = vpop.f32.mrb[0].mxu0
      %v5582 = vadd.f32 %v5539, %v5581
      %v5583 = vpop.f32.mrb[0].mxu0
      %v5584 = vadd.f32 %v5541, %v5583
      %5585 = vdwg.mxu0
      %5586 = vmatprep.subr.bf16.mxu0 %v4246
      %5587 = vmatpush1.bf16.msra.mxu0 %v4245
      %5588 = vmatprep.subr.bf16.mxu0 %v4250
      %5589 = vmatpush1.bf16.msra.mxu0 %v4249
      %5590 = vmatprep.subr.bf16.mxu0 %v4254
      %5591 = vmatpush1.bf16.msra.mxu0 %v4253
      %5592 = vmatprep.subr.bf16.mxu0 %v4258
      %5593 = vmatpush1.bf16.msra.mxu0 %v4257
      %5594 = vmatprep.subr.bf16.mxu0 %v4262
      %5595 = vmatpush1.bf16.msra.mxu0 %v4261
      %5596 = vmatprep.subr.bf16.mxu0 %v4266
      %5597 = vmatpush1.bf16.msra.mxu0 %v4265
      %5598 = vmatprep.subr.bf16.mxu0 %v4270
      %5599 = vmatpush1.bf16.msra.mxu0 %v4269
      %5600 = vmatprep.subr.bf16.mxu0 %v4274
      %5601 = vmatpush1.bf16.msra.mxu0 %v4273
      %5602 = vmatprep.subr.bf16.mxu0 %v4278
      %5603 = vmatpush1.bf16.msra.mxu0 %v4277
      %5604 = vmatprep.subr.bf16.mxu0 %v4282
      %5605 = vmatpush1.bf16.msra.mxu0 %v4281
      %5606 = vmatprep.subr.bf16.mxu0 %v4286
      %5607 = vmatpush1.bf16.msra.mxu0 %v4285
      %5608 = vmatprep.subr.bf16.mxu0 %v4290
      %5609 = vmatpush1.bf16.msra.mxu0 %v4289
      %5610 = vmatprep.subr.bf16.mxu0 %v4294
      %5611 = vmatpush1.bf16.msra.mxu0 %v4293
      %5612 = vmatprep.subr.bf16.mxu0 %v4298
      %5613 = vmatpush1.bf16.msra.mxu0 %v4297
      %5614 = vmatprep.subr.bf16.mxu0 %v4302
      %5615 = vmatpush1.bf16.msra.mxu0 %v4301
      %5616 = vmatprep.subr.bf16.mxu0 %v4306
      %5617 = vmatpush1.bf16.msra.mxu0 %v4305
      %5618 = vmatprep.mubr.bf16.mxu0 %v1163
      %5619 = vmatmul.mubr.bf16.gmra.mrb[0].mxu0 %v1162
      %v5620 = vpop.f32.mrb[0].mxu0
      %v5621 = vadd.f32 %v5578, %v5620
      %v5622 = vpop.f32.mrb[0].mxu0
      %v5623 = vadd.f32 %v5580, %v5622
      %v5624 = vpop.f32.mrb[0].mxu0
      %v5625 = vadd.f32 %v5582, %v5624
      %v5626 = vpop.f32.mrb[0].mxu0
      %v5627 = vadd.f32 %v5584, %v5626
      %5628 = vdwg.mxu0
      %5629 = vmatprep.subr.bf16.mxu0 %v4310
      %5630 = vmatpush1.bf16.msra.mxu0 %v4309
      %5631 = vmatprep.subr.bf16.mxu0 %v4314
      %5632 = vmatpush1.bf16.msra.mxu0 %v4313
      %5633 = vmatprep.subr.bf16.mxu0 %v4318
      %5634 = vmatpush1.bf16.msra.mxu0 %v4317
      %5635 = vmatprep.subr.bf16.mxu0 %v4322
      %5636 = vmatpush1.bf16.msra.mxu0 %v4321
      %5637 = vmatprep.subr.bf16.mxu0 0
      %5638 = vmatpush1.bf16.msra.mxu0 0
      %5639 = vmatprep.subr.bf16.mxu0 0
      %5640 = vmatpush1.bf16.msra.mxu0 0
      %5641 = vmatprep.subr.bf16.mxu0 0
      %5642 = vmatpush1.bf16.msra.mxu0 0
      %5643 = vmatprep.subr.bf16.mxu0 0
      %5644 = vmatpush1.bf16.msra.mxu0 0
      %5645 = vmatprep.subr.bf16.mxu0 0
      %5646 = vmatpush1.bf16.msra.mxu0 0
      %5647 = vmatprep.subr.bf16.mxu0 0
      %5648 = vmatpush1.bf16.msra.mxu0 0
      %5649 = vmatprep.subr.bf16.mxu0 0
      %5650 = vmatpush1.bf16.msra.mxu0 0
      %5651 = vmatprep.subr.bf16.mxu0 0
      %5652 = vmatpush1.bf16.msra.mxu0 0
      %5653 = vmatprep.subr.bf16.mxu0 0
      %5654 = vmatpush1.bf16.msra.mxu0 0
      %5655 = vmatprep.subr.bf16.mxu0 0
      %5656 = vmatpush1.bf16.msra.mxu0 0
      %5657 = vmatprep.subr.bf16.mxu0 0
      %5658 = vmatpush1.bf16.msra.mxu0 0
      %5659 = vmatprep.subr.bf16.mxu0 0
      %5660 = vmatpush1.bf16.msra.mxu0 0
      %5661 = vmatprep.mubr.bf16.mxu0 0
      %5662 = vmatmul.mubr.bf16.gmra.mrb[0].mxu0 %v5111
      %v5663 = vpop.f32.mrb[0].mxu0
      %v5664 = vadd.f32 %v5621, %v5663
      %v5665 = vpop.f32.mrb[0].mxu0
      %v5666 = vadd.f32 %v5623, %v5665
      %v5667 = vpop.f32.mrb[0].mxu0
      %v5668 = vadd.f32 %v5625, %v5667
      %v5669 = vpop.f32.mrb[0].mxu0
      %v5670 = vadd.f32 %v5627, %v5669
      %5671 = vdwg.mxu0
      %5672 = vmatprep.subr.bf16.mxu0 %v3544
      %5673 = vmatpush1.bf16.msra.mxu0 %v3543
      %5674 = vmatprep.subr.bf16.mxu0 %v3548
      %5675 = vmatpush1.bf16.msra.mxu0 %v3547
      %5676 = vmatprep.subr.bf16.mxu0 %v3552
      %5677 = vmatpush1.bf16.msra.mxu0 %v3551
      %5678 = vmatprep.subr.bf16.mxu0 %v3556
      %5679 = vmatpush1.bf16.msra.mxu0 %v3555
      %5680 = vmatprep.subr.bf16.mxu0 %v3560
      %5681 = vmatpush1.bf16.msra.mxu0 %v3559
      %5682 = vmatprep.subr.bf16.mxu0 %v3564
      %5683 = vmatpush1.bf16.msra.mxu0 %v3563
      %5684 = vmatprep.subr.bf16.mxu0 %v3568
      %5685 = vmatpush1.bf16.msra.mxu0 %v3567
      %5686 = vmatprep.subr.bf16.mxu0 %v3572
      %5687 = vmatpush1.bf16.msra.mxu0 %v3571
      %5688 = vmatprep.subr.bf16.mxu0 %v3576
      %5689 = vmatpush1.bf16.msra.mxu0 %v3575
      %5690 = vmatprep.subr.bf16.mxu0 %v3580
      %5691 = vmatpush1.bf16.msra.mxu0 %v3579
      %5692 = vmatprep.subr.bf16.mxu0 %v3584
      %5693 = vmatpush1.bf16.msra.mxu0 %v3583
      %5694 = vmatprep.subr.bf16.mxu0 %v3588
      %5695 = vmatpush1.bf16.msra.mxu0 %v3587
      %5696 = vmatprep.subr.bf16.mxu0 %v3592
      %5697 = vmatpush1.bf16.msra.mxu0 %v3591
      %5698 = vmatprep.subr.bf16.mxu0 %v3596
      %5699 = vmatpush1.bf16.msra.mxu0 %v3595
      %5700 = vmatprep.subr.bf16.mxu0 %v3600
      %5701 = vmatpush1.bf16.msra.mxu0 %v3599
      %5702 = vmatprep.subr.bf16.mxu0 %v3604
      %5703 = vmatpush1.bf16.msra.mxu0 %v3603
      %5704 = vmatprep.mubr.bf16.mxu0 %v1141
      %5705 = vmatmul.mubr.bf16.gmra.mrb[0].mxu0 %v1140
      %v5706 = vpop.f32.mrb[0].mxu0
      %v5707 = vadd.f32 %v1055, %v5706
      %v5708 = vpop.f32.mrb[0].mxu0
      %v5709 = vadd.f32 %v1059, %v5708
      %v5710 = vpop.f32.mrb[0].mxu0
      %v5711 = vadd.f32 %v1055, %v5710
      %v5712 = vpop.f32.mrb[0].mxu0
      %v5713 = vadd.f32 %v1059, %v5712
      %5714 = vdwg.mxu0
      %5715 = vmatprep.subr.bf16.mxu0 %v3608
      %5716 = vmatpush1.bf16.msra.mxu0 %v3607
      %5717 = vmatprep.subr.bf16.mxu0 %v3612
      %5718 = vmatpush1.bf16.msra.mxu0 %v3611
      %5719 = vmatprep.subr.bf16.mxu0 %v3616
      %5720 = vmatpush1.bf16.msra.mxu0 %v3615
      %5721 = vmatprep.subr.bf16.mxu0 %v3620
      %5722 = vmatpush1.bf16.msra.mxu0 %v3619
      %5723 = vmatprep.subr.bf16.mxu0 %v3624
      %5724 = vmatpush1.bf16.msra.mxu0 %v3623
      %5725 = vmatprep.subr.bf16.mxu0 %v3628
      %5726 = vmatpush1.bf16.msra.mxu0 %v3627
      %5727 = vmatprep.subr.bf16.mxu0 %v3632
      %5728 = vmatpush1.bf16.msra.mxu0 %v3631
      %5729 = vmatprep.subr.bf16.mxu0 %v3636
      %5730 = vmatpush1.bf16.msra.mxu0 %v3635
      %5731 = vmatprep.subr.bf16.mxu0 %v3640
      %5732 = vmatpush1.bf16.msra.mxu0 %v3639
      %5733 = vmatprep.subr.bf16.mxu0 %v3644
      %5734 = vmatpush1.bf16.msra.mxu0 %v3643
      %5735 = vmatprep.subr.bf16.mxu0 %v3648
      %5736 = vmatpush1.bf16.msra.mxu0 %v3647
      %5737 = vmatprep.subr.bf16.mxu0 %v3652
      %5738 = vmatpush1.bf16.msra.mxu0 %v3651
      %5739 = vmatprep.subr.bf16.mxu0 %v3656
      %5740 = vmatpush1.bf16.msra.mxu0 %v3655
      %5741 = vmatprep.subr.bf16.mxu0 %v3660
      %5742 = vmatpush1.bf16.msra.mxu0 %v3659
      %5743 = vmatprep.subr.bf16.mxu0 %v3664
      %5744 = vmatpush1.bf16.msra.mxu0 %v3663
      %5745 = vmatprep.subr.bf16.mxu0 %v3668
      %5746 = vmatpush1.bf16.msra.mxu0 %v3667
      %5747 = vmatprep.mubr.bf16.mxu0 %v1143
      %5748 = vmatmul.mubr.bf16.gmra.mrb[0].mxu0 %v1142
      %v5749 = vpop.f32.mrb[0].mxu0
      %v5750 = vadd.f32 %v5707, %v5749
      %v5751 = vpop.f32.mrb[0].mxu0
      %v5752 = vadd.f32 %v5709, %v5751
      %v5753 = vpop.f32.mrb[0].mxu0
      %v5754 = vadd.f32 %v5711, %v5753
      %v5755 = vpop.f32.mrb[0].mxu0
      %v5756 = vadd.f32 %v5713, %v5755
      %5757 = vdwg.mxu0
      %5758 = vmatprep.subr.bf16.mxu0 %v3672
      %5759 = vmatpush1.bf16.msra.mxu0 %v3671
      %5760 = vmatprep.subr.bf16.mxu0 %v3676
      %5761 = vmatpush1.bf16.msra.mxu0 %v3675
      %5762 = vmatprep.subr.bf16.mxu0 %v3680
      %5763 = vmatpush1.bf16.msra.mxu0 %v3679
      %5764 = vmatprep.subr.bf16.mxu0 %v3684
      %5765 = vmatpush1.bf16.msra.mxu0 %v3683
      %5766 = vmatprep.subr.bf16.mxu0 %v3688
      %5767 = vmatpush1.bf16.msra.mxu0 %v3687
      %5768 = vmatprep.subr.bf16.mxu0 %v3692
      %5769 = vmatpush1.bf16.msra.mxu0 %v3691
      %5770 = vmatprep.subr.bf16.mxu0 %v3696
      %5771 = vmatpush1.bf16.msra.mxu0 %v3695
      %5772 = vmatprep.subr.bf16.mxu0 %v3700
      %5773 = vmatpush1.bf16.msra.mxu0 %v3699
      %5774 = vmatprep.subr.bf16.mxu0 %v3704
      %5775 = vmatpush1.bf16.msra.mxu0 %v3703
      %5776 = vmatprep.subr.bf16.mxu0 %v3708
      %5777 = vmatpush1.bf16.msra.mxu0 %v3707
      %5778 = vmatprep.subr.bf16.mxu0 %v3712
      %5779 = vmatpush1.bf16.msra.mxu0 %v3711
      %5780 = vmatprep.subr.bf16.mxu0 %v3716
      %5781 = vmatpush1.bf16.msra.mxu0 %v3715
      %5782 = vmatprep.subr.bf16.mxu0 %v3720
      %5783 = vmatpush1.bf16.msra.mxu0 %v3719
      %5784 = vmatprep.subr.bf16.mxu0 %v3724
      %5785 = vmatpush1.bf16.msra.mxu0 %v3723
      %5786 = vmatprep.subr.bf16.mxu0 %v3728
      %5787 = vmatpush1.bf16.msra.mxu0 %v3727
      %5788 = vmatprep.subr.bf16.mxu0 %v3732
      %5789 = vmatpush1.bf16.msra.mxu0 %v3731
      %5790 = vmatprep.mubr.bf16.mxu0 %v1145
      %5791 = vmatmul.mubr.bf16.gmra.mrb[0].mxu0 %v1144
      %v5792 = vpop.f32.mrb[0].mxu0
      %v5793 = vadd.f32 %v5750, %v5792
      %v5794 = vpop.f32.mrb[0].mxu0
      %v5795 = vadd.f32 %v5752, %v5794
      %v5796 = vpop.f32.mrb[0].mxu0
      %v5797 = vadd.f32 %v5754, %v5796
      %v5798 = vpop.f32.mrb[0].mxu0
      %v5799 = vadd.f32 %v5756, %v5798
      %5800 = vdwg.mxu0
      %5801 = vmatprep.subr.bf16.mxu0 %v3736
      %5802 = vmatpush1.bf16.msra.mxu0 %v3735
      %5803 = vmatprep.subr.bf16.mxu0 %v3740
      %5804 = vmatpush1.bf16.msra.mxu0 %v3739
      %5805 = vmatprep.subr.bf16.mxu0 %v3744
      %5806 = vmatpush1.bf16.msra.mxu0 %v3743
      %5807 = vmatprep.subr.bf16.mxu0 %v3748
      %5808 = vmatpush1.bf16.msra.mxu0 %v3747
      %5809 = vmatprep.subr.bf16.mxu0 %v3752
      %5810 = vmatpush1.bf16.msra.mxu0 %v3751
      %5811 = vmatprep.subr.bf16.mxu0 %v3756
      %5812 = vmatpush1.bf16.msra.mxu0 %v3755
      %5813 = vmatprep.subr.bf16.mxu0 %v3760
      %5814 = vmatpush1.bf16.msra.mxu0 %v3759
      %5815 = vmatprep.subr.bf16.mxu0 %v3764
      %5816 = vmatpush1.bf16.msra.mxu0 %v3763
      %5817 = vmatprep.subr.bf16.mxu0 %v3768
      %5818 = vmatpush1.bf16.msra.mxu0 %v3767
      %5819 = vmatprep.subr.bf16.mxu0 %v3772
      %5820 = vmatpush1.bf16.msra.mxu0 %v3771
      %5821 = vmatprep.subr.bf16.mxu0 %v3776
      %5822 = vmatpush1.bf16.msra.mxu0 %v3775
      %5823 = vmatprep.subr.bf16.mxu0 %v3780
      %5824 = vmatpush1.bf16.msra.mxu0 %v3779
      %5825 = vmatprep.subr.bf16.mxu0 %v3784
      %5826 = vmatpush1.bf16.msra.mxu0 %v3783
      %5827 = vmatprep.subr.bf16.mxu0 %v3788
      %5828 = vmatpush1.bf16.msra.mxu0 %v3787
      %5829 = vmatprep.subr.bf16.mxu0 %v3792
      %5830 = vmatpush1.bf16.msra.mxu0 %v3791
      %5831 = vmatprep.subr.bf16.mxu0 %v3796
      %5832 = vmatpush1.bf16.msra.mxu0 %v3795
      %5833 = vmatprep.mubr.bf16.mxu0 %v1147
      %5834 = vmatmul.mubr.bf16.gmra.mrb[0].mxu0 %v1146
      %v5835 = vpop.f32.mrb[0].mxu0
      %v5836 = vadd.f32 %v5793, %v5835
      %v5837 = vpop.f32.mrb[0].mxu0
      %v5838 = vadd.f32 %v5795, %v5837
      %v5839 = vpop.f32.mrb[0].mxu0
      %v5840 = vadd.f32 %v5797, %v5839
      %v5841 = vpop.f32.mrb[0].mxu0
      %v5842 = vadd.f32 %v5799, %v5841
      %5843 = vdwg.mxu0
      %5844 = vmatprep.subr.bf16.mxu0 %v3800
      %5845 = vmatpush1.bf16.msra.mxu0 %v3799
      %5846 = vmatprep.subr.bf16.mxu0 %v3804
      %5847 = vmatpush1.bf16.msra.mxu0 %v3803
      %5848 = vmatprep.subr.bf16.mxu0 %v3808
      %5849 = vmatpush1.bf16.msra.mxu0 %v3807
      %5850 = vmatprep.subr.bf16.mxu0 %v3812
      %5851 = vmatpush1.bf16.msra.mxu0 %v3811
      %5852 = vmatprep.subr.bf16.mxu0 %v3816
      %5853 = vmatpush1.bf16.msra.mxu0 %v3815
      %5854 = vmatprep.subr.bf16.mxu0 %v3820
      %5855 = vmatpush1.bf16.msra.mxu0 %v3819
      %5856 = vmatprep.subr.bf16.mxu0 %v3824
      %5857 = vmatpush1.bf16.msra.mxu0 %v3823
      %5858 = vmatprep.subr.bf16.mxu0 %v3828
      %5859 = vmatpush1.bf16.msra.mxu0 %v3827
      %5860 = vmatprep.subr.bf16.mxu0 %v3832
      %5861 = vmatpush1.bf16.msra.mxu0 %v3831
      %5862 = vmatprep.subr.bf16.mxu0 %v3836
      %5863 = vmatpush1.bf16.msra.mxu0 %v3835
      %5864 = vmatprep.subr.bf16.mxu0 %v3840
      %5865 = vmatpush1.bf16.msra.mxu0 %v3839
      %5866 = vmatprep.subr.bf16.mxu0 %v3844
      %5867 = vmatpush1.bf16.msra.mxu0 %v3843
      %5868 = vmatprep.subr.bf16.mxu0 %v3848
      %5869 = vmatpush1.bf16.msra.mxu0 %v3847
      %5870 = vmatprep.subr.bf16.mxu0 %v3852
      %5871 = vmatpush1.bf16.msra.mxu0 %v3851
      %5872 = vmatprep.subr.bf16.mxu0 %v3856
      %5873 = vmatpush1.bf16.msra.mxu0 %v3855
      %5874 = vmatprep.subr.bf16.mxu0 %v3860
      %5875 = vmatpush1.bf16.msra.mxu0 %v3859
      %5876 = vmatprep.mubr.bf16.mxu0 %v1149
      %5877 = vmatmul.mubr.bf16.gmra.mrb[0].mxu0 %v1148
      %v5878 = vpop.f32.mrb[0].mxu0
      %v5879 = vadd.f32 %v5836, %v5878
      %v5880 = vpop.f32.mrb[0].mxu0
      %v5881 = vadd.f32 %v5838, %v5880
      %v5882 = vpop.f32.mrb[0].mxu0
      %v5883 = vadd.f32 %v5840, %v5882
      %v5884 = vpop.f32.mrb[0].mxu0
      %v5885 = vadd.f32 %v5842, %v5884
      %5886 = vdwg.mxu0
      %5887 = vmatprep.subr.bf16.mxu0 %v3864
      %5888 = vmatpush1.bf16.msra.mxu0 %v3863
      %5889 = vmatprep.subr.bf16.mxu0 %v3868
      %5890 = vmatpush1.bf16.msra.mxu0 %v3867
      %5891 = vmatprep.subr.bf16.mxu0 %v3872
      %5892 = vmatpush1.bf16.msra.mxu0 %v3871
      %5893 = vmatprep.subr.bf16.mxu0 %v3876
      %5894 = vmatpush1.bf16.msra.mxu0 %v3875
      %5895 = vmatprep.subr.bf16.mxu0 %v3880
      %5896 = vmatpush1.bf16.msra.mxu0 %v3879
      %5897 = vmatprep.subr.bf16.mxu0 %v3884
      %5898 = vmatpush1.bf16.msra.mxu0 %v3883
      %5899 = vmatprep.subr.bf16.mxu0 %v3888
      %5900 = vmatpush1.bf16.msra.mxu0 %v3887
      %5901 = vmatprep.subr.bf16.mxu0 %v3892
      %5902 = vmatpush1.bf16.msra.mxu0 %v3891
      %5903 = vmatprep.subr.bf16.mxu0 %v3896
      %5904 = vmatpush1.bf16.msra.mxu0 %v3895
      %5905 = vmatprep.subr.bf16.mxu0 %v3900
      %5906 = vmatpush1.bf16.msra.mxu0 %v3899
      %5907 = vmatprep.subr.bf16.mxu0 %v3904
      %5908 = vmatpush1.bf16.msra.mxu0 %v3903
      %5909 = vmatprep.subr.bf16.mxu0 %v3908
      %5910 = vmatpush1.bf16.msra.mxu0 %v3907
      %5911 = vmatprep.subr.bf16.mxu0 %v3912
      %5912 = vmatpush1.bf16.msra.mxu0 %v3911
      %5913 = vmatprep.subr.bf16.mxu0 %v3916
      %5914 = vmatpush1.bf16.msra.mxu0 %v3915
      %5915 = vmatprep.subr.bf16.mxu0 %v3920
      %5916 = vmatpush1.bf16.msra.mxu0 %v3919
      %5917 = vmatprep.subr.bf16.mxu0 %v3924
      %5918 = vmatpush1.bf16.msra.mxu0 %v3923
      %5919 = vmatprep.mubr.bf16.mxu0 %v1151
      %5920 = vmatmul.mubr.bf16.gmra.mrb[0].mxu0 %v1150
      %v5921 = vpop.f32.mrb[0].mxu0
      %v5922 = vadd.f32 %v5879, %v5921
      %v5923 = vpop.f32.mrb[0].mxu0
      %v5924 = vadd.f32 %v5881, %v5923
      %v5925 = vpop.f32.mrb[0].mxu0
      %v5926 = vadd.f32 %v5883, %v5925
      %v5927 = vpop.f32.mrb[0].mxu0
      %v5928 = vadd.f32 %v5885, %v5927
      %5929 = vdwg.mxu0
      %5930 = vmatprep.subr.bf16.mxu0 %v3928
      %5931 = vmatpush1.bf16.msra.mxu0 %v3927
      %5932 = vmatprep.subr.bf16.mxu0 %v3932
      %5933 = vmatpush1.bf16.msra.mxu0 %v3931
      %5934 = vmatprep.subr.bf16.mxu0 %v3936
      %5935 = vmatpush1.bf16.msra.mxu0 %v3935
      %5936 = vmatprep.subr.bf16.mxu0 %v3940
      %5937 = vmatpush1.bf16.msra.mxu0 %v3939
      %5938 = vmatprep.subr.bf16.mxu0 %v3944
      %5939 = vmatpush1.bf16.msra.mxu0 %v3943
      %5940 = vmatprep.subr.bf16.mxu0 %v3948
      %5941 = vmatpush1.bf16.msra.mxu0 %v3947
      %5942 = vmatprep.subr.bf16.mxu0 %v3952
      %5943 = vmatpush1.bf16.msra.mxu0 %v3951
      %5944 = vmatprep.subr.bf16.mxu0 %v3956
      %5945 = vmatpush1.bf16.msra.mxu0 %v3955
      %5946 = vmatprep.subr.bf16.mxu0 %v3960
      %5947 = vmatpush1.bf16.msra.mxu0 %v3959
      %5948 = vmatprep.subr.bf16.mxu0 %v3964
      %5949 = vmatpush1.bf16.msra.mxu0 %v3963
      %5950 = vmatprep.subr.bf16.mxu0 %v3968
      %5951 = vmatpush1.bf16.msra.mxu0 %v3967
      %5952 = vmatprep.subr.bf16.mxu0 %v3972
      %5953 = vmatpush1.bf16.msra.mxu0 %v3971
      %5954 = vmatprep.subr.bf16.mxu0 %v3976
      %5955 = vmatpush1.bf16.msra.mxu0 %v3975
      %5956 = vmatprep.subr.bf16.mxu0 %v3980
      %5957 = vmatpush1.bf16.msra.mxu0 %v3979
      %5958 = vmatprep.subr.bf16.mxu0 %v3984
      %5959 = vmatpush1.bf16.msra.mxu0 %v3983
      %5960 = vmatprep.subr.bf16.mxu0 %v3988
      %5961 = vmatpush1.bf16.msra.mxu0 %v3987
      %5962 = vmatprep.mubr.bf16.mxu0 %v1153
      %5963 = vmatmul.mubr.bf16.gmra.mrb[0].mxu0 %v1152
      %v5964 = vpop.f32.mrb[0].mxu0
      %v5965 = vadd.f32 %v5922, %v5964
      %v5966 = vpop.f32.mrb[0].mxu0
      %v5967 = vadd.f32 %v5924, %v5966
      %v5968 = vpop.f32.mrb[0].mxu0
      %v5969 = vadd.f32 %v5926, %v5968
      %v5970 = vpop.f32.mrb[0].mxu0
      %v5971 = vadd.f32 %v5928, %v5970
      %5972 = vdwg.mxu0
      %5973 = vmatprep.subr.bf16.mxu0 %v3992
      %5974 = vmatpush1.bf16.msra.mxu0 %v3991
      %5975 = vmatprep.subr.bf16.mxu0 %v3996
      %5976 = vmatpush1.bf16.msra.mxu0 %v3995
      %5977 = vmatprep.subr.bf16.mxu0 %v4000
      %5978 = vmatpush1.bf16.msra.mxu0 %v3999
      %5979 = vmatprep.subr.bf16.mxu0 %v4004
      %5980 = vmatpush1.bf16.msra.mxu0 %v4003
      %5981 = vmatprep.subr.bf16.mxu0 %v4008
      %5982 = vmatpush1.bf16.msra.mxu0 %v4007
      %5983 = vmatprep.subr.bf16.mxu0 %v4012
      %5984 = vmatpush1.bf16.msra.mxu0 %v4011
      %5985 = vmatprep.subr.bf16.mxu0 %v4016
      %5986 = vmatpush1.bf16.msra.mxu0 %v4015
      %5987 = vmatprep.subr.bf16.mxu0 %v4020
      %5988 = vmatpush1.bf16.msra.mxu0 %v4019
      %5989 = vmatprep.subr.bf16.mxu0 %v4024
      %5990 = vmatpush1.bf16.msra.mxu0 %v4023
      %5991 = vmatprep.subr.bf16.mxu0 %v4028
      %5992 = vmatpush1.bf16.msra.mxu0 %v4027
      %5993 = vmatprep.subr.bf16.mxu0 %v4032
      %5994 = vmatpush1.bf16.msra.mxu0 %v4031
      %5995 = vmatprep.subr.bf16.mxu0 %v4036
      %5996 = vmatpush1.bf16.msra.mxu0 %v4035
      %5997 = vmatprep.subr.bf16.mxu0 %v4040
      %5998 = vmatpush1.bf16.msra.mxu0 %v4039
      %5999 = vmatprep.subr.bf16.mxu0 %v4044
      %6000 = vmatpush1.bf16.msra.mxu0 %v4043
      %6001 = vmatprep.subr.bf16.mxu0 %v4048
      %6002 = vmatpush1.bf16.msra.mxu0 %v4047
      %6003 = vmatprep.subr.bf16.mxu0 %v4052
      %6004 = vmatpush1.bf16.msra.mxu0 %v4051
      %6005 = vmatprep.mubr.bf16.mxu0 %v1155
      %6006 = vmatmul.mubr.bf16.gmra.mrb[0].mxu0 %v1154
      %v6007 = vpop.f32.mrb[0].mxu0
      %v6008 = vadd.f32 %v5965, %v6007
      %v6009 = vpop.f32.mrb[0].mxu0
      %v6010 = vadd.f32 %v5967, %v6009
      %v6011 = vpop.f32.mrb[0].mxu0
      %v6012 = vadd.f32 %v5969, %v6011
      %v6013 = vpop.f32.mrb[0].mxu0
      %v6014 = vadd.f32 %v5971, %v6013
      %6015 = vdwg.mxu0
      %6016 = vmatprep.subr.bf16.mxu0 %v4056
      %6017 = vmatpush1.bf16.msra.mxu0 %v4055
      %6018 = vmatprep.subr.bf16.mxu0 %v4060
      %6019 = vmatpush1.bf16.msra.mxu0 %v4059
      %6020 = vmatprep.subr.bf16.mxu0 %v4064
      %6021 = vmatpush1.bf16.msra.mxu0 %v4063
      %6022 = vmatprep.subr.bf16.mxu0 %v4068
      %6023 = vmatpush1.bf16.msra.mxu0 %v4067
      %6024 = vmatprep.subr.bf16.mxu0 %v4072
      %6025 = vmatpush1.bf16.msra.mxu0 %v4071
      %6026 = vmatprep.subr.bf16.mxu0 %v4076
      %6027 = vmatpush1.bf16.msra.mxu0 %v4075
      %6028 = vmatprep.subr.bf16.mxu0 %v4080
      %6029 = vmatpush1.bf16.msra.mxu0 %v4079
      %6030 = vmatprep.subr.bf16.mxu0 %v4084
      %6031 = vmatpush1.bf16.msra.mxu0 %v4083
      %6032 = vmatprep.subr.bf16.mxu0 %v4088
      %6033 = vmatpush1.bf16.msra.mxu0 %v4087
      %6034 = vmatprep.subr.bf16.mxu0 %v4092
      %6035 = vmatpush1.bf16.msra.mxu0 %v4091
      %6036 = vmatprep.subr.bf16.mxu0 %v4096
      %6037 = vmatpush1.bf16.msra.mxu0 %v4095
      %6038 = vmatprep.subr.bf16.mxu0 %v4100
      %6039 = vmatpush1.bf16.msra.mxu0 %v4099
      %6040 = vmatprep.subr.bf16.mxu0 %v4104
      %6041 = vmatpush1.bf16.msra.mxu0 %v4103
      %6042 = vmatprep.subr.bf16.mxu0 %v4108
      %6043 = vmatpush1.bf16.msra.mxu0 %v4107
      %6044 = vmatprep.subr.bf16.mxu0 %v4112
      %6045 = vmatpush1.bf16.msra.mxu0 %v4111
      %6046 = vmatprep.subr.bf16.mxu0 %v4116
      %6047 = vmatpush1.bf16.msra.mxu0 %v4115
      %6048 = vmatprep.mubr.bf16.mxu0 %v1157
      %6049 = vmatmul.mubr.bf16.gmra.mrb[0].mxu0 %v1156
      %v6050 = vpop.f32.mrb[0].mxu0
      %v6051 = vadd.f32 %v6008, %v6050
      %v6052 = vpop.f32.mrb[0].mxu0
      %v6053 = vadd.f32 %v6010, %v6052
      %v6054 = vpop.f32.mrb[0].mxu0
      %v6055 = vadd.f32 %v6012, %v6054
      %v6056 = vpop.f32.mrb[0].mxu0
      %v6057 = vadd.f32 %v6014, %v6056
      %6058 = vdwg.mxu0
      %6059 = vmatprep.subr.bf16.mxu0 %v4120
      %6060 = vmatpush1.bf16.msra.mxu0 %v4119
      %6061 = vmatprep.subr.bf16.mxu0 %v4124
      %6062 = vmatpush1.bf16.msra.mxu0 %v4123
      %6063 = vmatprep.subr.bf16.mxu0 %v4128
      %6064 = vmatpush1.bf16.msra.mxu0 %v4127
      %6065 = vmatprep.subr.bf16.mxu0 %v4132
      %6066 = vmatpush1.bf16.msra.mxu0 %v4131
      %6067 = vmatprep.subr.bf16.mxu0 %v4136
      %6068 = vmatpush1.bf16.msra.mxu0 %v4135
      %6069 = vmatprep.subr.bf16.mxu0 %v4140
      %6070 = vmatpush1.bf16.msra.mxu0 %v4139
      %6071 = vmatprep.subr.bf16.mxu0 %v4144
      %6072 = vmatpush1.bf16.msra.mxu0 %v4143
      %6073 = vmatprep.subr.bf16.mxu0 %v4148
      %6074 = vmatpush1.bf16.msra.mxu0 %v4147
      %6075 = vmatprep.subr.bf16.mxu0 %v4152
      %6076 = vmatpush1.bf16.msra.mxu0 %v4151
      %6077 = vmatprep.subr.bf16.mxu0 %v4156
      %6078 = vmatpush1.bf16.msra.mxu0 %v4155
      %6079 = vmatprep.subr.bf16.mxu0 %v4160
      %6080 = vmatpush1.bf16.msra.mxu0 %v4159
      %6081 = vmatprep.subr.bf16.mxu0 %v4164
      %6082 = vmatpush1.bf16.msra.mxu0 %v4163
      %6083 = vmatprep.subr.bf16.mxu0 %v4168
      %6084 = vmatpush1.bf16.msra.mxu0 %v4167
      %6085 = vmatprep.subr.bf16.mxu0 %v4172
      %6086 = vmatpush1.bf16.msra.mxu0 %v4171
      %6087 = vmatprep.subr.bf16.mxu0 %v4176
      %6088 = vmatpush1.bf16.msra.mxu0 %v4175
      %6089 = vmatprep.subr.bf16.mxu0 %v4180
      %6090 = vmatpush1.bf16.msra.mxu0 %v4179
      %6091 = vmatprep.mubr.bf16.mxu0 %v1159
      %6092 = vmatmul.mubr.bf16.gmra.mrb[0].mxu0 %v1158
      %v6093 = vpop.f32.mrb[0].mxu0
      %v6094 = vadd.f32 %v6051, %v6093
      %v6095 = vpop.f32.mrb[0].mxu0
      %v6096 = vadd.f32 %v6053, %v6095
      %v6097 = vpop.f32.mrb[0].mxu0
      %v6098 = vadd.f32 %v6055, %v6097
      %v6099 = vpop.f32.mrb[0].mxu0
      %v6100 = vadd.f32 %v6057, %v6099
      %6101 = vdwg.mxu0
      %6102 = vmatprep.subr.bf16.mxu0 %v4184
      %6103 = vmatpush1.bf16.msra.mxu0 %v4183
      %6104 = vmatprep.subr.bf16.mxu0 %v4188
      %6105 = vmatpush1.bf16.msra.mxu0 %v4187
      %6106 = vmatprep.subr.bf16.mxu0 %v4192
      %6107 = vmatpush1.bf16.msra.mxu0 %v4191
      %6108 = vmatprep.subr.bf16.mxu0 %v4196
      %6109 = vmatpush1.bf16.msra.mxu0 %v4195
      %6110 = vmatprep.subr.bf16.mxu0 %v4200
      %6111 = vmatpush1.bf16.msra.mxu0 %v4199
      %6112 = vmatprep.subr.bf16.mxu0 %v4204
      %6113 = vmatpush1.bf16.msra.mxu0 %v4203
      %6114 = vmatprep.subr.bf16.mxu0 %v4208
      %6115 = vmatpush1.bf16.msra.mxu0 %v4207
      %6116 = vmatprep.subr.bf16.mxu0 %v4212
      %6117 = vmatpush1.bf16.msra.mxu0 %v4211
      %6118 = vmatprep.subr.bf16.mxu0 %v4216
      %6119 = vmatpush1.bf16.msra.mxu0 %v4215
      %6120 = vmatprep.subr.bf16.mxu0 %v4220
      %6121 = vmatpush1.bf16.msra.mxu0 %v4219
      %6122 = vmatprep.subr.bf16.mxu0 %v4224
      %6123 = vmatpush1.bf16.msra.mxu0 %v4223
      %6124 = vmatprep.subr.bf16.mxu0 %v4228
      %6125 = vmatpush1.bf16.msra.mxu0 %v4227
      %6126 = vmatprep.subr.bf16.mxu0 %v4232
      %6127 = vmatpush1.bf16.msra.mxu0 %v4231
      %6128 = vmatprep.subr.bf16.mxu0 %v4236
      %6129 = vmatpush1.bf16.msra.mxu0 %v4235
      %6130 = vmatprep.subr.bf16.mxu0 %v4240
      %6131 = vmatpush1.bf16.msra.mxu0 %v4239
      %6132 = vmatprep.subr.bf16.mxu0 %v4244
      %6133 = vmatpush1.bf16.msra.mxu0 %v4243
      %6134 = vmatprep.mubr.bf16.mxu0 %v1161
      %6135 = vmatmul.mubr.bf16.gmra.mrb[0].mxu0 %v1160
      %v6136 = vpop.f32.mrb[0].mxu0
      %v6137 = vadd.f32 %v6094, %v6136
      %v6138 = vpop.f32.mrb[0].mxu0
      %v6139 = vadd.f32 %v6096, %v6138
      %v6140 = vpop.f32.mrb[0].mxu0
      %v6141 = vadd.f32 %v6098, %v6140
      %v6142 = vpop.f32.mrb[0].mxu0
      %v6143 = vadd.f32 %v6100, %v6142
      %6144 = vdwg.mxu0
      %6145 = vmatprep.subr.bf16.mxu0 %v4248
      %6146 = vmatpush1.bf16.msra.mxu0 %v4247
      %6147 = vmatprep.subr.bf16.mxu0 %v4252
      %6148 = vmatpush1.bf16.msra.mxu0 %v4251
      %6149 = vmatprep.subr.bf16.mxu0 %v4256
      %6150 = vmatpush1.bf16.msra.mxu0 %v4255
      %6151 = vmatprep.subr.bf16.mxu0 %v4260
      %6152 = vmatpush1.bf16.msra.mxu0 %v4259
      %6153 = vmatprep.subr.bf16.mxu0 %v4264
      %6154 = vmatpush1.bf16.msra.mxu0 %v4263
      %6155 = vmatprep.subr.bf16.mxu0 %v4268
      %6156 = vmatpush1.bf16.msra.mxu0 %v4267
      %6157 = vmatprep.subr.bf16.mxu0 %v4272
      %6158 = vmatpush1.bf16.msra.mxu0 %v4271
      %6159 = vmatprep.subr.bf16.mxu0 %v4276
      %6160 = vmatpush1.bf16.msra.mxu0 %v4275
      %6161 = vmatprep.subr.bf16.mxu0 %v4280
      %6162 = vmatpush1.bf16.msra.mxu0 %v4279
      %6163 = vmatprep.subr.bf16.mxu0 %v4284
      %6164 = vmatpush1.bf16.msra.mxu0 %v4283
      %6165 = vmatprep.subr.bf16.mxu0 %v4288
      %6166 = vmatpush1.bf16.msra.mxu0 %v4287
      %6167 = vmatprep.subr.bf16.mxu0 %v4292
      %6168 = vmatpush1.bf16.msra.mxu0 %v4291
      %6169 = vmatprep.subr.bf16.mxu0 %v4296
      %6170 = vmatpush1.bf16.msra.mxu0 %v4295
      %6171 = vmatprep.subr.bf16.mxu0 %v4300
      %6172 = vmatpush1.bf16.msra.mxu0 %v4299
      %6173 = vmatprep.subr.bf16.mxu0 %v4304
      %6174 = vmatpush1.bf16.msra.mxu0 %v4303
      %6175 = vmatprep.subr.bf16.mxu0 %v4308
      %6176 = vmatpush1.bf16.msra.mxu0 %v4307
      %6177 = vmatprep.mubr.bf16.mxu0 %v1163
      %6178 = vmatmul.mubr.bf16.gmra.mrb[0].mxu0 %v1162
      %v6179 = vpop.f32.mrb[0].mxu0
      %v6180 = vadd.f32 %v6137, %v6179
      %v6181 = vpop.f32.mrb[0].mxu0
      %v6182 = vadd.f32 %v6139, %v6181
      %v6183 = vpop.f32.mrb[0].mxu0
      %v6184 = vadd.f32 %v6141, %v6183
      %v6185 = vpop.f32.mrb[0].mxu0
      %v6186 = vadd.f32 %v6143, %v6185
      %6187 = vdwg.mxu0
      %6188 = vmatprep.subr.bf16.mxu0 %v4312
      %6189 = vmatpush1.bf16.msra.mxu0 %v4311
      %6190 = vmatprep.subr.bf16.mxu0 %v4316
      %6191 = vmatpush1.bf16.msra.mxu0 %v4315
      %6192 = vmatprep.subr.bf16.mxu0 %v4320
      %6193 = vmatpush1.bf16.msra.mxu0 %v4319
      %6194 = vmatprep.subr.bf16.mxu0 %v4324
      %6195 = vmatpush1.bf16.msra.mxu0 %v4323
      %6196 = vmatprep.subr.bf16.mxu0 0
      %6197 = vmatpush1.bf16.msra.mxu0 0
      %6198 = vmatprep.subr.bf16.mxu0 0
      %6199 = vmatpush1.bf16.msra.mxu0 0
      %6200 = vmatprep.subr.bf16.mxu0 0
      %6201 = vmatpush1.bf16.msra.mxu0 0
      %6202 = vmatprep.subr.bf16.mxu0 0
      %6203 = vmatpush1.bf16.msra.mxu0 0
      %6204 = vmatprep.subr.bf16.mxu0 0
      %6205 = vmatpush1.bf16.msra.mxu0 0
      %6206 = vmatprep.subr.bf16.mxu0 0
      %6207 = vmatpush1.bf16.msra.mxu0 0
      %6208 = vmatprep.subr.bf16.mxu0 0
      %6209 = vmatpush1.bf16.msra.mxu0 0
      %6210 = vmatprep.subr.bf16.mxu0 0
      %6211 = vmatpush1.bf16.msra.mxu0 0
      %6212 = vmatprep.subr.bf16.mxu0 0
      %6213 = vmatpush1.bf16.msra.mxu0 0
      %6214 = vmatprep.subr.bf16.mxu0 0
      %6215 = vmatpush1.bf16.msra.mxu0 0
      %6216 = vmatprep.subr.bf16.mxu0 0
      %6217 = vmatpush1.bf16.msra.mxu0 0
      %6218 = vmatprep.subr.bf16.mxu0 0
      %6219 = vmatpush1.bf16.msra.mxu0 0
      %6220 = vmatprep.mubr.bf16.mxu0 0
      %6221 = vmatmul.mubr.bf16.gmra.mrb[0].mxu0 %v5111
      %v6222 = vpop.f32.mrb[0].mxu0
      %v6223 = vadd.f32 %v6180, %v6222
      %v6224 = vpop.f32.mrb[0].mxu0
      %v6225 = vadd.f32 %v6182, %v6224
      %v6226 = vpop.f32.mrb[0].mxu0
      %v6227 = vadd.f32 %v6184, %v6226
      %v6228 = vpop.f32.mrb[0].mxu0
      %v6229 = vadd.f32 %v6186, %v6228
      %6230 = vdwg.mxu0
      %v6231 = vmax.f32 %v5664, 0.0
      %v6232 = vmax.f32 %v5666, 0.0
      %v6233 = vmax.f32 %v6223, 0.0
      %v6234 = vmax.f32 %v6225, 0.0
      %v6235 = vmax.f32 %v5668, 0.0
      %v6236 = vmax.f32 %v5670, 0.0
      %v6237 = vmax.f32 %v6227, 0.0
      %v6238 = vmax.f32 %v6229, 0.0
      %v6239 = vpack.c.bf16 %v6235, %v6231
      %v6240 = vpack.c.bf16 %v6236, %v6232
      %v6241 = vpack.c.bf16 %v6237, %v6233
      %v6242 = vpack.c.bf16 %v6238, %v6234
      %v6243 = vld [vmem:[%s3] sm:$0xf]
      %v6244 = vld [vmem:[%s3 + $0x4] sm:$0xf]
      %v6245 = vld [vmem:[%s3 + $0x8] sm:$0xf]
      %v6246 = vld [vmem:[%s3 + $0xc] sm:$0xf]
      %v6247 = vld [vmem:[%s3 + $0x10] sm:$0xf]
      %v6248 = vld [vmem:[%s3 + $0x14] sm:$0xf]
      %v6249 = vld [vmem:[%s3 + $0x18] sm:$0xf]
      %v6250 = vld [vmem:[%s3 + $0x1c] sm:$0xf]
      %v6251 = vld [vmem:[%s3 + $0x20] sm:$0xf]
      %v6252 = vld [vmem:[%s3 + $0x24] sm:$0xf]
      %v6253 = vld [vmem:[%s3 + $0x28] sm:$0xf]
      %v6254 = vld [vmem:[%s3 + $0x2c] sm:$0xf]
      %v6255 = vld [vmem:[%s3 + $0x30] sm:$0xf]
      %v6256 = vld [vmem:[%s3 + $0x34] sm:$0xf]
      %v6257 = vld [vmem:[%s3 + $0x38] sm:$0xf]
      %v6258 = vld [vmem:[%s3 + $0x3c] sm:$0xf]
      %v6259 = vld [vmem:[%s3 + $0x40] sm:$0xf]
      %v6260 = vld [vmem:[%s3 + $0x44] sm:$0xf]
      %v6261 = vld [vmem:[%s3 + $0x48] sm:$0xf]
      %v6262 = vld [vmem:[%s3 + $0x4c] sm:$0xf]
      %v6263 = vld [vmem:[%s3 + $0x50] sm:$0xf]
      %v6264 = vld [vmem:[%s3 + $0x54] sm:$0xf]
      %v6265 = vld [vmem:[%s3 + $0x58] sm:$0xf]
      %v6266 = vld [vmem:[%s3 + $0x5c] sm:$0xf]
      %v6267 = vld [vmem:[%s3 + $0x60] sm:$0xf]
      %v6268 = vld [vmem:[%s3 + $0x64] sm:$0xf]
      %v6269 = vld [vmem:[%s3 + $0x68] sm:$0xf]
      %v6270 = vld [vmem:[%s3 + $0x6c] sm:$0xf]
      %v6271 = vld [vmem:[%s3 + $0x70] sm:$0xf]
      %v6272 = vld [vmem:[%s3 + $0x74] sm:$0xf]
      %v6273 = vld [vmem:[%s3 + $0x78] sm:$0xf]
      %v6274 = vld [vmem:[%s3 + $0x7c] sm:$0xf]
      %v6275 = vld [vmem:[%s3 + $0x80] sm:$0xf]
      %v6276 = vld [vmem:[%s3 + $0x84] sm:$0xf]
      %v6277 = vld [vmem:[%s3 + $0x88] sm:$0xf]
      %v6278 = vld [vmem:[%s3 + $0x8c] sm:$0xf]
      %v6279 = vld [vmem:[%s3 + $0x90] sm:$0xf]
      %v6280 = vld [vmem:[%s3 + $0x94] sm:$0xf]
      %v6281 = vld [vmem:[%s3 + $0x98] sm:$0xf]
      %v6282 = vld [vmem:[%s3 + $0x9c] sm:$0xf]
      %v6283 = vld [vmem:[%s3 + $0xa0] sm:$0xf]
      %v6284 = vld [vmem:[%s3 + $0xa4] sm:$0xf]
      %v6285 = vld [vmem:[%s3 + $0xa8] sm:$0xf]
      %v6286 = vld [vmem:[%s3 + $0xac] sm:$0xf]
      %v6287 = vld [vmem:[%s3 + $0xb0] sm:$0xf]
      %v6288 = vld [vmem:[%s3 + $0xb4] sm:$0xf]
      %v6289 = vld [vmem:[%s3 + $0xb8] sm:$0xf]
      %v6290 = vld [vmem:[%s3 + $0xbc] sm:$0xf]
      %v6291 = vld [vmem:[%s3 + $0xc0] sm:$0xf]
      %v6292 = vld [vmem:[%s3 + $0xc4] sm:$0xf]
      %v6293 = vld [vmem:[%s3 + $0xc8] sm:$0xf]
      %v6294 = vld [vmem:[%s3 + $0xcc] sm:$0xf]
      %v6295 = vld [vmem:[%s3 + $0xd0] sm:$0xf]
      %v6296 = vld [vmem:[%s3 + $0xd4] sm:$0xf]
      %v6297 = vld [vmem:[%s3 + $0xd8] sm:$0xf]
      %v6298 = vld [vmem:[%s3 + $0xdc] sm:$0xf]
      %v6299 = vld [vmem:[%s3 + $0xe0] sm:$0xf]
      %v6300 = vld [vmem:[%s3 + $0xe4] sm:$0xf]
      %v6301 = vld [vmem:[%s3 + $0xe8] sm:$0xf]
      %v6302 = vld [vmem:[%s3 + $0xec] sm:$0xf]
      %v6303 = vld [vmem:[%s3 + $0xf0] sm:$0xf]
      %v6304 = vld [vmem:[%s3 + $0xf4] sm:$0xf]
      %v6305 = vld [vmem:[%s3 + $0xf8] sm:$0xf]
      %v6306 = vld [vmem:[%s3 + $0xfc] sm:$0xf]
      %v6307 = vld [vmem:[%s4] sm:$0x1]
      %v6309 = vlaneseq
      %v6310 = vshrl.u32 %v6309, 7
      %v6311 = vsub.s32 0, %v6310
      %v6312 = vrot.slane %v6307, %v6311
      %v6378 = vunpack.c.l.b16 %v6243
      %v6379 = vunpack.c.l.b16 %v6244
      %v6380 = vunpack.c.l.b16 %v6245
      %v6381 = vunpack.c.l.b16 %v6246
      %v6382 = vunpack.c.l.b16 %v6247
      %v6383 = vunpack.c.l.b16 %v6248
      %v6384 = vunpack.c.l.b16 %v6249
      %v6385 = vunpack.c.l.b16 %v6250
      %v6386 = vunpack.c.l.b16 %v6251
      %v6387 = vunpack.c.l.b16 %v6252
      %v6388 = vunpack.c.l.b16 %v6253
      %v6389 = vunpack.c.l.b16 %v6254
      %v6390 = vunpack.c.l.b16 %v6255
      %v6391 = vunpack.c.l.b16 %v6256
      %v6392 = vunpack.c.l.b16 %v6257
      %v6393 = vunpack.c.l.b16 %v6258
      %v6394 = vunpack.c.l.b16 %v6259
      %v6395 = vunpack.c.l.b16 %v6260
      %v6396 = vunpack.c.l.b16 %v6261
      %v6397 = vunpack.c.l.b16 %v6262
      %v6398 = vunpack.c.l.b16 %v6263
      %v6399 = vunpack.c.l.b16 %v6264
      %v6400 = vunpack.c.l.b16 %v6265
      %v6401 = vunpack.c.l.b16 %v6266
      %v6402 = vunpack.c.l.b16 %v6267
      %v6403 = vunpack.c.l.b16 %v6268
      %v6404 = vunpack.c.l.b16 %v6269
      %v6405 = vunpack.c.l.b16 %v6270
      %v6406 = vunpack.c.l.b16 %v6271
      %v6407 = vunpack.c.l.b16 %v6272
      %v6408 = vunpack.c.l.b16 %v6273
      %v6409 = vunpack.c.l.b16 %v6274
      %v6410 = vunpack.c.l.b16 %v6275
      %v6411 = vunpack.c.l.b16 %v6276
      %v6412 = vunpack.c.l.b16 %v6277
      %v6413 = vunpack.c.l.b16 %v6278
      %v6414 = vunpack.c.l.b16 %v6279
      %v6415 = vunpack.c.l.b16 %v6280
      %v6416 = vunpack.c.l.b16 %v6281
      %v6417 = vunpack.c.l.b16 %v6282
      %v6418 = vunpack.c.l.b16 %v6283
      %v6419 = vunpack.c.l.b16 %v6284
      %v6420 = vunpack.c.l.b16 %v6285
      %v6421 = vunpack.c.l.b16 %v6286
      %v6422 = vunpack.c.l.b16 %v6287
      %v6423 = vunpack.c.l.b16 %v6288
      %v6424 = vunpack.c.l.b16 %v6289
      %v6425 = vunpack.c.l.b16 %v6290
      %v6426 = vunpack.c.l.b16 %v6291
      %v6427 = vunpack.c.l.b16 %v6292
      %v6428 = vunpack.c.l.b16 %v6293
      %v6429 = vunpack.c.l.b16 %v6294
      %v6430 = vunpack.c.l.b16 %v6295
      %v6431 = vunpack.c.l.b16 %v6296
      %v6432 = vunpack.c.l.b16 %v6297
      %v6433 = vunpack.c.l.b16 %v6298
      %v6434 = vunpack.c.l.b16 %v6299
      %v6435 = vunpack.c.l.b16 %v6300
      %v6436 = vunpack.c.l.b16 %v6301
      %v6437 = vunpack.c.l.b16 %v6302
      %v6438 = vunpack.c.l.b16 %v6303
      %v6439 = vunpack.c.l.b16 %v6304
      %v6440 = vunpack.c.l.b16 %v6305
      %v6441 = vunpack.c.l.b16 %v6306
      %v6442 = vpack.c.b16 %v6379, %v6378
      %v6443 = vpack.c.b16 %v6381, %v6380
      %v6444 = vpack.c.b16 %v6383, %v6382
      %v6445 = vpack.c.b16 %v6385, %v6384
      %v6446 = vpack.c.b16 %v6387, %v6386
      %v6447 = vpack.c.b16 %v6389, %v6388
      %v6448 = vpack.c.b16 %v6391, %v6390
      %v6449 = vpack.c.b16 %v6393, %v6392
      %v6450 = vpack.c.b16 %v6395, %v6394
      %v6451 = vpack.c.b16 %v6397, %v6396
      %v6452 = vpack.c.b16 %v6399, %v6398
      %v6453 = vpack.c.b16 %v6401, %v6400
      %v6454 = vpack.c.b16 %v6403, %v6402
      %v6455 = vpack.c.b16 %v6405, %v6404
      %v6456 = vpack.c.b16 %v6407, %v6406
      %v6457 = vpack.c.b16 %v6409, %v6408
      %v6458 = vpack.c.b16 %v6411, %v6410
      %v6459 = vpack.c.b16 %v6413, %v6412
      %v6460 = vpack.c.b16 %v6415, %v6414
      %v6461 = vpack.c.b16 %v6417, %v6416
      %v6462 = vpack.c.b16 %v6419, %v6418
      %v6463 = vpack.c.b16 %v6421, %v6420
      %v6464 = vpack.c.b16 %v6423, %v6422
      %v6465 = vpack.c.b16 %v6425, %v6424
      %v6466 = vpack.c.b16 %v6427, %v6426
      %v6467 = vpack.c.b16 %v6429, %v6428
      %v6468 = vpack.c.b16 %v6431, %v6430
      %v6469 = vpack.c.b16 %v6433, %v6432
      %v6470 = vpack.c.b16 %v6435, %v6434
      %v6471 = vpack.c.b16 %v6437, %v6436
      %v6472 = vpack.c.b16 %v6439, %v6438
      %v6473 = vpack.c.b16 %v6441, %v6440
      %6506 = vmatprep.subr.bf16.mxu0 0
      %6507 = vmatpush1.bf16.msra.mxu0 %v6442
      %6508 = vmatprep.subr.bf16.mxu0 0
      %6509 = vmatpush1.bf16.msra.mxu0 %v6443
      %6510 = vmatprep.subr.bf16.mxu0 0
      %6511 = vmatpush1.bf16.msra.mxu0 %v6444
      %6512 = vmatprep.subr.bf16.mxu0 0
      %6513 = vmatpush1.bf16.msra.mxu0 %v6445
      %6514 = vmatprep.subr.bf16.mxu0 0
      %6515 = vmatpush1.bf16.msra.mxu0 %v6446
      %6516 = vmatprep.subr.bf16.mxu0 0
      %6517 = vmatpush1.bf16.msra.mxu0 %v6447
      %6518 = vmatprep.subr.bf16.mxu0 0
      %6519 = vmatpush1.bf16.msra.mxu0 %v6448
      %6520 = vmatprep.subr.bf16.mxu0 0
      %6521 = vmatpush1.bf16.msra.mxu0 %v6449
      %6522 = vmatprep.subr.bf16.mxu0 0
      %6523 = vmatpush1.bf16.msra.mxu0 %v6450
      %6524 = vmatprep.subr.bf16.mxu0 0
      %6525 = vmatpush1.bf16.msra.mxu0 %v6451
      %6526 = vmatprep.subr.bf16.mxu0 0
      %6527 = vmatpush1.bf16.msra.mxu0 %v6452
      %6528 = vmatprep.subr.bf16.mxu0 0
      %6529 = vmatpush1.bf16.msra.mxu0 %v6453
      %6530 = vmatprep.subr.bf16.mxu0 0
      %6531 = vmatpush1.bf16.msra.mxu0 %v6454
      %6532 = vmatprep.subr.bf16.mxu0 0
      %6533 = vmatpush1.bf16.msra.mxu0 %v6455
      %6534 = vmatprep.subr.bf16.mxu0 0
      %6535 = vmatpush1.bf16.msra.mxu0 %v6456
      %6536 = vmatprep.subr.bf16.mxu0 0
      %6537 = vmatpush1.bf16.msra.mxu0 %v6457
      %6538 = vmatprep.mubr.bf16.mxu0 %v6240
      %6539 = vmatmul.mubr.bf16.gmra.mrb[0].mxu0 %v6239
      %v6540 = vpop.f32.mrb[0].mxu0
      %v6541 = vadd.f32 %v6312, %v6540
      %v6542 = vpop.f32.mrb[0].mxu0
      %v6543 = vpop.f32.mrb[0].mxu0
      %v6544 = vadd.f32 %v6312, %v6543
      %v6545 = vpop.f32.mrb[0].mxu0
      %6546 = vdwg.mxu0
      %6547 = vmatprep.subr.bf16.mxu0 0
      %6548 = vmatpush1.bf16.msra.mxu0 %v6458
      %6549 = vmatprep.subr.bf16.mxu0 0
      %6550 = vmatpush1.bf16.msra.mxu0 %v6459
      %6551 = vmatprep.subr.bf16.mxu0 0
      %6552 = vmatpush1.bf16.msra.mxu0 %v6460
      %6553 = vmatprep.subr.bf16.mxu0 0
      %6554 = vmatpush1.bf16.msra.mxu0 %v6461
      %6555 = vmatprep.subr.bf16.mxu0 0
      %6556 = vmatpush1.bf16.msra.mxu0 %v6462
      %6557 = vmatprep.subr.bf16.mxu0 0
      %6558 = vmatpush1.bf16.msra.mxu0 %v6463
      %6559 = vmatprep.subr.bf16.mxu0 0
      %6560 = vmatpush1.bf16.msra.mxu0 %v6464
      %6561 = vmatprep.subr.bf16.mxu0 0
      %6562 = vmatpush1.bf16.msra.mxu0 %v6465
      %6563 = vmatprep.subr.bf16.mxu0 0
      %6564 = vmatpush1.bf16.msra.mxu0 %v6466
      %6565 = vmatprep.subr.bf16.mxu0 0
      %6566 = vmatpush1.bf16.msra.mxu0 %v6467
      %6567 = vmatprep.subr.bf16.mxu0 0
      %6568 = vmatpush1.bf16.msra.mxu0 %v6468
      %6569 = vmatprep.subr.bf16.mxu0 0
      %6570 = vmatpush1.bf16.msra.mxu0 %v6469
      %6571 = vmatprep.subr.bf16.mxu0 0
      %6572 = vmatpush1.bf16.msra.mxu0 %v6470
      %6573 = vmatprep.subr.bf16.mxu0 0
      %6574 = vmatpush1.bf16.msra.mxu0 %v6471
      %6575 = vmatprep.subr.bf16.mxu0 0
      %6576 = vmatpush1.bf16.msra.mxu0 %v6472
      %6577 = vmatprep.subr.bf16.mxu0 0
      %6578 = vmatpush1.bf16.msra.mxu0 %v6473
      %6579 = vmatprep.mubr.bf16.mxu0 %v6242
      %6580 = vmatmul.mubr.bf16.gmra.mrb[0].mxu0 %v6241
      %v6581 = vpop.f32.mrb[0].mxu0
      %v6582 = vadd.f32 %v6541, %v6581
      %v6583 = vpop.f32.mrb[0].mxu0
      %v6584 = vpop.f32.mrb[0].mxu0
      %v6585 = vadd.f32 %v6544, %v6584
      %v6586 = vpop.f32.mrb[0].mxu0
      %6587 = vdwg.mxu0
      %6588 = vst [vmem:[%s229] sm:$0xff] %v6582
      %6589 = vst [vmem:[%s229 + $0x8] sm:$0xff] %v6585
      %s6590 = smul.u32 2, %s16
      %p6591 = scmp.lt.s32.totalorder %s6590, 3
      %s6592 = scalar_select %p6591, %s6590, 3
      %s6593 = smul.addr %s6592, 8
      %s6594 = scalar_lea.vmem %s5, %s6593
      // Predicated region
      $region41: #{dqn_conv_forward.7} parent=39 // pred_check
        %p6595 = pneg %p144
      $region42: #{dqn_conv_forward.7} parent=39 // pred_check_branch
        %6597 = sbr.rel (%p6595) target = $region44
      $region43: #{dqn_conv_forward.7} parent=39 // pred_region
        %s6598 = smul.u32 2, %s16
      $region44: #{dqn_conv_forward.7} parent=39 // pred_fallthru
        _
    $region40: #{dqn_conv_forward.7} parent=5 // pred_fallthru
      _
    %p6599 = scmp.le.s32.totalorder 2, %s11
    // Predicated region
    $region45: #{dqn_conv_forward.7} parent=5 // pred_check
      %p6600 = pneg %p6599
    $region46: #{dqn_conv_forward.7} parent=5 // pred_check_branch
      %6602 = sbr.rel (%p6600) target = $region48
    $region47: #{dqn_conv_forward.7} parent=5 // pred_region
      %s6603 = ssub.s32 %s11, 2
      // Predicated region
      $region49: #{dqn_conv_forward.7} parent=47 // pred_check
        %p6604 = pneg %p150
      $region50: #{dqn_conv_forward.7} parent=47 // pred_check_branch
        %6606 = sbr.rel (%p6604) target = $region52
      $region51: #{dqn_conv_forward.7} parent=47 // pred_region
        %s6607 = smul.u32 2, %s17
        %p6608 = scmp.lt.s32.totalorder %s6607, 3
        %s6609 = scalar_select %p6608, %s6607, 3
        %s6610 = smul.addr %s6609, 8
        %s6611 = scalar_lea.vmem %s5, %s6610
      $region52: #{dqn_conv_forward.7} parent=47 // pred_fallthru
        _
    $region48: #{dqn_conv_forward.7} parent=5 // pred_fallthru
      _
  $region6: #{dqn_conv_forward.7} parent=0 // loop_footer
    %s15 = sadd.s32 1, %s11
  $region7: #{dqn_conv_forward.7} parent=0 // loop_footer_branch
    %10 = sbr.rel target = $region3
  $region8: #{dqn_conv_forward.7} parent=0 // loop_exit
    _

</llo_original>
